<compile_context>
chip_gen: v6e
topology: v6e:2x2x1
jax: 0.10.0
libtpu: 0.0.40
codegen_flags: <defaults>
</compile_context>

<pallas_src>
import functools

import numpy as np
import jax
import jax.numpy as jnp
from jax import lax
from jax.experimental import pallas as pl
from jax.experimental.pallas import tpu as pltpu

BN_EPS = 1e-5
LANES = 128
SUBLANES = 8


# ----------------------------------------------------------------------------
# Static constant builders (pure numpy).
# ----------------------------------------------------------------------------
def _round_up(v, m):
    return (v + m - 1) // m * m


def _bilinear_matrix(out_size, in_size):
    """PyTorch F.interpolate(mode='bilinear', align_corners=False) as a matrix."""
    m = np.zeros((out_size, in_size), np.float32)
    if in_size == 1:
        m[:, 0] = 1.0
        return m
    scale = in_size / out_size
    for o in range(out_size):
        src = (o + 0.5) * scale - 0.5
        if src < 0.0:
            src = 0.0
        i0 = min(int(np.floor(src)), in_size - 1)
        i1 = min(i0 + 1, in_size - 1)
        frac = src - i0
        m[o, i0] += 1.0 - frac
        m[o, i1] += frac
    return m


def _stacked_row_taps(K, stride, pad, Ho, Hop, H):
    """G[i*Hop + oh, h] = 1 iff h == stride*oh + i - pad (zero pad / oh>=Ho -> zero)."""
    g = np.zeros((K * Hop, H), np.float32)
    for i in range(K):
        for oh in range(Ho):
            h = stride * oh + i - pad
            if 0 <= h < H:
                g[i * Hop + oh, h] = 1.0
    return g


# ----------------------------------------------------------------------------
# Fused kernel (one grid step per batch element).
# ----------------------------------------------------------------------------
def _dappm_kernel(x_ref, sc1_ref, sh1_ref, gh_ref, dw_ref, w1_ref, uh_ref,
                  *rest, K, stride, pad, H, W, Hop, Wo, Cp, Cbp, uw_taps,
                  has_prev):
    f32, bf16 = jnp.float32, jnp.bfloat16
    if has_prev:
        prev_ref, hm_ref, sc2_ref, sh2_ref, w3_ref, o_ref, dw_scr = rest
    else:
        o_ref, dw_scr = rest

    # ---- down_scale: BN1 + strided depthwise KxK conv + ReLU ----------------
    xbn = (x_ref[...] * sc1_ref[...] + sh1_ref[...]).astype(bf16)     # (H, W*Cp)
    # Stacked H-tap selection (one MXU matmul; zero padding and the Hop row
    # padding are baked into the 0/1 bf16 matrix):
    #   taps_h[i*Hop+oh, w*Cp+c] = xbn[stride*oh + i - pad, w, c]
    taps_h = jnp.dot(gh_ref[...], xbn, preferred_element_type=f32)    # (K*Hop, W*Cp)

    # Depthwise weights arrive already sublane-replicated: dw_ref[(i*K+j)*Hop+r, c]
    # so the inner loop is pure mul+add (no broadcasts).  Each per-ow result is
    # streamed into the VMEM scratch slab (bounded vreg pressure, no concat).
    for ow in range(Wo):
        acc = None
        for j in range(K):
            w_in = stride * ow + j - pad
            if not (0 <= w_in < W):
                continue                                              # zero padding
            tcol = taps_h[:, w_in * Cp:(w_in + 1) * Cp]               # (K*Hop, Cp)
            for i in range(K):
                t = i * K + j
                term = (dw_ref[t * Hop:(t + 1) * Hop, :]
                        * tcol[i * Hop:(i + 1) * Hop, :])
                acc = term if acc is None else acc + term
        if acc is None:
            acc = jnp.zeros((Hop, Cp), f32)
        dw_scr[ow * Hop:(ow + 1) * Hop, :] = jnp.maximum(acc, 0.0)

    # ---- 1x1 conv (channel mix) ---------------------------------------------
    y1 = jnp.dot(dw_scr[...].astype(bf16), w1_ref[...],
                 preferred_element_type=f32)                          # (Wo*Hop, Cbp)

    # ---- separable bilinear upsample (computed once) -------------------------
    y_lanes = jnp.concatenate(
        [y1[ow * Hop:(ow + 1) * Hop, :] for ow in range(Wo)],
        axis=1).astype(bf16)                                          # (Hop, Wo*Cbp)
    b = jnp.dot(uh_ref[...], y_lanes, preferred_element_type=f32)     # (H, Wo*Cbp)
    pieces = []
    for w in range(W):
        col = None
        for ow, wt in uw_taps[w]:                                     # <=2 static taps
            term = wt * b[:, ow * Cbp:(ow + 1) * Cbp]                 # (H, Cbp)
            col = term if col is None else col + term
        pieces.append(col)
    ups = jnp.concatenate(pieces, axis=0)                             # (P=W*H, Cbp)

    if not has_prev:
        o_ref[...] = ups
        return

    # ---- process: (+ prev) -> BN2 -> ReLU ------------------------------------
    P = W * H
    z = jnp.maximum((ups + prev_ref[...]) * sc2_ref[...] + sh2_ref[...], 0.0)

    # +-1 H-shifted variants derived in-kernel (sublane shift + boundary mask);
    # neither prev nor the upsample is shipped / recomputed three times.
    zrow = jnp.zeros((1, Cbp), f32)
    z_m1 = jnp.concatenate([zrow, z[:P - 1, :]], axis=0) * hm_ref[0]  # reads h-1
    z_p1 = jnp.concatenate([z[1:, :], zrow], axis=0) * hm_ref[1]      # reads h+1
    zcat = jnp.concatenate(
        [z_m1.astype(bf16), z.astype(bf16), z_p1.astype(bf16)], axis=1)  # (P, 3*Cbp)

    # ---- 3x3 conv: three fused (P,3*Cbp)x(3*Cbp,Cbp) matmuls (one per kw) ----
    zero_blk = jnp.zeros((H, 3 * Cbp), bf16)
    acc = jnp.dot(zcat, w3_ref[1], preferred_element_type=f32)                   # kw=1
    acc = acc + jnp.dot(jnp.concatenate([zero_blk, zcat[:P - H, :]], axis=0),
                        w3_ref[0], preferred_element_type=f32)                   # kw=0
    acc = acc + jnp.dot(jnp.concatenate([zcat[H:, :], zero_blk], axis=0),
                        w3_ref[2], preferred_element_type=f32)                   # kw=2
    o_ref[...] = acc


# ----------------------------------------------------------------------------
# DAPPMBranch forward (inference BN semantics).
# ----------------------------------------------------------------------------
def _pick_vmem_limit(per_step_bytes):
    try:
        cap = int(pltpu.get_tpu_info().vmem_capacity_bytes)
    except Exception:
        cap = 64 * 2**20                       # conservative (v7x per-TC) fallback
    ceiling = max(cap - 8 * 2**20, 32 * 2**20)
    want = int(1.5 * per_step_bytes) + 16 * 2**20
    return int(min(ceiling, max(32 * 2**20, want)))


def dappm_branch_forward(x, prev, params, *, kernel_size, stride):
    if stride <= 1:
        # TODO(synk): stride == 0 (AdaptiveAvgPool2d) / stride == 1 variants.
        raise NotImplementedError("only the stride > 1 branch is implemented")

    N, C, H, W = map(int, x.shape)
    K, s = int(kernel_size), int(stride)
    pad = s
    Ho = (H + 2 * pad - K) // s + 1
    Wo = (W + 2 * pad - K) // s + 1
    Hop = _round_up(max(Ho, 1), SUBLANES)          # sublane-aligned output rows
    Cb = int(params["w1"].shape[0])
    # TODO(synk): for C << 128 a packed (w, c) lane layout would avoid the
    # 128-lane padding of x in HBM; kept 128-aligned for aligned column slices.
    Cp = _round_up(C, LANES)
    Cbp = _round_up(Cb, LANES)
    P = W * H
    has_prev = prev is not None
    f32, bf16 = jnp.float32, jnp.bfloat16

    # --- fold BN1, pad channels, channels-last flat input ---------------------
    sc1 = params["bn1_gamma"] / jnp.sqrt(params["bn1_var"] + BN_EPS)
    sh1 = params["bn1_beta"] - params["bn1_mean"] * sc1
    sc1p = jnp.zeros((Cp,), f32).at[:C].set(sc1)
    sh1p = jnp.zeros((Cp,), f32).at[:C].set(sh1)
    sc1t = jnp.tile(sc1p, W).reshape(1, W * Cp)
    sh1t = jnp.tile(sh1p, W).reshape(1, W * Cp)

    x_cl = jnp.transpose(x, (0, 2, 3, 1))                             # (N, H, W, C)
    x_cl = jnp.pad(x_cl, ((0, 0), (0, 0), (0, 0), (0, Cp - C)))
    x_cl = x_cl.reshape(N, H, W * Cp).astype(f32)

    # depthwise weights, sublane-replicated: dw_rep[(i*K+j)*Hop + r, c] = dw[c,0,i,j]
    dwv = jnp.transpose(params["dw"].reshape(C, K * K), (1, 0))
    dwv = jnp.pad(dwv, ((0, 0), (0, Cp - C))).astype(f32)
    dw_rep = jnp.repeat(dwv, Hop, axis=0)                             # (K*K*Hop, Cp)

    # 1x1 conv weights (Cin, Cout), bf16 for the MXU
    w1p = jnp.transpose(params["w1"].reshape(Cb, C), (1, 0))
    w1p = jnp.pad(w1p, ((0, Cp - C), (0, Cbp - Cb))).astype(bf16)

    # static selection / interpolation constants (pre-cast to bf16, fetched once)
    ghs = jnp.asarray(_stacked_row_taps(K, s, pad, Ho, Hop, H), dtype=bf16)
    uh_np = np.zeros((H, Hop), np.float32)
    uh_np[:, :Ho] = _bilinear_matrix(H, Ho)
    uhj = jnp.asarray(uh_np, dtype=bf16)
    uw = _bilinear_matrix(W, Wo)
    uw_taps = tuple(
        tuple((int(ow), float(uw[w, ow])) for ow in range(Wo) if uw[w, ow] != 0.0)
        for w in range(W))

    inputs = [x_cl, sc1t, sh1t, ghs, dw_rep, w1p, uhj]
    in_specs = [
        pl.BlockSpec((None, H, W * Cp), lambda n: (n, 0, 0)),         # x (flat NHWC)
        pl.BlockSpec((1, W * Cp), lambda n: (0, 0)),                  # BN1 scale
        pl.BlockSpec((1, W * Cp), lambda n: (0, 0)),                  # BN1 shift
        pl.BlockSpec((K * Hop, H), lambda n: (0, 0)),                 # stacked H taps
        pl.BlockSpec((K * K * Hop, Cp), lambda n: (0, 0)),            # depthwise w
        pl.BlockSpec((Cp, Cbp), lambda n: (0, 0)),                    # 1x1 w
        pl.BlockSpec((H, Hop), lambda n: (0, 0)),                     # bilinear U_H
    ]

    if has_prev:
        sc2 = params["bn2_gamma"] / jnp.sqrt(params["bn2_var"] + BN_EPS)
        sh2 = params["bn2_beta"] - params["bn2_mean"] * sc2
        sc2p = jnp.zeros((1, Cbp), f32).at[0, :Cb].set(sc2)
        sh2p = jnp.zeros((1, Cbp), f32).at[0, :Cb].set(sh2)

        # w3cat[kw, kh*Cbp + ci, co] = w3[co, ci, kh, kw]
        w3t = jnp.transpose(params["w3"], (2, 3, 1, 0))               # (kh,kw,ci,co)
        w3t = jnp.pad(w3t, ((0, 0), (0, 0), (0, Cbp - Cb), (0, Cbp - Cb)))
        w3cat = jnp.transpose(w3t, (1, 0, 2, 3)).reshape(3, 3 * Cbp, Cbp).astype(bf16)

        # prev once, W-major channels-last flat layout (no pre-shifted copies)
        pcl = jnp.transpose(prev, (0, 3, 2, 1))                       # (N, W, H, Cb)
        pcl = jnp.pad(pcl, ((0, 0), (0, 0), (0, 0), (0, Cbp - Cb)))
        prev_flat = pcl.reshape(N, P, Cbp).astype(f32)

        # boundary masks for the in-kernel +-1 H shifts (tiny, (P,1) lane-bcast)
        hvals = np.arange(P) % H
        hmask = np.zeros((2, P, 1), np.float32)
        hmask[0, :, 0] = (hvals >= 1).astype(np.float32)
        hmask[1, :, 0] = (hvals <= H - 2).astype(np.float32)
        hmask = jnp.asarray(hmask)

        inputs += [prev_flat, hmask, sc2p, sh2p, w3cat]
        in_specs += [
            pl.BlockSpec((None, P, Cbp), lambda n: (n, 0, 0)),        # prev (once)
            pl.BlockSpec((2, P, 1), lambda n: (0, 0, 0)),             # H-shift masks
            pl.BlockSpec((1, Cbp), lambda n: (0, 0)),                 # BN2 scale
            pl.BlockSpec((1, Cbp), lambda n: (0, 0)),                 # BN2 shift
            pl.BlockSpec((3, 3 * Cbp, Cbp), lambda n: (0, 0, 0)),     # stacked 3x3 w
        ]

    kernel = functools.partial(
        _dappm_kernel, K=K, stride=s, pad=pad, H=H, W=W, Hop=Hop, Wo=Wo,
        Cp=Cp, Cbp=Cbp, uw_taps=uw_taps, has_prev=has_prev)

    # honest per-step VMEM requirement (double-buffered I/O + constants +
    # intermediates), clamped to this generation's physical VMEM capacity.
    step_bytes = 2 * (H * W * Cp * 4) + 2 * (P * Cbp * 4)
    const_bytes = (2 * W * Cp * 4 + K * Hop * H * 2 + K * K * Hop * Cp * 4
                   + Cp * Cbp * 2 + H * Hop * 2)
    inter_bytes = (H * W * Cp * 6 + K * Hop * W * Cp * 4 + Wo * Hop * Cp * 4
                   + Wo * Hop * Cbp * 6 + P * Cbp * 4)
    if has_prev:
        step_bytes += 2 * (P * Cbp * 4)
        const_bytes += 2 * P * 4 + 2 * Cbp * 4 + 9 * Cbp * Cbp * 2
        inter_bytes += P * Cbp * 22 + 3 * (P * 3 * Cbp * 2)
    vmem_limit = _pick_vmem_limit(step_bytes + 2 * const_bytes + inter_bytes)

    out_flat = pl.pallas_call(
        kernel,
        grid=(N,),
        in_specs=in_specs,
        out_specs=pl.BlockSpec((None, P, Cbp), lambda n: (n, 0, 0)),
        out_shape=jax.ShapeDtypeStruct((N, P, Cbp), f32),
        scratch_shapes=[pltpu.VMEM((Wo * Hop, Cp), f32)],
        compiler_params=pltpu.CompilerParams(
            dimension_semantics=("parallel",),
            vmem_limit_bytes=vmem_limit),
    )(*inputs)

    out = out_flat.reshape(N, W, H, Cbp)[:, :, :, :Cb]
    return jnp.transpose(out, (0, 3, 2, 1))                           # NCHW


# ----------------------------------------------------------------------------
# Pure-JAX reference (lax.conv based) for a sanity check.
# ----------------------------------------------------------------------------
def reference_forward(x, prev, params, *, kernel_size, stride):
    C = int(x.shape[1])
    H, W = x.shape[2], x.shape[3]
    sc1 = params["bn1_gamma"] / jnp.sqrt(params["bn1_var"] + BN_EPS)
    sh1 = params["bn1_beta"] - params["bn1_mean"] * sc1
    xb = x * sc1[None, :, None, None] + sh1[None, :, None, None]
    y = lax.conv_general_dilated(
        xb, params["dw"], window_strides=(stride, stride),
        padding=[(stride, stride), (stride, stride)],
        dimension_numbers=("NCHW", "OIHW", "NCHW"), feature_group_count=C)
    y = jnp.maximum(y, 0.0)
    y = lax.conv_general_dilated(
        y, params["w1"], (1, 1), [(0, 0), (0, 0)],
        dimension_numbers=("NCHW", "OIHW", "NCHW"))
    UH = jnp.asarray(_bilinear_matrix(H, y.shape[2]))
    UW = jnp.asarray(_bilinear_matrix(W, y.shape[3]))
    y = jnp.einsum("hH,ncHW,wW->nchw", UH, y, UW)
    if prev is None:
        return y
    sc2 = params["bn2_gamma"] / jnp.sqrt(params["bn2_var"] + BN_EPS)
    sh2 = params["bn2_beta"] - params["bn2_mean"] * sc2
    z = (y + prev) * sc2[None, :, None, None] + sh2[None, :, None, None]
    z = jnp.maximum(z, 0.0)
    return lax.conv_general_dilated(
        z, params["w3"], (1, 1), [(1, 1), (1, 1)],
        dimension_numbers=("NCHW", "OIHW", "NCHW"))


if __name__ == "__main__":
    N, in_ch, br_ch, H, W = 2, 4, 8, 16, 16
    kernel_size, stride = 5, 2

    key = jax.random.PRNGKey(0)
    ks = jax.random.split(key, 13)
    params = {
        "bn1_gamma": 1.0 + 0.1 * jax.random.normal(ks[0], (in_ch,), jnp.float32),
        "bn1_beta":  0.1 * jax.random.normal(ks[1], (in_ch,), jnp.float32),
        "bn1_mean":  0.1 * jax.random.normal(ks[2], (in_ch,), jnp.float32),
        "bn1_var":   1.0 + 0.1 * jax.random.uniform(ks[3], (in_ch,), jnp.float32),
        "dw":        0.2 * jax.random.normal(ks[4], (in_ch, 1, kernel_size, kernel_size), jnp.float32),
        "w1":        0.3 * jax.random.normal(ks[5], (br_ch, in_ch, 1, 1), jnp.float32),
        "bn2_gamma": 1.0 + 0.1 * jax.random.normal(ks[6], (br_ch,), jnp.float32),
        "bn2_beta":  0.1 * jax.random.normal(ks[7], (br_ch,), jnp.float32),
        "bn2_mean":  0.1 * jax.random.normal(ks[8], (br_ch,), jnp.float32),
        "bn2_var":   1.0 + 0.1 * jax.random.uniform(ks[9], (br_ch,), jnp.float32),
        "w3":        0.2 * jax.random.normal(ks[10], (br_ch, br_ch, 3, 3), jnp.float32),
    }
    x = jax.random.normal(ks[11], (N, in_ch, H, W), jnp.float32)
    prev = jax.random.normal(ks[12], (N, br_ch, H, W), jnp.float32)

    # branch-k style call (previous-branch output present -> `process` applied)
    out = jax.block_until_ready(
        dappm_branch_forward(x, prev, params, kernel_size=kernel_size, stride=stride))
    ref = jax.block_until_ready(
        reference_forward(x, prev, params, kernel_size=kernel_size, stride=stride))
    assert out.shape == (N, br_ch, H, W), out.shape
    max_err = float(jnp.max(jnp.abs(out - ref)))
    # bf16 MXU operands with f32 accumulation vs a pure-f32 reference.
    assert np.isfinite(max_err) and max_err < 0.1, f"max_err={max_err}"

    # branch-0 style call (no previous-branch output -> no `process` stage)
    out0 = jax.block_until_ready(
        dappm_branch_forward(x, None, params, kernel_size=kernel_size, stride=stride))
    ref0 = jax.block_until_ready(
        reference_forward(x, None, params, kernel_size=kernel_size, stride=stride))
    assert out0.shape == (N, br_ch, H, W), out0.shape
    max_err0 = float(jnp.max(jnp.abs(out0 - ref0)))
    assert np.isfinite(max_err0) and max_err0 < 0.1, f"max_err_noprev={max_err0}"

    print("KERNEL_OK")
</pallas_src>

<mosaic_0001>
module attributes {stable_mosaic.version = 11 : i64} {
  func.func @_dappm_kernel(%arg0: i32, %arg1: memref<1x16x2048xf32, #tpu.memory_space<vmem>>, %arg2: memref<1x2048xf32, #tpu.memory_space<vmem>>, %arg3: memref<1x2048xf32, #tpu.memory_space<vmem>>, %arg4: memref<40x16xbf16, #tpu.memory_space<vmem>>, %arg5: memref<200x128xf32, #tpu.memory_space<vmem>>, %arg6: memref<128x128xbf16, #tpu.memory_space<vmem>>, %arg7: memref<16x8xbf16, #tpu.memory_space<vmem>>, %arg8: memref<1x256x128xf32, #tpu.memory_space<vmem>>, %arg9: memref<2x256x1xf32, #tpu.memory_space<vmem>>, %arg10: memref<1x128xf32, #tpu.memory_space<vmem>>, %arg11: memref<1x128xf32, #tpu.memory_space<vmem>>, %arg12: memref<3x384x128xbf16, #tpu.memory_space<vmem>>, %arg13: memref<1x256x128xf32, #tpu.memory_space<vmem>>, %arg14: memref<64x128xf32, #tpu.memory_space<vmem>>) attributes {dimension_semantics = [#tpu.dimension_semantics<parallel>], iteration_bounds = array<i64: 2>, scalar_prefetch = 0 : i64, scratch_operands = 1 : i64, tpu.core_type = #tpu.core_type<tc>, window_params = [{transform_indices = @transform_0, window_bounds = array<i64: 1, 16, 2048>}, {pipeline_mode = #tpu.pipeline_mode<synchronous>, transform_indices = @transform_1, window_bounds = array<i64: 1, 2048>}, {pipeline_mode = #tpu.pipeline_mode<synchronous>, transform_indices = @transform_2, window_bounds = array<i64: 1, 2048>}, {pipeline_mode = #tpu.pipeline_mode<synchronous>, transform_indices = @transform_3, window_bounds = array<i64: 40, 16>}, {pipeline_mode = #tpu.pipeline_mode<synchronous>, transform_indices = @transform_4, window_bounds = array<i64: 200, 128>}, {pipeline_mode = #tpu.pipeline_mode<synchronous>, transform_indices = @transform_5, window_bounds = array<i64: 128, 128>}, {pipeline_mode = #tpu.pipeline_mode<synchronous>, transform_indices = @transform_6, window_bounds = array<i64: 16, 8>}, {transform_indices = @transform_7, window_bounds = array<i64: 1, 256, 128>}, {pipeline_mode = #tpu.pipeline_mode<synchronous>, transform_indices = @transform_8, window_bounds = array<i64: 2, 256, 1>}, {pipeline_mode = #tpu.pipeline_mode<synchronous>, transform_indices = @transform_9, window_bounds = array<i64: 1, 128>}, {pipeline_mode = #tpu.pipeline_mode<synchronous>, transform_indices = @transform_10, window_bounds = array<i64: 1, 128>}, {pipeline_mode = #tpu.pipeline_mode<synchronous>, transform_indices = @transform_11, window_bounds = array<i64: 3, 384, 128>}, {transform_indices = @transform_12, window_bounds = array<i64: 1, 256, 128>}]} {
    %c0 = arith.constant 0 : index
    %c0_0 = arith.constant 0 : index
    %c0_1 = arith.constant 0 : index
    %0 = vector.load %arg1[%c0, %c0_0, %c0_1] : memref<1x16x2048xf32, #tpu.memory_space<vmem>>, vector<1x16x2048xf32>
    %1 = vector.shape_cast %0 : vector<1x16x2048xf32> to vector<16x2048xf32>
    %c0_2 = arith.constant 0 : index
    %c0_3 = arith.constant 0 : index
    %2 = vector.load %arg2[%c0_2, %c0_3] : memref<1x2048xf32, #tpu.memory_space<vmem>>, vector<1x2048xf32>
    %3 = vector.broadcast %2 : vector<1x2048xf32> to vector<16x2048xf32>
    %4 = arith.mulf %1, %3 : vector<16x2048xf32>
    %c0_4 = arith.constant 0 : index
    %c0_5 = arith.constant 0 : index
    %5 = vector.load %arg3[%c0_4, %c0_5] : memref<1x2048xf32, #tpu.memory_space<vmem>>, vector<1x2048xf32>
    %6 = vector.broadcast %5 : vector<1x2048xf32> to vector<16x2048xf32>
    %7 = arith.addf %4, %6 : vector<16x2048xf32>
    %8 = arith.truncf %7 : vector<16x2048xf32> to vector<16x2048xbf16>
    %c0_6 = arith.constant 0 : index
    %c0_7 = arith.constant 0 : index
    %9 = vector.load %arg4[%c0_6, %c0_7] : memref<40x16xbf16, #tpu.memory_space<vmem>>, vector<40x16xbf16>
    %cst = arith.constant dense<0.000000e+00> : vector<40x2048xf32>
    %10 = tpu.matmul %9, %8, %cst {dimension_numbers = #tpu.dot_dimension_numbers<[1], [0], [0], [1], [0, 0, 1, 1], [], []>} : vector<40x16xbf16>, vector<16x2048xbf16>, vector<40x2048xf32> -> vector<40x2048xf32>
    %11 = vector.extract_strided_slice %10 {offsets = [0, 0], sizes = [40, 128], strides = [1, 1]} : vector<40x2048xf32> to vector<40x128xf32>
    %c16 = arith.constant 16 : index
    %c0_8 = arith.constant 0 : index
    %12 = vector.load %arg5[%c16, %c0_8] : memref<200x128xf32, #tpu.memory_space<vmem>>, vector<8x128xf32>
    %13 = vector.extract_strided_slice %11 {offsets = [0, 0], sizes = [8, 128], strides = [1, 1]} : vector<40x128xf32> to vector<8x128xf32>
    %14 = arith.mulf %12, %13 : vector<8x128xf32>
    %c56 = arith.constant 56 : index
    %c0_9 = arith.constant 0 : index
    %15 = vector.load %arg5[%c56, %c0_9] : memref<200x128xf32, #tpu.memory_space<vmem>>, vector<8x128xf32>
    %16 = vector.extract_strided_slice %11 {offsets = [8, 0], sizes = [8, 128], strides = [1, 1]} : vector<40x128xf32> to vector<8x128xf32>
    %17 = arith.mulf %15, %16 : vector<8x128xf32>
    %18 = arith.addf %14, %17 : vector<8x128xf32>
    %c96 = arith.constant 96 : index
    %c0_10 = arith.constant 0 : index
    %19 = vector.load %arg5[%c96, %c0_10] : memref<200x128xf32, #tpu.memory_space<vmem>>, vector<8x128xf32>
    %20 = vector.extract_strided_slice %11 {offsets = [16, 0], sizes = [8, 128], strides = [1, 1]} : vector<40x128xf32> to vector<8x128xf32>
    %21 = arith.mulf %19, %20 : vector<8x128xf32>
    %22 = arith.addf %18, %21 : vector<8x128xf32>
    %c136 = arith.constant 136 : index
    %c0_11 = arith.constant 0 : index
    %23 = vector.load %arg5[%c136, %c0_11] : memref<200x128xf32, #tpu.memory_space<vmem>>, vector<8x128xf32>
    %24 = vector.extract_strided_slice %11 {offsets = [24, 0], sizes = [8, 128], strides = [1, 1]} : vector<40x128xf32> to vector<8x128xf32>
    %25 = arith.mulf %23, %24 : vector<8x128xf32>
    %26 = arith.addf %22, %25 : vector<8x128xf32>
    %c176 = arith.constant 176 : index
    %c0_12 = arith.constant 0 : index
    %27 = vector.load %arg5[%c176, %c0_12] : memref<200x128xf32, #tpu.memory_space<vmem>>, vector<8x128xf32>
    %28 = vector.extract_strided_slice %11 {offsets = [32, 0], sizes = [8, 128], strides = [1, 1]} : vector<40x128xf32> to vector<8x128xf32>
    %29 = arith.mulf %27, %28 : vector<8x128xf32>
    %30 = arith.addf %26, %29 : vector<8x128xf32>
    %31 = vector.extract_strided_slice %10 {offsets = [0, 128], sizes = [40, 128], strides = [1, 1]} : vector<40x2048xf32> to vector<40x128xf32>
    %c24 = arith.constant 24 : index
    %c0_13 = arith.constant 0 : index
    %32 = vector.load %arg5[%c24, %c0_13] : memref<200x128xf32, #tpu.memory_space<vmem>>, vector<8x128xf32>
    %33 = vector.extract_strided_slice %31 {offsets = [0, 0], sizes = [8, 128], strides = [1, 1]} : vector<40x128xf32> to vector<8x128xf32>
    %34 = arith.mulf %32, %33 : vector<8x128xf32>
    %35 = arith.addf %30, %34 : vector<8x128xf32>
    %c64 = arith.constant 64 : index
    %c0_14 = arith.constant 0 : index
    %36 = vector.load %arg5[%c64, %c0_14] : memref<200x128xf32, #tpu.memory_space<vmem>>, vector<8x128xf32>
    %37 = vector.extract_strided_slice %31 {offsets = [8, 0], sizes = [8, 128], strides = [1, 1]} : vector<40x128xf32> to vector<8x128xf32>
    %38 = arith.mulf %36, %37 : vector<8x128xf32>
    %39 = arith.addf %35, %38 : vector<8x128xf32>
    %c104 = arith.constant 104 : index
    %c0_15 = arith.constant 0 : index
    %40 = vector.load %arg5[%c104, %c0_15] : memref<200x128xf32, #tpu.memory_space<vmem>>, vector<8x128xf32>
    %41 = vector.extract_strided_slice %31 {offsets = [16, 0], sizes = [8, 128], strides = [1, 1]} : vector<40x128xf32> to vector<8x128xf32>
    %42 = arith.mulf %40, %41 : vector<8x128xf32>
    %43 = arith.addf %39, %42 : vector<8x128xf32>
    %c144 = arith.constant 144 : index
    %c0_16 = arith.constant 0 : index
    %44 = vector.load %arg5[%c144, %c0_16] : memref<200x128xf32, #tpu.memory_space<vmem>>, vector<8x128xf32>
    %45 = vector.extract_strided_slice %31 {offsets = [24, 0], sizes = [8, 128], strides = [1, 1]} : vector<40x128xf32> to vector<8x128xf32>
    %46 = arith.mulf %44, %45 : vector<8x128xf32>
    %47 = arith.addf %43, %46 : vector<8x128xf32>
    %c184 = arith.constant 184 : index
    %c0_17 = arith.constant 0 : index
    %48 = vector.load %arg5[%c184, %c0_17] : memref<200x128xf32, #tpu.memory_space<vmem>>, vector<8x128xf32>
    %49 = vector.extract_strided_slice %31 {offsets = [32, 0], sizes = [8, 128], strides = [1, 1]} : vector<40x128xf32> to vector<8x128xf32>
    %50 = arith.mulf %48, %49 : vector<8x128xf32>
    %51 = arith.addf %47, %50 : vector<8x128xf32>
    %52 = vector.extract_strided_slice %10 {offsets = [0, 256], sizes = [40, 128], strides = [1, 1]} : vector<40x2048xf32> to vector<40x128xf32>
    %c32 = arith.constant 32 : index
    %c0_18 = arith.constant 0 : index
    %53 = vector.load %arg5[%c32, %c0_18] : memref<200x128xf32, #tpu.memory_space<vmem>>, vector<8x128xf32>
    %54 = vector.extract_strided_slice %52 {offsets = [0, 0], sizes = [8, 128], strides = [1, 1]} : vector<40x128xf32> to vector<8x128xf32>
    %55 = arith.mulf %53, %54 : vector<8x128xf32>
    %56 = arith.addf %51, %55 : vector<8x128xf32>
    %c72 = arith.constant 72 : index
    %c0_19 = arith.constant 0 : index
    %57 = vector.load %arg5[%c72, %c0_19] : memref<200x128xf32, #tpu.memory_space<vmem>>, vector<8x128xf32>
    %58 = vector.extract_strided_slice %52 {offsets = [8, 0], sizes = [8, 128], strides = [1, 1]} : vector<40x128xf32> to vector<8x128xf32>
    %59 = arith.mulf %57, %58 : vector<8x128xf32>
    %60 = arith.addf %56, %59 : vector<8x128xf32>
    %c112 = arith.constant 112 : index
    %c0_20 = arith.constant 0 : index
    %61 = vector.load %arg5[%c112, %c0_20] : memref<200x128xf32, #tpu.memory_space<vmem>>, vector<8x128xf32>
    %62 = vector.extract_strided_slice %52 {offsets = [16, 0], sizes = [8, 128], strides = [1, 1]} : vector<40x128xf32> to vector<8x128xf32>
    %63 = arith.mulf %61, %62 : vector<8x128xf32>
    %64 = arith.addf %60, %63 : vector<8x128xf32>
    %c152 = arith.constant 152 : index
    %c0_21 = arith.constant 0 : index
    %65 = vector.load %arg5[%c152, %c0_21] : memref<200x128xf32, #tpu.memory_space<vmem>>, vector<8x128xf32>
    %66 = vector.extract_strided_slice %52 {offsets = [24, 0], sizes = [8, 128], strides = [1, 1]} : vector<40x128xf32> to vector<8x128xf32>
    %67 = arith.mulf %65, %66 : vector<8x128xf32>
    %68 = arith.addf %64, %67 : vector<8x128xf32>
    %c192 = arith.constant 192 : index
    %c0_22 = arith.constant 0 : index
    %69 = vector.load %arg5[%c192, %c0_22] : memref<200x128xf32, #tpu.memory_space<vmem>>, vector<8x128xf32>
    %70 = vector.extract_strided_slice %52 {offsets = [32, 0], sizes = [8, 128], strides = [1, 1]} : vector<40x128xf32> to vector<8x128xf32>
    %71 = arith.mulf %69, %70 : vector<8x128xf32>
    %72 = arith.addf %68, %71 : vector<8x128xf32>
    %cst_23 = arith.constant 0.000000e+00 : f32
    %73 = vector.broadcast %cst_23 : f32 to vector<8x128xf32>
    %74 = arith.maximumf %72, %73 : vector<8x128xf32>
    %c0_24 = arith.constant 0 : index
    %c0_25 = arith.constant 0 : index
    %75 = vector.load %arg14[%c0_24, %c0_25] : memref<64x128xf32, #tpu.memory_space<vmem>>, vector<8x128xf32>
    tpu.vector_store %arg14[%c0_24, %c0_25], %74 {strides = array<i32>} : memref<64x128xf32, #tpu.memory_space<vmem>>, vector<8x128xf32>,
    %76 = vector.extract_strided_slice %10 {offsets = [0, 0], sizes = [40, 128], strides = [1, 1]} : vector<40x2048xf32> to vector<40x128xf32>
    %c0_26 = arith.constant 0 : index
    %c0_27 = arith.constant 0 : index
    %77 = vector.load %arg5[%c0_26, %c0_27] : memref<200x128xf32, #tpu.memory_space<vmem>>, vector<8x128xf32>
    %78 = vector.extract_strided_slice %76 {offsets = [0, 0], sizes = [8, 128], strides = [1, 1]} : vector<40x128xf32> to vector<8x128xf32>
    %79 = arith.mulf %77, %78 : vector<8x128xf32>
    %c40 = arith.constant 40 : index
    %c0_28 = arith.constant 0 : index
    %80 = vector.load %arg5[%c40, %c0_28] : memref<200x128xf32, #tpu.memory_space<vmem>>, vector<8x128xf32>
    %81 = vector.extract_strided_slice %76 {offsets = [8, 0], sizes = [8, 128], strides = [1, 1]} : vector<40x128xf32> to vector<8x128xf32>
    %82 = arith.mulf %80, %81 : vector<8x128xf32>
    %83 = arith.addf %79, %82 : vector<8x128xf32>
    %c80 = arith.constant 80 : index
    %c0_29 = arith.constant 0 : index
    %84 = vector.load %arg5[%c80, %c0_29] : memref<200x128xf32, #tpu.memory_space<vmem>>, vector<8x128xf32>
    %85 = vector.extract_strided_slice %76 {offsets = [16, 0], sizes = [8, 128], strides = [1, 1]} : vector<40x128xf32> to vector<8x128xf32>
    %86 = arith.mulf %84, %85 : vector<8x128xf32>
    %87 = arith.addf %83, %86 : vector<8x128xf32>
    %c120 = arith.constant 120 : index
    %c0_30 = arith.constant 0 : index
    %88 = vector.load %arg5[%c120, %c0_30] : memref<200x128xf32, #tpu.memory_space<vmem>>, vector<8x128xf32>
    %89 = vector.extract_strided_slice %76 {offsets = [24, 0], sizes = [8, 128], strides = [1, 1]} : vector<40x128xf32> to vector<8x128xf32>
    %90 = arith.mulf %88, %89 : vector<8x128xf32>
    %91 = arith.addf %87, %90 : vector<8x128xf32>
    %c160 = arith.constant 160 : index
    %c0_31 = arith.constant 0 : index
    %92 = vector.load %arg5[%c160, %c0_31] : memref<200x128xf32, #tpu.memory_space<vmem>>, vector<8x128xf32>
    %93 = vector.extract_strided_slice %76 {offsets = [32, 0], sizes = [8, 128], strides = [1, 1]} : vector<40x128xf32> to vector<8x128xf32>
    %94 = arith.mulf %92, %93 : vector<8x128xf32>
    %95 = arith.addf %91, %94 : vector<8x128xf32>
    %96 = vector.extract_strided_slice %10 {offsets = [0, 128], sizes = [40, 128], strides = [1, 1]} : vector<40x2048xf32> to vector<40x128xf32>
    %c8 = arith.constant 8 : index
    %c0_32 = arith.constant 0 : index
    %97 = vector.load %arg5[%c8, %c0_32] : memref<200x128xf32, #tpu.memory_space<vmem>>, vector<8x128xf32>
    %98 = vector.extract_strided_slice %96 {offsets = [0, 0], sizes = [8, 128], strides = [1, 1]} : vector<40x128xf32> to vector<8x128xf32>
    %99 = arith.mulf %97, %98 : vector<8x128xf32>
    %100 = arith.addf %95, %99 : vector<8x128xf32>
    %c48 = arith.constant 48 : index
    %c0_33 = arith.constant 0 : index
    %101 = vector.load %arg5[%c48, %c0_33] : memref<200x128xf32, #tpu.memory_space<vmem>>, vector<8x128xf32>
    %102 = vector.extract_strided_slice %96 {offsets = [8, 0], sizes = [8, 128], strides = [1, 1]} : vector<40x128xf32> to vector<8x128xf32>
    %103 = arith.mulf %101, %102 : vector<8x128xf32>
    %104 = arith.addf %100, %103 : vector<8x128xf32>
    %c88 = arith.constant 88 : index
    %c0_34 = arith.constant 0 : index
    %105 = vector.load %arg5[%c88, %c0_34] : memref<200x128xf32, #tpu.memory_space<vmem>>, vector<8x128xf32>
    %106 = vector.extract_strided_slice %96 {offsets = [16, 0], sizes = [8, 128], strides = [1, 1]} : vector<40x128xf32> to vector<8x128xf32>
    %107 = arith.mulf %105, %106 : vector<8x128xf32>
    %108 = arith.addf %104, %107 : vector<8x128xf32>
    %c128 = arith.constant 128 : index
    %c0_35 = arith.constant 0 : index
    %109 = vector.load %arg5[%c128, %c0_35] : memref<200x128xf32, #tpu.memory_space<vmem>>, vector<8x128xf32>
    %110 = vector.extract_strided_slice %96 {offsets = [24, 0], sizes = [8, 128], strides = [1, 1]} : vector<40x128xf32> to vector<8x128xf32>
    %111 = arith.mulf %109, %110 : vector<8x128xf32>
    %112 = arith.addf %108, %111 : vector<8x128xf32>
    %c168 = arith.constant 168 : index
    %c0_36 = arith.constant 0 : index
    %113 = vector.load %arg5[%c168, %c0_36] : memref<200x128xf32, #tpu.memory_space<vmem>>, vector<8x128xf32>
    %114 = vector.extract_strided_slice %96 {offsets = [32, 0], sizes = [8, 128], strides = [1, 1]} : vector<40x128xf32> to vector<8x128xf32>
    %115 = arith.mulf %113, %114 : vector<8x128xf32>
    %116 = arith.addf %112, %115 : vector<8x128xf32>
    %117 = vector.extract_strided_slice %10 {offsets = [0, 256], sizes = [40, 128], strides = [1, 1]} : vector<40x2048xf32> to vector<40x128xf32>
    %c16_37 = arith.constant 16 : index
    %c0_38 = arith.constant 0 : index
    %118 = vector.load %arg5[%c16_37, %c0_38] : memref<200x128xf32, #tpu.memory_space<vmem>>, vector<8x128xf32>
    %119 = vector.extract_strided_slice %117 {offsets = [0, 0], sizes = [8, 128], strides = [1, 1]} : vector<40x128xf32> to vector<8x128xf32>
    %120 = arith.mulf %118, %119 : vector<8x128xf32>
    %121 = arith.addf %116, %120 : vector<8x128xf32>
    %c56_39 = arith.constant 56 : index
    %c0_40 = arith.constant 0 : index
    %122 = vector.load %arg5[%c56_39, %c0_40] : memref<200x128xf32, #tpu.memory_space<vmem>>, vector<8x128xf32>
    %123 = vector.extract_strided_slice %117 {offsets = [8, 0], sizes = [8, 128], strides = [1, 1]} : vector<40x128xf32> to vector<8x128xf32>
    %124 = arith.mulf %122, %123 : vector<8x128xf32>
    %125 = arith.addf %121, %124 : vector<8x128xf32>
    %c96_41 = arith.constant 96 : index
    %c0_42 = arith.constant 0 : index
    %126 = vector.load %arg5[%c96_41, %c0_42] : memref<200x128xf32, #tpu.memory_space<vmem>>, vector<8x128xf32>
    %127 = vector.extract_strided_slice %117 {offsets = [16, 0], sizes = [8, 128], strides = [1, 1]} : vector<40x128xf32> to vector<8x128xf32>
    %128 = arith.mulf %126, %127 : vector<8x128xf32>
    %129 = arith.addf %125, %128 : vector<8x128xf32>
    %c136_43 = arith.constant 136 : index
    %c0_44 = arith.constant 0 : index
    %130 = vector.load %arg5[%c136_43, %c0_44] : memref<200x128xf32, #tpu.memory_space<vmem>>, vector<8x128xf32>
    %131 = vector.extract_strided_slice %117 {offsets = [24, 0], sizes = [8, 128], strides = [1, 1]} : vector<40x128xf32> to vector<8x128xf32>
    %132 = arith.mulf %130, %131 : vector<8x128xf32>
    %133 = arith.addf %129, %132 : vector<8x128xf32>
    %c176_45 = arith.constant 176 : index
    %c0_46 = arith.constant 0 : index
    %134 = vector.load %arg5[%c176_45, %c0_46] : memref<200x128xf32, #tpu.memory_space<vmem>>, vector<8x128xf32>
    %135 = vector.extract_strided_slice %117 {offsets = [32, 0], sizes = [8, 128], strides = [1, 1]} : vector<40x128xf32> to vector<8x128xf32>
    %136 = arith.mulf %134, %135 : vector<8x128xf32>
    %137 = arith.addf %133, %136 : vector<8x128xf32>
    %138 = vector.extract_strided_slice %10 {offsets = [0, 384], sizes = [40, 128], strides = [1, 1]} : vector<40x2048xf32> to vector<40x128xf32>
    %c24_47 = arith.constant 24 : index
    %c0_48 = arith.constant 0 : index
    %139 = vector.load %arg5[%c24_47, %c0_48] : memref<200x128xf32, #tpu.memory_space<vmem>>, vector<8x128xf32>
    %140 = vector.extract_strided_slice %138 {offsets = [0, 0], sizes = [8, 128], strides = [1, 1]} : vector<40x128xf32> to vector<8x128xf32>
    %141 = arith.mulf %139, %140 : vector<8x128xf32>
    %142 = arith.addf %137, %141 : vector<8x128xf32>
    %c64_49 = arith.constant 64 : index
    %c0_50 = arith.constant 0 : index
    %143 = vector.load %arg5[%c64_49, %c0_50] : memref<200x128xf32, #tpu.memory_space<vmem>>, vector<8x128xf32>
    %144 = vector.extract_strided_slice %138 {offsets = [8, 0], sizes = [8, 128], strides = [1, 1]} : vector<40x128xf32> to vector<8x128xf32>
    %145 = arith.mulf %143, %144 : vector<8x128xf32>
    %146 = arith.addf %142, %145 : vector<8x128xf32>
    %c104_51 = arith.constant 104 : index
    %c0_52 = arith.constant 0 : index
    %147 = vector.load %arg5[%c104_51, %c0_52] : memref<200x128xf32, #tpu.memory_space<vmem>>, vector<8x128xf32>
    %148 = vector.extract_strided_slice %138 {offsets = [16, 0], sizes = [8, 128], strides = [1, 1]} : vector<40x128xf32> to vector<8x128xf32>
    %149 = arith.mulf %147, %148 : vector<8x128xf32>
    %150 = arith.addf %146, %149 : vector<8x128xf32>
    %c144_53 = arith.constant 144 : index
    %c0_54 = arith.constant 0 : index
    %151 = vector.load %arg5[%c144_53, %c0_54] : memref<200x128xf32, #tpu.memory_space<vmem>>, vector<8x128xf32>
    %152 = vector.extract_strided_slice %138 {offsets = [24, 0], sizes = [8, 128], strides = [1, 1]} : vector<40x128xf32> to vector<8x128xf32>
    %153 = arith.mulf %151, %152 : vector<8x128xf32>
    %154 = arith.addf %150, %153 : vector<8x128xf32>
    %c184_55 = arith.constant 184 : index
    %c0_56 = arith.constant 0 : index
    %155 = vector.load %arg5[%c184_55, %c0_56] : memref<200x128xf32, #tpu.memory_space<vmem>>, vector<8x128xf32>
    %156 = vector.extract_strided_slice %138 {offsets = [32, 0], sizes = [8, 128], strides = [1, 1]} : vector<40x128xf32> to vector<8x128xf32>
    %157 = arith.mulf %155, %156 : vector<8x128xf32>
    %158 = arith.addf %154, %157 : vector<8x128xf32>
    %159 = vector.extract_strided_slice %10 {offsets = [0, 512], sizes = [40, 128], strides = [1, 1]} : vector<40x2048xf32> to vector<40x128xf32>
    %c32_57 = arith.constant 32 : index
    %c0_58 = arith.constant 0 : index
    %160 = vector.load %arg5[%c32_57, %c0_58] : memref<200x128xf32, #tpu.memory_space<vmem>>, vector<8x128xf32>
    %161 = vector.extract_strided_slice %159 {offsets = [0, 0], sizes = [8, 128], strides = [1, 1]} : vector<40x128xf32> to vector<8x128xf32>
    %162 = arith.mulf %160, %161 : vector<8x128xf32>
    %163 = arith.addf %158, %162 : vector<8x128xf32>
    %c72_59 = arith.constant 72 : index
    %c0_60 = arith.constant 0 : index
    %164 = vector.load %arg5[%c72_59, %c0_60] : memref<200x128xf32, #tpu.memory_space<vmem>>, vector<8x128xf32>
    %165 = vector.extract_strided_slice %159 {offsets = [8, 0], sizes = [8, 128], strides = [1, 1]} : vector<40x128xf32> to vector<8x128xf32>
    %166 = arith.mulf %164, %165 : vector<8x128xf32>
    %167 = arith.addf %163, %166 : vector<8x128xf32>
    %c112_61 = arith.constant 112 : index
    %c0_62 = arith.constant 0 : index
    %168 = vector.load %arg5[%c112_61, %c0_62] : memref<200x128xf32, #tpu.memory_space<vmem>>, vector<8x128xf32>
    %169 = vector.extract_strided_slice %159 {offsets = [16, 0], sizes = [8, 128], strides = [1, 1]} : vector<40x128xf32> to vector<8x128xf32>
    %170 = arith.mulf %168, %169 : vector<8x128xf32>
    %171 = arith.addf %167, %170 : vector<8x128xf32>
    %c152_63 = arith.constant 152 : index
    %c0_64 = arith.constant 0 : index
    %172 = vector.load %arg5[%c152_63, %c0_64] : memref<200x128xf32, #tpu.memory_space<vmem>>, vector<8x128xf32>
    %173 = vector.extract_strided_slice %159 {offsets = [24, 0], sizes = [8, 128], strides = [1, 1]} : vector<40x128xf32> to vector<8x128xf32>
    %174 = arith.mulf %172, %173 : vector<8x128xf32>
    %175 = arith.addf %171, %174 : vector<8x128xf32>
    %c192_65 = arith.constant 192 : index
    %c0_66 = arith.constant 0 : index
    %176 = vector.load %arg5[%c192_65, %c0_66] : memref<200x128xf32, #tpu.memory_space<vmem>>, vector<8x128xf32>
    %177 = vector.extract_strided_slice %159 {offsets = [32, 0], sizes = [8, 128], strides = [1, 1]} : vector<40x128xf32> to vector<8x128xf32>
    %178 = arith.mulf %176, %177 : vector<8x128xf32>
    %179 = arith.addf %175, %178 : vector<8x128xf32>
    %cst_67 = arith.constant 0.000000e+00 : f32
    %180 = vector.broadcast %cst_67 : f32 to vector<8x128xf32>
    %181 = arith.maximumf %179, %180 : vector<8x128xf32>
    %c8_68 = arith.constant 8 : index
    %c0_69 = arith.constant 0 : index
    %182 = vector.load %arg14[%c8_68, %c0_69] : memref<64x128xf32, #tpu.memory_space<vmem>>, vector<8x128xf32>
    tpu.vector_store %arg14[%c8_68, %c0_69], %181 {strides = array<i32>} : memref<64x128xf32, #tpu.memory_space<vmem>>, vector<8x128xf32>,
    %183 = vector.extract_strided_slice %10 {offsets = [0, 256], sizes = [40, 128], strides = [1, 1]} : vector<40x2048xf32> to vector<40x128xf32>
    %c0_70 = arith.constant 0 : index
    %c0_71 = arith.constant 0 : index
    %184 = vector.load %arg5[%c0_70, %c0_71] : memref<200x128xf32, #tpu.memory_space<vmem>>, vector<8x128xf32>
    %185 = vector.extract_strided_slice %183 {offsets = [0, 0], sizes = [8, 128], strides = [1, 1]} : vector<40x128xf32> to vector<8x128xf32>
    %186 = arith.mulf %184, %185 : vector<8x128xf32>
    %c40_72 = arith.constant 40 : index
    %c0_73 = arith.constant 0 : index
    %187 = vector.load %arg5[%c40_72, %c0_73] : memref<200x128xf32, #tpu.memory_space<vmem>>, vector<8x128xf32>
    %188 = vector.extract_strided_slice %183 {offsets = [8, 0], sizes = [8, 128], strides = [1, 1]} : vector<40x128xf32> to vector<8x128xf32>
    %189 = arith.mulf %187, %188 : vector<8x128xf32>
    %190 = arith.addf %186, %189 : vector<8x128xf32>
    %c80_74 = arith.constant 80 : index
    %c0_75 = arith.constant 0 : index
    %191 = vector.load %arg5[%c80_74, %c0_75] : memref<200x128xf32, #tpu.memory_space<vmem>>, vector<8x128xf32>
    %192 = vector.extract_strided_slice %183 {offsets = [16, 0], sizes = [8, 128], strides = [1, 1]} : vector<40x128xf32> to vector<8x128xf32>
    %193 = arith.mulf %191, %192 : vector<8x128xf32>
    %194 = arith.addf %190, %193 : vector<8x128xf32>
    %c120_76 = arith.constant 120 : index
    %c0_77 = arith.constant 0 : index
    %195 = vector.load %arg5[%c120_76, %c0_77] : memref<200x128xf32, #tpu.memory_space<vmem>>, vector<8x128xf32>
    %196 = vector.extract_strided_slice %183 {offsets = [24, 0], sizes = [8, 128], strides = [1, 1]} : vector<40x128xf32> to vector<8x128xf32>
    %197 = arith.mulf %195, %196 : vector<8x128xf32>
    %198 = arith.addf %194, %197 : vector<8x128xf32>
    %c160_78 = arith.constant 160 : index
    %c0_79 = arith.constant 0 : index
    %199 = vector.load %arg5[%c160_78, %c0_79] : memref<200x128xf32, #tpu.memory_space<vmem>>, vector<8x128xf32>
    %200 = vector.extract_strided_slice %183 {offsets = [32, 0], sizes = [8, 128], strides = [1, 1]} : vector<40x128xf32> to vector<8x128xf32>
    %201 = arith.mulf %199, %200 : vector<8x128xf32>
    %202 = arith.addf %198, %201 : vector<8x128xf32>
    %203 = vector.extract_strided_slice %10 {offsets = [0, 384], sizes = [40, 128], strides = [1, 1]} : vector<40x2048xf32> to vector<40x128xf32>
    %c8_80 = arith.constant 8 : index
    %c0_81 = arith.constant 0 : index
    %204 = vector.load %arg5[%c8_80, %c0_81] : memref<200x128xf32, #tpu.memory_space<vmem>>, vector<8x128xf32>
    %205 = vector.extract_strided_slice %203 {offsets = [0, 0], sizes = [8, 128], strides = [1, 1]} : vector<40x128xf32> to vector<8x128xf32>
    %206 = arith.mulf %204, %205 : vector<8x128xf32>
    %207 = arith.addf %202, %206 : vector<8x128xf32>
    %c48_82 = arith.constant 48 : index
    %c0_83 = arith.constant 0 : index
    %208 = vector.load %arg5[%c48_82, %c0_83] : memref<200x128xf32, #tpu.memory_space<vmem>>, vector<8x128xf32>
    %209 = vector.extract_strided_slice %203 {offsets = [8, 0], sizes = [8, 128], strides = [1, 1]} : vector<40x128xf32> to vector<8x128xf32>
    %210 = arith.mulf %208, %209 : vector<8x128xf32>
    %211 = arith.addf %207, %210 : vector<8x128xf32>
    %c88_84 = arith.constant 88 : index
    %c0_85 = arith.constant 0 : index
    %212 = vector.load %arg5[%c88_84, %c0_85] : memref<200x128xf32, #tpu.memory_space<vmem>>, vector<8x128xf32>
    %213 = vector.extract_strided_slice %203 {offsets = [16, 0], sizes = [8, 128], strides = [1, 1]} : vector<40x128xf32> to vector<8x128xf32>
    %214 = arith.mulf %212, %213 : vector<8x128xf32>
    %215 = arith.addf %211, %214 : vector<8x128xf32>
    %c128_86 = arith.constant 128 : index
    %c0_87 = arith.constant 0 : index
    %216 = vector.load %arg5[%c128_86, %c0_87] : memref<200x128xf32, #tpu.memory_space<vmem>>, vector<8x128xf32>
    %217 = vector.extract_strided_slice %203 {offsets = [24, 0], sizes = [8, 128], strides = [1, 1]} : vector<40x128xf32> to vector<8x128xf32>
    %218 = arith.mulf %216, %217 : vector<8x128xf32>
    %219 = arith.addf %215, %218 : vector<8x128xf32>
    %c168_88 = arith.constant 168 : index
    %c0_89 = arith.constant 0 : index
    %220 = vector.load %arg5[%c168_88, %c0_89] : memref<200x128xf32, #tpu.memory_space<vmem>>, vector<8x128xf32>
    %221 = vector.extract_strided_slice %203 {offsets = [32, 0], sizes = [8, 128], strides = [1, 1]} : vector<40x128xf32> to vector<8x128xf32>
    %222 = arith.mulf %220, %221 : vector<8x128xf32>
    %223 = arith.addf %219, %222 : vector<8x128xf32>
    %224 = vector.extract_strided_slice %10 {offsets = [0, 512], sizes = [40, 128], strides = [1, 1]} : vector<40x2048xf32> to vector<40x128xf32>
    %c16_90 = arith.constant 16 : index
    %c0_91 = arith.constant 0 : index
    %225 = vector.load %arg5[%c16_90, %c0_91] : memref<200x128xf32, #tpu.memory_space<vmem>>, vector<8x128xf32>
    %226 = vector.extract_strided_slice %224 {offsets = [0, 0], sizes = [8, 128], strides = [1, 1]} : vector<40x128xf32> to vector<8x128xf32>
    %227 = arith.mulf %225, %226 : vector<8x128xf32>
    %228 = arith.addf %223, %227 : vector<8x128xf32>
    %c56_92 = arith.constant 56 : index
    %c0_93 = arith.constant 0 : index
    %229 = vector.load %arg5[%c56_92, %c0_93] : memref<200x128xf32, #tpu.memory_space<vmem>>, vector<8x128xf32>
    %230 = vector.extract_strided_slice %224 {offsets = [8, 0], sizes = [8, 128], strides = [1, 1]} : vector<40x128xf32> to vector<8x128xf32>
    %231 = arith.mulf %229, %230 : vector<8x128xf32>
    %232 = arith.addf %228, %231 : vector<8x128xf32>
    %c96_94 = arith.constant 96 : index
    %c0_95 = arith.constant 0 : index
    %233 = vector.load %arg5[%c96_94, %c0_95] : memref<200x128xf32, #tpu.memory_space<vmem>>, vector<8x128xf32>
    %234 = vector.extract_strided_slice %224 {offsets = [16, 0], sizes = [8, 128], strides = [1, 1]} : vector<40x128xf32> to vector<8x128xf32>
    %235 = arith.mulf %233, %234 : vector<8x128xf32>
    %236 = arith.addf %232, %235 : vector<8x128xf32>
    %c136_96 = arith.constant 136 : index
    %c0_97 = arith.constant 0 : index
    %237 = vector.load %arg5[%c136_96, %c0_97] : memref<200x128xf32, #tpu.memory_space<vmem>>, vector<8x128xf32>
    %238 = vector.extract_strided_slice %224 {offsets = [24, 0], sizes = [8, 128], strides = [1, 1]} : vector<40x128xf32> to vector<8x128xf32>
    %239 = arith.mulf %237, %238 : vector<8x128xf32>
    %240 = arith.addf %236, %239 : vector<8x128xf32>
    %c176_98 = arith.constant 176 : index
    %c0_99 = arith.constant 0 : index
    %241 = vector.load %arg5[%c176_98, %c0_99] : memref<200x128xf32, #tpu.memory_space<vmem>>, vector<8x128xf32>
    %242 = vector.extract_strided_slice %224 {offsets = [32, 0], sizes = [8, 128], strides = [1, 1]} : vector<40x128xf32> to vector<8x128xf32>
    %243 = arith.mulf %241, %242 : vector<8x128xf32>
    %244 = arith.addf %240, %243 : vector<8x128xf32>
    %245 = vector.extract_strided_slice %10 {offsets = [0, 640], sizes = [40, 128], strides = [1, 1]} : vector<40x2048xf32> to vector<40x128xf32>
    %c24_100 = arith.constant 24 : index
    %c0_101 = arith.constant 0 : index
    %246 = vector.load %arg5[%c24_100, %c0_101] : memref<200x128xf32, #tpu.memory_space<vmem>>, vector<8x128xf32>
    %247 = vector.extract_strided_slice %245 {offsets = [0, 0], sizes = [8, 128], strides = [1, 1]} : vector<40x128xf32> to vector<8x128xf32>
    %248 = arith.mulf %246, %247 : vector<8x128xf32>
    %249 = arith.addf %244, %248 : vector<8x128xf32>
    %c64_102 = arith.constant 64 : index
    %c0_103 = arith.constant 0 : index
    %250 = vector.load %arg5[%c64_102, %c0_103] : memref<200x128xf32, #tpu.memory_space<vmem>>, vector<8x128xf32>
    %251 = vector.extract_strided_slice %245 {offsets = [8, 0], sizes = [8, 128], strides = [1, 1]} : vector<40x128xf32> to vector<8x128xf32>
    %252 = arith.mulf %250, %251 : vector<8x128xf32>
    %253 = arith.addf %249, %252 : vector<8x128xf32>
    %c104_104 = arith.constant 104 : index
    %c0_105 = arith.constant 0 : index
    %254 = vector.load %arg5[%c104_104, %c0_105] : memref<200x128xf32, #tpu.memory_space<vmem>>, vector<8x128xf32>
    %255 = vector.extract_strided_slice %245 {offsets = [16, 0], sizes = [8, 128], strides = [1, 1]} : vector<40x128xf32> to vector<8x128xf32>
    %256 = arith.mulf %254, %255 : vector<8x128xf32>
    %257 = arith.addf %253, %256 : vector<8x128xf32>
    %c144_106 = arith.constant 144 : index
    %c0_107 = arith.constant 0 : index
    %258 = vector.load %arg5[%c144_106, %c0_107] : memref<200x128xf32, #tpu.memory_space<vmem>>, vector<8x128xf32>
    %259 = vector.extract_strided_slice %245 {offsets = [24, 0], sizes = [8, 128], strides = [1, 1]} : vector<40x128xf32> to vector<8x128xf32>
    %260 = arith.mulf %258, %259 : vector<8x128xf32>
    %261 = arith.addf %257, %260 : vector<8x128xf32>
    %c184_108 = arith.constant 184 : index
    %c0_109 = arith.constant 0 : index
    %262 = vector.load %arg5[%c184_108, %c0_109] : memref<200x128xf32, #tpu.memory_space<vmem>>, vector<8x128xf32>
    %263 = vector.extract_strided_slice %245 {offsets = [32, 0], sizes = [8, 128], strides = [1, 1]} : vector<40x128xf32> to vector<8x128xf32>
    %264 = arith.mulf %262, %263 : vector<8x128xf32>
    %265 = arith.addf %261, %264 : vector<8x128xf32>
    %266 = vector.extract_strided_slice %10 {offsets = [0, 768], sizes = [40, 128], strides = [1, 1]} : vector<40x2048xf32> to vector<40x128xf32>
    %c32_110 = arith.constant 32 : index
    %c0_111 = arith.constant 0 : index
    %267 = vector.load %arg5[%c32_110, %c0_111] : memref<200x128xf32, #tpu.memory_space<vmem>>, vector<8x128xf32>
    %268 = vector.extract_strided_slice %266 {offsets = [0, 0], sizes = [8, 128], strides = [1, 1]} : vector<40x128xf32> to vector<8x128xf32>
    %269 = arith.mulf %267, %268 : vector<8x128xf32>
    %270 = arith.addf %265, %269 : vector<8x128xf32>
    %c72_112 = arith.constant 72 : index
    %c0_113 = arith.constant 0 : index
    %271 = vector.load %arg5[%c72_112, %c0_113] : memref<200x128xf32, #tpu.memory_space<vmem>>, vector<8x128xf32>
    %272 = vector.extract_strided_slice %266 {offsets = [8, 0], sizes = [8, 128], strides = [1, 1]} : vector<40x128xf32> to vector<8x128xf32>
    %273 = arith.mulf %271, %272 : vector<8x128xf32>
    %274 = arith.addf %270, %273 : vector<8x128xf32>
    %c112_114 = arith.constant 112 : index
    %c0_115 = arith.constant 0 : index
    %275 = vector.load %arg5[%c112_114, %c0_115] : memref<200x128xf32, #tpu.memory_space<vmem>>, vector<8x128xf32>
    %276 = vector.extract_strided_slice %266 {offsets = [16, 0], sizes = [8, 128], strides = [1, 1]} : vector<40x128xf32> to vector<8x128xf32>
    %277 = arith.mulf %275, %276 : vector<8x128xf32>
    %278 = arith.addf %274, %277 : vector<8x128xf32>
    %c152_116 = arith.constant 152 : index
    %c0_117 = arith.constant 0 : index
    %279 = vector.load %arg5[%c152_116, %c0_117] : memref<200x128xf32, #tpu.memory_space<vmem>>, vector<8x128xf32>
    %280 = vector.extract_strided_slice %266 {offsets = [24, 0], sizes = [8, 128], strides = [1, 1]} : vector<40x128xf32> to vector<8x128xf32>
    %281 = arith.mulf %279, %280 : vector<8x128xf32>
    %282 = arith.addf %278, %281 : vector<8x128xf32>
    %c192_118 = arith.constant 192 : index
    %c0_119 = arith.constant 0 : index
    %283 = vector.load %arg5[%c192_118, %c0_119] : memref<200x128xf32, #tpu.memory_space<vmem>>, vector<8x128xf32>
    %284 = vector.extract_strided_slice %266 {offsets = [32, 0], sizes = [8, 128], strides = [1, 1]} : vector<40x128xf32> to vector<8x128xf32>
    %285 = arith.mulf %283, %284 : vector<8x128xf32>
    %286 = arith.addf %282, %285 : vector<8x128xf32>
    %cst_120 = arith.constant 0.000000e+00 : f32
    %287 = vector.broadcast %cst_120 : f32 to vector<8x128xf32>
    %288 = arith.maximumf %286, %287 : vector<8x128xf32>
    %c16_121 = arith.constant 16 : index
    %c0_122 = arith.constant 0 : index
    %289 = vector.load %arg14[%c16_121, %c0_122] : memref<64x128xf32, #tpu.memory_space<vmem>>, vector<8x128xf32>
    tpu.vector_store %arg14[%c16_121, %c0_122], %288 {strides = array<i32>} : memref<64x128xf32, #tpu.memory_space<vmem>>, vector<8x128xf32>,
    %290 = vector.extract_strided_slice %10 {offsets = [0, 512], sizes = [40, 128], strides = [1, 1]} : vector<40x2048xf32> to vector<40x128xf32>
    %c0_123 = arith.constant 0 : index
    %c0_124 = arith.constant 0 : index
    %291 = vector.load %arg5[%c0_123, %c0_124] : memref<200x128xf32, #tpu.memory_space<vmem>>, vector<8x128xf32>
    %292 = vector.extract_strided_slice %290 {offsets = [0, 0], sizes = [8, 128], strides = [1, 1]} : vector<40x128xf32> to vector<8x128xf32>
    %293 = arith.mulf %291, %292 : vector<8x128xf32>
    %c40_125 = arith.constant 40 : index
    %c0_126 = arith.constant 0 : index
    %294 = vector.load %arg5[%c40_125, %c0_126] : memref<200x128xf32, #tpu.memory_space<vmem>>, vector<8x128xf32>
    %295 = vector.extract_strided_slice %290 {offsets = [8, 0], sizes = [8, 128], strides = [1, 1]} : vector<40x128xf32> to vector<8x128xf32>
    %296 = arith.mulf %294, %295 : vector<8x128xf32>
    %297 = arith.addf %293, %296 : vector<8x128xf32>
    %c80_127 = arith.constant 80 : index
    %c0_128 = arith.constant 0 : index
    %298 = vector.load %arg5[%c80_127, %c0_128] : memref<200x128xf32, #tpu.memory_space<vmem>>, vector<8x128xf32>
    %299 = vector.extract_strided_slice %290 {offsets = [16, 0], sizes = [8, 128], strides = [1, 1]} : vector<40x128xf32> to vector<8x128xf32>
    %300 = arith.mulf %298, %299 : vector<8x128xf32>
    %301 = arith.addf %297, %300 : vector<8x128xf32>
    %c120_129 = arith.constant 120 : index
    %c0_130 = arith.constant 0 : index
    %302 = vector.load %arg5[%c120_129, %c0_130] : memref<200x128xf32, #tpu.memory_space<vmem>>, vector<8x128xf32>
    %303 = vector.extract_strided_slice %290 {offsets = [24, 0], sizes = [8, 128], strides = [1, 1]} : vector<40x128xf32> to vector<8x128xf32>
    %304 = arith.mulf %302, %303 : vector<8x128xf32>
    %305 = arith.addf %301, %304 : vector<8x128xf32>
    %c160_131 = arith.constant 160 : index
    %c0_132 = arith.constant 0 : index
    %306 = vector.load %arg5[%c160_131, %c0_132] : memref<200x128xf32, #tpu.memory_space<vmem>>, vector<8x128xf32>
    %307 = vector.extract_strided_slice %290 {offsets = [32, 0], sizes = [8, 128], strides = [1, 1]} : vector<40x128xf32> to vector<8x128xf32>
    %308 = arith.mulf %306, %307 : vector<8x128xf32>
    %309 = arith.addf %305, %308 : vector<8x128xf32>
    %310 = vector.extract_strided_slice %10 {offsets = [0, 640], sizes = [40, 128], strides = [1, 1]} : vector<40x2048xf32> to vector<40x128xf32>
    %c8_133 = arith.constant 8 : index
    %c0_134 = arith.constant 0 : index
    %311 = vector.load %arg5[%c8_133, %c0_134] : memref<200x128xf32, #tpu.memory_space<vmem>>, vector<8x128xf32>
    %312 = vector.extract_strided_slice %310 {offsets = [0, 0], sizes = [8, 128], strides = [1, 1]} : vector<40x128xf32> to vector<8x128xf32>
    %313 = arith.mulf %311, %312 : vector<8x128xf32>
    %314 = arith.addf %309, %313 : vector<8x128xf32>
    %c48_135 = arith.constant 48 : index
    %c0_136 = arith.constant 0 : index
    %315 = vector.load %arg5[%c48_135, %c0_136] : memref<200x128xf32, #tpu.memory_space<vmem>>, vector<8x128xf32>
    %316 = vector.extract_strided_slice %310 {offsets = [8, 0], sizes = [8, 128], strides = [1, 1]} : vector<40x128xf32> to vector<8x128xf32>
    %317 = arith.mulf %315, %316 : vector<8x128xf32>
    %318 = arith.addf %314, %317 : vector<8x128xf32>
    %c88_137 = arith.constant 88 : index
    %c0_138 = arith.constant 0 : index
    %319 = vector.load %arg5[%c88_137, %c0_138] : memref<200x128xf32, #tpu.memory_space<vmem>>, vector<8x128xf32>
    %320 = vector.extract_strided_slice %310 {offsets = [16, 0], sizes = [8, 128], strides = [1, 1]} : vector<40x128xf32> to vector<8x128xf32>
    %321 = arith.mulf %319, %320 : vector<8x128xf32>
    %322 = arith.addf %318, %321 : vector<8x128xf32>
    %c128_139 = arith.constant 128 : index
    %c0_140 = arith.constant 0 : index
    %323 = vector.load %arg5[%c128_139, %c0_140] : memref<200x128xf32, #tpu.memory_space<vmem>>, vector<8x128xf32>
    %324 = vector.extract_strided_slice %310 {offsets = [24, 0], sizes = [8, 128], strides = [1, 1]} : vector<40x128xf32> to vector<8x128xf32>
    %325 = arith.mulf %323, %324 : vector<8x128xf32>
    %326 = arith.addf %322, %325 : vector<8x128xf32>
    %c168_141 = arith.constant 168 : index
    %c0_142 = arith.constant 0 : index
    %327 = vector.load %arg5[%c168_141, %c0_142] : memref<200x128xf32, #tpu.memory_space<vmem>>, vector<8x128xf32>
    %328 = vector.extract_strided_slice %310 {offsets = [32, 0], sizes = [8, 128], strides = [1, 1]} : vector<40x128xf32> to vector<8x128xf32>
    %329 = arith.mulf %327, %328 : vector<8x128xf32>
    %330 = arith.addf %326, %329 : vector<8x128xf32>
    %331 = vector.extract_strided_slice %10 {offsets = [0, 768], sizes = [40, 128], strides = [1, 1]} : vector<40x2048xf32> to vector<40x128xf32>
    %c16_143 = arith.constant 16 : index
    %c0_144 = arith.constant 0 : index
    %332 = vector.load %arg5[%c16_143, %c0_144] : memref<200x128xf32, #tpu.memory_space<vmem>>, vector<8x128xf32>
    %333 = vector.extract_strided_slice %331 {offsets = [0, 0], sizes = [8, 128], strides = [1, 1]} : vector<40x128xf32> to vector<8x128xf32>
    %334 = arith.mulf %332, %333 : vector<8x128xf32>
    %335 = arith.addf %330, %334 : vector<8x128xf32>
    %c56_145 = arith.constant 56 : index
    %c0_146 = arith.constant 0 : index
    %336 = vector.load %arg5[%c56_145, %c0_146] : memref<200x128xf32, #tpu.memory_space<vmem>>, vector<8x128xf32>
    %337 = vector.extract_strided_slice %331 {offsets = [8, 0], sizes = [8, 128], strides = [1, 1]} : vector<40x128xf32> to vector<8x128xf32>
    %338 = arith.mulf %336, %337 : vector<8x128xf32>
    %339 = arith.addf %335, %338 : vector<8x128xf32>
    %c96_147 = arith.constant 96 : index
    %c0_148 = arith.constant 0 : index
    %340 = vector.load %arg5[%c96_147, %c0_148] : memref<200x128xf32, #tpu.memory_space<vmem>>, vector<8x128xf32>
    %341 = vector.extract_strided_slice %331 {offsets = [16, 0], sizes = [8, 128], strides = [1, 1]} : vector<40x128xf32> to vector<8x128xf32>
    %342 = arith.mulf %340, %341 : vector<8x128xf32>
    %343 = arith.addf %339, %342 : vector<8x128xf32>
    %c136_149 = arith.constant 136 : index
    %c0_150 = arith.constant 0 : index
    %344 = vector.load %arg5[%c136_149, %c0_150] : memref<200x128xf32, #tpu.memory_space<vmem>>, vector<8x128xf32>
    %345 = vector.extract_strided_slice %331 {offsets = [24, 0], sizes = [8, 128], strides = [1, 1]} : vector<40x128xf32> to vector<8x128xf32>
    %346 = arith.mulf %344, %345 : vector<8x128xf32>
    %347 = arith.addf %343, %346 : vector<8x128xf32>
    %c176_151 = arith.constant 176 : index
    %c0_152 = arith.constant 0 : index
    %348 = vector.load %arg5[%c176_151, %c0_152] : memref<200x128xf32, #tpu.memory_space<vmem>>, vector<8x128xf32>
    %349 = vector.extract_strided_slice %331 {offsets = [32, 0], sizes = [8, 128], strides = [1, 1]} : vector<40x128xf32> to vector<8x128xf32>
    %350 = arith.mulf %348, %349 : vector<8x128xf32>
    %351 = arith.addf %347, %350 : vector<8x128xf32>
    %352 = vector.extract_strided_slice %10 {offsets = [0, 896], sizes = [40, 128], strides = [1, 1]} : vector<40x2048xf32> to vector<40x128xf32>
    %c24_153 = arith.constant 24 : index
    %c0_154 = arith.constant 0 : index
    %353 = vector.load %arg5[%c24_153, %c0_154] : memref<200x128xf32, #tpu.memory_space<vmem>>, vector<8x128xf32>
    %354 = vector.extract_strided_slice %352 {offsets = [0, 0], sizes = [8, 128], strides = [1, 1]} : vector<40x128xf32> to vector<8x128xf32>
    %355 = arith.mulf %353, %354 : vector<8x128xf32>
    %356 = arith.addf %351, %355 : vector<8x128xf32>
    %c64_155 = arith.constant 64 : index
    %c0_156 = arith.constant 0 : index
    %357 = vector.load %arg5[%c64_155, %c0_156] : memref<200x128xf32, #tpu.memory_space<vmem>>, vector<8x128xf32>
    %358 = vector.extract_strided_slice %352 {offsets = [8, 0], sizes = [8, 128], strides = [1, 1]} : vector<40x128xf32> to vector<8x128xf32>
    %359 = arith.mulf %357, %358 : vector<8x128xf32>
    %360 = arith.addf %356, %359 : vector<8x128xf32>
    %c104_157 = arith.constant 104 : index
    %c0_158 = arith.constant 0 : index
    %361 = vector.load %arg5[%c104_157, %c0_158] : memref<200x128xf32, #tpu.memory_space<vmem>>, vector<8x128xf32>
    %362 = vector.extract_strided_slice %352 {offsets = [16, 0], sizes = [8, 128], strides = [1, 1]} : vector<40x128xf32> to vector<8x128xf32>
    %363 = arith.mulf %361, %362 : vector<8x128xf32>
    %364 = arith.addf %360, %363 : vector<8x128xf32>
    %c144_159 = arith.constant 144 : index
    %c0_160 = arith.constant 0 : index
    %365 = vector.load %arg5[%c144_159, %c0_160] : memref<200x128xf32, #tpu.memory_space<vmem>>, vector<8x128xf32>
    %366 = vector.extract_strided_slice %352 {offsets = [24, 0], sizes = [8, 128], strides = [1, 1]} : vector<40x128xf32> to vector<8x128xf32>
    %367 = arith.mulf %365, %366 : vector<8x128xf32>
    %368 = arith.addf %364, %367 : vector<8x128xf32>
    %c184_161 = arith.constant 184 : index
    %c0_162 = arith.constant 0 : index
    %369 = vector.load %arg5[%c184_161, %c0_162] : memref<200x128xf32, #tpu.memory_space<vmem>>, vector<8x128xf32>
    %370 = vector.extract_strided_slice %352 {offsets = [32, 0], sizes = [8, 128], strides = [1, 1]} : vector<40x128xf32> to vector<8x128xf32>
    %371 = arith.mulf %369, %370 : vector<8x128xf32>
    %372 = arith.addf %368, %371 : vector<8x128xf32>
    %373 = vector.extract_strided_slice %10 {offsets = [0, 1024], sizes = [40, 128], strides = [1, 1]} : vector<40x2048xf32> to vector<40x128xf32>
    %c32_163 = arith.constant 32 : index
    %c0_164 = arith.constant 0 : index
    %374 = vector.load %arg5[%c32_163, %c0_164] : memref<200x128xf32, #tpu.memory_space<vmem>>, vector<8x128xf32>
    %375 = vector.extract_strided_slice %373 {offsets = [0, 0], sizes = [8, 128], strides = [1, 1]} : vector<40x128xf32> to vector<8x128xf32>
    %376 = arith.mulf %374, %375 : vector<8x128xf32>
    %377 = arith.addf %372, %376 : vector<8x128xf32>
    %c72_165 = arith.constant 72 : index
    %c0_166 = arith.constant 0 : index
    %378 = vector.load %arg5[%c72_165, %c0_166] : memref<200x128xf32, #tpu.memory_space<vmem>>, vector<8x128xf32>
    %379 = vector.extract_strided_slice %373 {offsets = [8, 0], sizes = [8, 128], strides = [1, 1]} : vector<40x128xf32> to vector<8x128xf32>
    %380 = arith.mulf %378, %379 : vector<8x128xf32>
    %381 = arith.addf %377, %380 : vector<8x128xf32>
    %c112_167 = arith.constant 112 : index
    %c0_168 = arith.constant 0 : index
    %382 = vector.load %arg5[%c112_167, %c0_168] : memref<200x128xf32, #tpu.memory_space<vmem>>, vector<8x128xf32>
    %383 = vector.extract_strided_slice %373 {offsets = [16, 0], sizes = [8, 128], strides = [1, 1]} : vector<40x128xf32> to vector<8x128xf32>
    %384 = arith.mulf %382, %383 : vector<8x128xf32>
    %385 = arith.addf %381, %384 : vector<8x128xf32>
    %c152_169 = arith.constant 152 : index
    %c0_170 = arith.constant 0 : index
    %386 = vector.load %arg5[%c152_169, %c0_170] : memref<200x128xf32, #tpu.memory_space<vmem>>, vector<8x128xf32>
    %387 = vector.extract_strided_slice %373 {offsets = [24, 0], sizes = [8, 128], strides = [1, 1]} : vector<40x128xf32> to vector<8x128xf32>
    %388 = arith.mulf %386, %387 : vector<8x128xf32>
    %389 = arith.addf %385, %388 : vector<8x128xf32>
    %c192_171 = arith.constant 192 : index
    %c0_172 = arith.constant 0 : index
    %390 = vector.load %arg5[%c192_171, %c0_172] : memref<200x128xf32, #tpu.memory_space<vmem>>, vector<8x128xf32>
    %391 = vector.extract_strided_slice %373 {offsets = [32, 0], sizes = [8, 128], strides = [1, 1]} : vector<40x128xf32> to vector<8x128xf32>
    %392 = arith.mulf %390, %391 : vector<8x128xf32>
    %393 = arith.addf %389, %392 : vector<8x128xf32>
    %cst_173 = arith.constant 0.000000e+00 : f32
    %394 = vector.broadcast %cst_173 : f32 to vector<8x128xf32>
    %395 = arith.maximumf %393, %394 : vector<8x128xf32>
    %c24_174 = arith.constant 24 : index
    %c0_175 = arith.constant 0 : index
    %396 = vector.load %arg14[%c24_174, %c0_175] : memref<64x128xf32, #tpu.memory_space<vmem>>, vector<8x128xf32>
    tpu.vector_store %arg14[%c24_174, %c0_175], %395 {strides = array<i32>} : memref<64x128xf32, #tpu.memory_space<vmem>>, vector<8x128xf32>,
    %397 = vector.extract_strided_slice %10 {offsets = [0, 768], sizes = [40, 128], strides = [1, 1]} : vector<40x2048xf32> to vector<40x128xf32>
    %c0_176 = arith.constant 0 : index
    %c0_177 = arith.constant 0 : index
    %398 = vector.load %arg5[%c0_176, %c0_177] : memref<200x128xf32, #tpu.memory_space<vmem>>, vector<8x128xf32>
    %399 = vector.extract_strided_slice %397 {offsets = [0, 0], sizes = [8, 128], strides = [1, 1]} : vector<40x128xf32> to vector<8x128xf32>
    %400 = arith.mulf %398, %399 : vector<8x128xf32>
    %c40_178 = arith.constant 40 : index
    %c0_179 = arith.constant 0 : index
    %401 = vector.load %arg5[%c40_178, %c0_179] : memref<200x128xf32, #tpu.memory_space<vmem>>, vector<8x128xf32>
    %402 = vector.extract_strided_slice %397 {offsets = [8, 0], sizes = [8, 128], strides = [1, 1]} : vector<40x128xf32> to vector<8x128xf32>
    %403 = arith.mulf %401, %402 : vector<8x128xf32>
    %404 = arith.addf %400, %403 : vector<8x128xf32>
    %c80_180 = arith.constant 80 : index
    %c0_181 = arith.constant 0 : index
    %405 = vector.load %arg5[%c80_180, %c0_181] : memref<200x128xf32, #tpu.memory_space<vmem>>, vector<8x128xf32>
    %406 = vector.extract_strided_slice %397 {offsets = [16, 0], sizes = [8, 128], strides = [1, 1]} : vector<40x128xf32> to vector<8x128xf32>
    %407 = arith.mulf %405, %406 : vector<8x128xf32>
    %408 = arith.addf %404, %407 : vector<8x128xf32>
    %c120_182 = arith.constant 120 : index
    %c0_183 = arith.constant 0 : index
    %409 = vector.load %arg5[%c120_182, %c0_183] : memref<200x128xf32, #tpu.memory_space<vmem>>, vector<8x128xf32>
    %410 = vector.extract_strided_slice %397 {offsets = [24, 0], sizes = [8, 128], strides = [1, 1]} : vector<40x128xf32> to vector<8x128xf32>
    %411 = arith.mulf %409, %410 : vector<8x128xf32>
    %412 = arith.addf %408, %411 : vector<8x128xf32>
    %c160_184 = arith.constant 160 : index
    %c0_185 = arith.constant 0 : index
    %413 = vector.load %arg5[%c160_184, %c0_185] : memref<200x128xf32, #tpu.memory_space<vmem>>, vector<8x128xf32>
    %414 = vector.extract_strided_slice %397 {offsets = [32, 0], sizes = [8, 128], strides = [1, 1]} : vector<40x128xf32> to vector<8x128xf32>
    %415 = arith.mulf %413, %414 : vector<8x128xf32>
    %416 = arith.addf %412, %415 : vector<8x128xf32>
    %417 = vector.extract_strided_slice %10 {offsets = [0, 896], sizes = [40, 128], strides = [1, 1]} : vector<40x2048xf32> to vector<40x128xf32>
    %c8_186 = arith.constant 8 : index
    %c0_187 = arith.constant 0 : index
    %418 = vector.load %arg5[%c8_186, %c0_187] : memref<200x128xf32, #tpu.memory_space<vmem>>, vector<8x128xf32>
    %419 = vector.extract_strided_slice %417 {offsets = [0, 0], sizes = [8, 128], strides = [1, 1]} : vector<40x128xf32> to vector<8x128xf32>
    %420 = arith.mulf %418, %419 : vector<8x128xf32>
    %421 = arith.addf %416, %420 : vector<8x128xf32>
    %c48_188 = arith.constant 48 : index
    %c0_189 = arith.constant 0 : index
    %422 = vector.load %arg5[%c48_188, %c0_189] : memref<200x128xf32, #tpu.memory_space<vmem>>, vector<8x128xf32>
    %423 = vector.extract_strided_slice %417 {offsets = [8, 0], sizes = [8, 128], strides = [1, 1]} : vector<40x128xf32> to vector<8x128xf32>
    %424 = arith.mulf %422, %423 : vector<8x128xf32>
    %425 = arith.addf %421, %424 : vector<8x128xf32>
    %c88_190 = arith.constant 88 : index
    %c0_191 = arith.constant 0 : index
    %426 = vector.load %arg5[%c88_190, %c0_191] : memref<200x128xf32, #tpu.memory_space<vmem>>, vector<8x128xf32>
    %427 = vector.extract_strided_slice %417 {offsets = [16, 0], sizes = [8, 128], strides = [1, 1]} : vector<40x128xf32> to vector<8x128xf32>
    %428 = arith.mulf %426, %427 : vector<8x128xf32>
    %429 = arith.addf %425, %428 : vector<8x128xf32>
    %c128_192 = arith.constant 128 : index
    %c0_193 = arith.constant 0 : index
    %430 = vector.load %arg5[%c128_192, %c0_193] : memref<200x128xf32, #tpu.memory_space<vmem>>, vector<8x128xf32>
    %431 = vector.extract_strided_slice %417 {offsets = [24, 0], sizes = [8, 128], strides = [1, 1]} : vector<40x128xf32> to vector<8x128xf32>
    %432 = arith.mulf %430, %431 : vector<8x128xf32>
    %433 = arith.addf %429, %432 : vector<8x128xf32>
    %c168_194 = arith.constant 168 : index
    %c0_195 = arith.constant 0 : index
    %434 = vector.load %arg5[%c168_194, %c0_195] : memref<200x128xf32, #tpu.memory_space<vmem>>, vector<8x128xf32>
    %435 = vector.extract_strided_slice %417 {offsets = [32, 0], sizes = [8, 128], strides = [1, 1]} : vector<40x128xf32> to vector<8x128xf32>
    %436 = arith.mulf %434, %435 : vector<8x128xf32>
    %437 = arith.addf %433, %436 : vector<8x128xf32>
    %438 = vector.extract_strided_slice %10 {offsets = [0, 1024], sizes = [40, 128], strides = [1, 1]} : vector<40x2048xf32> to vector<40x128xf32>
    %c16_196 = arith.constant 16 : index
    %c0_197 = arith.constant 0 : index
    %439 = vector.load %arg5[%c16_196, %c0_197] : memref<200x128xf32, #tpu.memory_space<vmem>>, vector<8x128xf32>
    %440 = vector.extract_strided_slice %438 {offsets = [0, 0], sizes = [8, 128], strides = [1, 1]} : vector<40x128xf32> to vector<8x128xf32>
    %441 = arith.mulf %439, %440 : vector<8x128xf32>
    %442 = arith.addf %437, %441 : vector<8x128xf32>
    %c56_198 = arith.constant 56 : index
    %c0_199 = arith.constant 0 : index
    %443 = vector.load %arg5[%c56_198, %c0_199] : memref<200x128xf32, #tpu.memory_space<vmem>>, vector<8x128xf32>
    %444 = vector.extract_strided_slice %438 {offsets = [8, 0], sizes = [8, 128], strides = [1, 1]} : vector<40x128xf32> to vector<8x128xf32>
    %445 = arith.mulf %443, %444 : vector<8x128xf32>
    %446 = arith.addf %442, %445 : vector<8x128xf32>
    %c96_200 = arith.constant 96 : index
    %c0_201 = arith.constant 0 : index
    %447 = vector.load %arg5[%c96_200, %c0_201] : memref<200x128xf32, #tpu.memory_space<vmem>>, vector<8x128xf32>
    %448 = vector.extract_strided_slice %438 {offsets = [16, 0], sizes = [8, 128], strides = [1, 1]} : vector<40x128xf32> to vector<8x128xf32>
    %449 = arith.mulf %447, %448 : vector<8x128xf32>
    %450 = arith.addf %446, %449 : vector<8x128xf32>
    %c136_202 = arith.constant 136 : index
    %c0_203 = arith.constant 0 : index
    %451 = vector.load %arg5[%c136_202, %c0_203] : memref<200x128xf32, #tpu.memory_space<vmem>>, vector<8x128xf32>
    %452 = vector.extract_strided_slice %438 {offsets = [24, 0], sizes = [8, 128], strides = [1, 1]} : vector<40x128xf32> to vector<8x128xf32>
    %453 = arith.mulf %451, %452 : vector<8x128xf32>
    %454 = arith.addf %450, %453 : vector<8x128xf32>
    %c176_204 = arith.constant 176 : index
    %c0_205 = arith.constant 0 : index
    %455 = vector.load %arg5[%c176_204, %c0_205] : memref<200x128xf32, #tpu.memory_space<vmem>>, vector<8x128xf32>
    %456 = vector.extract_strided_slice %438 {offsets = [32, 0], sizes = [8, 128], strides = [1, 1]} : vector<40x128xf32> to vector<8x128xf32>
    %457 = arith.mulf %455, %456 : vector<8x128xf32>
    %458 = arith.addf %454, %457 : vector<8x128xf32>
    %459 = vector.extract_strided_slice %10 {offsets = [0, 1152], sizes = [40, 128], strides = [1, 1]} : vector<40x2048xf32> to vector<40x128xf32>
    %c24_206 = arith.constant 24 : index
    %c0_207 = arith.constant 0 : index
    %460 = vector.load %arg5[%c24_206, %c0_207] : memref<200x128xf32, #tpu.memory_space<vmem>>, vector<8x128xf32>
    %461 = vector.extract_strided_slice %459 {offsets = [0, 0], sizes = [8, 128], strides = [1, 1]} : vector<40x128xf32> to vector<8x128xf32>
    %462 = arith.mulf %460, %461 : vector<8x128xf32>
    %463 = arith.addf %458, %462 : vector<8x128xf32>
    %c64_208 = arith.constant 64 : index
    %c0_209 = arith.constant 0 : index
    %464 = vector.load %arg5[%c64_208, %c0_209] : memref<200x128xf32, #tpu.memory_space<vmem>>, vector<8x128xf32>
    %465 = vector.extract_strided_slice %459 {offsets = [8, 0], sizes = [8, 128], strides = [1, 1]} : vector<40x128xf32> to vector<8x128xf32>
    %466 = arith.mulf %464, %465 : vector<8x128xf32>
    %467 = arith.addf %463, %466 : vector<8x128xf32>
    %c104_210 = arith.constant 104 : index
    %c0_211 = arith.constant 0 : index
    %468 = vector.load %arg5[%c104_210, %c0_211] : memref<200x128xf32, #tpu.memory_space<vmem>>, vector<8x128xf32>
    %469 = vector.extract_strided_slice %459 {offsets = [16, 0], sizes = [8, 128], strides = [1, 1]} : vector<40x128xf32> to vector<8x128xf32>
    %470 = arith.mulf %468, %469 : vector<8x128xf32>
    %471 = arith.addf %467, %470 : vector<8x128xf32>
    %c144_212 = arith.constant 144 : index
    %c0_213 = arith.constant 0 : index
    %472 = vector.load %arg5[%c144_212, %c0_213] : memref<200x128xf32, #tpu.memory_space<vmem>>, vector<8x128xf32>
    %473 = vector.extract_strided_slice %459 {offsets = [24, 0], sizes = [8, 128], strides = [1, 1]} : vector<40x128xf32> to vector<8x128xf32>
    %474 = arith.mulf %472, %473 : vector<8x128xf32>
    %475 = arith.addf %471, %474 : vector<8x128xf32>
    %c184_214 = arith.constant 184 : index
    %c0_215 = arith.constant 0 : index
    %476 = vector.load %arg5[%c184_214, %c0_215] : memref<200x128xf32, #tpu.memory_space<vmem>>, vector<8x128xf32>
    %477 = vector.extract_strided_slice %459 {offsets = [32, 0], sizes = [8, 128], strides = [1, 1]} : vector<40x128xf32> to vector<8x128xf32>
    %478 = arith.mulf %476, %477 : vector<8x128xf32>
    %479 = arith.addf %475, %478 : vector<8x128xf32>
    %480 = vector.extract_strided_slice %10 {offsets = [0, 1280], sizes = [40, 128], strides = [1, 1]} : vector<40x2048xf32> to vector<40x128xf32>
    %c32_216 = arith.constant 32 : index
    %c0_217 = arith.constant 0 : index
    %481 = vector.load %arg5[%c32_216, %c0_217] : memref<200x128xf32, #tpu.memory_space<vmem>>, vector<8x128xf32>
    %482 = vector.extract_strided_slice %480 {offsets = [0, 0], sizes = [8, 128], strides = [1, 1]} : vector<40x128xf32> to vector<8x128xf32>
    %483 = arith.mulf %481, %482 : vector<8x128xf32>
    %484 = arith.addf %479, %483 : vector<8x128xf32>
    %c72_218 = arith.constant 72 : index
    %c0_219 = arith.constant 0 : index
    %485 = vector.load %arg5[%c72_218, %c0_219] : memref<200x128xf32, #tpu.memory_space<vmem>>, vector<8x128xf32>
    %486 = vector.extract_strided_slice %480 {offsets = [8, 0], sizes = [8, 128], strides = [1, 1]} : vector<40x128xf32> to vector<8x128xf32>
    %487 = arith.mulf %485, %486 : vector<8x128xf32>
    %488 = arith.addf %484, %487 : vector<8x128xf32>
    %c112_220 = arith.constant 112 : index
    %c0_221 = arith.constant 0 : index
    %489 = vector.load %arg5[%c112_220, %c0_221] : memref<200x128xf32, #tpu.memory_space<vmem>>, vector<8x128xf32>
    %490 = vector.extract_strided_slice %480 {offsets = [16, 0], sizes = [8, 128], strides = [1, 1]} : vector<40x128xf32> to vector<8x128xf32>
    %491 = arith.mulf %489, %490 : vector<8x128xf32>
    %492 = arith.addf %488, %491 : vector<8x128xf32>
    %c152_222 = arith.constant 152 : index
    %c0_223 = arith.constant 0 : index
    %493 = vector.load %arg5[%c152_222, %c0_223] : memref<200x128xf32, #tpu.memory_space<vmem>>, vector<8x128xf32>
    %494 = vector.extract_strided_slice %480 {offsets = [24, 0], sizes = [8, 128], strides = [1, 1]} : vector<40x128xf32> to vector<8x128xf32>
    %495 = arith.mulf %493, %494 : vector<8x128xf32>
    %496 = arith.addf %492, %495 : vector<8x128xf32>
    %c192_224 = arith.constant 192 : index
    %c0_225 = arith.constant 0 : index
    %497 = vector.load %arg5[%c192_224, %c0_225] : memref<200x128xf32, #tpu.memory_space<vmem>>, vector<8x128xf32>
    %498 = vector.extract_strided_slice %480 {offsets = [32, 0], sizes = [8, 128], strides = [1, 1]} : vector<40x128xf32> to vector<8x128xf32>
    %499 = arith.mulf %497, %498 : vector<8x128xf32>
    %500 = arith.addf %496, %499 : vector<8x128xf32>
    %cst_226 = arith.constant 0.000000e+00 : f32
    %501 = vector.broadcast %cst_226 : f32 to vector<8x128xf32>
    %502 = arith.maximumf %500, %501 : vector<8x128xf32>
    %c32_227 = arith.constant 32 : index
    %c0_228 = arith.constant 0 : index
    %503 = vector.load %arg14[%c32_227, %c0_228] : memref<64x128xf32, #tpu.memory_space<vmem>>, vector<8x128xf32>
    tpu.vector_store %arg14[%c32_227, %c0_228], %502 {strides = array<i32>} : memref<64x128xf32, #tpu.memory_space<vmem>>, vector<8x128xf32>,
    %504 = vector.extract_strided_slice %10 {offsets = [0, 1024], sizes = [40, 128], strides = [1, 1]} : vector<40x2048xf32> to vector<40x128xf32>
    %c0_229 = arith.constant 0 : index
    %c0_230 = arith.constant 0 : index
    %505 = vector.load %arg5[%c0_229, %c0_230] : memref<200x128xf32, #tpu.memory_space<vmem>>, vector<8x128xf32>
    %506 = vector.extract_strided_slice %504 {offsets = [0, 0], sizes = [8, 128], strides = [1, 1]} : vector<40x128xf32> to vector<8x128xf32>
    %507 = arith.mulf %505, %506 : vector<8x128xf32>
    %c40_231 = arith.constant 40 : index
    %c0_232 = arith.constant 0 : index
    %508 = vector.load %arg5[%c40_231, %c0_232] : memref<200x128xf32, #tpu.memory_space<vmem>>, vector<8x128xf32>
    %509 = vector.extract_strided_slice %504 {offsets = [8, 0], sizes = [8, 128], strides = [1, 1]} : vector<40x128xf32> to vector<8x128xf32>
    %510 = arith.mulf %508, %509 : vector<8x128xf32>
    %511 = arith.addf %507, %510 : vector<8x128xf32>
    %c80_233 = arith.constant 80 : index
    %c0_234 = arith.constant 0 : index
    %512 = vector.load %arg5[%c80_233, %c0_234] : memref<200x128xf32, #tpu.memory_space<vmem>>, vector<8x128xf32>
    %513 = vector.extract_strided_slice %504 {offsets = [16, 0], sizes = [8, 128], strides = [1, 1]} : vector<40x128xf32> to vector<8x128xf32>
    %514 = arith.mulf %512, %513 : vector<8x128xf32>
    %515 = arith.addf %511, %514 : vector<8x128xf32>
    %c120_235 = arith.constant 120 : index
    %c0_236 = arith.constant 0 : index
    %516 = vector.load %arg5[%c120_235, %c0_236] : memref<200x128xf32, #tpu.memory_space<vmem>>, vector<8x128xf32>
    %517 = vector.extract_strided_slice %504 {offsets = [24, 0], sizes = [8, 128], strides = [1, 1]} : vector<40x128xf32> to vector<8x128xf32>
    %518 = arith.mulf %516, %517 : vector<8x128xf32>
    %519 = arith.addf %515, %518 : vector<8x128xf32>
    %c160_237 = arith.constant 160 : index
    %c0_238 = arith.constant 0 : index
    %520 = vector.load %arg5[%c160_237, %c0_238] : memref<200x128xf32, #tpu.memory_space<vmem>>, vector<8x128xf32>
    %521 = vector.extract_strided_slice %504 {offsets = [32, 0], sizes = [8, 128], strides = [1, 1]} : vector<40x128xf32> to vector<8x128xf32>
    %522 = arith.mulf %520, %521 : vector<8x128xf32>
    %523 = arith.addf %519, %522 : vector<8x128xf32>
    %524 = vector.extract_strided_slice %10 {offsets = [0, 1152], sizes = [40, 128], strides = [1, 1]} : vector<40x2048xf32> to vector<40x128xf32>
    %c8_239 = arith.constant 8 : index
    %c0_240 = arith.constant 0 : index
    %525 = vector.load %arg5[%c8_239, %c0_240] : memref<200x128xf32, #tpu.memory_space<vmem>>, vector<8x128xf32>
    %526 = vector.extract_strided_slice %524 {offsets = [0, 0], sizes = [8, 128], strides = [1, 1]} : vector<40x128xf32> to vector<8x128xf32>
    %527 = arith.mulf %525, %526 : vector<8x128xf32>
    %528 = arith.addf %523, %527 : vector<8x128xf32>
    %c48_241 = arith.constant 48 : index
    %c0_242 = arith.constant 0 : index
    %529 = vector.load %arg5[%c48_241, %c0_242] : memref<200x128xf32, #tpu.memory_space<vmem>>, vector<8x128xf32>
    %530 = vector.extract_strided_slice %524 {offsets = [8, 0], sizes = [8, 128], strides = [1, 1]} : vector<40x128xf32> to vector<8x128xf32>
    %531 = arith.mulf %529, %530 : vector<8x128xf32>
    %532 = arith.addf %528, %531 : vector<8x128xf32>
    %c88_243 = arith.constant 88 : index
    %c0_244 = arith.constant 0 : index
    %533 = vector.load %arg5[%c88_243, %c0_244] : memref<200x128xf32, #tpu.memory_space<vmem>>, vector<8x128xf32>
    %534 = vector.extract_strided_slice %524 {offsets = [16, 0], sizes = [8, 128], strides = [1, 1]} : vector<40x128xf32> to vector<8x128xf32>
    %535 = arith.mulf %533, %534 : vector<8x128xf32>
    %536 = arith.addf %532, %535 : vector<8x128xf32>
    %c128_245 = arith.constant 128 : index
    %c0_246 = arith.constant 0 : index
    %537 = vector.load %arg5[%c128_245, %c0_246] : memref<200x128xf32, #tpu.memory_space<vmem>>, vector<8x128xf32>
    %538 = vector.extract_strided_slice %524 {offsets = [24, 0], sizes = [8, 128], strides = [1, 1]} : vector<40x128xf32> to vector<8x128xf32>
    %539 = arith.mulf %537, %538 : vector<8x128xf32>
    %540 = arith.addf %536, %539 : vector<8x128xf32>
    %c168_247 = arith.constant 168 : index
    %c0_248 = arith.constant 0 : index
    %541 = vector.load %arg5[%c168_247, %c0_248] : memref<200x128xf32, #tpu.memory_space<vmem>>, vector<8x128xf32>
    %542 = vector.extract_strided_slice %524 {offsets = [32, 0], sizes = [8, 128], strides = [1, 1]} : vector<40x128xf32> to vector<8x128xf32>
    %543 = arith.mulf %541, %542 : vector<8x128xf32>
    %544 = arith.addf %540, %543 : vector<8x128xf32>
    %545 = vector.extract_strided_slice %10 {offsets = [0, 1280], sizes = [40, 128], strides = [1, 1]} : vector<40x2048xf32> to vector<40x128xf32>
    %c16_249 = arith.constant 16 : index
    %c0_250 = arith.constant 0 : index
    %546 = vector.load %arg5[%c16_249, %c0_250] : memref<200x128xf32, #tpu.memory_space<vmem>>, vector<8x128xf32>
    %547 = vector.extract_strided_slice %545 {offsets = [0, 0], sizes = [8, 128], strides = [1, 1]} : vector<40x128xf32> to vector<8x128xf32>
    %548 = arith.mulf %546, %547 : vector<8x128xf32>
    %549 = arith.addf %544, %548 : vector<8x128xf32>
    %c56_251 = arith.constant 56 : index
    %c0_252 = arith.constant 0 : index
    %550 = vector.load %arg5[%c56_251, %c0_252] : memref<200x128xf32, #tpu.memory_space<vmem>>, vector<8x128xf32>
    %551 = vector.extract_strided_slice %545 {offsets = [8, 0], sizes = [8, 128], strides = [1, 1]} : vector<40x128xf32> to vector<8x128xf32>
    %552 = arith.mulf %550, %551 : vector<8x128xf32>
    %553 = arith.addf %549, %552 : vector<8x128xf32>
    %c96_253 = arith.constant 96 : index
    %c0_254 = arith.constant 0 : index
    %554 = vector.load %arg5[%c96_253, %c0_254] : memref<200x128xf32, #tpu.memory_space<vmem>>, vector<8x128xf32>
    %555 = vector.extract_strided_slice %545 {offsets = [16, 0], sizes = [8, 128], strides = [1, 1]} : vector<40x128xf32> to vector<8x128xf32>
    %556 = arith.mulf %554, %555 : vector<8x128xf32>
    %557 = arith.addf %553, %556 : vector<8x128xf32>
    %c136_255 = arith.constant 136 : index
    %c0_256 = arith.constant 0 : index
    %558 = vector.load %arg5[%c136_255, %c0_256] : memref<200x128xf32, #tpu.memory_space<vmem>>, vector<8x128xf32>
    %559 = vector.extract_strided_slice %545 {offsets = [24, 0], sizes = [8, 128], strides = [1, 1]} : vector<40x128xf32> to vector<8x128xf32>
    %560 = arith.mulf %558, %559 : vector<8x128xf32>
    %561 = arith.addf %557, %560 : vector<8x128xf32>
    %c176_257 = arith.constant 176 : index
    %c0_258 = arith.constant 0 : index
    %562 = vector.load %arg5[%c176_257, %c0_258] : memref<200x128xf32, #tpu.memory_space<vmem>>, vector<8x128xf32>
    %563 = vector.extract_strided_slice %545 {offsets = [32, 0], sizes = [8, 128], strides = [1, 1]} : vector<40x128xf32> to vector<8x128xf32>
    %564 = arith.mulf %562, %563 : vector<8x128xf32>
    %565 = arith.addf %561, %564 : vector<8x128xf32>
    %566 = vector.extract_strided_slice %10 {offsets = [0, 1408], sizes = [40, 128], strides = [1, 1]} : vector<40x2048xf32> to vector<40x128xf32>
    %c24_259 = arith.constant 24 : index
    %c0_260 = arith.constant 0 : index
    %567 = vector.load %arg5[%c24_259, %c0_260] : memref<200x128xf32, #tpu.memory_space<vmem>>, vector<8x128xf32>
    %568 = vector.extract_strided_slice %566 {offsets = [0, 0], sizes = [8, 128], strides = [1, 1]} : vector<40x128xf32> to vector<8x128xf32>
    %569 = arith.mulf %567, %568 : vector<8x128xf32>
    %570 = arith.addf %565, %569 : vector<8x128xf32>
    %c64_261 = arith.constant 64 : index
    %c0_262 = arith.constant 0 : index
    %571 = vector.load %arg5[%c64_261, %c0_262] : memref<200x128xf32, #tpu.memory_space<vmem>>, vector<8x128xf32>
    %572 = vector.extract_strided_slice %566 {offsets = [8, 0], sizes = [8, 128], strides = [1, 1]} : vector<40x128xf32> to vector<8x128xf32>
    %573 = arith.mulf %571, %572 : vector<8x128xf32>
    %574 = arith.addf %570, %573 : vector<8x128xf32>
    %c104_263 = arith.constant 104 : index
    %c0_264 = arith.constant 0 : index
    %575 = vector.load %arg5[%c104_263, %c0_264] : memref<200x128xf32, #tpu.memory_space<vmem>>, vector<8x128xf32>
    %576 = vector.extract_strided_slice %566 {offsets = [16, 0], sizes = [8, 128], strides = [1, 1]} : vector<40x128xf32> to vector<8x128xf32>
    %577 = arith.mulf %575, %576 : vector<8x128xf32>
    %578 = arith.addf %574, %577 : vector<8x128xf32>
    %c144_265 = arith.constant 144 : index
    %c0_266 = arith.constant 0 : index
    %579 = vector.load %arg5[%c144_265, %c0_266] : memref<200x128xf32, #tpu.memory_space<vmem>>, vector<8x128xf32>
    %580 = vector.extract_strided_slice %566 {offsets = [24, 0], sizes = [8, 128], strides = [1, 1]} : vector<40x128xf32> to vector<8x128xf32>
    %581 = arith.mulf %579, %580 : vector<8x128xf32>
    %582 = arith.addf %578, %581 : vector<8x128xf32>
    %c184_267 = arith.constant 184 : index
    %c0_268 = arith.constant 0 : index
    %583 = vector.load %arg5[%c184_267, %c0_268] : memref<200x128xf32, #tpu.memory_space<vmem>>, vector<8x128xf32>
    %584 = vector.extract_strided_slice %566 {offsets = [32, 0], sizes = [8, 128], strides = [1, 1]} : vector<40x128xf32> to vector<8x128xf32>
    %585 = arith.mulf %583, %584 : vector<8x128xf32>
    %586 = arith.addf %582, %585 : vector<8x128xf32>
    %587 = vector.extract_strided_slice %10 {offsets = [0, 1536], sizes = [40, 128], strides = [1, 1]} : vector<40x2048xf32> to vector<40x128xf32>
    %c32_269 = arith.constant 32 : index
    %c0_270 = arith.constant 0 : index
    %588 = vector.load %arg5[%c32_269, %c0_270] : memref<200x128xf32, #tpu.memory_space<vmem>>, vector<8x128xf32>
    %589 = vector.extract_strided_slice %587 {offsets = [0, 0], sizes = [8, 128], strides = [1, 1]} : vector<40x128xf32> to vector<8x128xf32>
    %590 = arith.mulf %588, %589 : vector<8x128xf32>
    %591 = arith.addf %586, %590 : vector<8x128xf32>
    %c72_271 = arith.constant 72 : index
    %c0_272 = arith.constant 0 : index
    %592 = vector.load %arg5[%c72_271, %c0_272] : memref<200x128xf32, #tpu.memory_space<vmem>>, vector<8x128xf32>
    %593 = vector.extract_strided_slice %587 {offsets = [8, 0], sizes = [8, 128], strides = [1, 1]} : vector<40x128xf32> to vector<8x128xf32>
    %594 = arith.mulf %592, %593 : vector<8x128xf32>
    %595 = arith.addf %591, %594 : vector<8x128xf32>
    %c112_273 = arith.constant 112 : index
    %c0_274 = arith.constant 0 : index
    %596 = vector.load %arg5[%c112_273, %c0_274] : memref<200x128xf32, #tpu.memory_space<vmem>>, vector<8x128xf32>
    %597 = vector.extract_strided_slice %587 {offsets = [16, 0], sizes = [8, 128], strides = [1, 1]} : vector<40x128xf32> to vector<8x128xf32>
    %598 = arith.mulf %596, %597 : vector<8x128xf32>
    %599 = arith.addf %595, %598 : vector<8x128xf32>
    %c152_275 = arith.constant 152 : index
    %c0_276 = arith.constant 0 : index
    %600 = vector.load %arg5[%c152_275, %c0_276] : memref<200x128xf32, #tpu.memory_space<vmem>>, vector<8x128xf32>
    %601 = vector.extract_strided_slice %587 {offsets = [24, 0], sizes = [8, 128], strides = [1, 1]} : vector<40x128xf32> to vector<8x128xf32>
    %602 = arith.mulf %600, %601 : vector<8x128xf32>
    %603 = arith.addf %599, %602 : vector<8x128xf32>
    %c192_277 = arith.constant 192 : index
    %c0_278 = arith.constant 0 : index
    %604 = vector.load %arg5[%c192_277, %c0_278] : memref<200x128xf32, #tpu.memory_space<vmem>>, vector<8x128xf32>
    %605 = vector.extract_strided_slice %587 {offsets = [32, 0], sizes = [8, 128], strides = [1, 1]} : vector<40x128xf32> to vector<8x128xf32>
    %606 = arith.mulf %604, %605 : vector<8x128xf32>
    %607 = arith.addf %603, %606 : vector<8x128xf32>
    %cst_279 = arith.constant 0.000000e+00 : f32
    %608 = vector.broadcast %cst_279 : f32 to vector<8x128xf32>
    %609 = arith.maximumf %607, %608 : vector<8x128xf32>
    %c40_280 = arith.constant 40 : index
    %c0_281 = arith.constant 0 : index
    %610 = vector.load %arg14[%c40_280, %c0_281] : memref<64x128xf32, #tpu.memory_space<vmem>>, vector<8x128xf32>
    tpu.vector_store %arg14[%c40_280, %c0_281], %609 {strides = array<i32>} : memref<64x128xf32, #tpu.memory_space<vmem>>, vector<8x128xf32>,
    %611 = vector.extract_strided_slice %10 {offsets = [0, 1280], sizes = [40, 128], strides = [1, 1]} : vector<40x2048xf32> to vector<40x128xf32>
    %c0_282 = arith.constant 0 : index
    %c0_283 = arith.constant 0 : index
    %612 = vector.load %arg5[%c0_282, %c0_283] : memref<200x128xf32, #tpu.memory_space<vmem>>, vector<8x128xf32>
    %613 = vector.extract_strided_slice %611 {offsets = [0, 0], sizes = [8, 128], strides = [1, 1]} : vector<40x128xf32> to vector<8x128xf32>
    %614 = arith.mulf %612, %613 : vector<8x128xf32>
    %c40_284 = arith.constant 40 : index
    %c0_285 = arith.constant 0 : index
    %615 = vector.load %arg5[%c40_284, %c0_285] : memref<200x128xf32, #tpu.memory_space<vmem>>, vector<8x128xf32>
    %616 = vector.extract_strided_slice %611 {offsets = [8, 0], sizes = [8, 128], strides = [1, 1]} : vector<40x128xf32> to vector<8x128xf32>
    %617 = arith.mulf %615, %616 : vector<8x128xf32>
    %618 = arith.addf %614, %617 : vector<8x128xf32>
    %c80_286 = arith.constant 80 : index
    %c0_287 = arith.constant 0 : index
    %619 = vector.load %arg5[%c80_286, %c0_287] : memref<200x128xf32, #tpu.memory_space<vmem>>, vector<8x128xf32>
    %620 = vector.extract_strided_slice %611 {offsets = [16, 0], sizes = [8, 128], strides = [1, 1]} : vector<40x128xf32> to vector<8x128xf32>
    %621 = arith.mulf %619, %620 : vector<8x128xf32>
    %622 = arith.addf %618, %621 : vector<8x128xf32>
    %c120_288 = arith.constant 120 : index
    %c0_289 = arith.constant 0 : index
    %623 = vector.load %arg5[%c120_288, %c0_289] : memref<200x128xf32, #tpu.memory_space<vmem>>, vector<8x128xf32>
    %624 = vector.extract_strided_slice %611 {offsets = [24, 0], sizes = [8, 128], strides = [1, 1]} : vector<40x128xf32> to vector<8x128xf32>
    %625 = arith.mulf %623, %624 : vector<8x128xf32>
    %626 = arith.addf %622, %625 : vector<8x128xf32>
    %c160_290 = arith.constant 160 : index
    %c0_291 = arith.constant 0 : index
    %627 = vector.load %arg5[%c160_290, %c0_291] : memref<200x128xf32, #tpu.memory_space<vmem>>, vector<8x128xf32>
    %628 = vector.extract_strided_slice %611 {offsets = [32, 0], sizes = [8, 128], strides = [1, 1]} : vector<40x128xf32> to vector<8x128xf32>
    %629 = arith.mulf %627, %628 : vector<8x128xf32>
    %630 = arith.addf %626, %629 : vector<8x128xf32>
    %631 = vector.extract_strided_slice %10 {offsets = [0, 1408], sizes = [40, 128], strides = [1, 1]} : vector<40x2048xf32> to vector<40x128xf32>
    %c8_292 = arith.constant 8 : index
    %c0_293 = arith.constant 0 : index
    %632 = vector.load %arg5[%c8_292, %c0_293] : memref<200x128xf32, #tpu.memory_space<vmem>>, vector<8x128xf32>
    %633 = vector.extract_strided_slice %631 {offsets = [0, 0], sizes = [8, 128], strides = [1, 1]} : vector<40x128xf32> to vector<8x128xf32>
    %634 = arith.mulf %632, %633 : vector<8x128xf32>
    %635 = arith.addf %630, %634 : vector<8x128xf32>
    %c48_294 = arith.constant 48 : index
    %c0_295 = arith.constant 0 : index
    %636 = vector.load %arg5[%c48_294, %c0_295] : memref<200x128xf32, #tpu.memory_space<vmem>>, vector<8x128xf32>
    %637 = vector.extract_strided_slice %631 {offsets = [8, 0], sizes = [8, 128], strides = [1, 1]} : vector<40x128xf32> to vector<8x128xf32>
    %638 = arith.mulf %636, %637 : vector<8x128xf32>
    %639 = arith.addf %635, %638 : vector<8x128xf32>
    %c88_296 = arith.constant 88 : index
    %c0_297 = arith.constant 0 : index
    %640 = vector.load %arg5[%c88_296, %c0_297] : memref<200x128xf32, #tpu.memory_space<vmem>>, vector<8x128xf32>
    %641 = vector.extract_strided_slice %631 {offsets = [16, 0], sizes = [8, 128], strides = [1, 1]} : vector<40x128xf32> to vector<8x128xf32>
    %642 = arith.mulf %640, %641 : vector<8x128xf32>
    %643 = arith.addf %639, %642 : vector<8x128xf32>
    %c128_298 = arith.constant 128 : index
    %c0_299 = arith.constant 0 : index
    %644 = vector.load %arg5[%c128_298, %c0_299] : memref<200x128xf32, #tpu.memory_space<vmem>>, vector<8x128xf32>
    %645 = vector.extract_strided_slice %631 {offsets = [24, 0], sizes = [8, 128], strides = [1, 1]} : vector<40x128xf32> to vector<8x128xf32>
    %646 = arith.mulf %644, %645 : vector<8x128xf32>
    %647 = arith.addf %643, %646 : vector<8x128xf32>
    %c168_300 = arith.constant 168 : index
    %c0_301 = arith.constant 0 : index
    %648 = vector.load %arg5[%c168_300, %c0_301] : memref<200x128xf32, #tpu.memory_space<vmem>>, vector<8x128xf32>
    %649 = vector.extract_strided_slice %631 {offsets = [32, 0], sizes = [8, 128], strides = [1, 1]} : vector<40x128xf32> to vector<8x128xf32>
    %650 = arith.mulf %648, %649 : vector<8x128xf32>
    %651 = arith.addf %647, %650 : vector<8x128xf32>
    %652 = vector.extract_strided_slice %10 {offsets = [0, 1536], sizes = [40, 128], strides = [1, 1]} : vector<40x2048xf32> to vector<40x128xf32>
    %c16_302 = arith.constant 16 : index
    %c0_303 = arith.constant 0 : index
    %653 = vector.load %arg5[%c16_302, %c0_303] : memref<200x128xf32, #tpu.memory_space<vmem>>, vector<8x128xf32>
    %654 = vector.extract_strided_slice %652 {offsets = [0, 0], sizes = [8, 128], strides = [1, 1]} : vector<40x128xf32> to vector<8x128xf32>
    %655 = arith.mulf %653, %654 : vector<8x128xf32>
    %656 = arith.addf %651, %655 : vector<8x128xf32>
    %c56_304 = arith.constant 56 : index
    %c0_305 = arith.constant 0 : index
    %657 = vector.load %arg5[%c56_304, %c0_305] : memref<200x128xf32, #tpu.memory_space<vmem>>, vector<8x128xf32>
    %658 = vector.extract_strided_slice %652 {offsets = [8, 0], sizes = [8, 128], strides = [1, 1]} : vector<40x128xf32> to vector<8x128xf32>
    %659 = arith.mulf %657, %658 : vector<8x128xf32>
    %660 = arith.addf %656, %659 : vector<8x128xf32>
    %c96_306 = arith.constant 96 : index
    %c0_307 = arith.constant 0 : index
    %661 = vector.load %arg5[%c96_306, %c0_307] : memref<200x128xf32, #tpu.memory_space<vmem>>, vector<8x128xf32>
    %662 = vector.extract_strided_slice %652 {offsets = [16, 0], sizes = [8, 128], strides = [1, 1]} : vector<40x128xf32> to vector<8x128xf32>
    %663 = arith.mulf %661, %662 : vector<8x128xf32>
    %664 = arith.addf %660, %663 : vector<8x128xf32>
    %c136_308 = arith.constant 136 : index
    %c0_309 = arith.constant 0 : index
    %665 = vector.load %arg5[%c136_308, %c0_309] : memref<200x128xf32, #tpu.memory_space<vmem>>, vector<8x128xf32>
    %666 = vector.extract_strided_slice %652 {offsets = [24, 0], sizes = [8, 128], strides = [1, 1]} : vector<40x128xf32> to vector<8x128xf32>
    %667 = arith.mulf %665, %666 : vector<8x128xf32>
    %668 = arith.addf %664, %667 : vector<8x128xf32>
    %c176_310 = arith.constant 176 : index
    %c0_311 = arith.constant 0 : index
    %669 = vector.load %arg5[%c176_310, %c0_311] : memref<200x128xf32, #tpu.memory_space<vmem>>, vector<8x128xf32>
    %670 = vector.extract_strided_slice %652 {offsets = [32, 0], sizes = [8, 128], strides = [1, 1]} : vector<40x128xf32> to vector<8x128xf32>
    %671 = arith.mulf %669, %670 : vector<8x128xf32>
    %672 = arith.addf %668, %671 : vector<8x128xf32>
    %673 = vector.extract_strided_slice %10 {offsets = [0, 1664], sizes = [40, 128], strides = [1, 1]} : vector<40x2048xf32> to vector<40x128xf32>
    %c24_312 = arith.constant 24 : index
    %c0_313 = arith.constant 0 : index
    %674 = vector.load %arg5[%c24_312, %c0_313] : memref<200x128xf32, #tpu.memory_space<vmem>>, vector<8x128xf32>
    %675 = vector.extract_strided_slice %673 {offsets = [0, 0], sizes = [8, 128], strides = [1, 1]} : vector<40x128xf32> to vector<8x128xf32>
    %676 = arith.mulf %674, %675 : vector<8x128xf32>
    %677 = arith.addf %672, %676 : vector<8x128xf32>
    %c64_314 = arith.constant 64 : index
    %c0_315 = arith.constant 0 : index
    %678 = vector.load %arg5[%c64_314, %c0_315] : memref<200x128xf32, #tpu.memory_space<vmem>>, vector<8x128xf32>
    %679 = vector.extract_strided_slice %673 {offsets = [8, 0], sizes = [8, 128], strides = [1, 1]} : vector<40x128xf32> to vector<8x128xf32>
    %680 = arith.mulf %678, %679 : vector<8x128xf32>
    %681 = arith.addf %677, %680 : vector<8x128xf32>
    %c104_316 = arith.constant 104 : index
    %c0_317 = arith.constant 0 : index
    %682 = vector.load %arg5[%c104_316, %c0_317] : memref<200x128xf32, #tpu.memory_space<vmem>>, vector<8x128xf32>
    %683 = vector.extract_strided_slice %673 {offsets = [16, 0], sizes = [8, 128], strides = [1, 1]} : vector<40x128xf32> to vector<8x128xf32>
    %684 = arith.mulf %682, %683 : vector<8x128xf32>
    %685 = arith.addf %681, %684 : vector<8x128xf32>
    %c144_318 = arith.constant 144 : index
    %c0_319 = arith.constant 0 : index
    %686 = vector.load %arg5[%c144_318, %c0_319] : memref<200x128xf32, #tpu.memory_space<vmem>>, vector<8x128xf32>
    %687 = vector.extract_strided_slice %673 {offsets = [24, 0], sizes = [8, 128], strides = [1, 1]} : vector<40x128xf32> to vector<8x128xf32>
    %688 = arith.mulf %686, %687 : vector<8x128xf32>
    %689 = arith.addf %685, %688 : vector<8x128xf32>
    %c184_320 = arith.constant 184 : index
    %c0_321 = arith.constant 0 : index
    %690 = vector.load %arg5[%c184_320, %c0_321] : memref<200x128xf32, #tpu.memory_space<vmem>>, vector<8x128xf32>
    %691 = vector.extract_strided_slice %673 {offsets = [32, 0], sizes = [8, 128], strides = [1, 1]} : vector<40x128xf32> to vector<8x128xf32>
    %692 = arith.mulf %690, %691 : vector<8x128xf32>
    %693 = arith.addf %689, %692 : vector<8x128xf32>
    %694 = vector.extract_strided_slice %10 {offsets = [0, 1792], sizes = [40, 128], strides = [1, 1]} : vector<40x2048xf32> to vector<40x128xf32>
    %c32_322 = arith.constant 32 : index
    %c0_323 = arith.constant 0 : index
    %695 = vector.load %arg5[%c32_322, %c0_323] : memref<200x128xf32, #tpu.memory_space<vmem>>, vector<8x128xf32>
    %696 = vector.extract_strided_slice %694 {offsets = [0, 0], sizes = [8, 128], strides = [1, 1]} : vector<40x128xf32> to vector<8x128xf32>
    %697 = arith.mulf %695, %696 : vector<8x128xf32>
    %698 = arith.addf %693, %697 : vector<8x128xf32>
    %c72_324 = arith.constant 72 : index
    %c0_325 = arith.constant 0 : index
    %699 = vector.load %arg5[%c72_324, %c0_325] : memref<200x128xf32, #tpu.memory_space<vmem>>, vector<8x128xf32>
    %700 = vector.extract_strided_slice %694 {offsets = [8, 0], sizes = [8, 128], strides = [1, 1]} : vector<40x128xf32> to vector<8x128xf32>
    %701 = arith.mulf %699, %700 : vector<8x128xf32>
    %702 = arith.addf %698, %701 : vector<8x128xf32>
    %c112_326 = arith.constant 112 : index
    %c0_327 = arith.constant 0 : index
    %703 = vector.load %arg5[%c112_326, %c0_327] : memref<200x128xf32, #tpu.memory_space<vmem>>, vector<8x128xf32>
    %704 = vector.extract_strided_slice %694 {offsets = [16, 0], sizes = [8, 128], strides = [1, 1]} : vector<40x128xf32> to vector<8x128xf32>
    %705 = arith.mulf %703, %704 : vector<8x128xf32>
    %706 = arith.addf %702, %705 : vector<8x128xf32>
    %c152_328 = arith.constant 152 : index
    %c0_329 = arith.constant 0 : index
    %707 = vector.load %arg5[%c152_328, %c0_329] : memref<200x128xf32, #tpu.memory_space<vmem>>, vector<8x128xf32>
    %708 = vector.extract_strided_slice %694 {offsets = [24, 0], sizes = [8, 128], strides = [1, 1]} : vector<40x128xf32> to vector<8x128xf32>
    %709 = arith.mulf %707, %708 : vector<8x128xf32>
    %710 = arith.addf %706, %709 : vector<8x128xf32>
    %c192_330 = arith.constant 192 : index
    %c0_331 = arith.constant 0 : index
    %711 = vector.load %arg5[%c192_330, %c0_331] : memref<200x128xf32, #tpu.memory_space<vmem>>, vector<8x128xf32>
    %712 = vector.extract_strided_slice %694 {offsets = [32, 0], sizes = [8, 128], strides = [1, 1]} : vector<40x128xf32> to vector<8x128xf32>
    %713 = arith.mulf %711, %712 : vector<8x128xf32>
    %714 = arith.addf %710, %713 : vector<8x128xf32>
    %cst_332 = arith.constant 0.000000e+00 : f32
    %715 = vector.broadcast %cst_332 : f32 to vector<8x128xf32>
    %716 = arith.maximumf %714, %715 : vector<8x128xf32>
    %c48_333 = arith.constant 48 : index
    %c0_334 = arith.constant 0 : index
    %717 = vector.load %arg14[%c48_333, %c0_334] : memref<64x128xf32, #tpu.memory_space<vmem>>, vector<8x128xf32>
    tpu.vector_store %arg14[%c48_333, %c0_334], %716 {strides = array<i32>} : memref<64x128xf32, #tpu.memory_space<vmem>>, vector<8x128xf32>,
    %718 = vector.extract_strided_slice %10 {offsets = [0, 1536], sizes = [40, 128], strides = [1, 1]} : vector<40x2048xf32> to vector<40x128xf32>
    %c0_335 = arith.constant 0 : index
    %c0_336 = arith.constant 0 : index
    %719 = vector.load %arg5[%c0_335, %c0_336] : memref<200x128xf32, #tpu.memory_space<vmem>>, vector<8x128xf32>
    %720 = vector.extract_strided_slice %718 {offsets = [0, 0], sizes = [8, 128], strides = [1, 1]} : vector<40x128xf32> to vector<8x128xf32>
    %721 = arith.mulf %719, %720 : vector<8x128xf32>
    %c40_337 = arith.constant 40 : index
    %c0_338 = arith.constant 0 : index
    %722 = vector.load %arg5[%c40_337, %c0_338] : memref<200x128xf32, #tpu.memory_space<vmem>>, vector<8x128xf32>
    %723 = vector.extract_strided_slice %718 {offsets = [8, 0], sizes = [8, 128], strides = [1, 1]} : vector<40x128xf32> to vector<8x128xf32>
    %724 = arith.mulf %722, %723 : vector<8x128xf32>
    %725 = arith.addf %721, %724 : vector<8x128xf32>
    %c80_339 = arith.constant 80 : index
    %c0_340 = arith.constant 0 : index
    %726 = vector.load %arg5[%c80_339, %c0_340] : memref<200x128xf32, #tpu.memory_space<vmem>>, vector<8x128xf32>
    %727 = vector.extract_strided_slice %718 {offsets = [16, 0], sizes = [8, 128], strides = [1, 1]} : vector<40x128xf32> to vector<8x128xf32>
    %728 = arith.mulf %726, %727 : vector<8x128xf32>
    %729 = arith.addf %725, %728 : vector<8x128xf32>
    %c120_341 = arith.constant 120 : index
    %c0_342 = arith.constant 0 : index
    %730 = vector.load %arg5[%c120_341, %c0_342] : memref<200x128xf32, #tpu.memory_space<vmem>>, vector<8x128xf32>
    %731 = vector.extract_strided_slice %718 {offsets = [24, 0], sizes = [8, 128], strides = [1, 1]} : vector<40x128xf32> to vector<8x128xf32>
    %732 = arith.mulf %730, %731 : vector<8x128xf32>
    %733 = arith.addf %729, %732 : vector<8x128xf32>
    %c160_343 = arith.constant 160 : index
    %c0_344 = arith.constant 0 : index
    %734 = vector.load %arg5[%c160_343, %c0_344] : memref<200x128xf32, #tpu.memory_space<vmem>>, vector<8x128xf32>
    %735 = vector.extract_strided_slice %718 {offsets = [32, 0], sizes = [8, 128], strides = [1, 1]} : vector<40x128xf32> to vector<8x128xf32>
    %736 = arith.mulf %734, %735 : vector<8x128xf32>
    %737 = arith.addf %733, %736 : vector<8x128xf32>
    %738 = vector.extract_strided_slice %10 {offsets = [0, 1664], sizes = [40, 128], strides = [1, 1]} : vector<40x2048xf32> to vector<40x128xf32>
    %c8_345 = arith.constant 8 : index
    %c0_346 = arith.constant 0 : index
    %739 = vector.load %arg5[%c8_345, %c0_346] : memref<200x128xf32, #tpu.memory_space<vmem>>, vector<8x128xf32>
    %740 = vector.extract_strided_slice %738 {offsets = [0, 0], sizes = [8, 128], strides = [1, 1]} : vector<40x128xf32> to vector<8x128xf32>
    %741 = arith.mulf %739, %740 : vector<8x128xf32>
    %742 = arith.addf %737, %741 : vector<8x128xf32>
    %c48_347 = arith.constant 48 : index
    %c0_348 = arith.constant 0 : index
    %743 = vector.load %arg5[%c48_347, %c0_348] : memref<200x128xf32, #tpu.memory_space<vmem>>, vector<8x128xf32>
    %744 = vector.extract_strided_slice %738 {offsets = [8, 0], sizes = [8, 128], strides = [1, 1]} : vector<40x128xf32> to vector<8x128xf32>
    %745 = arith.mulf %743, %744 : vector<8x128xf32>
    %746 = arith.addf %742, %745 : vector<8x128xf32>
    %c88_349 = arith.constant 88 : index
    %c0_350 = arith.constant 0 : index
    %747 = vector.load %arg5[%c88_349, %c0_350] : memref<200x128xf32, #tpu.memory_space<vmem>>, vector<8x128xf32>
    %748 = vector.extract_strided_slice %738 {offsets = [16, 0], sizes = [8, 128], strides = [1, 1]} : vector<40x128xf32> to vector<8x128xf32>
    %749 = arith.mulf %747, %748 : vector<8x128xf32>
    %750 = arith.addf %746, %749 : vector<8x128xf32>
    %c128_351 = arith.constant 128 : index
    %c0_352 = arith.constant 0 : index
    %751 = vector.load %arg5[%c128_351, %c0_352] : memref<200x128xf32, #tpu.memory_space<vmem>>, vector<8x128xf32>
    %752 = vector.extract_strided_slice %738 {offsets = [24, 0], sizes = [8, 128], strides = [1, 1]} : vector<40x128xf32> to vector<8x128xf32>
    %753 = arith.mulf %751, %752 : vector<8x128xf32>
    %754 = arith.addf %750, %753 : vector<8x128xf32>
    %c168_353 = arith.constant 168 : index
    %c0_354 = arith.constant 0 : index
    %755 = vector.load %arg5[%c168_353, %c0_354] : memref<200x128xf32, #tpu.memory_space<vmem>>, vector<8x128xf32>
    %756 = vector.extract_strided_slice %738 {offsets = [32, 0], sizes = [8, 128], strides = [1, 1]} : vector<40x128xf32> to vector<8x128xf32>
    %757 = arith.mulf %755, %756 : vector<8x128xf32>
    %758 = arith.addf %754, %757 : vector<8x128xf32>
    %759 = vector.extract_strided_slice %10 {offsets = [0, 1792], sizes = [40, 128], strides = [1, 1]} : vector<40x2048xf32> to vector<40x128xf32>
    %c16_355 = arith.constant 16 : index
    %c0_356 = arith.constant 0 : index
    %760 = vector.load %arg5[%c16_355, %c0_356] : memref<200x128xf32, #tpu.memory_space<vmem>>, vector<8x128xf32>
    %761 = vector.extract_strided_slice %759 {offsets = [0, 0], sizes = [8, 128], strides = [1, 1]} : vector<40x128xf32> to vector<8x128xf32>
    %762 = arith.mulf %760, %761 : vector<8x128xf32>
    %763 = arith.addf %758, %762 : vector<8x128xf32>
    %c56_357 = arith.constant 56 : index
    %c0_358 = arith.constant 0 : index
    %764 = vector.load %arg5[%c56_357, %c0_358] : memref<200x128xf32, #tpu.memory_space<vmem>>, vector<8x128xf32>
    %765 = vector.extract_strided_slice %759 {offsets = [8, 0], sizes = [8, 128], strides = [1, 1]} : vector<40x128xf32> to vector<8x128xf32>
    %766 = arith.mulf %764, %765 : vector<8x128xf32>
    %767 = arith.addf %763, %766 : vector<8x128xf32>
    %c96_359 = arith.constant 96 : index
    %c0_360 = arith.constant 0 : index
    %768 = vector.load %arg5[%c96_359, %c0_360] : memref<200x128xf32, #tpu.memory_space<vmem>>, vector<8x128xf32>
    %769 = vector.extract_strided_slice %759 {offsets = [16, 0], sizes = [8, 128], strides = [1, 1]} : vector<40x128xf32> to vector<8x128xf32>
    %770 = arith.mulf %768, %769 : vector<8x128xf32>
    %771 = arith.addf %767, %770 : vector<8x128xf32>
    %c136_361 = arith.constant 136 : index
    %c0_362 = arith.constant 0 : index
    %772 = vector.load %arg5[%c136_361, %c0_362] : memref<200x128xf32, #tpu.memory_space<vmem>>, vector<8x128xf32>
    %773 = vector.extract_strided_slice %759 {offsets = [24, 0], sizes = [8, 128], strides = [1, 1]} : vector<40x128xf32> to vector<8x128xf32>
    %774 = arith.mulf %772, %773 : vector<8x128xf32>
    %775 = arith.addf %771, %774 : vector<8x128xf32>
    %c176_363 = arith.constant 176 : index
    %c0_364 = arith.constant 0 : index
    %776 = vector.load %arg5[%c176_363, %c0_364] : memref<200x128xf32, #tpu.memory_space<vmem>>, vector<8x128xf32>
    %777 = vector.extract_strided_slice %759 {offsets = [32, 0], sizes = [8, 128], strides = [1, 1]} : vector<40x128xf32> to vector<8x128xf32>
    %778 = arith.mulf %776, %777 : vector<8x128xf32>
    %779 = arith.addf %775, %778 : vector<8x128xf32>
    %780 = vector.extract_strided_slice %10 {offsets = [0, 1920], sizes = [40, 128], strides = [1, 1]} : vector<40x2048xf32> to vector<40x128xf32>
    %c24_365 = arith.constant 24 : index
    %c0_366 = arith.constant 0 : index
    %781 = vector.load %arg5[%c24_365, %c0_366] : memref<200x128xf32, #tpu.memory_space<vmem>>, vector<8x128xf32>
    %782 = vector.extract_strided_slice %780 {offsets = [0, 0], sizes = [8, 128], strides = [1, 1]} : vector<40x128xf32> to vector<8x128xf32>
    %783 = arith.mulf %781, %782 : vector<8x128xf32>
    %784 = arith.addf %779, %783 : vector<8x128xf32>
    %c64_367 = arith.constant 64 : index
    %c0_368 = arith.constant 0 : index
    %785 = vector.load %arg5[%c64_367, %c0_368] : memref<200x128xf32, #tpu.memory_space<vmem>>, vector<8x128xf32>
    %786 = vector.extract_strided_slice %780 {offsets = [8, 0], sizes = [8, 128], strides = [1, 1]} : vector<40x128xf32> to vector<8x128xf32>
    %787 = arith.mulf %785, %786 : vector<8x128xf32>
    %788 = arith.addf %784, %787 : vector<8x128xf32>
    %c104_369 = arith.constant 104 : index
    %c0_370 = arith.constant 0 : index
    %789 = vector.load %arg5[%c104_369, %c0_370] : memref<200x128xf32, #tpu.memory_space<vmem>>, vector<8x128xf32>
    %790 = vector.extract_strided_slice %780 {offsets = [16, 0], sizes = [8, 128], strides = [1, 1]} : vector<40x128xf32> to vector<8x128xf32>
    %791 = arith.mulf %789, %790 : vector<8x128xf32>
    %792 = arith.addf %788, %791 : vector<8x128xf32>
    %c144_371 = arith.constant 144 : index
    %c0_372 = arith.constant 0 : index
    %793 = vector.load %arg5[%c144_371, %c0_372] : memref<200x128xf32, #tpu.memory_space<vmem>>, vector<8x128xf32>
    %794 = vector.extract_strided_slice %780 {offsets = [24, 0], sizes = [8, 128], strides = [1, 1]} : vector<40x128xf32> to vector<8x128xf32>
    %795 = arith.mulf %793, %794 : vector<8x128xf32>
    %796 = arith.addf %792, %795 : vector<8x128xf32>
    %c184_373 = arith.constant 184 : index
    %c0_374 = arith.constant 0 : index
    %797 = vector.load %arg5[%c184_373, %c0_374] : memref<200x128xf32, #tpu.memory_space<vmem>>, vector<8x128xf32>
    %798 = vector.extract_strided_slice %780 {offsets = [32, 0], sizes = [8, 128], strides = [1, 1]} : vector<40x128xf32> to vector<8x128xf32>
    %799 = arith.mulf %797, %798 : vector<8x128xf32>
    %800 = arith.addf %796, %799 : vector<8x128xf32>
    %cst_375 = arith.constant 0.000000e+00 : f32
    %801 = vector.broadcast %cst_375 : f32 to vector<8x128xf32>
    %802 = arith.maximumf %800, %801 : vector<8x128xf32>
    %c56_376 = arith.constant 56 : index
    %c0_377 = arith.constant 0 : index
    %803 = vector.load %arg14[%c56_376, %c0_377] : memref<64x128xf32, #tpu.memory_space<vmem>>, vector<8x128xf32>
    tpu.vector_store %arg14[%c56_376, %c0_377], %802 {strides = array<i32>} : memref<64x128xf32, #tpu.memory_space<vmem>>, vector<8x128xf32>,
    %c0_378 = arith.constant 0 : index
    %c0_379 = arith.constant 0 : index
    %804 = vector.load %arg14[%c0_378, %c0_379] : memref<64x128xf32, #tpu.memory_space<vmem>>, vector<64x128xf32>
    %805 = arith.truncf %804 : vector<64x128xf32> to vector<64x128xbf16>
    %c0_380 = arith.constant 0 : index
    %c0_381 = arith.constant 0 : index
    %806 = vector.load %arg6[%c0_380, %c0_381] : memref<128x128xbf16, #tpu.memory_space<vmem>>, vector<128x128xbf16>
    %cst_382 = arith.constant dense<0.000000e+00> : vector<64x128xf32>
    %807 = tpu.matmul %805, %806, %cst_382 {dimension_numbers = #tpu.dot_dimension_numbers<[1], [0], [0], [1], [0, 0, 1, 1], [], []>} : vector<64x128xbf16>, vector<128x128xbf16>, vector<64x128xf32> -> vector<64x128xf32>
    %808 = vector.extract_strided_slice %807 {offsets = [0, 0], sizes = [8, 128], strides = [1, 1]} : vector<64x128xf32> to vector<8x128xf32>
    %809 = vector.extract_strided_slice %807 {offsets = [8, 0], sizes = [8, 128], strides = [1, 1]} : vector<64x128xf32> to vector<8x128xf32>
    %810 = vector.extract_strided_slice %807 {offsets = [16, 0], sizes = [8, 128], strides = [1, 1]} : vector<64x128xf32> to vector<8x128xf32>
    %811 = vector.extract_strided_slice %807 {offsets = [24, 0], sizes = [8, 128], strides = [1, 1]} : vector<64x128xf32> to vector<8x128xf32>
    %812 = vector.extract_strided_slice %807 {offsets = [32, 0], sizes = [8, 128], strides = [1, 1]} : vector<64x128xf32> to vector<8x128xf32>
    %813 = vector.extract_strided_slice %807 {offsets = [40, 0], sizes = [8, 128], strides = [1, 1]} : vector<64x128xf32> to vector<8x128xf32>
    %814 = vector.extract_strided_slice %807 {offsets = [48, 0], sizes = [8, 128], strides = [1, 1]} : vector<64x128xf32> to vector<8x128xf32>
    %815 = vector.extract_strided_slice %807 {offsets = [56, 0], sizes = [8, 128], strides = [1, 1]} : vector<64x128xf32> to vector<8x128xf32>
    %816 = tpu.concatenate %808, %809, %810, %811, %812, %813, %814, %815 in 1 : vector<8x128xf32>, vector<8x128xf32>, vector<8x128xf32>, vector<8x128xf32>, vector<8x128xf32>, vector<8x128xf32>, vector<8x128xf32>, vector<8x128xf32> -> vector<8x1024xf32>
    %817 = arith.truncf %816 : vector<8x1024xf32> to vector<8x1024xbf16>
    %c0_383 = arith.constant 0 : index
    %c0_384 = arith.constant 0 : index
    %818 = vector.load %arg7[%c0_383, %c0_384] : memref<16x8xbf16, #tpu.memory_space<vmem>>, vector<16x8xbf16>
    %cst_385 = arith.constant dense<0.000000e+00> : vector<16x1024xf32>
    %819 = tpu.matmul %818, %817, %cst_385 {dimension_numbers = #tpu.dot_dimension_numbers<[1], [0], [0], [1], [0, 0, 1, 1], [], []>} : vector<16x8xbf16>, vector<8x1024xbf16>, vector<16x1024xf32> -> vector<16x1024xf32>
    %820 = vector.extract_strided_slice %819 {offsets = [0, 0], sizes = [16, 128], strides = [1, 1]} : vector<16x1024xf32> to vector<16x128xf32>
    %cst_386 = arith.constant 1.000000e+00 : f32
    %821 = vector.broadcast %cst_386 : f32 to vector<16x128xf32>
    %822 = arith.mulf %821, %820 : vector<16x128xf32>
    %823 = vector.extract_strided_slice %819 {offsets = [0, 0], sizes = [16, 128], strides = [1, 1]} : vector<16x1024xf32> to vector<16x128xf32>
    %cst_387 = arith.constant 7.500000e-01 : f32
    %824 = vector.broadcast %cst_387 : f32 to vector<16x128xf32>
    %825 = arith.mulf %824, %823 : vector<16x128xf32>
    %826 = vector.extract_strided_slice %819 {offsets = [0, 128], sizes = [16, 128], strides = [1, 1]} : vector<16x1024xf32> to vector<16x128xf32>
    %cst_388 = arith.constant 2.500000e-01 : f32
    %827 = vector.broadcast %cst_388 : f32 to vector<16x128xf32>
    %828 = arith.mulf %827, %826 : vector<16x128xf32>
    %829 = arith.addf %825, %828 : vector<16x128xf32>
    %830 = vector.extract_strided_slice %819 {offsets = [0, 0], sizes = [16, 128], strides = [1, 1]} : vector<16x1024xf32> to vector<16x128xf32>
    %cst_389 = arith.constant 2.500000e-01 : f32
    %831 = vector.broadcast %cst_389 : f32 to vector<16x128xf32>
    %832 = arith.mulf %831, %830 : vector<16x128xf32>
    %833 = vector.extract_strided_slice %819 {offsets = [0, 128], sizes = [16, 128], strides = [1, 1]} : vector<16x1024xf32> to vector<16x128xf32>
    %cst_390 = arith.constant 7.500000e-01 : f32
    %834 = vector.broadcast %cst_390 : f32 to vector<16x128xf32>
    %835 = arith.mulf %834, %833 : vector<16x128xf32>
    %836 = arith.addf %832, %835 : vector<16x128xf32>
    %837 = vector.extract_strided_slice %819 {offsets = [0, 128], sizes = [16, 128], strides = [1, 1]} : vector<16x1024xf32> to vector<16x128xf32>
    %cst_391 = arith.constant 7.500000e-01 : f32
    %838 = vector.broadcast %cst_391 : f32 to vector<16x128xf32>
    %839 = arith.mulf %838, %837 : vector<16x128xf32>
    %840 = vector.extract_strided_slice %819 {offsets = [0, 256], sizes = [16, 128], strides = [1, 1]} : vector<16x1024xf32> to vector<16x128xf32>
    %cst_392 = arith.constant 2.500000e-01 : f32
    %841 = vector.broadcast %cst_392 : f32 to vector<16x128xf32>
    %842 = arith.mulf %841, %840 : vector<16x128xf32>
    %843 = arith.addf %839, %842 : vector<16x128xf32>
    %844 = vector.extract_strided_slice %819 {offsets = [0, 128], sizes = [16, 128], strides = [1, 1]} : vector<16x1024xf32> to vector<16x128xf32>
    %cst_393 = arith.constant 2.500000e-01 : f32
    %845 = vector.broadcast %cst_393 : f32 to vector<16x128xf32>
    %846 = arith.mulf %845, %844 : vector<16x128xf32>
    %847 = vector.extract_strided_slice %819 {offsets = [0, 256], sizes = [16, 128], strides = [1, 1]} : vector<16x1024xf32> to vector<16x128xf32>
    %cst_394 = arith.constant 7.500000e-01 : f32
    %848 = vector.broadcast %cst_394 : f32 to vector<16x128xf32>
    %849 = arith.mulf %848, %847 : vector<16x128xf32>
    %850 = arith.addf %846, %849 : vector<16x128xf32>
    %851 = vector.extract_strided_slice %819 {offsets = [0, 256], sizes = [16, 128], strides = [1, 1]} : vector<16x1024xf32> to vector<16x128xf32>
    %cst_395 = arith.constant 7.500000e-01 : f32
    %852 = vector.broadcast %cst_395 : f32 to vector<16x128xf32>
    %853 = arith.mulf %852, %851 : vector<16x128xf32>
    %854 = vector.extract_strided_slice %819 {offsets = [0, 384], sizes = [16, 128], strides = [1, 1]} : vector<16x1024xf32> to vector<16x128xf32>
    %cst_396 = arith.constant 2.500000e-01 : f32
    %855 = vector.broadcast %cst_396 : f32 to vector<16x128xf32>
    %856 = arith.mulf %855, %854 : vector<16x128xf32>
    %857 = arith.addf %853, %856 : vector<16x128xf32>
    %858 = vector.extract_strided_slice %819 {offsets = [0, 256], sizes = [16, 128], strides = [1, 1]} : vector<16x1024xf32> to vector<16x128xf32>
    %cst_397 = arith.constant 2.500000e-01 : f32
    %859 = vector.broadcast %cst_397 : f32 to vector<16x128xf32>
    %860 = arith.mulf %859, %858 : vector<16x128xf32>
    %861 = vector.extract_strided_slice %819 {offsets = [0, 384], sizes = [16, 128], strides = [1, 1]} : vector<16x1024xf32> to vector<16x128xf32>
    %cst_398 = arith.constant 7.500000e-01 : f32
    %862 = vector.broadcast %cst_398 : f32 to vector<16x128xf32>
    %863 = arith.mulf %862, %861 : vector<16x128xf32>
    %864 = arith.addf %860, %863 : vector<16x128xf32>
    %865 = vector.extract_strided_slice %819 {offsets = [0, 384], sizes = [16, 128], strides = [1, 1]} : vector<16x1024xf32> to vector<16x128xf32>
    %cst_399 = arith.constant 7.500000e-01 : f32
    %866 = vector.broadcast %cst_399 : f32 to vector<16x128xf32>
    %867 = arith.mulf %866, %865 : vector<16x128xf32>
    %868 = vector.extract_strided_slice %819 {offsets = [0, 512], sizes = [16, 128], strides = [1, 1]} : vector<16x1024xf32> to vector<16x128xf32>
    %cst_400 = arith.constant 2.500000e-01 : f32
    %869 = vector.broadcast %cst_400 : f32 to vector<16x128xf32>
    %870 = arith.mulf %869, %868 : vector<16x128xf32>
    %871 = arith.addf %867, %870 : vector<16x128xf32>
    %872 = vector.extract_strided_slice %819 {offsets = [0, 384], sizes = [16, 128], strides = [1, 1]} : vector<16x1024xf32> to vector<16x128xf32>
    %cst_401 = arith.constant 2.500000e-01 : f32
    %873 = vector.broadcast %cst_401 : f32 to vector<16x128xf32>
    %874 = arith.mulf %873, %872 : vector<16x128xf32>
    %875 = vector.extract_strided_slice %819 {offsets = [0, 512], sizes = [16, 128], strides = [1, 1]} : vector<16x1024xf32> to vector<16x128xf32>
    %cst_402 = arith.constant 7.500000e-01 : f32
    %876 = vector.broadcast %cst_402 : f32 to vector<16x128xf32>
    %877 = arith.mulf %876, %875 : vector<16x128xf32>
    %878 = arith.addf %874, %877 : vector<16x128xf32>
    %879 = vector.extract_strided_slice %819 {offsets = [0, 512], sizes = [16, 128], strides = [1, 1]} : vector<16x1024xf32> to vector<16x128xf32>
    %cst_403 = arith.constant 7.500000e-01 : f32
    %880 = vector.broadcast %cst_403 : f32 to vector<16x128xf32>
    %881 = arith.mulf %880, %879 : vector<16x128xf32>
    %882 = vector.extract_strided_slice %819 {offsets = [0, 640], sizes = [16, 128], strides = [1, 1]} : vector<16x1024xf32> to vector<16x128xf32>
    %cst_404 = arith.constant 2.500000e-01 : f32
    %883 = vector.broadcast %cst_404 : f32 to vector<16x128xf32>
    %884 = arith.mulf %883, %882 : vector<16x128xf32>
    %885 = arith.addf %881, %884 : vector<16x128xf32>
    %886 = vector.extract_strided_slice %819 {offsets = [0, 512], sizes = [16, 128], strides = [1, 1]} : vector<16x1024xf32> to vector<16x128xf32>
    %cst_405 = arith.constant 2.500000e-01 : f32
    %887 = vector.broadcast %cst_405 : f32 to vector<16x128xf32>
    %888 = arith.mulf %887, %886 : vector<16x128xf32>
    %889 = vector.extract_strided_slice %819 {offsets = [0, 640], sizes = [16, 128], strides = [1, 1]} : vector<16x1024xf32> to vector<16x128xf32>
    %cst_406 = arith.constant 7.500000e-01 : f32
    %890 = vector.broadcast %cst_406 : f32 to vector<16x128xf32>
    %891 = arith.mulf %890, %889 : vector<16x128xf32>
    %892 = arith.addf %888, %891 : vector<16x128xf32>
    %893 = vector.extract_strided_slice %819 {offsets = [0, 640], sizes = [16, 128], strides = [1, 1]} : vector<16x1024xf32> to vector<16x128xf32>
    %cst_407 = arith.constant 7.500000e-01 : f32
    %894 = vector.broadcast %cst_407 : f32 to vector<16x128xf32>
    %895 = arith.mulf %894, %893 : vector<16x128xf32>
    %896 = vector.extract_strided_slice %819 {offsets = [0, 768], sizes = [16, 128], strides = [1, 1]} : vector<16x1024xf32> to vector<16x128xf32>
    %cst_408 = arith.constant 2.500000e-01 : f32
    %897 = vector.broadcast %cst_408 : f32 to vector<16x128xf32>
    %898 = arith.mulf %897, %896 : vector<16x128xf32>
    %899 = arith.addf %895, %898 : vector<16x128xf32>
    %900 = vector.extract_strided_slice %819 {offsets = [0, 640], sizes = [16, 128], strides = [1, 1]} : vector<16x1024xf32> to vector<16x128xf32>
    %cst_409 = arith.constant 2.500000e-01 : f32
    %901 = vector.broadcast %cst_409 : f32 to vector<16x128xf32>
    %902 = arith.mulf %901, %900 : vector<16x128xf32>
    %903 = vector.extract_strided_slice %819 {offsets = [0, 768], sizes = [16, 128], strides = [1, 1]} : vector<16x1024xf32> to vector<16x128xf32>
    %cst_410 = arith.constant 7.500000e-01 : f32
    %904 = vector.broadcast %cst_410 : f32 to vector<16x128xf32>
    %905 = arith.mulf %904, %903 : vector<16x128xf32>
    %906 = arith.addf %902, %905 : vector<16x128xf32>
    %907 = vector.extract_strided_slice %819 {offsets = [0, 768], sizes = [16, 128], strides = [1, 1]} : vector<16x1024xf32> to vector<16x128xf32>
    %cst_411 = arith.constant 7.500000e-01 : f32
    %908 = vector.broadcast %cst_411 : f32 to vector<16x128xf32>
    %909 = arith.mulf %908, %907 : vector<16x128xf32>
    %910 = vector.extract_strided_slice %819 {offsets = [0, 896], sizes = [16, 128], strides = [1, 1]} : vector<16x1024xf32> to vector<16x128xf32>
    %cst_412 = arith.constant 2.500000e-01 : f32
    %911 = vector.broadcast %cst_412 : f32 to vector<16x128xf32>
    %912 = arith.mulf %911, %910 : vector<16x128xf32>
    %913 = arith.addf %909, %912 : vector<16x128xf32>
    %914 = vector.extract_strided_slice %819 {offsets = [0, 768], sizes = [16, 128], strides = [1, 1]} : vector<16x1024xf32> to vector<16x128xf32>
    %cst_413 = arith.constant 2.500000e-01 : f32
    %915 = vector.broadcast %cst_413 : f32 to vector<16x128xf32>
    %916 = arith.mulf %915, %914 : vector<16x128xf32>
    %917 = vector.extract_strided_slice %819 {offsets = [0, 896], sizes = [16, 128], strides = [1, 1]} : vector<16x1024xf32> to vector<16x128xf32>
    %cst_414 = arith.constant 7.500000e-01 : f32
    %918 = vector.broadcast %cst_414 : f32 to vector<16x128xf32>
    %919 = arith.mulf %918, %917 : vector<16x128xf32>
    %920 = arith.addf %916, %919 : vector<16x128xf32>
    %921 = vector.extract_strided_slice %819 {offsets = [0, 896], sizes = [16, 128], strides = [1, 1]} : vector<16x1024xf32> to vector<16x128xf32>
    %cst_415 = arith.constant 1.000000e+00 : f32
    %922 = vector.broadcast %cst_415 : f32 to vector<16x128xf32>
    %923 = arith.mulf %922, %921 : vector<16x128xf32>
    %924 = tpu.concatenate %822, %829, %836, %843, %850, %857, %864, %871, %878, %885, %892, %899, %906, %913, %920, %923 in 0 : vector<16x128xf32>, vector<16x128xf32>, vector<16x128xf32>, vector<16x128xf32>, vector<16x128xf32>, vector<16x128xf32>, vector<16x128xf32>, vector<16x128xf32>, vector<16x128xf32>, vector<16x128xf32>, vector<16x128xf32>, vector<16x128xf32>, vector<16x128xf32>, vector<16x128xf32>, vector<16x128xf32>, vector<16x128xf32> -> vector<256x128xf32>
    %c0_416 = arith.constant 0 : index
    %c0_417 = arith.constant 0 : index
    %c0_418 = arith.constant 0 : index
    %925 = vector.load %arg8[%c0_416, %c0_417, %c0_418] : memref<1x256x128xf32, #tpu.memory_space<vmem>>, vector<1x256x128xf32>
    %926 = vector.shape_cast %925 : vector<1x256x128xf32> to vector<256x128xf32>
    %927 = arith.addf %924, %926 : vector<256x128xf32>
    %c0_419 = arith.constant 0 : index
    %c0_420 = arith.constant 0 : index
    %928 = vector.load %arg10[%c0_419, %c0_420] : memref<1x128xf32, #tpu.memory_space<vmem>>, vector<1x128xf32>
    %929 = vector.broadcast %928 : vector<1x128xf32> to vector<256x128xf32>
    %930 = arith.mulf %927, %929 : vector<256x128xf32>
    %c0_421 = arith.constant 0 : index
    %c0_422 = arith.constant 0 : index
    %931 = vector.load %arg11[%c0_421, %c0_422] : memref<1x128xf32, #tpu.memory_space<vmem>>, vector<1x128xf32>
    %932 = vector.broadcast %931 : vector<1x128xf32> to vector<256x128xf32>
    %933 = arith.addf %930, %932 : vector<256x128xf32>
    %cst_423 = arith.constant 0.000000e+00 : f32
    %934 = vector.broadcast %cst_423 : f32 to vector<256x128xf32>
    %935 = arith.maximumf %933, %934 : vector<256x128xf32>
    %cst_424 = arith.constant 0.000000e+00 : f32
    %936 = vector.broadcast %cst_424 : f32 to vector<1x128xf32>
    %937 = vector.extract_strided_slice %935 {offsets = [0, 0], sizes = [255, 128], strides = [1, 1]} : vector<256x128xf32> to vector<255x128xf32>
    %938 = tpu.concatenate %936, %937 in 0 : vector<1x128xf32>, vector<255x128xf32> -> vector<256x128xf32>
    %c0_425 = arith.constant 0 : index
    %c0_426 = arith.constant 0 : index
    %c0_427 = arith.constant 0 : index
    %939 = vector.load %arg9[%c0_425, %c0_426, %c0_427] : memref<2x256x1xf32, #tpu.memory_space<vmem>>, vector<1x256x1xf32>
    %940 = vector.shape_cast %939 : vector<1x256x1xf32> to vector<256x1xf32>
    %941 = vector.broadcast %940 : vector<256x1xf32> to vector<256x128xf32>
    %942 = arith.mulf %938, %941 : vector<256x128xf32>
    %943 = vector.extract_strided_slice %935 {offsets = [1, 0], sizes = [255, 128], strides = [1, 1]} : vector<256x128xf32> to vector<255x128xf32>
    %944 = tpu.concatenate %943, %936 in 0 : vector<255x128xf32>, vector<1x128xf32> -> vector<256x128xf32>
    %c1 = arith.constant 1 : index
    %c0_428 = arith.constant 0 : index
    %c0_429 = arith.constant 0 : index
    %945 = vector.load %arg9[%c1, %c0_428, %c0_429] : memref<2x256x1xf32, #tpu.memory_space<vmem>>, vector<1x256x1xf32>
    %946 = vector.shape_cast %945 : vector<1x256x1xf32> to vector<256x1xf32>
    %947 = vector.broadcast %946 : vector<256x1xf32> to vector<256x128xf32>
    %948 = arith.mulf %944, %947 : vector<256x128xf32>
    %949 = arith.truncf %942 : vector<256x128xf32> to vector<256x128xbf16>
    %950 = arith.truncf %935 : vector<256x128xf32> to vector<256x128xbf16>
    %951 = arith.truncf %948 : vector<256x128xf32> to vector<256x128xbf16>
    %952 = tpu.concatenate %949, %950, %951 in 1 : vector<256x128xbf16>, vector<256x128xbf16>, vector<256x128xbf16> -> vector<256x384xbf16>
    %cst_430 = arith.constant 0.000000e+00 : bf16
    %953 = vector.broadcast %cst_430 : bf16 to vector<16x384xbf16>
    %c1_431 = arith.constant 1 : index
    %c0_432 = arith.constant 0 : index
    %c0_433 = arith.constant 0 : index
    %954 = vector.load %arg12[%c1_431, %c0_432, %c0_433] : memref<3x384x128xbf16, #tpu.memory_space<vmem>>, vector<1x384x128xbf16>
    %955 = vector.shape_cast %954 : vector<1x384x128xbf16> to vector<384x128xbf16>
    %cst_434 = arith.constant dense<0.000000e+00> : vector<256x128xf32>
    %956 = tpu.matmul %952, %955, %cst_434 {dimension_numbers = #tpu.dot_dimension_numbers<[1], [0], [0], [1], [0, 0, 1, 1], [], []>} : vector<256x384xbf16>, vector<384x128xbf16>, vector<256x128xf32> -> vector<256x128xf32>
    %957 = vector.extract_strided_slice %952 {offsets = [0, 0], sizes = [240, 384], strides = [1, 1]} : vector<256x384xbf16> to vector<240x384xbf16>
    %958 = tpu.concatenate %953, %957 in 0 : vector<16x384xbf16>, vector<240x384xbf16> -> vector<256x384xbf16>
    %c0_435 = arith.constant 0 : index
    %c0_436 = arith.constant 0 : index
    %c0_437 = arith.constant 0 : index
    %959 = vector.load %arg12[%c0_435, %c0_436, %c0_437] : memref<3x384x128xbf16, #tpu.memory_space<vmem>>, vector<1x384x128xbf16>
    %960 = vector.shape_cast %959 : vector<1x384x128xbf16> to vector<384x128xbf16>
    %cst_438 = arith.constant dense<0.000000e+00> : vector<256x128xf32>
    %961 = tpu.matmul %958, %960, %cst_438 {dimension_numbers = #tpu.dot_dimension_numbers<[1], [0], [0], [1], [0, 0, 1, 1], [], []>} : vector<256x384xbf16>, vector<384x128xbf16>, vector<256x128xf32> -> vector<256x128xf32>
    %962 = arith.addf %956, %961 : vector<256x128xf32>
    %963 = vector.extract_strided_slice %952 {offsets = [16, 0], sizes = [240, 384], strides = [1, 1]} : vector<256x384xbf16> to vector<240x384xbf16>
    %964 = tpu.concatenate %963, %953 in 0 : vector<240x384xbf16>, vector<16x384xbf16> -> vector<256x384xbf16>
    %c2 = arith.constant 2 : index
    %c0_439 = arith.constant 0 : index
    %c0_440 = arith.constant 0 : index
    %965 = vector.load %arg12[%c2, %c0_439, %c0_440] : memref<3x384x128xbf16, #tpu.memory_space<vmem>>, vector<1x384x128xbf16>
    %966 = vector.shape_cast %965 : vector<1x384x128xbf16> to vector<384x128xbf16>
    %cst_441 = arith.constant dense<0.000000e+00> : vector<256x128xf32>
    %967 = tpu.matmul %964, %966, %cst_441 {dimension_numbers = #tpu.dot_dimension_numbers<[1], [0], [0], [1], [0, 0, 1, 1], [], []>} : vector<256x384xbf16>, vector<384x128xbf16>, vector<256x128xf32> -> vector<256x128xf32>
    %968 = arith.addf %962, %967 : vector<256x128xf32>
    %c0_442 = arith.constant 0 : index
    %c0_443 = arith.constant 0 : index
    %c0_444 = arith.constant 0 : index
    %969 = vector.load %arg13[%c0_442, %c0_443, %c0_444] : memref<1x256x128xf32, #tpu.memory_space<vmem>>, vector<1x256x128xf32>
    %970 = vector.shape_cast %969 : vector<1x256x128xf32> to vector<256x128xf32>
    %971 = vector.shape_cast %968 : vector<256x128xf32> to vector<1x256x128xf32>
    tpu.vector_store %arg13[%c0_442, %c0_443, %c0_444], %971 {strides = array<i32>} : memref<1x256x128xf32, #tpu.memory_space<vmem>>, vector<1x256x128xf32>,
    return
  }
  func.func @transform_0(%arg0: i32) -> (i32, i32, i32) {
    %c0_i32 = arith.constant 0 : i32
    %c0_i32_0 = arith.constant 0 : i32
    %c0_i32_1 = arith.constant 0 : i32
    return %arg0, %c0_i32, %c0_i32_0 : i32, i32, i32
  }
  func.func @transform_1(%arg0: i32) -> (i32, i32) {
    %c0_i32 = arith.constant 0 : i32
    %c0_i32_0 = arith.constant 0 : i32
    %c0_i32_1 = arith.constant 0 : i32
    return %c0_i32, %c0_i32_0 : i32, i32
  }
  func.func @transform_2(%arg0: i32) -> (i32, i32) {
    %c0_i32 = arith.constant 0 : i32
    %c0_i32_0 = arith.constant 0 : i32
    %c0_i32_1 = arith.constant 0 : i32
    return %c0_i32, %c0_i32_0 : i32, i32
  }
  func.func @transform_3(%arg0: i32) -> (i32, i32) {
    %c0_i32 = arith.constant 0 : i32
    %c0_i32_0 = arith.constant 0 : i32
    %c0_i32_1 = arith.constant 0 : i32
    return %c0_i32, %c0_i32_0 : i32, i32
  }
  func.func @transform_4(%arg0: i32) -> (i32, i32) {
    %c0_i32 = arith.constant 0 : i32
    %c0_i32_0 = arith.constant 0 : i32
    %c0_i32_1 = arith.constant 0 : i32
    return %c0_i32, %c0_i32_0 : i32, i32
  }
  func.func @transform_5(%arg0: i32) -> (i32, i32) {
    %c0_i32 = arith.constant 0 : i32
    %c0_i32_0 = arith.constant 0 : i32
    %c0_i32_1 = arith.constant 0 : i32
    return %c0_i32, %c0_i32_0 : i32, i32
  }
  func.func @transform_6(%arg0: i32) -> (i32, i32) {
    %c0_i32 = arith.constant 0 : i32
    %c0_i32_0 = arith.constant 0 : i32
    %c0_i32_1 = arith.constant 0 : i32
    return %c0_i32, %c0_i32_0 : i32, i32
  }
  func.func @transform_7(%arg0: i32) -> (i32, i32, i32) {
    %c0_i32 = arith.constant 0 : i32
    %c0_i32_0 = arith.constant 0 : i32
    %c0_i32_1 = arith.constant 0 : i32
    return %arg0, %c0_i32, %c0_i32_0 : i32, i32, i32
  }
  func.func @transform_8(%arg0: i32) -> (i32, i32, i32) {
    %c0_i32 = arith.constant 0 : i32
    %c0_i32_0 = arith.constant 0 : i32
    %c0_i32_1 = arith.constant 0 : i32
    %c0_i32_2 = arith.constant 0 : i32
    return %c0_i32, %c0_i32_0, %c0_i32_1 : i32, i32, i32
  }
  func.func @transform_9(%arg0: i32) -> (i32, i32) {
    %c0_i32 = arith.constant 0 : i32
    %c0_i32_0 = arith.constant 0 : i32
    %c0_i32_1 = arith.constant 0 : i32
    return %c0_i32, %c0_i32_0 : i32, i32
  }
  func.func @transform_10(%arg0: i32) -> (i32, i32) {
    %c0_i32 = arith.constant 0 : i32
    %c0_i32_0 = arith.constant 0 : i32
    %c0_i32_1 = arith.constant 0 : i32
    return %c0_i32, %c0_i32_0 : i32, i32
  }
  func.func @transform_11(%arg0: i32) -> (i32, i32, i32) {
    %c0_i32 = arith.constant 0 : i32
    %c0_i32_0 = arith.constant 0 : i32
    %c0_i32_1 = arith.constant 0 : i32
    %c0_i32_2 = arith.constant 0 : i32
    return %c0_i32, %c0_i32_0, %c0_i32_1 : i32, i32, i32
  }
  func.func @transform_12(%arg0: i32) -> (i32, i32, i32) {
    %c0_i32 = arith.constant 0 : i32
    %c0_i32_0 = arith.constant 0 : i32
    %c0_i32_1 = arith.constant 0 : i32
    return %arg0, %c0_i32, %c0_i32_0 : i32, i32, i32
  }
}

</mosaic_0001>

<llo_original>
// kernel: tpu_custom_call.1
$region0: #{tpu_custom_call.1}
  #allocation0 [shape = 'u32[]', space=smem, size = 0x4, offset = 0x4, fixed_abs, tag = 'smem constant byte address 0x4 - core index']
  #allocation1 [shape = 'u32[144,128]{1,0:T(1,128)}', space=vmem, size = 0x12000, scoped, tag = 'internal scratch']
  #allocation2 [shape = 'f32[64,128]{1,0:T(8,128)}', space=vmem, size = 0x8000, scoped, tag = 'scratch operand']
  %s0 = inlined_call_operand.hbm [shape: f32[2,16,2048], index: 0, kind: input, shape index: {}]
  %s1 = inlined_call_operand.hbm [shape: f32[1,2048], index: 1, kind: input, shape index: {}]
  %s2 = inlined_call_operand.hbm [shape: f32[1,2048], index: 2, kind: input, shape index: {}]
  %s3 = inlined_call_operand.vmem [shape: bf16[40,16], index: 3, kind: input, shape index: {}]
  %s4 = inlined_call_operand.hbm [shape: f32[200,128], index: 4, kind: input, shape index: {}]
  %s5 = inlined_call_operand.hbm [shape: bf16[128,128], index: 5, kind: input, shape index: {}]
  %s6 = inlined_call_operand.vmem [shape: bf16[16,8], index: 6, kind: input, shape index: {}]
  %s7 = inlined_call_operand.hbm [shape: f32[2,256,128], index: 7, kind: input, shape index: {}]
  %s8 = inlined_call_operand.vmem [shape: f32[2,256,1], index: 8, kind: input, shape index: {}]
  %s9 = inlined_call_operand.hbm [shape: f32[1,128], index: 9, kind: input, shape index: {}]
  %s10 = inlined_call_operand.hbm [shape: f32[1,128], index: 10, kind: input, shape index: {}]
  %s11 = inlined_call_operand.vmem [shape: bf16[3,384,128], index: 11, kind: input, shape index: {}]
  %s12 = inlined_call_operand.hbm [shape: f32[2,256,128], index: 12, kind: output, shape index: {}]
  %s13 = sld [smem:[#allocation0]]
  $region113: #{tpu_custom_call.1} parent=0
    _
  %s15 = ssub.s32 1, %s13
  %s16 = scalar_select 0, %s15, %s13
  $region1: #{tpu_custom_call.1} parent=0
    #allocation3 [shape = 'u8[262144]{0}', space=vmem, size = 0x40000, scoped, tag = 'input window, operand 0']
    #allocation4 [shape = 's32[2]{0}', space=sflag, size = 0x8, scoped, tag = 'scoped memory for tpu_custom_call.1']
    #allocation5 [shape = 's32[2]{0}', space=sflag, size = 0x8, scoped, tag = 'scoped memory for tpu_custom_call.1']
    #allocation6 [shape = 'u8[8192]{0}', space=vmem, size = 0x2000, scoped, tag = 'input window, operand 1, single buffered']
    #allocation7 [shape = 's32[1]{0}', space=sflag, size = 0x4, scoped, tag = 'scoped memory for tpu_custom_call.1']
    #allocation8 [shape = 'u8[8192]{0}', space=vmem, size = 0x2000, scoped, tag = 'input window, operand 2, single buffered']
    #allocation9 [shape = 'u8[102400]{0}', space=vmem, size = 0x19000, scoped, tag = 'input window, operand 4, single buffered']
    #allocation10 [shape = 's32[1]{0}', space=sflag, size = 0x4, scoped, tag = 'scoped memory for tpu_custom_call.1']
    #allocation11 [shape = 'u8[32768]{0}', space=vmem, size = 0x8000, scoped, tag = 'input window, operand 5, single buffered']
    #allocation12 [shape = 'u8[262144]{0}', space=vmem, size = 0x40000, scoped, tag = 'input window, operand 7']
    #allocation13 [shape = 's32[2]{0}', space=sflag, size = 0x8, scoped, tag = 'scoped memory for tpu_custom_call.1']
    #allocation14 [shape = 'u8[512]{0}', space=vmem, size = 0x400, scoped, tag = 'input window, operand 9, single buffered']
    #allocation15 [shape = 'u8[512]{0}', space=vmem, size = 0x400, scoped, tag = 'input window, operand 10, single buffered']
    #allocation16 [shape = 's32[1]{0}', space=sflag, size = 0x4, scoped, tag = 'scoped memory for tpu_custom_call.1']
    #allocation17 [shape = 'u8[262144]{0}', space=vmem, size = 0x40000, scoped, tag = 'output window, operand 0']
    %17 = vsyncpa [#allocation4], 0
    %s18 = scalar_lea.sflag [#allocation4], 1
    %19 = vsyncpa %s18, 0
    %20 = vsyncpa [#allocation7], 0
    %21 = vsyncpa [#allocation10], 0
    %22 = vsyncpa [#allocation13], 0
    %s23 = scalar_lea.sflag [#allocation13], 1
    %24 = vsyncpa %s23, 0
    %25 = vsyncpa [#allocation16], 0
    %26 = vsyncpa [#allocation5], 0
    %s27 = scalar_lea.sflag [#allocation5], 1
    %28 = vsyncpa %s27, 0
    loop: start=0, step=1, limit=4
    $region2: #{tpu_custom_call.1} parent=1 // loop_pre_header
      _
    $region3: #{tpu_custom_call.1} parent=1 // loop_header
      %s30 = sphi 0, %s34
      %p31 = scmp.ge.s32.totalorder %s30, 4
      %s40 = sphi 0, %s42
      %s43 = sphi 0, %s40
      %s44 = sphi 0, %s43
      %s60 = sphi 0, %s44
      %s64 = sphi 0, %s64
      %s66 = sphi 0, %s64
      %s67 = sphi 0, %s66
      %s81 = sphi 0, %s67
      %s85 = sphi 0, %s85
      %s87 = sphi 0, %s85
      %s88 = sphi 0, %s87
      %s102 = sphi 0, %s88
      %s106 = sphi 0, %s106
      %s108 = sphi 0, %s106
      %s109 = sphi 0, %s108
      %s123 = sphi 0, %s109
      %s127 = sphi 0, %s127
      %s129 = sphi 0, %s127
      %s130 = sphi 0, %s129
      %s144 = sphi 0, %s130
      %s148 = sphi 0, %s148
      %s150 = sphi 0, %s148
      %s151 = sphi 0, %s150
      %s165 = sphi 0, %s151
      %s169 = sphi 0, %s169
      %s171 = sphi 0, %s169
      %s172 = sphi 0, %s171
      %s186 = sphi 0, %s172
      %s192 = sphi 0, %s194
      %s195 = sphi 0, %s192
      %s196 = sphi 0, %s195
      %s212 = sphi 0, %s196
      %s216 = sphi 0, %s216
      %s218 = sphi 0, %s216
      %s219 = sphi 0, %s218
      %s233 = sphi 0, %s219
      %s237 = sphi 0, %s237
      %s239 = sphi 0, %s237
      %s240 = sphi 0, %s239
      %s254 = sphi 0, %s240
      %s258 = sphi 0, %s258
      %s260 = sphi 0, %s258
      %s261 = sphi 0, %s260
      %s275 = sphi 0, %s261
      %s279 = sphi 0, %s279
      %s281 = sphi 0, %s279
      %s282 = sphi 0, %s281
      %s296 = sphi 0, %s282
      %s302 = sphi 0, %s304
      %s305 = sphi 0, %s302
      %s306 = sphi 0, %s305
      %s322 = sphi 0, %s306
    $region4: #{tpu_custom_call.1} parent=1 // loop_header_branch
      %33 = sbr.rel (%p31) target = $region8
    $region5: #{tpu_custom_call.1} parent=1 // loop_body
      %s35 = ssub.s32 %s30, 1
      %s36 = ssub.s32 %s30, 2
      %s37 = sadd.s32 %s30, 1
      %s38 = ssub.s32 %s30, %s37
      %p39 = scmp.eq.s32.totalorder %s38, 0
      %s41 = sadd.s32 %s40, 1
      %s42 = scalar_select %p39, %s40, %s41
      %p45 = pneg %p39
      %p46 = scmp.eq.s32.totalorder %s30, 1
      %p47 = por %p45, %p46
      %p48 = scmp.ne.s32.totalorder %s40, %s43
      %p49 = scmp.eq.s32.totalorder %s30, 0
      %p50 = por %p48, %p49
      %p51 = scmp.ne.s32.totalorder %s40, %s43
      %p52 = scmp.eq.s32.totalorder %s35, 1
      %p53 = por %p51, %p52
      %p54 = scmp.ne.s32.totalorder %s43, %s44
      %p55 = scmp.eq.s32.totalorder %s35, 0
      %p56 = por %p54, %p55
      %p57 = scmp.ne.s32.totalorder %s43, %s44
      %p58 = scmp.eq.s32.totalorder %s36, 1
      %p59 = por %p57, %p58
      %p61 = scmp.ne.s32.totalorder %s44, %s60
      %p62 = scmp.eq.s32.totalorder %s36, 0
      %p63 = por %p61, %p62
      %s65 = sadd.s32 %s64, 1
      %p68 = scmp.eq.s32.totalorder %s30, 1
      %p69 = scmp.ne.s32.totalorder %s64, %s66
      %p70 = scmp.eq.s32.totalorder %s30, 0
      %p71 = por %p69, %p70
      %p72 = scmp.ne.s32.totalorder %s64, %s66
      %p73 = scmp.eq.s32.totalorder %s35, 1
      %p74 = por %p72, %p73
      %p75 = scmp.ne.s32.totalorder %s66, %s67
      %p76 = scmp.eq.s32.totalorder %s35, 0
      %p77 = por %p75, %p76
      %p78 = scmp.ne.s32.totalorder %s66, %s67
      %p79 = scmp.eq.s32.totalorder %s36, 1
      %p80 = por %p78, %p79
      %p82 = scmp.ne.s32.totalorder %s67, %s81
      %p83 = scmp.eq.s32.totalorder %s36, 0
      %p84 = por %p82, %p83
      %s86 = sadd.s32 %s85, 1
      %p89 = scmp.eq.s32.totalorder %s30, 1
      %p90 = scmp.ne.s32.totalorder %s85, %s87
      %p91 = scmp.eq.s32.totalorder %s30, 0
      %p92 = por %p90, %p91
      %p93 = scmp.ne.s32.totalorder %s85, %s87
      %p94 = scmp.eq.s32.totalorder %s35, 1
      %p95 = por %p93, %p94
      %p96 = scmp.ne.s32.totalorder %s87, %s88
      %p97 = scmp.eq.s32.totalorder %s35, 0
      %p98 = por %p96, %p97
      %p99 = scmp.ne.s32.totalorder %s87, %s88
      %p100 = scmp.eq.s32.totalorder %s36, 1
      %p101 = por %p99, %p100
      %p103 = scmp.ne.s32.totalorder %s88, %s102
      %p104 = scmp.eq.s32.totalorder %s36, 0
      %p105 = por %p103, %p104
      %s107 = sadd.s32 %s106, 1
      %p110 = scmp.eq.s32.totalorder %s30, 1
      %p111 = scmp.ne.s32.totalorder %s106, %s108
      %p112 = scmp.eq.s32.totalorder %s30, 0
      %p113 = por %p111, %p112
      %p114 = scmp.ne.s32.totalorder %s106, %s108
      %p115 = scmp.eq.s32.totalorder %s35, 1
      %p116 = por %p114, %p115
      %p117 = scmp.ne.s32.totalorder %s108, %s109
      %p118 = scmp.eq.s32.totalorder %s35, 0
      %p119 = por %p117, %p118
      %p120 = scmp.ne.s32.totalorder %s108, %s109
      %p121 = scmp.eq.s32.totalorder %s36, 1
      %p122 = por %p120, %p121
      %p124 = scmp.ne.s32.totalorder %s109, %s123
      %p125 = scmp.eq.s32.totalorder %s36, 0
      %p126 = por %p124, %p125
      %s128 = sadd.s32 %s127, 1
      %p131 = scmp.eq.s32.totalorder %s30, 1
      %p132 = scmp.ne.s32.totalorder %s127, %s129
      %p133 = scmp.eq.s32.totalorder %s30, 0
      %p134 = por %p132, %p133
      %p135 = scmp.ne.s32.totalorder %s127, %s129
      %p136 = scmp.eq.s32.totalorder %s35, 1
      %p137 = por %p135, %p136
      %p138 = scmp.ne.s32.totalorder %s129, %s130
      %p139 = scmp.eq.s32.totalorder %s35, 0
      %p140 = por %p138, %p139
      %p141 = scmp.ne.s32.totalorder %s129, %s130
      %p142 = scmp.eq.s32.totalorder %s36, 1
      %p143 = por %p141, %p142
      %p145 = scmp.ne.s32.totalorder %s130, %s144
      %p146 = scmp.eq.s32.totalorder %s36, 0
      %p147 = por %p145, %p146
      %s149 = sadd.s32 %s148, 1
      %p152 = scmp.eq.s32.totalorder %s30, 1
      %p153 = scmp.ne.s32.totalorder %s148, %s150
      %p154 = scmp.eq.s32.totalorder %s30, 0
      %p155 = por %p153, %p154
      %p156 = scmp.ne.s32.totalorder %s148, %s150
      %p157 = scmp.eq.s32.totalorder %s35, 1
      %p158 = por %p156, %p157
      %p159 = scmp.ne.s32.totalorder %s150, %s151
      %p160 = scmp.eq.s32.totalorder %s35, 0
      %p161 = por %p159, %p160
      %p162 = scmp.ne.s32.totalorder %s150, %s151
      %p163 = scmp.eq.s32.totalorder %s36, 1
      %p164 = por %p162, %p163
      %p166 = scmp.ne.s32.totalorder %s151, %s165
      %p167 = scmp.eq.s32.totalorder %s36, 0
      %p168 = por %p166, %p167
      %s170 = sadd.s32 %s169, 1
      %p173 = scmp.eq.s32.totalorder %s30, 1
      %p174 = scmp.ne.s32.totalorder %s169, %s171
      %p175 = scmp.eq.s32.totalorder %s30, 0
      %p176 = por %p174, %p175
      %p177 = scmp.ne.s32.totalorder %s169, %s171
      %p178 = scmp.eq.s32.totalorder %s35, 1
      %p179 = por %p177, %p178
      %p180 = scmp.ne.s32.totalorder %s171, %s172
      %p181 = scmp.eq.s32.totalorder %s35, 0
      %p182 = por %p180, %p181
      %p183 = scmp.ne.s32.totalorder %s171, %s172
      %p184 = scmp.eq.s32.totalorder %s36, 1
      %p185 = por %p183, %p184
      %p187 = scmp.ne.s32.totalorder %s172, %s186
      %p188 = scmp.eq.s32.totalorder %s36, 0
      %p189 = por %p187, %p188
      %s190 = ssub.s32 %s30, %s37
      %p191 = scmp.eq.s32.totalorder %s190, 0
      %s193 = sadd.s32 %s192, 1
      %s194 = scalar_select %p191, %s192, %s193
      %p197 = pneg %p191
      %p198 = scmp.eq.s32.totalorder %s30, 1
      %p199 = por %p197, %p198
      %p200 = scmp.ne.s32.totalorder %s192, %s195
      %p201 = scmp.eq.s32.totalorder %s30, 0
      %p202 = por %p200, %p201
      %p203 = scmp.ne.s32.totalorder %s192, %s195
      %p204 = scmp.eq.s32.totalorder %s35, 1
      %p205 = por %p203, %p204
      %p206 = scmp.ne.s32.totalorder %s195, %s196
      %p207 = scmp.eq.s32.totalorder %s35, 0
      %p208 = por %p206, %p207
      %p209 = scmp.ne.s32.totalorder %s195, %s196
      %p210 = scmp.eq.s32.totalorder %s36, 1
      %p211 = por %p209, %p210
      %p213 = scmp.ne.s32.totalorder %s196, %s212
      %p214 = scmp.eq.s32.totalorder %s36, 0
      %p215 = por %p213, %p214
      %s217 = sadd.s32 %s216, 1
      %p220 = scmp.eq.s32.totalorder %s30, 1
      %p221 = scmp.ne.s32.totalorder %s216, %s218
      %p222 = scmp.eq.s32.totalorder %s30, 0
      %p223 = por %p221, %p222
      %p224 = scmp.ne.s32.totalorder %s216, %s218
      %p225 = scmp.eq.s32.totalorder %s35, 1
      %p226 = por %p224, %p225
      %p227 = scmp.ne.s32.totalorder %s218, %s219
      %p228 = scmp.eq.s32.totalorder %s35, 0
      %p229 = por %p227, %p228
      %p230 = scmp.ne.s32.totalorder %s218, %s219
      %p231 = scmp.eq.s32.totalorder %s36, 1
      %p232 = por %p230, %p231
      %p234 = scmp.ne.s32.totalorder %s219, %s233
      %p235 = scmp.eq.s32.totalorder %s36, 0
      %p236 = por %p234, %p235
      %s238 = sadd.s32 %s237, 1
      %p241 = scmp.eq.s32.totalorder %s30, 1
      %p242 = scmp.ne.s32.totalorder %s237, %s239
      %p243 = scmp.eq.s32.totalorder %s30, 0
      %p244 = por %p242, %p243
      %p245 = scmp.ne.s32.totalorder %s237, %s239
      %p246 = scmp.eq.s32.totalorder %s35, 1
      %p247 = por %p245, %p246
      %p248 = scmp.ne.s32.totalorder %s239, %s240
      %p249 = scmp.eq.s32.totalorder %s35, 0
      %p250 = por %p248, %p249
      %p251 = scmp.ne.s32.totalorder %s239, %s240
      %p252 = scmp.eq.s32.totalorder %s36, 1
      %p253 = por %p251, %p252
      %p255 = scmp.ne.s32.totalorder %s240, %s254
      %p256 = scmp.eq.s32.totalorder %s36, 0
      %p257 = por %p255, %p256
      %s259 = sadd.s32 %s258, 1
      %p262 = scmp.eq.s32.totalorder %s30, 1
      %p263 = scmp.ne.s32.totalorder %s258, %s260
      %p264 = scmp.eq.s32.totalorder %s30, 0
      %p265 = por %p263, %p264
      %p266 = scmp.ne.s32.totalorder %s258, %s260
      %p267 = scmp.eq.s32.totalorder %s35, 1
      %p268 = por %p266, %p267
      %p269 = scmp.ne.s32.totalorder %s260, %s261
      %p270 = scmp.eq.s32.totalorder %s35, 0
      %p271 = por %p269, %p270
      %p272 = scmp.ne.s32.totalorder %s260, %s261
      %p273 = scmp.eq.s32.totalorder %s36, 1
      %p274 = por %p272, %p273
      %p276 = scmp.ne.s32.totalorder %s261, %s275
      %p277 = scmp.eq.s32.totalorder %s36, 0
      %p278 = por %p276, %p277
      %s280 = sadd.s32 %s279, 1
      %p283 = scmp.eq.s32.totalorder %s30, 1
      %p284 = scmp.ne.s32.totalorder %s279, %s281
      %p285 = scmp.eq.s32.totalorder %s30, 0
      %p286 = por %p284, %p285
      %p287 = scmp.ne.s32.totalorder %s279, %s281
      %p288 = scmp.eq.s32.totalorder %s35, 1
      %p289 = por %p287, %p288
      %p290 = scmp.ne.s32.totalorder %s281, %s282
      %p291 = scmp.eq.s32.totalorder %s35, 0
      %p292 = por %p290, %p291
      %p293 = scmp.ne.s32.totalorder %s281, %s282
      %p294 = scmp.eq.s32.totalorder %s36, 1
      %p295 = por %p293, %p294
      %p297 = scmp.ne.s32.totalorder %s282, %s296
      %p298 = scmp.eq.s32.totalorder %s36, 0
      %p299 = por %p297, %p298
      %s300 = ssub.s32 %s30, %s37
      %p301 = scmp.eq.s32.totalorder %s300, 0
      %s303 = sadd.s32 %s302, 1
      %s304 = scalar_select %p301, %s302, %s303
      %p307 = pneg %p301
      %p308 = scmp.eq.s32.totalorder %s30, 1
      %p309 = por %p307, %p308
      %p310 = scmp.ne.s32.totalorder %s302, %s305
      %p311 = scmp.eq.s32.totalorder %s30, 0
      %p312 = por %p310, %p311
      %p313 = scmp.ne.s32.totalorder %s302, %s305
      %p314 = scmp.eq.s32.totalorder %s35, 1
      %p315 = por %p313, %p314
      %p316 = scmp.ne.s32.totalorder %s305, %s306
      %p317 = scmp.eq.s32.totalorder %s35, 0
      %p318 = por %p316, %p317
      %p319 = scmp.ne.s32.totalorder %s305, %s306
      %p320 = scmp.eq.s32.totalorder %s36, 1
      %p321 = por %p319, %p320
      %p323 = scmp.ne.s32.totalorder %s306, %s322
      %p324 = scmp.eq.s32.totalorder %s36, 0
      %p325 = por %p323, %p324
      %p326 = scmp.le.s32.totalorder 1, %s30
      %p327 = scmp.lt.s32.totalorder %s30, 3
      %p328 = pnand %p326, %p327
      %p329 = pneg %p328
      // Predicated region
      $region9: #{tpu_custom_call.1} parent=5 // pred_check
        _
      $region10: #{tpu_custom_call.1} parent=5 // pred_check_branch
        %331 = sbr.rel (%p328) target = $region12
      $region11: #{tpu_custom_call.1} parent=5 // pred_region
        %s332 = ssub.s32 %s30, 1
        // Predicated region
        $region13: #{tpu_custom_call.1} parent=11 // pred_check
          %p333 = pneg %p77
        $region14: #{tpu_custom_call.1} parent=11 // pred_check_branch
          %335 = sbr.rel (%p333) target = $region16
        $region15: #{tpu_custom_call.1} parent=11 // pred_region
          %s337 = ssub.s32 256, 256
          %338 = vsyncadd [#allocation7], %s337
          %s340 = sshll.u32 [#allocation6], 4
          %s341 = int_to_ptr.vmem [resolvable:$true] %s340
          %343 = dma.hbm_to_vmem [thread:$0]  %s1, 256, %s341, [#allocation7]
        $region16: #{tpu_custom_call.1} parent=11 // pred_fallthru
          _
        // Predicated region
        $region17: #{tpu_custom_call.1} parent=11 // pred_check
          %p344 = pneg %p98
        $region18: #{tpu_custom_call.1} parent=11 // pred_check_branch
          %346 = sbr.rel (%p344) target = $region20
        $region19: #{tpu_custom_call.1} parent=11 // pred_region
          %s348 = ssub.s32 256, 256
          %349 = vsyncadd [#allocation7], %s348
          %s351 = sshll.u32 [#allocation8], 4
          %s352 = int_to_ptr.vmem [resolvable:$true] %s351
          %354 = dma.hbm_to_vmem [thread:$0]  %s2, 256, %s352, [#allocation7]
        $region20: #{tpu_custom_call.1} parent=11 // pred_fallthru
          _
        // Predicated region
        $region21: #{tpu_custom_call.1} parent=11 // pred_check
          %p355 = pneg %p119
        $region22: #{tpu_custom_call.1} parent=11 // pred_check_branch
          %357 = sbr.rel (%p355) target = $region24
        $region23: #{tpu_custom_call.1} parent=11 // pred_region
          _
        $region24: #{tpu_custom_call.1} parent=11 // pred_fallthru
          _
        // Predicated region
        $region25: #{tpu_custom_call.1} parent=11 // pred_check
          %p358 = pneg %p140
        $region26: #{tpu_custom_call.1} parent=11 // pred_check_branch
          %360 = sbr.rel (%p358) target = $region28
        $region27: #{tpu_custom_call.1} parent=11 // pred_region
          %s362 = ssub.s32 3200, 3200
          %363 = vsyncadd [#allocation10], %s362
          %s364 = sshll.u32 [#allocation9], 4
          %s365 = int_to_ptr.vmem [resolvable:$true] %s364
          %370 = dma.hbm_to_vmem [thread:$0]  %s4, 3200, %s365, [#allocation10], 128, 128, 8
        $region28: #{tpu_custom_call.1} parent=11 // pred_fallthru
          _
        // Predicated region
        $region29: #{tpu_custom_call.1} parent=11 // pred_check
          %p371 = pneg %p161
        $region30: #{tpu_custom_call.1} parent=11 // pred_check_branch
          %373 = sbr.rel (%p371) target = $region32
        $region31: #{tpu_custom_call.1} parent=11 // pred_region
          %s375 = ssub.s32 1024, 1024
          %376 = vsyncadd [#allocation10], %s375
          %s377 = sshll.u32 [#allocation11], 4
          %s378 = int_to_ptr.vmem [resolvable:$true] %s377
          %383 = dma.hbm_to_vmem [thread:$0]  %s5, 1024, %s378, [#allocation10], 64, 64, 4
        $region32: #{tpu_custom_call.1} parent=11 // pred_fallthru
          _
        // Predicated region
        $region33: #{tpu_custom_call.1} parent=11 // pred_check
          %p384 = pneg %p182
        $region34: #{tpu_custom_call.1} parent=11 // pred_check_branch
          %386 = sbr.rel (%p384) target = $region36
        $region35: #{tpu_custom_call.1} parent=11 // pred_region
          _
        $region36: #{tpu_custom_call.1} parent=11 // pred_fallthru
          _
        // Predicated region
        $region37: #{tpu_custom_call.1} parent=11 // pred_check
          %p387 = pneg %p229
        $region38: #{tpu_custom_call.1} parent=11 // pred_check_branch
          %389 = sbr.rel (%p387) target = $region40
        $region39: #{tpu_custom_call.1} parent=11 // pred_region
          _
        $region40: #{tpu_custom_call.1} parent=11 // pred_fallthru
          _
        // Predicated region
        $region41: #{tpu_custom_call.1} parent=11 // pred_check
          %p390 = pneg %p250
        $region42: #{tpu_custom_call.1} parent=11 // pred_check_branch
          %392 = sbr.rel (%p390) target = $region44
        $region43: #{tpu_custom_call.1} parent=11 // pred_region
          %s394 = ssub.s32 16, 16
          %395 = vsyncadd [#allocation13], %s394
          %s397 = sshll.u32 [#allocation14], 4
          %s398 = int_to_ptr.vmem [resolvable:$true] %s397
          %400 = dma.hbm_to_vmem [thread:$0]  %s9, 16, %s398, [#allocation13]
        $region44: #{tpu_custom_call.1} parent=11 // pred_fallthru
          _
        // Predicated region
        $region45: #{tpu_custom_call.1} parent=11 // pred_check
          %p401 = pneg %p271
        $region46: #{tpu_custom_call.1} parent=11 // pred_check_branch
          %403 = sbr.rel (%p401) target = $region48
        $region47: #{tpu_custom_call.1} parent=11 // pred_region
          %s405 = ssub.s32 16, 16
          %406 = vsyncadd [#allocation16], %s405
          %s408 = sshll.u32 [#allocation15], 4
          %s409 = int_to_ptr.vmem [resolvable:$true] %s408
          %411 = dma.hbm_to_vmem [thread:$0]  %s10, 16, %s409, [#allocation16]
        $region48: #{tpu_custom_call.1} parent=11 // pred_fallthru
          _
        // Predicated region
        $region49: #{tpu_custom_call.1} parent=11 // pred_check
          %p412 = pneg %p292
        $region50: #{tpu_custom_call.1} parent=11 // pred_check_branch
          %414 = sbr.rel (%p412) target = $region52
        $region51: #{tpu_custom_call.1} parent=11 // pred_region
          _
        $region52: #{tpu_custom_call.1} parent=11 // pred_fallthru
          _
      $region12: #{tpu_custom_call.1} parent=5 // pred_fallthru
        _
      %p415 = scmp.lt.s32.totalorder %s30, 2
      // Predicated region
      $region53: #{tpu_custom_call.1} parent=5 // pred_check
        %p416 = pneg %p415
      $region54: #{tpu_custom_call.1} parent=5 // pred_check_branch
        %418 = sbr.rel (%p416) target = $region56
      $region55: #{tpu_custom_call.1} parent=5 // pred_region
        // Predicated region
        $region57: #{tpu_custom_call.1} parent=55 // pred_check
          %p419 = pneg %p50
        $region58: #{tpu_custom_call.1} parent=55 // pred_check_branch
          %421 = sbr.rel (%p419) target = $region60
        $region59: #{tpu_custom_call.1} parent=55 // pred_region
          %s422 = sand.u32 %s40, 1
          %s423 = scalar_lea.sflag [#allocation4], %s422
          %s424 = sand.u32 %s40, 1
          %s425 = smul.addr %s424, 256
          %s426 = scalar_lea.vmem [#allocation3], %s425
          %s428 = ssub.s32 4096, 4096
          %429 = vsyncadd %s423, %s428
          %s430 = smul.addr %s30, 32
          %s431 = smul.addr %s430, 128
          %s432 = scalar_lea.hbm %s0, %s431
          %s433 = sshll.u32 %s426, 4
          %s434 = int_to_ptr.vmem [resolvable:$true] %s433
          %439 = dma.hbm_to_vmem [thread:$0]  %s432, 4096, %s434, %s423, 2048, 2048, 128
        $region60: #{tpu_custom_call.1} parent=55 // pred_fallthru
          _
        // Predicated region
        $region61: #{tpu_custom_call.1} parent=55 // pred_check
          %p440 = pneg %p202
        $region62: #{tpu_custom_call.1} parent=55 // pred_check_branch
          %442 = sbr.rel (%p440) target = $region64
        $region63: #{tpu_custom_call.1} parent=55 // pred_region
          %s443 = sand.u32 %s30, 1
          %s444 = scalar_lea.sflag [#allocation13], %s443
          %s445 = sand.u32 %s192, 1
          %s446 = smul.addr %s445, 256
          %s447 = scalar_lea.vmem [#allocation12], %s446
          %s449 = ssub.s32 4096, 4096
          %450 = vsyncadd %s444, %s449
          %s451 = smul.addr %s30, 32
          %s452 = smul.addr %s451, 128
          %s453 = scalar_lea.hbm %s7, %s452
          %s454 = sshll.u32 %s447, 4
          %s455 = int_to_ptr.vmem [resolvable:$true] %s454
          %460 = dma.hbm_to_vmem [thread:$0]  %s453, 4096, %s455, %s444, 128, 128, 8
        $region64: #{tpu_custom_call.1} parent=55 // pred_fallthru
          _
      $region56: #{tpu_custom_call.1} parent=5 // pred_fallthru
        _
      %p461 = scmp.le.s32.totalorder 1, %s30
      %p462 = scmp.lt.s32.totalorder %s30, 3
      %p463 = pnand %p461, %p462
      %p464 = pneg %p463
      // Predicated region
      $region65: #{tpu_custom_call.1} parent=5 // pred_check
        _
      $region66: #{tpu_custom_call.1} parent=5 // pred_check_branch
        %466 = sbr.rel (%p463) target = $region68
      $region67: #{tpu_custom_call.1} parent=5 // pred_region
        %s467 = ssub.s32 %s30, 1
        %s468 = sand.u32 %s43, 1
        %s469 = scalar_lea.sflag [#allocation4], %s468
        %s470 = sand.u32 %s43, 1
        %s471 = smul.addr %s470, 256
        %s472 = scalar_lea.vmem [#allocation3], %s471
        // Predicated region
        $region69: #{tpu_custom_call.1} parent=67 // pred_check
          %p473 = pneg %p56
        $region70: #{tpu_custom_call.1} parent=67 // pred_check_branch
          %475 = sbr.rel (%p473) target = $region72
        $region71: #{tpu_custom_call.1} parent=67 // pred_region
          %476 = dma.done %s469, 4096
        $region72: #{tpu_custom_call.1} parent=67 // pred_fallthru
          _
        // Predicated region
        $region73: #{tpu_custom_call.1} parent=67 // pred_check
          %p477 = pneg %p77
        $region74: #{tpu_custom_call.1} parent=67 // pred_check_branch
          %479 = sbr.rel (%p477) target = $region76
        $region75: #{tpu_custom_call.1} parent=67 // pred_region
          %480 = dma.done [#allocation7], 256
        $region76: #{tpu_custom_call.1} parent=67 // pred_fallthru
          _
        // Predicated region
        $region77: #{tpu_custom_call.1} parent=67 // pred_check
          %p481 = pneg %p98
        $region78: #{tpu_custom_call.1} parent=67 // pred_check_branch
          %483 = sbr.rel (%p481) target = $region80
        $region79: #{tpu_custom_call.1} parent=67 // pred_region
          %484 = dma.done [#allocation7], 256
        $region80: #{tpu_custom_call.1} parent=67 // pred_fallthru
          _
        // Predicated region
        $region81: #{tpu_custom_call.1} parent=67 // pred_check
          %p485 = pneg %p140
        $region82: #{tpu_custom_call.1} parent=67 // pred_check_branch
          %487 = sbr.rel (%p485) target = $region84
        $region83: #{tpu_custom_call.1} parent=67 // pred_region
          %488 = dma.done [#allocation10], 3200
        $region84: #{tpu_custom_call.1} parent=67 // pred_fallthru
          _
        // Predicated region
        $region85: #{tpu_custom_call.1} parent=67 // pred_check
          %p489 = pneg %p161
        $region86: #{tpu_custom_call.1} parent=67 // pred_check_branch
          %491 = sbr.rel (%p489) target = $region88
        $region87: #{tpu_custom_call.1} parent=67 // pred_region
          %492 = dma.done [#allocation10], 1024
        $region88: #{tpu_custom_call.1} parent=67 // pred_fallthru
          _
        %s493 = sand.u32 %s35, 1
        %s494 = scalar_lea.sflag [#allocation13], %s493
        %s495 = sand.u32 %s195, 1
        %s496 = smul.addr %s495, 256
        %s497 = scalar_lea.vmem [#allocation12], %s496
        // Predicated region
        $region89: #{tpu_custom_call.1} parent=67 // pred_check
          %p498 = pneg %p208
        $region90: #{tpu_custom_call.1} parent=67 // pred_check_branch
          %500 = sbr.rel (%p498) target = $region92
        $region91: #{tpu_custom_call.1} parent=67 // pred_region
          %501 = dma.done %s494, 4096
        $region92: #{tpu_custom_call.1} parent=67 // pred_fallthru
          _
        // Predicated region
        $region93: #{tpu_custom_call.1} parent=67 // pred_check
          %p502 = pneg %p250
        $region94: #{tpu_custom_call.1} parent=67 // pred_check_branch
          %504 = sbr.rel (%p502) target = $region96
        $region95: #{tpu_custom_call.1} parent=67 // pred_region
          %505 = dma.done [#allocation13], 16
        $region96: #{tpu_custom_call.1} parent=67 // pred_fallthru
          _
        // Predicated region
        $region97: #{tpu_custom_call.1} parent=67 // pred_check
          %p506 = pneg %p271
        $region98: #{tpu_custom_call.1} parent=67 // pred_check_branch
          %508 = sbr.rel (%p506) target = $region100
        $region99: #{tpu_custom_call.1} parent=67 // pred_region
          %509 = dma.done [#allocation16], 16
        $region100: #{tpu_custom_call.1} parent=67 // pred_fallthru
          _
        %s510 = sand.u32 %s43, 1
        %s511 = scalar_lea.sflag [#allocation4], %s510
        %s512 = sand.u32 %s43, 1
        %s513 = smul.addr %s512, 256
        %s514 = scalar_lea.vmem [#allocation3], %s513
        %p515 = pneg %p56
        %p516 = pneg %p53
        %p517 = pneg %p77
        %p518 = pneg %p74
        %p519 = pneg %p98
        %p520 = pneg %p95
        %p521 = pneg %p119
        %p522 = pneg %p116
        %p523 = pneg %p140
        %p524 = pneg %p137
        %p525 = pneg %p161
        %p526 = pneg %p158
        %p527 = pneg %p182
        %p528 = pneg %p179
        %s529 = sand.u32 %s35, 1
        %s530 = scalar_lea.sflag [#allocation13], %s529
        %s531 = sand.u32 %s195, 1
        %s532 = smul.addr %s531, 256
        %s533 = scalar_lea.vmem [#allocation12], %s532
        %p534 = pneg %p208
        %p535 = pneg %p205
        %p536 = pneg %p229
        %p537 = pneg %p226
        %p538 = pneg %p250
        %p539 = pneg %p247
        %p540 = pneg %p271
        %p541 = pneg %p268
        %p542 = pneg %p292
        %p543 = pneg %p289
        %p544 = pneg %p318
        %p545 = pneg %p315
        %s546 = sand.u32 %s305, 1
        %s547 = scalar_lea.sflag [#allocation5], %s546
        %s548 = sand.u32 %s305, 1
        %s549 = smul.addr %s548, 256
        %s550 = scalar_lea.vmem [#allocation17], %s549
        %v552 = vld [vmem:[%s472] sm:$0xff]
        %v553 = vld [vmem:[%s472 + $0x8] sm:$0xff]
        %v554 = vld [vmem:[%s472 + $0x10] sm:$0xff]
        %v555 = vld [vmem:[%s472 + $0x18] sm:$0xff]
        %v556 = vld [vmem:[%s472 + $0x20] sm:$0xff]
        %v557 = vld [vmem:[%s472 + $0x28] sm:$0xff]
        %v558 = vld [vmem:[%s472 + $0x30] sm:$0xff]
        %v559 = vld [vmem:[%s472 + $0x38] sm:$0xff]
        %v560 = vld [vmem:[%s472 + $0x40] sm:$0xff]
        %v561 = vld [vmem:[%s472 + $0x48] sm:$0xff]
        %v562 = vld [vmem:[%s472 + $0x50] sm:$0xff]
        %v563 = vld [vmem:[%s472 + $0x58] sm:$0xff]
        %v564 = vld [vmem:[%s472 + $0x60] sm:$0xff]
        %v565 = vld [vmem:[%s472 + $0x68] sm:$0xff]
        %v566 = vld [vmem:[%s472 + $0x70] sm:$0xff]
        %v567 = vld [vmem:[%s472 + $0x78] sm:$0xff]
        %v568 = vld [vmem:[%s472 + $0x80] sm:$0xff]
        %v569 = vld [vmem:[%s472 + $0x88] sm:$0xff]
        %v570 = vld [vmem:[%s472 + $0x90] sm:$0xff]
        %v571 = vld [vmem:[%s472 + $0x98] sm:$0xff]
        %v572 = vld [vmem:[%s472 + $0xa0] sm:$0xff]
        %v573 = vld [vmem:[%s472 + $0xa8] sm:$0xff]
        %v574 = vld [vmem:[%s472 + $0xb0] sm:$0xff]
        %v575 = vld [vmem:[%s472 + $0xb8] sm:$0xff]
        %v576 = vld [vmem:[%s472 + $0xc0] sm:$0xff]
        %v577 = vld [vmem:[%s472 + $0xc8] sm:$0xff]
        %v578 = vld [vmem:[%s472 + $0xd0] sm:$0xff]
        %v579 = vld [vmem:[%s472 + $0xd8] sm:$0xff]
        %v580 = vld [vmem:[%s472 + $0xe0] sm:$0xff]
        %v581 = vld [vmem:[%s472 + $0xe8] sm:$0xff]
        %v582 = vld [vmem:[%s472 + $0xf0] sm:$0xff]
        %v583 = vld [vmem:[%s472 + $0xf8] sm:$0xff]
        %v584 = vld [vmem:[#allocation6] sm:$0xff]
        %v585 = vld [vmem:[#allocation6 + $0x8] sm:$0xff]
        %v588 = vlaneseq
        %v589 = vshrl.u32 %v588, 7
        %v590 = vsub.s32 0, %v589
        %v591 = vrot.slane %v584, %v590
        %v592 = vlaneseq
        %v593 = vshrl.u32 %v592, 7
        %v594 = vsub.s32 1, %v593
        %v595 = vrot.slane %v584, %v594
        %v596 = vlaneseq
        %v597 = vshrl.u32 %v596, 7
        %v598 = vsub.s32 2, %v597
        %v599 = vrot.slane %v584, %v598
        %v600 = vlaneseq
        %v601 = vshrl.u32 %v600, 7
        %v602 = vsub.s32 3, %v601
        %v603 = vrot.slane %v584, %v602
        %v604 = vlaneseq
        %v605 = vshrl.u32 %v604, 7
        %v606 = vsub.s32 4, %v605
        %v607 = vrot.slane %v584, %v606
        %v608 = vlaneseq
        %v609 = vshrl.u32 %v608, 7
        %v610 = vsub.s32 5, %v609
        %v611 = vrot.slane %v584, %v610
        %v612 = vlaneseq
        %v613 = vshrl.u32 %v612, 7
        %v614 = vsub.s32 6, %v613
        %v615 = vrot.slane %v584, %v614
        %v616 = vlaneseq
        %v617 = vshrl.u32 %v616, 7
        %v618 = vsub.s32 7, %v617
        %v619 = vrot.slane %v584, %v618
        %v620 = vlaneseq
        %v621 = vshrl.u32 %v620, 7
        %v622 = vsub.s32 0, %v621
        %v623 = vrot.slane %v585, %v622
        %v624 = vlaneseq
        %v625 = vshrl.u32 %v624, 7
        %v626 = vsub.s32 1, %v625
        %v627 = vrot.slane %v585, %v626
        %v628 = vlaneseq
        %v629 = vshrl.u32 %v628, 7
        %v630 = vsub.s32 2, %v629
        %v631 = vrot.slane %v585, %v630
        %v632 = vlaneseq
        %v633 = vshrl.u32 %v632, 7
        %v634 = vsub.s32 3, %v633
        %v635 = vrot.slane %v585, %v634
        %v636 = vlaneseq
        %v637 = vshrl.u32 %v636, 7
        %v638 = vsub.s32 4, %v637
        %v639 = vrot.slane %v585, %v638
        %v640 = vlaneseq
        %v641 = vshrl.u32 %v640, 7
        %v642 = vsub.s32 5, %v641
        %v643 = vrot.slane %v585, %v642
        %v644 = vlaneseq
        %v645 = vshrl.u32 %v644, 7
        %v646 = vsub.s32 6, %v645
        %v647 = vrot.slane %v585, %v646
        %v648 = vlaneseq
        %v649 = vshrl.u32 %v648, 7
        %v650 = vsub.s32 7, %v649
        %v651 = vrot.slane %v585, %v650
        %v668 = vmul.f32 %v552, %v591
        %v669 = vmul.f32 %v553, %v595
        %v670 = vmul.f32 %v554, %v599
        %v671 = vmul.f32 %v555, %v603
        %v672 = vmul.f32 %v556, %v607
        %v673 = vmul.f32 %v557, %v611
        %v674 = vmul.f32 %v558, %v615
        %v675 = vmul.f32 %v559, %v619
        %v676 = vmul.f32 %v560, %v623
        %v677 = vmul.f32 %v561, %v627
        %v678 = vmul.f32 %v562, %v631
        %v679 = vmul.f32 %v563, %v635
        %v680 = vmul.f32 %v564, %v639
        %v681 = vmul.f32 %v565, %v643
        %v682 = vmul.f32 %v566, %v647
        %v683 = vmul.f32 %v567, %v651
        %v684 = vmul.f32 %v568, %v591
        %v685 = vmul.f32 %v569, %v595
        %v686 = vmul.f32 %v570, %v599
        %v687 = vmul.f32 %v571, %v603
        %v688 = vmul.f32 %v572, %v607
        %v689 = vmul.f32 %v573, %v611
        %v690 = vmul.f32 %v574, %v615
        %v691 = vmul.f32 %v575, %v619
        %v692 = vmul.f32 %v576, %v623
        %v693 = vmul.f32 %v577, %v627
        %v694 = vmul.f32 %v578, %v631
        %v695 = vmul.f32 %v579, %v635
        %v696 = vmul.f32 %v580, %v639
        %v697 = vmul.f32 %v581, %v643
        %v698 = vmul.f32 %v582, %v647
        %v699 = vmul.f32 %v583, %v651
        %v700 = vld [vmem:[#allocation8] sm:$0xff]
        %v701 = vld [vmem:[#allocation8 + $0x8] sm:$0xff]
        %v704 = vlaneseq
        %v705 = vshrl.u32 %v704, 7
        %v706 = vsub.s32 0, %v705
        %v707 = vrot.slane %v700, %v706
        %v708 = vlaneseq
        %v709 = vshrl.u32 %v708, 7
        %v710 = vsub.s32 1, %v709
        %v711 = vrot.slane %v700, %v710
        %v712 = vlaneseq
        %v713 = vshrl.u32 %v712, 7
        %v714 = vsub.s32 2, %v713
        %v715 = vrot.slane %v700, %v714
        %v716 = vlaneseq
        %v717 = vshrl.u32 %v716, 7
        %v718 = vsub.s32 3, %v717
        %v719 = vrot.slane %v700, %v718
        %v720 = vlaneseq
        %v721 = vshrl.u32 %v720, 7
        %v722 = vsub.s32 4, %v721
        %v723 = vrot.slane %v700, %v722
        %v724 = vlaneseq
        %v725 = vshrl.u32 %v724, 7
        %v726 = vsub.s32 5, %v725
        %v727 = vrot.slane %v700, %v726
        %v728 = vlaneseq
        %v729 = vshrl.u32 %v728, 7
        %v730 = vsub.s32 6, %v729
        %v731 = vrot.slane %v700, %v730
        %v732 = vlaneseq
        %v733 = vshrl.u32 %v732, 7
        %v734 = vsub.s32 7, %v733
        %v735 = vrot.slane %v700, %v734
        %v736 = vlaneseq
        %v737 = vshrl.u32 %v736, 7
        %v738 = vsub.s32 0, %v737
        %v739 = vrot.slane %v701, %v738
        %v740 = vlaneseq
        %v741 = vshrl.u32 %v740, 7
        %v742 = vsub.s32 1, %v741
        %v743 = vrot.slane %v701, %v742
        %v744 = vlaneseq
        %v745 = vshrl.u32 %v744, 7
        %v746 = vsub.s32 2, %v745
        %v747 = vrot.slane %v701, %v746
        %v748 = vlaneseq
        %v749 = vshrl.u32 %v748, 7
        %v750 = vsub.s32 3, %v749
        %v751 = vrot.slane %v701, %v750
        %v752 = vlaneseq
        %v753 = vshrl.u32 %v752, 7
        %v754 = vsub.s32 4, %v753
        %v755 = vrot.slane %v701, %v754
        %v756 = vlaneseq
        %v757 = vshrl.u32 %v756, 7
        %v758 = vsub.s32 5, %v757
        %v759 = vrot.slane %v701, %v758
        %v760 = vlaneseq
        %v761 = vshrl.u32 %v760, 7
        %v762 = vsub.s32 6, %v761
        %v763 = vrot.slane %v701, %v762
        %v764 = vlaneseq
        %v765 = vshrl.u32 %v764, 7
        %v766 = vsub.s32 7, %v765
        %v767 = vrot.slane %v701, %v766
        %v784 = vadd.f32 %v668, %v707
        %v785 = vadd.f32 %v669, %v711
        %v786 = vadd.f32 %v670, %v715
        %v787 = vadd.f32 %v671, %v719
        %v788 = vadd.f32 %v672, %v723
        %v789 = vadd.f32 %v673, %v727
        %v790 = vadd.f32 %v674, %v731
        %v791 = vadd.f32 %v675, %v735
        %v792 = vadd.f32 %v676, %v739
        %v793 = vadd.f32 %v677, %v743
        %v794 = vadd.f32 %v678, %v747
        %v795 = vadd.f32 %v679, %v751
        %v796 = vadd.f32 %v680, %v755
        %v797 = vadd.f32 %v681, %v759
        %v798 = vadd.f32 %v682, %v763
        %v799 = vadd.f32 %v683, %v767
        %v800 = vadd.f32 %v684, %v707
        %v801 = vadd.f32 %v685, %v711
        %v802 = vadd.f32 %v686, %v715
        %v803 = vadd.f32 %v687, %v719
        %v804 = vadd.f32 %v688, %v723
        %v805 = vadd.f32 %v689, %v727
        %v806 = vadd.f32 %v690, %v731
        %v807 = vadd.f32 %v691, %v735
        %v808 = vadd.f32 %v692, %v739
        %v809 = vadd.f32 %v693, %v743
        %v810 = vadd.f32 %v694, %v747
        %v811 = vadd.f32 %v695, %v751
        %v812 = vadd.f32 %v696, %v755
        %v813 = vadd.f32 %v697, %v759
        %v814 = vadd.f32 %v698, %v763
        %v815 = vadd.f32 %v699, %v767
        %v816 = vpack.c.bf16 %v800, %v784
        %v817 = vpack.c.bf16 %v801, %v785
        %v818 = vpack.c.bf16 %v802, %v786
        %v819 = vpack.c.bf16 %v803, %v787
        %v820 = vpack.c.bf16 %v804, %v788
        %v821 = vpack.c.bf16 %v805, %v789
        %v822 = vpack.c.bf16 %v806, %v790
        %v823 = vpack.c.bf16 %v807, %v791
        %v824 = vpack.c.bf16 %v808, %v792
        %v825 = vpack.c.bf16 %v809, %v793
        %v826 = vpack.c.bf16 %v810, %v794
        %v827 = vpack.c.bf16 %v811, %v795
        %v828 = vpack.c.bf16 %v812, %v796
        %v829 = vpack.c.bf16 %v813, %v797
        %v830 = vpack.c.bf16 %v814, %v798
        %v831 = vpack.c.bf16 %v815, %v799
        %v832 = vld [vmem:[%s3] sm:$0xf]
        %v833 = vld [vmem:[%s3 + $0x4] sm:$0xf]
        %v834 = vld [vmem:[%s3 + $0x8] sm:$0xf]
        %v835 = vld [vmem:[%s3 + $0xc] sm:$0xf]
        %v836 = vld [vmem:[%s3 + $0x10] sm:$0xf]
        %v842 = vunpack.c.l.b16 %v832
        %v843 = vunpack.c.l.b16 %v833
        %v844 = vunpack.c.l.b16 %v834
        %v845 = vunpack.c.l.b16 %v835
        %v846 = vunpack.c.l.b16 %v836
        %v847 = vpack.c.b16 %v843, %v842
        %v848 = vpack.c.b16 %v845, %v844
        %v849 = vpack.c.b16 %v846, %v846
        %vm850 = vcmask 130048
        %v852 = vsel %vm850, %v847, 0
        %v855 = vsel %vm850, %v848, 0
        %v858 = vsel %vm850, %v849, 0
        %860 = vmatprep.subr.bf16.mxu0 0
        %861 = vmatpush1.bf16.msra.mxu0 0
        %862 = vmatprep.subr.bf16.mxu0 0
        %863 = vmatpush1.bf16.msra.mxu0 0
        %864 = vmatprep.subr.bf16.mxu0 0
        %865 = vmatpush1.bf16.msra.mxu0 0
        %866 = vmatprep.subr.bf16.mxu0 0
        %867 = vmatpush1.bf16.msra.mxu0 0
        %868 = vmatprep.subr.bf16.mxu0 0
        %869 = vmatpush1.bf16.msra.mxu0 0
        %870 = vmatprep.subr.bf16.mxu0 0
        %871 = vmatpush1.bf16.msra.mxu0 0
        %872 = vmatprep.subr.bf16.mxu0 0
        %873 = vmatpush1.bf16.msra.mxu0 0
        %874 = vmatprep.subr.bf16.mxu0 %v817
        %875 = vmatpush1.bf16.msra.mxu0 %v816
        %876 = vmatprep.subr.bf16.mxu0 0
        %877 = vmatpush2.bf16.msra.mxu0 0
        %878 = vmatprep.subr.bf16.mxu0 0
        %879 = vmatpush2.bf16.msra.mxu0 0
        %880 = vmatprep.subr.bf16.mxu0 0
        %881 = vmatpush2.bf16.msra.mxu0 0
        %882 = vmatprep.subr.bf16.mxu0 0
        %883 = vmatpush2.bf16.msra.mxu0 0
        %884 = vmatprep.subr.bf16.mxu0 0
        %885 = vmatpush2.bf16.msra.mxu0 0
        %886 = vmatprep.subr.bf16.mxu0 0
        %887 = vmatpush2.bf16.msra.mxu0 0
        %888 = vmatprep.subr.bf16.mxu0 0
        %889 = vmatpush2.bf16.msra.mxu0 0
        %890 = vmatprep.subr.bf16.mxu0 0
        %891 = vmatpush2.bf16.msra.mxu0 0
        %892 = vmatprep.mubr.bf16.mxu0 0
        %893 = vmatmul.mubr.bf16.gmra.mxu0 %v852
        %v894 = vpop.f32.mrf.mxu0
        %v895 = vadd.f32 0.0, %v894
        %v896 = vpop.f32.mrf.mxu0
        %v897 = vadd.f32 0.0, %v896
        %v898 = vpop.f32.mrf.mxu0
        %v899 = vadd.f32 0.0, %v898
        %v900 = vpop.f32.mrf.mxu0
        %v901 = vadd.f32 0.0, %v900
        %902 = vmatprep.mubr.bf16.mxu0 0
        %903 = vmatmul.mubr.bf16.gmra.mxu0 %v855
        %v904 = vpop.f32.mrf.mxu0
        %v905 = vadd.f32 0.0, %v904
        %v906 = vpop.f32.mrf.mxu0
        %v907 = vadd.f32 0.0, %v906
        %v908 = vpop.f32.mrf.mxu0
        %v909 = vadd.f32 0.0, %v908
        %v910 = vpop.f32.mrf.mxu0
        %v911 = vadd.f32 0.0, %v910
        %912 = vmatprep.mubr.bf16.mxu0 0
        %913 = vmatmul.mubr.bf16.gmra.mxu0 %v858
        %v914 = vpop.f32.mrf.mxu0
        %v915 = vadd.f32 0.0, %v914
        %v916 = vpop.f32.mrf.mxu0
        %v917 = vadd.f32 0.0, %v916
        %v918 = vpop.f32.mrf.mxu0
        %v919 = vpop.f32.mrf.mxu0
        %920 = vdwg.mxu0
        %921 = vmatprep.subr.bf16.mxu0 0
        %922 = vmatpush1.bf16.msra.mxu0 0
        %923 = vmatprep.subr.bf16.mxu0 0
        %924 = vmatpush1.bf16.msra.mxu0 0
        %925 = vmatprep.subr.bf16.mxu0 0
        %926 = vmatpush1.bf16.msra.mxu0 0
        %927 = vmatprep.subr.bf16.mxu0 0
        %928 = vmatpush1.bf16.msra.mxu0 0
        %929 = vmatprep.subr.bf16.mxu0 0
        %930 = vmatpush1.bf16.msra.mxu0 0
        %931 = vmatprep.subr.bf16.mxu0 0
        %932 = vmatpush1.bf16.msra.mxu0 0
        %933 = vmatprep.subr.bf16.mxu0 0
        %934 = vmatpush1.bf16.msra.mxu0 0
        %935 = vmatprep.subr.bf16.mxu0 %v819
        %936 = vmatpush1.bf16.msra.mxu0 %v818
        %937 = vmatprep.subr.bf16.mxu0 0
        %938 = vmatpush2.bf16.msra.mxu0 0
        %939 = vmatprep.subr.bf16.mxu0 0
        %940 = vmatpush2.bf16.msra.mxu0 0
        %941 = vmatprep.subr.bf16.mxu0 0
        %942 = vmatpush2.bf16.msra.mxu0 0
        %943 = vmatprep.subr.bf16.mxu0 0
        %944 = vmatpush2.bf16.msra.mxu0 0
        %945 = vmatprep.subr.bf16.mxu0 0
        %946 = vmatpush2.bf16.msra.mxu0 0
        %947 = vmatprep.subr.bf16.mxu0 0
        %948 = vmatpush2.bf16.msra.mxu0 0
        %949 = vmatprep.subr.bf16.mxu0 0
        %950 = vmatpush2.bf16.msra.mxu0 0
        %951 = vmatprep.subr.bf16.mxu0 0
        %952 = vmatpush2.bf16.msra.mxu0 0
        %953 = vmatprep.mubr.bf16.mxu0 0
        %954 = vmatmul.mubr.bf16.gmra.mxu0 %v852
        %v955 = vpop.f32.mrf.mxu0
        %v956 = vadd.f32 0.0, %v955
        %v957 = vpop.f32.mrf.mxu0
        %v958 = vadd.f32 0.0, %v957
        %v959 = vpop.f32.mrf.mxu0
        %v960 = vadd.f32 0.0, %v959
        %v961 = vpop.f32.mrf.mxu0
        %v962 = vadd.f32 0.0, %v961
        %963 = vmatprep.mubr.bf16.mxu0 0
        %964 = vmatmul.mubr.bf16.gmra.mxu0 %v855
        %v965 = vpop.f32.mrf.mxu0
        %v966 = vadd.f32 0.0, %v965
        %v967 = vpop.f32.mrf.mxu0
        %v968 = vadd.f32 0.0, %v967
        %v969 = vpop.f32.mrf.mxu0
        %v970 = vadd.f32 0.0, %v969
        %v971 = vpop.f32.mrf.mxu0
        %v972 = vadd.f32 0.0, %v971
        %973 = vmatprep.mubr.bf16.mxu0 0
        %974 = vmatmul.mubr.bf16.gmra.mxu0 %v858
        %v975 = vpop.f32.mrf.mxu0
        %v976 = vadd.f32 0.0, %v975
        %v977 = vpop.f32.mrf.mxu0
        %v978 = vadd.f32 0.0, %v977
        %v979 = vpop.f32.mrf.mxu0
        %v980 = vpop.f32.mrf.mxu0
        %981 = vdwg.mxu0
        %982 = vmatprep.subr.bf16.mxu0 0
        %983 = vmatpush1.bf16.msra.mxu0 0
        %984 = vmatprep.subr.bf16.mxu0 0
        %985 = vmatpush1.bf16.msra.mxu0 0
        %986 = vmatprep.subr.bf16.mxu0 0
        %987 = vmatpush1.bf16.msra.mxu0 0
        %988 = vmatprep.subr.bf16.mxu0 0
        %989 = vmatpush1.bf16.msra.mxu0 0
        %990 = vmatprep.subr.bf16.mxu0 0
        %991 = vmatpush1.bf16.msra.mxu0 0
        %992 = vmatprep.subr.bf16.mxu0 0
        %993 = vmatpush1.bf16.msra.mxu0 0
        %994 = vmatprep.subr.bf16.mxu0 0
        %995 = vmatpush1.bf16.msra.mxu0 0
        %996 = vmatprep.subr.bf16.mxu0 %v821
        %997 = vmatpush1.bf16.msra.mxu0 %v820
        %998 = vmatprep.subr.bf16.mxu0 0
        %999 = vmatpush2.bf16.msra.mxu0 0
        %1000 = vmatprep.subr.bf16.mxu0 0
        %1001 = vmatpush2.bf16.msra.mxu0 0
        %1002 = vmatprep.subr.bf16.mxu0 0
        %1003 = vmatpush2.bf16.msra.mxu0 0
        %1004 = vmatprep.subr.bf16.mxu0 0
        %1005 = vmatpush2.bf16.msra.mxu0 0
        %1006 = vmatprep.subr.bf16.mxu0 0
        %1007 = vmatpush2.bf16.msra.mxu0 0
        %1008 = vmatprep.subr.bf16.mxu0 0
        %1009 = vmatpush2.bf16.msra.mxu0 0
        %1010 = vmatprep.subr.bf16.mxu0 0
        %1011 = vmatpush2.bf16.msra.mxu0 0
        %1012 = vmatprep.subr.bf16.mxu0 0
        %1013 = vmatpush2.bf16.msra.mxu0 0
        %1014 = vmatprep.mubr.bf16.mxu0 0
        %1015 = vmatmul.mubr.bf16.gmra.mxu0 %v852
        %v1016 = vpop.f32.mrf.mxu0
        %v1017 = vadd.f32 0.0, %v1016
        %v1018 = vpop.f32.mrf.mxu0
        %v1019 = vadd.f32 0.0, %v1018
        %v1020 = vpop.f32.mrf.mxu0
        %v1021 = vadd.f32 0.0, %v1020
        %v1022 = vpop.f32.mrf.mxu0
        %v1023 = vadd.f32 0.0, %v1022
        %1024 = vmatprep.mubr.bf16.mxu0 0
        %1025 = vmatmul.mubr.bf16.gmra.mxu0 %v855
        %v1026 = vpop.f32.mrf.mxu0
        %v1027 = vadd.f32 0.0, %v1026
        %v1028 = vpop.f32.mrf.mxu0
        %v1029 = vadd.f32 0.0, %v1028
        %v1030 = vpop.f32.mrf.mxu0
        %v1031 = vadd.f32 0.0, %v1030
        %v1032 = vpop.f32.mrf.mxu0
        %v1033 = vadd.f32 0.0, %v1032
        %1034 = vmatprep.mubr.bf16.mxu0 0
        %1035 = vmatmul.mubr.bf16.gmra.mxu0 %v858
        %v1036 = vpop.f32.mrf.mxu0
        %v1037 = vadd.f32 0.0, %v1036
        %v1038 = vpop.f32.mrf.mxu0
        %v1039 = vadd.f32 0.0, %v1038
        %v1040 = vpop.f32.mrf.mxu0
        %v1041 = vpop.f32.mrf.mxu0
        %1042 = vdwg.mxu0
        %1043 = vmatprep.subr.bf16.mxu0 0
        %1044 = vmatpush1.bf16.msra.mxu0 0
        %1045 = vmatprep.subr.bf16.mxu0 0
        %1046 = vmatpush1.bf16.msra.mxu0 0
        %1047 = vmatprep.subr.bf16.mxu0 0
        %1048 = vmatpush1.bf16.msra.mxu0 0
        %1049 = vmatprep.subr.bf16.mxu0 0
        %1050 = vmatpush1.bf16.msra.mxu0 0
        %1051 = vmatprep.subr.bf16.mxu0 0
        %1052 = vmatpush1.bf16.msra.mxu0 0
        %1053 = vmatprep.subr.bf16.mxu0 0
        %1054 = vmatpush1.bf16.msra.mxu0 0
        %1055 = vmatprep.subr.bf16.mxu0 0
        %1056 = vmatpush1.bf16.msra.mxu0 0
        %1057 = vmatprep.subr.bf16.mxu0 %v823
        %1058 = vmatpush1.bf16.msra.mxu0 %v822
        %1059 = vmatprep.subr.bf16.mxu0 0
        %1060 = vmatpush2.bf16.msra.mxu0 0
        %1061 = vmatprep.subr.bf16.mxu0 0
        %1062 = vmatpush2.bf16.msra.mxu0 0
        %1063 = vmatprep.subr.bf16.mxu0 0
        %1064 = vmatpush2.bf16.msra.mxu0 0
        %1065 = vmatprep.subr.bf16.mxu0 0
        %1066 = vmatpush2.bf16.msra.mxu0 0
        %1067 = vmatprep.subr.bf16.mxu0 0
        %1068 = vmatpush2.bf16.msra.mxu0 0
        %1069 = vmatprep.subr.bf16.mxu0 0
        %1070 = vmatpush2.bf16.msra.mxu0 0
        %1071 = vmatprep.subr.bf16.mxu0 0
        %1072 = vmatpush2.bf16.msra.mxu0 0
        %1073 = vmatprep.subr.bf16.mxu0 0
        %1074 = vmatpush2.bf16.msra.mxu0 0
        %1075 = vmatprep.mubr.bf16.mxu0 0
        %1076 = vmatmul.mubr.bf16.gmra.mxu0 %v852
        %v1077 = vpop.f32.mrf.mxu0
        %v1078 = vadd.f32 0.0, %v1077
        %v1079 = vpop.f32.mrf.mxu0
        %v1080 = vadd.f32 0.0, %v1079
        %v1081 = vpop.f32.mrf.mxu0
        %v1082 = vadd.f32 0.0, %v1081
        %v1083 = vpop.f32.mrf.mxu0
        %v1084 = vadd.f32 0.0, %v1083
        %1085 = vmatprep.mubr.bf16.mxu0 0
        %1086 = vmatmul.mubr.bf16.gmra.mxu0 %v855
        %v1087 = vpop.f32.mrf.mxu0
        %v1088 = vadd.f32 0.0, %v1087
        %v1089 = vpop.f32.mrf.mxu0
        %v1090 = vadd.f32 0.0, %v1089
        %v1091 = vpop.f32.mrf.mxu0
        %v1092 = vadd.f32 0.0, %v1091
        %v1093 = vpop.f32.mrf.mxu0
        %v1094 = vadd.f32 0.0, %v1093
        %1095 = vmatprep.mubr.bf16.mxu0 0
        %1096 = vmatmul.mubr.bf16.gmra.mxu0 %v858
        %v1097 = vpop.f32.mrf.mxu0
        %v1098 = vadd.f32 0.0, %v1097
        %v1099 = vpop.f32.mrf.mxu0
        %v1100 = vadd.f32 0.0, %v1099
        %v1101 = vpop.f32.mrf.mxu0
        %v1102 = vpop.f32.mrf.mxu0
        %1103 = vdwg.mxu0
        %1104 = vmatprep.subr.bf16.mxu0 0
        %1105 = vmatpush1.bf16.msra.mxu0 0
        %1106 = vmatprep.subr.bf16.mxu0 0
        %1107 = vmatpush1.bf16.msra.mxu0 0
        %1108 = vmatprep.subr.bf16.mxu0 0
        %1109 = vmatpush1.bf16.msra.mxu0 0
        %1110 = vmatprep.subr.bf16.mxu0 0
        %1111 = vmatpush1.bf16.msra.mxu0 0
        %1112 = vmatprep.subr.bf16.mxu0 0
        %1113 = vmatpush1.bf16.msra.mxu0 0
        %1114 = vmatprep.subr.bf16.mxu0 0
        %1115 = vmatpush1.bf16.msra.mxu0 0
        %1116 = vmatprep.subr.bf16.mxu0 0
        %1117 = vmatpush1.bf16.msra.mxu0 0
        %1118 = vmatprep.subr.bf16.mxu0 %v825
        %1119 = vmatpush1.bf16.msra.mxu0 %v824
        %1120 = vmatprep.subr.bf16.mxu0 0
        %1121 = vmatpush2.bf16.msra.mxu0 0
        %1122 = vmatprep.subr.bf16.mxu0 0
        %1123 = vmatpush2.bf16.msra.mxu0 0
        %1124 = vmatprep.subr.bf16.mxu0 0
        %1125 = vmatpush2.bf16.msra.mxu0 0
        %1126 = vmatprep.subr.bf16.mxu0 0
        %1127 = vmatpush2.bf16.msra.mxu0 0
        %1128 = vmatprep.subr.bf16.mxu0 0
        %1129 = vmatpush2.bf16.msra.mxu0 0
        %1130 = vmatprep.subr.bf16.mxu0 0
        %1131 = vmatpush2.bf16.msra.mxu0 0
        %1132 = vmatprep.subr.bf16.mxu0 0
        %1133 = vmatpush2.bf16.msra.mxu0 0
        %1134 = vmatprep.subr.bf16.mxu0 0
        %1135 = vmatpush2.bf16.msra.mxu0 0
        %1136 = vmatprep.mubr.bf16.mxu0 0
        %1137 = vmatmul.mubr.bf16.gmra.mxu0 %v852
        %v1138 = vpop.f32.mrf.mxu0
        %v1139 = vadd.f32 0.0, %v1138
        %v1140 = vpop.f32.mrf.mxu0
        %v1141 = vadd.f32 0.0, %v1140
        %v1142 = vpop.f32.mrf.mxu0
        %v1143 = vadd.f32 0.0, %v1142
        %v1144 = vpop.f32.mrf.mxu0
        %v1145 = vadd.f32 0.0, %v1144
        %1146 = vmatprep.mubr.bf16.mxu0 0
        %1147 = vmatmul.mubr.bf16.gmra.mxu0 %v855
        %v1148 = vpop.f32.mrf.mxu0
        %v1149 = vadd.f32 0.0, %v1148
        %v1150 = vpop.f32.mrf.mxu0
        %v1151 = vadd.f32 0.0, %v1150
        %v1152 = vpop.f32.mrf.mxu0
        %v1153 = vadd.f32 0.0, %v1152
        %v1154 = vpop.f32.mrf.mxu0
        %v1155 = vadd.f32 0.0, %v1154
        %1156 = vmatprep.mubr.bf16.mxu0 0
        %1157 = vmatmul.mubr.bf16.gmra.mxu0 %v858
        %v1158 = vpop.f32.mrf.mxu0
        %v1159 = vadd.f32 0.0, %v1158
        %v1160 = vpop.f32.mrf.mxu0
        %v1161 = vadd.f32 0.0, %v1160
        %v1162 = vpop.f32.mrf.mxu0
        %v1163 = vpop.f32.mrf.mxu0
        %1164 = vdwg.mxu0
        %1165 = vmatprep.subr.bf16.mxu0 0
        %1166 = vmatpush1.bf16.msra.mxu0 0
        %1167 = vmatprep.subr.bf16.mxu0 0
        %1168 = vmatpush1.bf16.msra.mxu0 0
        %1169 = vmatprep.subr.bf16.mxu0 0
        %1170 = vmatpush1.bf16.msra.mxu0 0
        %1171 = vmatprep.subr.bf16.mxu0 0
        %1172 = vmatpush1.bf16.msra.mxu0 0
        %1173 = vmatprep.subr.bf16.mxu0 0
        %1174 = vmatpush1.bf16.msra.mxu0 0
        %1175 = vmatprep.subr.bf16.mxu0 0
        %1176 = vmatpush1.bf16.msra.mxu0 0
        %1177 = vmatprep.subr.bf16.mxu0 0
        %1178 = vmatpush1.bf16.msra.mxu0 0
        %1179 = vmatprep.subr.bf16.mxu0 %v827
        %1180 = vmatpush1.bf16.msra.mxu0 %v826
        %1181 = vmatprep.subr.bf16.mxu0 0
        %1182 = vmatpush2.bf16.msra.mxu0 0
        %1183 = vmatprep.subr.bf16.mxu0 0
        %1184 = vmatpush2.bf16.msra.mxu0 0
        %1185 = vmatprep.subr.bf16.mxu0 0
        %1186 = vmatpush2.bf16.msra.mxu0 0
        %1187 = vmatprep.subr.bf16.mxu0 0
        %1188 = vmatpush2.bf16.msra.mxu0 0
        %1189 = vmatprep.subr.bf16.mxu0 0
        %1190 = vmatpush2.bf16.msra.mxu0 0
        %1191 = vmatprep.subr.bf16.mxu0 0
        %1192 = vmatpush2.bf16.msra.mxu0 0
        %1193 = vmatprep.subr.bf16.mxu0 0
        %1194 = vmatpush2.bf16.msra.mxu0 0
        %1195 = vmatprep.subr.bf16.mxu0 0
        %1196 = vmatpush2.bf16.msra.mxu0 0
        %1197 = vmatprep.mubr.bf16.mxu0 0
        %1198 = vmatmul.mubr.bf16.gmra.mxu0 %v852
        %v1199 = vpop.f32.mrf.mxu0
        %v1200 = vadd.f32 0.0, %v1199
        %v1201 = vpop.f32.mrf.mxu0
        %v1202 = vadd.f32 0.0, %v1201
        %v1203 = vpop.f32.mrf.mxu0
        %v1204 = vadd.f32 0.0, %v1203
        %v1205 = vpop.f32.mrf.mxu0
        %v1206 = vadd.f32 0.0, %v1205
        %1207 = vmatprep.mubr.bf16.mxu0 0
        %1208 = vmatmul.mubr.bf16.gmra.mxu0 %v855
        %v1209 = vpop.f32.mrf.mxu0
        %v1210 = vadd.f32 0.0, %v1209
        %v1211 = vpop.f32.mrf.mxu0
        %v1212 = vadd.f32 0.0, %v1211
        %v1213 = vpop.f32.mrf.mxu0
        %v1214 = vadd.f32 0.0, %v1213
        %v1215 = vpop.f32.mrf.mxu0
        %v1216 = vadd.f32 0.0, %v1215
        %1217 = vmatprep.mubr.bf16.mxu0 0
        %1218 = vmatmul.mubr.bf16.gmra.mxu0 %v858
        %v1219 = vpop.f32.mrf.mxu0
        %v1220 = vadd.f32 0.0, %v1219
        %v1221 = vpop.f32.mrf.mxu0
        %v1222 = vadd.f32 0.0, %v1221
        %v1223 = vpop.f32.mrf.mxu0
        %v1224 = vpop.f32.mrf.mxu0
        %1225 = vdwg.mxu0
        %1226 = vmatprep.subr.bf16.mxu0 0
        %1227 = vmatpush1.bf16.msra.mxu0 0
        %1228 = vmatprep.subr.bf16.mxu0 0
        %1229 = vmatpush1.bf16.msra.mxu0 0
        %1230 = vmatprep.subr.bf16.mxu0 0
        %1231 = vmatpush1.bf16.msra.mxu0 0
        %1232 = vmatprep.subr.bf16.mxu0 0
        %1233 = vmatpush1.bf16.msra.mxu0 0
        %1234 = vmatprep.subr.bf16.mxu0 0
        %1235 = vmatpush1.bf16.msra.mxu0 0
        %1236 = vmatprep.subr.bf16.mxu0 0
        %1237 = vmatpush1.bf16.msra.mxu0 0
        %1238 = vmatprep.subr.bf16.mxu0 0
        %1239 = vmatpush1.bf16.msra.mxu0 0
        %1240 = vmatprep.subr.bf16.mxu0 %v829
        %1241 = vmatpush1.bf16.msra.mxu0 %v828
        %1242 = vmatprep.subr.bf16.mxu0 0
        %1243 = vmatpush2.bf16.msra.mxu0 0
        %1244 = vmatprep.subr.bf16.mxu0 0
        %1245 = vmatpush2.bf16.msra.mxu0 0
        %1246 = vmatprep.subr.bf16.mxu0 0
        %1247 = vmatpush2.bf16.msra.mxu0 0
        %1248 = vmatprep.subr.bf16.mxu0 0
        %1249 = vmatpush2.bf16.msra.mxu0 0
        %1250 = vmatprep.subr.bf16.mxu0 0
        %1251 = vmatpush2.bf16.msra.mxu0 0
        %1252 = vmatprep.subr.bf16.mxu0 0
        %1253 = vmatpush2.bf16.msra.mxu0 0
        %1254 = vmatprep.subr.bf16.mxu0 0
        %1255 = vmatpush2.bf16.msra.mxu0 0
        %1256 = vmatprep.subr.bf16.mxu0 0
        %1257 = vmatpush2.bf16.msra.mxu0 0
        %1258 = vmatprep.mubr.bf16.mxu0 0
        %1259 = vmatmul.mubr.bf16.gmra.mxu0 %v852
        %v1260 = vpop.f32.mrf.mxu0
        %v1261 = vadd.f32 0.0, %v1260
        %v1262 = vpop.f32.mrf.mxu0
        %v1263 = vadd.f32 0.0, %v1262
        %v1264 = vpop.f32.mrf.mxu0
        %v1265 = vadd.f32 0.0, %v1264
        %v1266 = vpop.f32.mrf.mxu0
        %v1267 = vadd.f32 0.0, %v1266
        %1268 = vmatprep.mubr.bf16.mxu0 0
        %1269 = vmatmul.mubr.bf16.gmra.mxu0 %v855
        %v1270 = vpop.f32.mrf.mxu0
        %v1271 = vadd.f32 0.0, %v1270
        %v1272 = vpop.f32.mrf.mxu0
        %v1273 = vadd.f32 0.0, %v1272
        %v1274 = vpop.f32.mrf.mxu0
        %v1275 = vadd.f32 0.0, %v1274
        %v1276 = vpop.f32.mrf.mxu0
        %v1277 = vadd.f32 0.0, %v1276
        %1278 = vmatprep.mubr.bf16.mxu0 0
        %1279 = vmatmul.mubr.bf16.gmra.mxu0 %v858
        %v1280 = vpop.f32.mrf.mxu0
        %v1281 = vadd.f32 0.0, %v1280
        %v1282 = vpop.f32.mrf.mxu0
        %v1283 = vadd.f32 0.0, %v1282
        %v1284 = vpop.f32.mrf.mxu0
        %v1285 = vpop.f32.mrf.mxu0
        %1286 = vdwg.mxu0
        %1287 = vmatprep.subr.bf16.mxu0 0
        %1288 = vmatpush1.bf16.msra.mxu0 0
        %1289 = vmatprep.subr.bf16.mxu0 0
        %1290 = vmatpush1.bf16.msra.mxu0 0
        %1291 = vmatprep.subr.bf16.mxu0 0
        %1292 = vmatpush1.bf16.msra.mxu0 0
        %1293 = vmatprep.subr.bf16.mxu0 0
        %1294 = vmatpush1.bf16.msra.mxu0 0
        %1295 = vmatprep.subr.bf16.mxu0 0
        %1296 = vmatpush1.bf16.msra.mxu0 0
        %1297 = vmatprep.subr.bf16.mxu0 0
        %1298 = vmatpush1.bf16.msra.mxu0 0
        %1299 = vmatprep.subr.bf16.mxu0 0
        %1300 = vmatpush1.bf16.msra.mxu0 0
        %1301 = vmatprep.subr.bf16.mxu0 %v831
        %1302 = vmatpush1.bf16.msra.mxu0 %v830
        %1303 = vmatprep.subr.bf16.mxu0 0
        %1304 = vmatpush2.bf16.msra.mxu0 0
        %1305 = vmatprep.subr.bf16.mxu0 0
        %1306 = vmatpush2.bf16.msra.mxu0 0
        %1307 = vmatprep.subr.bf16.mxu0 0
        %1308 = vmatpush2.bf16.msra.mxu0 0
        %1309 = vmatprep.subr.bf16.mxu0 0
        %1310 = vmatpush2.bf16.msra.mxu0 0
        %1311 = vmatprep.subr.bf16.mxu0 0
        %1312 = vmatpush2.bf16.msra.mxu0 0
        %1313 = vmatprep.subr.bf16.mxu0 0
        %1314 = vmatpush2.bf16.msra.mxu0 0
        %1315 = vmatprep.subr.bf16.mxu0 0
        %1316 = vmatpush2.bf16.msra.mxu0 0
        %1317 = vmatprep.subr.bf16.mxu0 0
        %1318 = vmatpush2.bf16.msra.mxu0 0
        %1319 = vmatprep.mubr.bf16.mxu0 0
        %1320 = vmatmul.mubr.bf16.gmra.mxu0 %v852
        %v1321 = vpop.f32.mrf.mxu0
        %v1322 = vadd.f32 0.0, %v1321
        %v1323 = vpop.f32.mrf.mxu0
        %v1324 = vadd.f32 0.0, %v1323
        %v1325 = vpop.f32.mrf.mxu0
        %v1326 = vadd.f32 0.0, %v1325
        %v1327 = vpop.f32.mrf.mxu0
        %v1328 = vadd.f32 0.0, %v1327
        %1329 = vmatprep.mubr.bf16.mxu0 0
        %1330 = vmatmul.mubr.bf16.gmra.mxu0 %v855
        %v1331 = vpop.f32.mrf.mxu0
        %v1332 = vadd.f32 0.0, %v1331
        %v1333 = vpop.f32.mrf.mxu0
        %v1334 = vadd.f32 0.0, %v1333
        %v1335 = vpop.f32.mrf.mxu0
        %v1336 = vadd.f32 0.0, %v1335
        %v1337 = vpop.f32.mrf.mxu0
        %v1338 = vadd.f32 0.0, %v1337
        %1339 = vmatprep.mubr.bf16.mxu0 0
        %1340 = vmatmul.mubr.bf16.gmra.mxu0 %v858
        %v1341 = vpop.f32.mrf.mxu0
        %v1342 = vadd.f32 0.0, %v1341
        %v1343 = vpop.f32.mrf.mxu0
        %v1344 = vadd.f32 0.0, %v1343
        %v1345 = vpop.f32.mrf.mxu0
        %v1346 = vpop.f32.mrf.mxu0
        %1347 = vdwg.mxu0
        %v1348 = vld [vmem:[#allocation9 + $0x10] sm:$0xff]
        %v1349 = vmul.f32 %v1348, %v895
        %v1350 = vld [vmem:[#allocation9 + $0x38] sm:$0xff]
        %v1351 = vmul.f32 %v1350, %v899
        %v1352 = vadd.f32 %v1349, %v1351
        %v1353 = vld [vmem:[#allocation9 + $0x60] sm:$0xff]
        %v1354 = vmul.f32 %v1353, %v905
        %v1355 = vadd.f32 %v1352, %v1354
        %v1356 = vld [vmem:[#allocation9 + $0x88] sm:$0xff]
        %v1357 = vmul.f32 %v1356, %v909
        %v1358 = vadd.f32 %v1355, %v1357
        %v1359 = vld [vmem:[#allocation9 + $0xb0] sm:$0xff]
        %v1360 = vmul.f32 %v1359, %v915
        %v1361 = vadd.f32 %v1358, %v1360
        %v1362 = vld [vmem:[#allocation9 + $0x18] sm:$0xff]
        %v1363 = vmul.f32 %v1362, %v897
        %v1364 = vadd.f32 %v1361, %v1363
        %v1365 = vld [vmem:[#allocation9 + $0x40] sm:$0xff]
        %v1366 = vmul.f32 %v1365, %v901
        %v1367 = vadd.f32 %v1364, %v1366
        %v1368 = vld [vmem:[#allocation9 + $0x68] sm:$0xff]
        %v1369 = vmul.f32 %v1368, %v907
        %v1370 = vadd.f32 %v1367, %v1369
        %v1371 = vld [vmem:[#allocation9 + $0x90] sm:$0xff]
        %v1372 = vmul.f32 %v1371, %v911
        %v1373 = vadd.f32 %v1370, %v1372
        %v1374 = vld [vmem:[#allocation9 + $0xb8] sm:$0xff]
        %v1375 = vmul.f32 %v1374, %v917
        %v1376 = vadd.f32 %v1373, %v1375
        %v1377 = vld [vmem:[#allocation9 + $0x20] sm:$0xff]
        %v1378 = vmul.f32 %v1377, %v956
        %v1379 = vadd.f32 %v1376, %v1378
        %v1380 = vld [vmem:[#allocation9 + $0x48] sm:$0xff]
        %v1381 = vmul.f32 %v1380, %v960
        %v1382 = vadd.f32 %v1379, %v1381
        %v1383 = vld [vmem:[#allocation9 + $0x70] sm:$0xff]
        %v1384 = vmul.f32 %v1383, %v966
        %v1385 = vadd.f32 %v1382, %v1384
        %v1386 = vld [vmem:[#allocation9 + $0x98] sm:$0xff]
        %v1387 = vmul.f32 %v1386, %v970
        %v1388 = vadd.f32 %v1385, %v1387
        %v1389 = vld [vmem:[#allocation9 + $0xc0] sm:$0xff]
        %v1390 = vmul.f32 %v1389, %v976
        %v1391 = vadd.f32 %v1388, %v1390
        %v1392 = vmax.f32 %v1391, 0.0
        %1393 = vst [vmem:[#allocation2] sm:$0xff] %v1392
        %v1394 = vld [vmem:[#allocation9] sm:$0xff]
        %v1395 = vmul.f32 %v1394, %v895
        %v1396 = vld [vmem:[#allocation9 + $0x28] sm:$0xff]
        %v1397 = vmul.f32 %v1396, %v899
        %v1398 = vadd.f32 %v1395, %v1397
        %v1399 = vld [vmem:[#allocation9 + $0x50] sm:$0xff]
        %v1400 = vmul.f32 %v1399, %v905
        %v1401 = vadd.f32 %v1398, %v1400
        %v1402 = vld [vmem:[#allocation9 + $0x78] sm:$0xff]
        %v1403 = vmul.f32 %v1402, %v909
        %v1404 = vadd.f32 %v1401, %v1403
        %v1405 = vld [vmem:[#allocation9 + $0xa0] sm:$0xff]
        %v1406 = vmul.f32 %v1405, %v915
        %v1407 = vadd.f32 %v1404, %v1406
        %v1408 = vld [vmem:[#allocation9 + $0x8] sm:$0xff]
        %v1409 = vmul.f32 %v1408, %v897
        %v1410 = vadd.f32 %v1407, %v1409
        %v1411 = vld [vmem:[#allocation9 + $0x30] sm:$0xff]
        %v1412 = vmul.f32 %v1411, %v901
        %v1413 = vadd.f32 %v1410, %v1412
        %v1414 = vld [vmem:[#allocation9 + $0x58] sm:$0xff]
        %v1415 = vmul.f32 %v1414, %v907
        %v1416 = vadd.f32 %v1413, %v1415
        %v1417 = vld [vmem:[#allocation9 + $0x80] sm:$0xff]
        %v1418 = vmul.f32 %v1417, %v911
        %v1419 = vadd.f32 %v1416, %v1418
        %v1420 = vld [vmem:[#allocation9 + $0xa8] sm:$0xff]
        %v1421 = vmul.f32 %v1420, %v917
        %v1422 = vadd.f32 %v1419, %v1421
        %v1423 = vld [vmem:[#allocation9 + $0x10] sm:$0xff]
        %v1424 = vmul.f32 %v1423, %v956
        %v1425 = vadd.f32 %v1422, %v1424
        %v1426 = vld [vmem:[#allocation9 + $0x38] sm:$0xff]
        %v1427 = vmul.f32 %v1426, %v960
        %v1428 = vadd.f32 %v1425, %v1427
        %v1429 = vld [vmem:[#allocation9 + $0x60] sm:$0xff]
        %v1430 = vmul.f32 %v1429, %v966
        %v1431 = vadd.f32 %v1428, %v1430
        %v1432 = vld [vmem:[#allocation9 + $0x88] sm:$0xff]
        %v1433 = vmul.f32 %v1432, %v970
        %v1434 = vadd.f32 %v1431, %v1433
        %v1435 = vld [vmem:[#allocation9 + $0xb0] sm:$0xff]
        %v1436 = vmul.f32 %v1435, %v976
        %v1437 = vadd.f32 %v1434, %v1436
        %v1438 = vld [vmem:[#allocation9 + $0x18] sm:$0xff]
        %v1439 = vmul.f32 %v1438, %v958
        %v1440 = vadd.f32 %v1437, %v1439
        %v1441 = vld [vmem:[#allocation9 + $0x40] sm:$0xff]
        %v1442 = vmul.f32 %v1441, %v962
        %v1443 = vadd.f32 %v1440, %v1442
        %v1444 = vld [vmem:[#allocation9 + $0x68] sm:$0xff]
        %v1445 = vmul.f32 %v1444, %v968
        %v1446 = vadd.f32 %v1443, %v1445
        %v1447 = vld [vmem:[#allocation9 + $0x90] sm:$0xff]
        %v1448 = vmul.f32 %v1447, %v972
        %v1449 = vadd.f32 %v1446, %v1448
        %v1450 = vld [vmem:[#allocation9 + $0xb8] sm:$0xff]
        %v1451 = vmul.f32 %v1450, %v978
        %v1452 = vadd.f32 %v1449, %v1451
        %v1453 = vld [vmem:[#allocation9 + $0x20] sm:$0xff]
        %v1454 = vmul.f32 %v1453, %v1017
        %v1455 = vadd.f32 %v1452, %v1454
        %v1456 = vld [vmem:[#allocation9 + $0x48] sm:$0xff]
        %v1457 = vmul.f32 %v1456, %v1021
        %v1458 = vadd.f32 %v1455, %v1457
        %v1459 = vld [vmem:[#allocation9 + $0x70] sm:$0xff]
        %v1460 = vmul.f32 %v1459, %v1027
        %v1461 = vadd.f32 %v1458, %v1460
        %v1462 = vld [vmem:[#allocation9 + $0x98] sm:$0xff]
        %v1463 = vmul.f32 %v1462, %v1031
        %v1464 = vadd.f32 %v1461, %v1463
        %v1465 = vld [vmem:[#allocation9 + $0xc0] sm:$0xff]
        %v1466 = vmul.f32 %v1465, %v1037
        %v1467 = vadd.f32 %v1464, %v1466
        %v1468 = vmax.f32 %v1467, 0.0
        %1469 = vst [vmem:[#allocation2 + $0x8] sm:$0xff] %v1468
        %v1470 = vld [vmem:[#allocation9] sm:$0xff]
        %v1471 = vmul.f32 %v1470, %v956
        %v1472 = vld [vmem:[#allocation9 + $0x28] sm:$0xff]
        %v1473 = vmul.f32 %v1472, %v960
        %v1474 = vadd.f32 %v1471, %v1473
        %v1475 = vld [vmem:[#allocation9 + $0x50] sm:$0xff]
        %v1476 = vmul.f32 %v1475, %v966
        %v1477 = vadd.f32 %v1474, %v1476
        %v1478 = vld [vmem:[#allocation9 + $0x78] sm:$0xff]
        %v1479 = vmul.f32 %v1478, %v970
        %v1480 = vadd.f32 %v1477, %v1479
        %v1481 = vld [vmem:[#allocation9 + $0xa0] sm:$0xff]
        %v1482 = vmul.f32 %v1481, %v976
        %v1483 = vadd.f32 %v1480, %v1482
        %v1484 = vld [vmem:[#allocation9 + $0x8] sm:$0xff]
        %v1485 = vmul.f32 %v1484, %v958
        %v1486 = vadd.f32 %v1483, %v1485
        %v1487 = vld [vmem:[#allocation9 + $0x30] sm:$0xff]
        %v1488 = vmul.f32 %v1487, %v962
        %v1489 = vadd.f32 %v1486, %v1488
        %v1490 = vld [vmem:[#allocation9 + $0x58] sm:$0xff]
        %v1491 = vmul.f32 %v1490, %v968
        %v1492 = vadd.f32 %v1489, %v1491
        %v1493 = vld [vmem:[#allocation9 + $0x80] sm:$0xff]
        %v1494 = vmul.f32 %v1493, %v972
        %v1495 = vadd.f32 %v1492, %v1494
        %v1496 = vld [vmem:[#allocation9 + $0xa8] sm:$0xff]
        %v1497 = vmul.f32 %v1496, %v978
        %v1498 = vadd.f32 %v1495, %v1497
        %v1499 = vld [vmem:[#allocation9 + $0x10] sm:$0xff]
        %v1500 = vmul.f32 %v1499, %v1017
        %v1501 = vadd.f32 %v1498, %v1500
        %v1502 = vld [vmem:[#allocation9 + $0x38] sm:$0xff]
        %v1503 = vmul.f32 %v1502, %v1021
        %v1504 = vadd.f32 %v1501, %v1503
        %v1505 = vld [vmem:[#allocation9 + $0x60] sm:$0xff]
        %v1506 = vmul.f32 %v1505, %v1027
        %v1507 = vadd.f32 %v1504, %v1506
        %v1508 = vld [vmem:[#allocation9 + $0x88] sm:$0xff]
        %v1509 = vmul.f32 %v1508, %v1031
        %v1510 = vadd.f32 %v1507, %v1509
        %v1511 = vld [vmem:[#allocation9 + $0xb0] sm:$0xff]
        %v1512 = vmul.f32 %v1511, %v1037
        %v1513 = vadd.f32 %v1510, %v1512
        %v1514 = vld [vmem:[#allocation9 + $0x18] sm:$0xff]
        %v1515 = vmul.f32 %v1514, %v1019
        %v1516 = vadd.f32 %v1513, %v1515
        %v1517 = vld [vmem:[#allocation9 + $0x40] sm:$0xff]
        %v1518 = vmul.f32 %v1517, %v1023
        %v1519 = vadd.f32 %v1516, %v1518
        %v1520 = vld [vmem:[#allocation9 + $0x68] sm:$0xff]
        %v1521 = vmul.f32 %v1520, %v1029
        %v1522 = vadd.f32 %v1519, %v1521
        %v1523 = vld [vmem:[#allocation9 + $0x90] sm:$0xff]
        %v1524 = vmul.f32 %v1523, %v1033
        %v1525 = vadd.f32 %v1522, %v1524
        %v1526 = vld [vmem:[#allocation9 + $0xb8] sm:$0xff]
        %v1527 = vmul.f32 %v1526, %v1039
        %v1528 = vadd.f32 %v1525, %v1527
        %v1529 = vld [vmem:[#allocation9 + $0x20] sm:$0xff]
        %v1530 = vmul.f32 %v1529, %v1078
        %v1531 = vadd.f32 %v1528, %v1530
        %v1532 = vld [vmem:[#allocation9 + $0x48] sm:$0xff]
        %v1533 = vmul.f32 %v1532, %v1082
        %v1534 = vadd.f32 %v1531, %v1533
        %v1535 = vld [vmem:[#allocation9 + $0x70] sm:$0xff]
        %v1536 = vmul.f32 %v1535, %v1088
        %v1537 = vadd.f32 %v1534, %v1536
        %v1538 = vld [vmem:[#allocation9 + $0x98] sm:$0xff]
        %v1539 = vmul.f32 %v1538, %v1092
        %v1540 = vadd.f32 %v1537, %v1539
        %v1541 = vld [vmem:[#allocation9 + $0xc0] sm:$0xff]
        %v1542 = vmul.f32 %v1541, %v1098
        %v1543 = vadd.f32 %v1540, %v1542
        %v1544 = vmax.f32 %v1543, 0.0
        %1545 = vst [vmem:[#allocation2 + $0x10] sm:$0xff] %v1544
        %v1546 = vld [vmem:[#allocation9] sm:$0xff]
        %v1547 = vmul.f32 %v1546, %v1017
        %v1548 = vld [vmem:[#allocation9 + $0x28] sm:$0xff]
        %v1549 = vmul.f32 %v1548, %v1021
        %v1550 = vadd.f32 %v1547, %v1549
        %v1551 = vld [vmem:[#allocation9 + $0x50] sm:$0xff]
        %v1552 = vmul.f32 %v1551, %v1027
        %v1553 = vadd.f32 %v1550, %v1552
        %v1554 = vld [vmem:[#allocation9 + $0x78] sm:$0xff]
        %v1555 = vmul.f32 %v1554, %v1031
        %v1556 = vadd.f32 %v1553, %v1555
        %v1557 = vld [vmem:[#allocation9 + $0xa0] sm:$0xff]
        %v1558 = vmul.f32 %v1557, %v1037
        %v1559 = vadd.f32 %v1556, %v1558
        %v1560 = vld [vmem:[#allocation9 + $0x8] sm:$0xff]
        %v1561 = vmul.f32 %v1560, %v1019
        %v1562 = vadd.f32 %v1559, %v1561
        %v1563 = vld [vmem:[#allocation9 + $0x30] sm:$0xff]
        %v1564 = vmul.f32 %v1563, %v1023
        %v1565 = vadd.f32 %v1562, %v1564
        %v1566 = vld [vmem:[#allocation9 + $0x58] sm:$0xff]
        %v1567 = vmul.f32 %v1566, %v1029
        %v1568 = vadd.f32 %v1565, %v1567
        %v1569 = vld [vmem:[#allocation9 + $0x80] sm:$0xff]
        %v1570 = vmul.f32 %v1569, %v1033
        %v1571 = vadd.f32 %v1568, %v1570
        %v1572 = vld [vmem:[#allocation9 + $0xa8] sm:$0xff]
        %v1573 = vmul.f32 %v1572, %v1039
        %v1574 = vadd.f32 %v1571, %v1573
        %v1575 = vld [vmem:[#allocation9 + $0x10] sm:$0xff]
        %v1576 = vmul.f32 %v1575, %v1078
        %v1577 = vadd.f32 %v1574, %v1576
        %v1578 = vld [vmem:[#allocation9 + $0x38] sm:$0xff]
        %v1579 = vmul.f32 %v1578, %v1082
        %v1580 = vadd.f32 %v1577, %v1579
        %v1581 = vld [vmem:[#allocation9 + $0x60] sm:$0xff]
        %v1582 = vmul.f32 %v1581, %v1088
        %v1583 = vadd.f32 %v1580, %v1582
        %v1584 = vld [vmem:[#allocation9 + $0x88] sm:$0xff]
        %v1585 = vmul.f32 %v1584, %v1092
        %v1586 = vadd.f32 %v1583, %v1585
        %v1587 = vld [vmem:[#allocation9 + $0xb0] sm:$0xff]
        %v1588 = vmul.f32 %v1587, %v1098
        %v1589 = vadd.f32 %v1586, %v1588
        %v1590 = vld [vmem:[#allocation9 + $0x18] sm:$0xff]
        %v1591 = vmul.f32 %v1590, %v1080
        %v1592 = vadd.f32 %v1589, %v1591
        %v1593 = vld [vmem:[#allocation9 + $0x40] sm:$0xff]
        %v1594 = vmul.f32 %v1593, %v1084
        %v1595 = vadd.f32 %v1592, %v1594
        %v1596 = vld [vmem:[#allocation9 + $0x68] sm:$0xff]
        %v1597 = vmul.f32 %v1596, %v1090
        %v1598 = vadd.f32 %v1595, %v1597
        %v1599 = vld [vmem:[#allocation9 + $0x90] sm:$0xff]
        %v1600 = vmul.f32 %v1599, %v1094
        %v1601 = vadd.f32 %v1598, %v1600
        %v1602 = vld [vmem:[#allocation9 + $0xb8] sm:$0xff]
        %v1603 = vmul.f32 %v1602, %v1100
        %v1604 = vadd.f32 %v1601, %v1603
        %v1605 = vld [vmem:[#allocation9 + $0x20] sm:$0xff]
        %v1606 = vmul.f32 %v1605, %v1139
        %v1607 = vadd.f32 %v1604, %v1606
        %v1608 = vld [vmem:[#allocation9 + $0x48] sm:$0xff]
        %v1609 = vmul.f32 %v1608, %v1143
        %v1610 = vadd.f32 %v1607, %v1609
        %v1611 = vld [vmem:[#allocation9 + $0x70] sm:$0xff]
        %v1612 = vmul.f32 %v1611, %v1149
        %v1613 = vadd.f32 %v1610, %v1612
        %v1614 = vld [vmem:[#allocation9 + $0x98] sm:$0xff]
        %v1615 = vmul.f32 %v1614, %v1153
        %v1616 = vadd.f32 %v1613, %v1615
        %v1617 = vld [vmem:[#allocation9 + $0xc0] sm:$0xff]
        %v1618 = vmul.f32 %v1617, %v1159
        %v1619 = vadd.f32 %v1616, %v1618
        %v1620 = vmax.f32 %v1619, 0.0
        %1621 = vst [vmem:[#allocation2 + $0x18] sm:$0xff] %v1620
        %v1622 = vld [vmem:[#allocation9] sm:$0xff]
        %v1623 = vmul.f32 %v1622, %v1078
        %v1624 = vld [vmem:[#allocation9 + $0x28] sm:$0xff]
        %v1625 = vmul.f32 %v1624, %v1082
        %v1626 = vadd.f32 %v1623, %v1625
        %v1627 = vld [vmem:[#allocation9 + $0x50] sm:$0xff]
        %v1628 = vmul.f32 %v1627, %v1088
        %v1629 = vadd.f32 %v1626, %v1628
        %v1630 = vld [vmem:[#allocation9 + $0x78] sm:$0xff]
        %v1631 = vmul.f32 %v1630, %v1092
        %v1632 = vadd.f32 %v1629, %v1631
        %v1633 = vld [vmem:[#allocation9 + $0xa0] sm:$0xff]
        %v1634 = vmul.f32 %v1633, %v1098
        %v1635 = vadd.f32 %v1632, %v1634
        %v1636 = vld [vmem:[#allocation9 + $0x8] sm:$0xff]
        %v1637 = vmul.f32 %v1636, %v1080
        %v1638 = vadd.f32 %v1635, %v1637
        %v1639 = vld [vmem:[#allocation9 + $0x30] sm:$0xff]
        %v1640 = vmul.f32 %v1639, %v1084
        %v1641 = vadd.f32 %v1638, %v1640
        %v1642 = vld [vmem:[#allocation9 + $0x58] sm:$0xff]
        %v1643 = vmul.f32 %v1642, %v1090
        %v1644 = vadd.f32 %v1641, %v1643
        %v1645 = vld [vmem:[#allocation9 + $0x80] sm:$0xff]
        %v1646 = vmul.f32 %v1645, %v1094
        %v1647 = vadd.f32 %v1644, %v1646
        %v1648 = vld [vmem:[#allocation9 + $0xa8] sm:$0xff]
        %v1649 = vmul.f32 %v1648, %v1100
        %v1650 = vadd.f32 %v1647, %v1649
        %v1651 = vld [vmem:[#allocation9 + $0x10] sm:$0xff]
        %v1652 = vmul.f32 %v1651, %v1139
        %v1653 = vadd.f32 %v1650, %v1652
        %v1654 = vld [vmem:[#allocation9 + $0x38] sm:$0xff]
        %v1655 = vmul.f32 %v1654, %v1143
        %v1656 = vadd.f32 %v1653, %v1655
        %v1657 = vld [vmem:[#allocation9 + $0x60] sm:$0xff]
        %v1658 = vmul.f32 %v1657, %v1149
        %v1659 = vadd.f32 %v1656, %v1658
        %v1660 = vld [vmem:[#allocation9 + $0x88] sm:$0xff]
        %v1661 = vmul.f32 %v1660, %v1153
        %v1662 = vadd.f32 %v1659, %v1661
        %v1663 = vld [vmem:[#allocation9 + $0xb0] sm:$0xff]
        %v1664 = vmul.f32 %v1663, %v1159
        %v1665 = vadd.f32 %v1662, %v1664
        %v1666 = vld [vmem:[#allocation9 + $0x18] sm:$0xff]
        %v1667 = vmul.f32 %v1666, %v1141
        %v1668 = vadd.f32 %v1665, %v1667
        %v1669 = vld [vmem:[#allocation9 + $0x40] sm:$0xff]
        %v1670 = vmul.f32 %v1669, %v1145
        %v1671 = vadd.f32 %v1668, %v1670
        %v1672 = vld [vmem:[#allocation9 + $0x68] sm:$0xff]
        %v1673 = vmul.f32 %v1672, %v1151
        %v1674 = vadd.f32 %v1671, %v1673
        %v1675 = vld [vmem:[#allocation9 + $0x90] sm:$0xff]
        %v1676 = vmul.f32 %v1675, %v1155
        %v1677 = vadd.f32 %v1674, %v1676
        %v1678 = vld [vmem:[#allocation9 + $0xb8] sm:$0xff]
        %v1679 = vmul.f32 %v1678, %v1161
        %v1680 = vadd.f32 %v1677, %v1679
        %v1681 = vld [vmem:[#allocation9 + $0x20] sm:$0xff]
        %v1682 = vmul.f32 %v1681, %v1200
        %v1683 = vadd.f32 %v1680, %v1682
        %v1684 = vld [vmem:[#allocation9 + $0x48] sm:$0xff]
        %v1685 = vmul.f32 %v1684, %v1204
        %v1686 = vadd.f32 %v1683, %v1685
        %v1687 = vld [vmem:[#allocation9 + $0x70] sm:$0xff]
        %v1688 = vmul.f32 %v1687, %v1210
        %v1689 = vadd.f32 %v1686, %v1688
        %v1690 = vld [vmem:[#allocation9 + $0x98] sm:$0xff]
        %v1691 = vmul.f32 %v1690, %v1214
        %v1692 = vadd.f32 %v1689, %v1691
        %v1693 = vld [vmem:[#allocation9 + $0xc0] sm:$0xff]
        %v1694 = vmul.f32 %v1693, %v1220
        %v1695 = vadd.f32 %v1692, %v1694
        %v1696 = vmax.f32 %v1695, 0.0
        %1697 = vst [vmem:[#allocation2 + $0x20] sm:$0xff] %v1696
        %v1698 = vld [vmem:[#allocation9] sm:$0xff]
        %v1699 = vmul.f32 %v1698, %v1139
        %v1700 = vld [vmem:[#allocation9 + $0x28] sm:$0xff]
        %v1701 = vmul.f32 %v1700, %v1143
        %v1702 = vadd.f32 %v1699, %v1701
        %v1703 = vld [vmem:[#allocation9 + $0x50] sm:$0xff]
        %v1704 = vmul.f32 %v1703, %v1149
        %v1705 = vadd.f32 %v1702, %v1704
        %v1706 = vld [vmem:[#allocation9 + $0x78] sm:$0xff]
        %v1707 = vmul.f32 %v1706, %v1153
        %v1708 = vadd.f32 %v1705, %v1707
        %v1709 = vld [vmem:[#allocation9 + $0xa0] sm:$0xff]
        %v1710 = vmul.f32 %v1709, %v1159
        %v1711 = vadd.f32 %v1708, %v1710
        %v1712 = vld [vmem:[#allocation9 + $0x8] sm:$0xff]
        %v1713 = vmul.f32 %v1712, %v1141
        %v1714 = vadd.f32 %v1711, %v1713
        %v1715 = vld [vmem:[#allocation9 + $0x30] sm:$0xff]
        %v1716 = vmul.f32 %v1715, %v1145
        %v1717 = vadd.f32 %v1714, %v1716
        %v1718 = vld [vmem:[#allocation9 + $0x58] sm:$0xff]
        %v1719 = vmul.f32 %v1718, %v1151
        %v1720 = vadd.f32 %v1717, %v1719
        %v1721 = vld [vmem:[#allocation9 + $0x80] sm:$0xff]
        %v1722 = vmul.f32 %v1721, %v1155
        %v1723 = vadd.f32 %v1720, %v1722
        %v1724 = vld [vmem:[#allocation9 + $0xa8] sm:$0xff]
        %v1725 = vmul.f32 %v1724, %v1161
        %v1726 = vadd.f32 %v1723, %v1725
        %v1727 = vld [vmem:[#allocation9 + $0x10] sm:$0xff]
        %v1728 = vmul.f32 %v1727, %v1200
        %v1729 = vadd.f32 %v1726, %v1728
        %v1730 = vld [vmem:[#allocation9 + $0x38] sm:$0xff]
        %v1731 = vmul.f32 %v1730, %v1204
        %v1732 = vadd.f32 %v1729, %v1731
        %v1733 = vld [vmem:[#allocation9 + $0x60] sm:$0xff]
        %v1734 = vmul.f32 %v1733, %v1210
        %v1735 = vadd.f32 %v1732, %v1734
        %v1736 = vld [vmem:[#allocation9 + $0x88] sm:$0xff]
        %v1737 = vmul.f32 %v1736, %v1214
        %v1738 = vadd.f32 %v1735, %v1737
        %v1739 = vld [vmem:[#allocation9 + $0xb0] sm:$0xff]
        %v1740 = vmul.f32 %v1739, %v1220
        %v1741 = vadd.f32 %v1738, %v1740
        %v1742 = vld [vmem:[#allocation9 + $0x18] sm:$0xff]
        %v1743 = vmul.f32 %v1742, %v1202
        %v1744 = vadd.f32 %v1741, %v1743
        %v1745 = vld [vmem:[#allocation9 + $0x40] sm:$0xff]
        %v1746 = vmul.f32 %v1745, %v1206
        %v1747 = vadd.f32 %v1744, %v1746
        %v1748 = vld [vmem:[#allocation9 + $0x68] sm:$0xff]
        %v1749 = vmul.f32 %v1748, %v1212
        %v1750 = vadd.f32 %v1747, %v1749
        %v1751 = vld [vmem:[#allocation9 + $0x90] sm:$0xff]
        %v1752 = vmul.f32 %v1751, %v1216
        %v1753 = vadd.f32 %v1750, %v1752
        %v1754 = vld [vmem:[#allocation9 + $0xb8] sm:$0xff]
        %v1755 = vmul.f32 %v1754, %v1222
        %v1756 = vadd.f32 %v1753, %v1755
        %v1757 = vld [vmem:[#allocation9 + $0x20] sm:$0xff]
        %v1758 = vmul.f32 %v1757, %v1261
        %v1759 = vadd.f32 %v1756, %v1758
        %v1760 = vld [vmem:[#allocation9 + $0x48] sm:$0xff]
        %v1761 = vmul.f32 %v1760, %v1265
        %v1762 = vadd.f32 %v1759, %v1761
        %v1763 = vld [vmem:[#allocation9 + $0x70] sm:$0xff]
        %v1764 = vmul.f32 %v1763, %v1271
        %v1765 = vadd.f32 %v1762, %v1764
        %v1766 = vld [vmem:[#allocation9 + $0x98] sm:$0xff]
        %v1767 = vmul.f32 %v1766, %v1275
        %v1768 = vadd.f32 %v1765, %v1767
        %v1769 = vld [vmem:[#allocation9 + $0xc0] sm:$0xff]
        %v1770 = vmul.f32 %v1769, %v1281
        %v1771 = vadd.f32 %v1768, %v1770
        %v1772 = vmax.f32 %v1771, 0.0
        %1773 = vst [vmem:[#allocation2 + $0x28] sm:$0xff] %v1772
        %v1774 = vld [vmem:[#allocation9] sm:$0xff]
        %v1775 = vmul.f32 %v1774, %v1200
        %v1776 = vld [vmem:[#allocation9 + $0x28] sm:$0xff]
        %v1777 = vmul.f32 %v1776, %v1204
        %v1778 = vadd.f32 %v1775, %v1777
        %v1779 = vld [vmem:[#allocation9 + $0x50] sm:$0xff]
        %v1780 = vmul.f32 %v1779, %v1210
        %v1781 = vadd.f32 %v1778, %v1780
        %v1782 = vld [vmem:[#allocation9 + $0x78] sm:$0xff]
        %v1783 = vmul.f32 %v1782, %v1214
        %v1784 = vadd.f32 %v1781, %v1783
        %v1785 = vld [vmem:[#allocation9 + $0xa0] sm:$0xff]
        %v1786 = vmul.f32 %v1785, %v1220
        %v1787 = vadd.f32 %v1784, %v1786
        %v1788 = vld [vmem:[#allocation9 + $0x8] sm:$0xff]
        %v1789 = vmul.f32 %v1788, %v1202
        %v1790 = vadd.f32 %v1787, %v1789
        %v1791 = vld [vmem:[#allocation9 + $0x30] sm:$0xff]
        %v1792 = vmul.f32 %v1791, %v1206
        %v1793 = vadd.f32 %v1790, %v1792
        %v1794 = vld [vmem:[#allocation9 + $0x58] sm:$0xff]
        %v1795 = vmul.f32 %v1794, %v1212
        %v1796 = vadd.f32 %v1793, %v1795
        %v1797 = vld [vmem:[#allocation9 + $0x80] sm:$0xff]
        %v1798 = vmul.f32 %v1797, %v1216
        %v1799 = vadd.f32 %v1796, %v1798
        %v1800 = vld [vmem:[#allocation9 + $0xa8] sm:$0xff]
        %v1801 = vmul.f32 %v1800, %v1222
        %v1802 = vadd.f32 %v1799, %v1801
        %v1803 = vld [vmem:[#allocation9 + $0x10] sm:$0xff]
        %v1804 = vmul.f32 %v1803, %v1261
        %v1805 = vadd.f32 %v1802, %v1804
        %v1806 = vld [vmem:[#allocation9 + $0x38] sm:$0xff]
        %v1807 = vmul.f32 %v1806, %v1265
        %v1808 = vadd.f32 %v1805, %v1807
        %v1809 = vld [vmem:[#allocation9 + $0x60] sm:$0xff]
        %v1810 = vmul.f32 %v1809, %v1271
        %v1811 = vadd.f32 %v1808, %v1810
        %v1812 = vld [vmem:[#allocation9 + $0x88] sm:$0xff]
        %v1813 = vmul.f32 %v1812, %v1275
        %v1814 = vadd.f32 %v1811, %v1813
        %v1815 = vld [vmem:[#allocation9 + $0xb0] sm:$0xff]
        %v1816 = vmul.f32 %v1815, %v1281
        %v1817 = vadd.f32 %v1814, %v1816
        %v1818 = vld [vmem:[#allocation9 + $0x18] sm:$0xff]
        %v1819 = vmul.f32 %v1818, %v1263
        %v1820 = vadd.f32 %v1817, %v1819
        %v1821 = vld [vmem:[#allocation9 + $0x40] sm:$0xff]
        %v1822 = vmul.f32 %v1821, %v1267
        %v1823 = vadd.f32 %v1820, %v1822
        %v1824 = vld [vmem:[#allocation9 + $0x68] sm:$0xff]
        %v1825 = vmul.f32 %v1824, %v1273
        %v1826 = vadd.f32 %v1823, %v1825
        %v1827 = vld [vmem:[#allocation9 + $0x90] sm:$0xff]
        %v1828 = vmul.f32 %v1827, %v1277
        %v1829 = vadd.f32 %v1826, %v1828
        %v1830 = vld [vmem:[#allocation9 + $0xb8] sm:$0xff]
        %v1831 = vmul.f32 %v1830, %v1283
        %v1832 = vadd.f32 %v1829, %v1831
        %v1833 = vld [vmem:[#allocation9 + $0x20] sm:$0xff]
        %v1834 = vmul.f32 %v1833, %v1322
        %v1835 = vadd.f32 %v1832, %v1834
        %v1836 = vld [vmem:[#allocation9 + $0x48] sm:$0xff]
        %v1837 = vmul.f32 %v1836, %v1326
        %v1838 = vadd.f32 %v1835, %v1837
        %v1839 = vld [vmem:[#allocation9 + $0x70] sm:$0xff]
        %v1840 = vmul.f32 %v1839, %v1332
        %v1841 = vadd.f32 %v1838, %v1840
        %v1842 = vld [vmem:[#allocation9 + $0x98] sm:$0xff]
        %v1843 = vmul.f32 %v1842, %v1336
        %v1844 = vadd.f32 %v1841, %v1843
        %v1845 = vld [vmem:[#allocation9 + $0xc0] sm:$0xff]
        %v1846 = vmul.f32 %v1845, %v1342
        %v1847 = vadd.f32 %v1844, %v1846
        %v1848 = vmax.f32 %v1847, 0.0
        %1849 = vst [vmem:[#allocation2 + $0x30] sm:$0xff] %v1848
        %v1850 = vld [vmem:[#allocation9] sm:$0xff]
        %v1851 = vmul.f32 %v1850, %v1261
        %v1852 = vld [vmem:[#allocation9 + $0x28] sm:$0xff]
        %v1853 = vmul.f32 %v1852, %v1265
        %v1854 = vadd.f32 %v1851, %v1853
        %v1855 = vld [vmem:[#allocation9 + $0x50] sm:$0xff]
        %v1856 = vmul.f32 %v1855, %v1271
        %v1857 = vadd.f32 %v1854, %v1856
        %v1858 = vld [vmem:[#allocation9 + $0x78] sm:$0xff]
        %v1859 = vmul.f32 %v1858, %v1275
        %v1860 = vadd.f32 %v1857, %v1859
        %v1861 = vld [vmem:[#allocation9 + $0xa0] sm:$0xff]
        %v1862 = vmul.f32 %v1861, %v1281
        %v1863 = vadd.f32 %v1860, %v1862
        %v1864 = vld [vmem:[#allocation9 + $0x8] sm:$0xff]
        %v1865 = vmul.f32 %v1864, %v1263
        %v1866 = vadd.f32 %v1863, %v1865
        %v1867 = vld [vmem:[#allocation9 + $0x30] sm:$0xff]
        %v1868 = vmul.f32 %v1867, %v1267
        %v1869 = vadd.f32 %v1866, %v1868
        %v1870 = vld [vmem:[#allocation9 + $0x58] sm:$0xff]
        %v1871 = vmul.f32 %v1870, %v1273
        %v1872 = vadd.f32 %v1869, %v1871
        %v1873 = vld [vmem:[#allocation9 + $0x80] sm:$0xff]
        %v1874 = vmul.f32 %v1873, %v1277
        %v1875 = vadd.f32 %v1872, %v1874
        %v1876 = vld [vmem:[#allocation9 + $0xa8] sm:$0xff]
        %v1877 = vmul.f32 %v1876, %v1283
        %v1878 = vadd.f32 %v1875, %v1877
        %v1879 = vld [vmem:[#allocation9 + $0x10] sm:$0xff]
        %v1880 = vmul.f32 %v1879, %v1322
        %v1881 = vadd.f32 %v1878, %v1880
        %v1882 = vld [vmem:[#allocation9 + $0x38] sm:$0xff]
        %v1883 = vmul.f32 %v1882, %v1326
        %v1884 = vadd.f32 %v1881, %v1883
        %v1885 = vld [vmem:[#allocation9 + $0x60] sm:$0xff]
        %v1886 = vmul.f32 %v1885, %v1332
        %v1887 = vadd.f32 %v1884, %v1886
        %v1888 = vld [vmem:[#allocation9 + $0x88] sm:$0xff]
        %v1889 = vmul.f32 %v1888, %v1336
        %v1890 = vadd.f32 %v1887, %v1889
        %v1891 = vld [vmem:[#allocation9 + $0xb0] sm:$0xff]
        %v1892 = vmul.f32 %v1891, %v1342
        %v1893 = vadd.f32 %v1890, %v1892
        %v1894 = vld [vmem:[#allocation9 + $0x18] sm:$0xff]
        %v1895 = vmul.f32 %v1894, %v1324
        %v1896 = vadd.f32 %v1893, %v1895
        %v1897 = vld [vmem:[#allocation9 + $0x40] sm:$0xff]
        %v1898 = vmul.f32 %v1897, %v1328
        %v1899 = vadd.f32 %v1896, %v1898
        %v1900 = vld [vmem:[#allocation9 + $0x68] sm:$0xff]
        %v1901 = vmul.f32 %v1900, %v1334
        %v1902 = vadd.f32 %v1899, %v1901
        %v1903 = vld [vmem:[#allocation9 + $0x90] sm:$0xff]
        %v1904 = vmul.f32 %v1903, %v1338
        %v1905 = vadd.f32 %v1902, %v1904
        %v1906 = vld [vmem:[#allocation9 + $0xb8] sm:$0xff]
        %v1907 = vmul.f32 %v1906, %v1344
        %v1908 = vadd.f32 %v1905, %v1907
        %v1909 = vmax.f32 %v1908, 0.0
        %1910 = vst [vmem:[#allocation2 + $0x38] sm:$0xff] %v1909
        %v1911 = vld [vmem:[#allocation2] sm:$0xff]
        %v1912 = vld [vmem:[#allocation2 + $0x8] sm:$0xff]
        %v1913 = vld [vmem:[#allocation2 + $0x10] sm:$0xff]
        %v1914 = vld [vmem:[#allocation2 + $0x18] sm:$0xff]
        %v1915 = vld [vmem:[#allocation2 + $0x20] sm:$0xff]
        %v1916 = vld [vmem:[#allocation2 + $0x28] sm:$0xff]
        %v1917 = vld [vmem:[#allocation2 + $0x30] sm:$0xff]
        %v1918 = vld [vmem:[#allocation2 + $0x38] sm:$0xff]
        %v1919 = vpack.c.bf16 %v1912, %v1911
        %v1920 = vpack.c.bf16 %v1914, %v1913
        %v1921 = vpack.c.bf16 %v1916, %v1915
        %v1922 = vpack.c.bf16 %v1918, %v1917
        %v1923 = vld [vmem:[#allocation11] sm:$0xf]
        %v1924 = vld [vmem:[#allocation11 + $0x4] sm:$0xf]
        %v1925 = vld [vmem:[#allocation11 + $0x8] sm:$0xf]
        %v1926 = vld [vmem:[#allocation11 + $0xc] sm:$0xf]
        %v1927 = vld [vmem:[#allocation11 + $0x10] sm:$0xf]
        %v1928 = vld [vmem:[#allocation11 + $0x14] sm:$0xf]
        %v1929 = vld [vmem:[#allocation11 + $0x18] sm:$0xf]
        %v1930 = vld [vmem:[#allocation11 + $0x1c] sm:$0xf]
        %v1931 = vld [vmem:[#allocation11 + $0x20] sm:$0xf]
        %v1932 = vld [vmem:[#allocation11 + $0x24] sm:$0xf]
        %v1933 = vld [vmem:[#allocation11 + $0x28] sm:$0xf]
        %v1934 = vld [vmem:[#allocation11 + $0x2c] sm:$0xf]
        %v1935 = vld [vmem:[#allocation11 + $0x30] sm:$0xf]
        %v1936 = vld [vmem:[#allocation11 + $0x34] sm:$0xf]
        %v1937 = vld [vmem:[#allocation11 + $0x38] sm:$0xf]
        %v1938 = vld [vmem:[#allocation11 + $0x3c] sm:$0xf]
        %v1955 = vunpack.c.l.b16 %v1923
        %v1956 = vunpack.c.l.b16 %v1924
        %v1957 = vunpack.c.l.b16 %v1925
        %v1958 = vunpack.c.l.b16 %v1926
        %v1959 = vunpack.c.l.b16 %v1927
        %v1960 = vunpack.c.l.b16 %v1928
        %v1961 = vunpack.c.l.b16 %v1929
        %v1962 = vunpack.c.l.b16 %v1930
        %v1963 = vunpack.c.l.b16 %v1931
        %v1964 = vunpack.c.l.b16 %v1932
        %v1965 = vunpack.c.l.b16 %v1933
        %v1966 = vunpack.c.l.b16 %v1934
        %v1967 = vunpack.c.l.b16 %v1935
        %v1968 = vunpack.c.l.b16 %v1936
        %v1969 = vunpack.c.l.b16 %v1937
        %v1970 = vunpack.c.l.b16 %v1938
        %v1971 = vpack.c.b16 %v1956, %v1955
        %v1972 = vpack.c.b16 %v1958, %v1957
        %v1973 = vpack.c.b16 %v1960, %v1959
        %v1974 = vpack.c.b16 %v1962, %v1961
        %v1975 = vpack.c.b16 %v1964, %v1963
        %v1976 = vpack.c.b16 %v1966, %v1965
        %v1977 = vpack.c.b16 %v1968, %v1967
        %v1978 = vpack.c.b16 %v1970, %v1969
        %1987 = vmatprep.subr.bf16.mxu0 0
        %1988 = vmatpush1.bf16.msra.mxu0 %v1978
        %1989 = vmatprep.subr.bf16.mxu0 0
        %1990 = vmatpush1.bf16.msra.mxu0 %v1977
        %1991 = vmatprep.subr.bf16.mxu0 0
        %1992 = vmatpush1.bf16.msra.mxu0 %v1976
        %1993 = vmatprep.subr.bf16.mxu0 0
        %1994 = vmatpush1.bf16.msra.mxu0 %v1975
        %1995 = vmatprep.subr.bf16.mxu0 0
        %1996 = vmatpush1.bf16.msra.mxu0 %v1974
        %1997 = vmatprep.subr.bf16.mxu0 0
        %1998 = vmatpush1.bf16.msra.mxu0 %v1973
        %1999 = vmatprep.subr.bf16.mxu0 0
        %2000 = vmatpush1.bf16.msra.mxu0 %v1972
        %2001 = vmatprep.subr.bf16.mxu0 0
        %2002 = vmatpush1.bf16.msra.mxu0 %v1971
        %2003 = vmatprep.subr.bf16.mxu0 0
        %2004 = vmatpush2.bf16.msra.mxu0 0
        %2005 = vmatprep.subr.bf16.mxu0 0
        %2006 = vmatpush2.bf16.msra.mxu0 0
        %2007 = vmatprep.subr.bf16.mxu0 0
        %2008 = vmatpush2.bf16.msra.mxu0 0
        %2009 = vmatprep.subr.bf16.mxu0 0
        %2010 = vmatpush2.bf16.msra.mxu0 0
        %2011 = vmatprep.subr.bf16.mxu0 0
        %2012 = vmatpush2.bf16.msra.mxu0 0
        %2013 = vmatprep.subr.bf16.mxu0 0
        %2014 = vmatpush2.bf16.msra.mxu0 0
        %2015 = vmatprep.subr.bf16.mxu0 0
        %2016 = vmatpush2.bf16.msra.mxu0 0
        %2017 = vmatprep.subr.bf16.mxu0 0
        %2018 = vmatpush2.bf16.msra.mxu0 0
        %2019 = vmatprep.mubr.bf16.mxu0 0
        %2020 = vmatmul.mubr.bf16.gmra.mxu0 %v1919
        %v2021 = vpop.f32.mrf.mxu0
        %v2022 = vadd.f32 0.0, %v2021
        %v2023 = vpop.f32.mrf.mxu0
        %v2024 = vpop.f32.mrf.mxu0
        %v2025 = vadd.f32 0.0, %v2024
        %v2026 = vpop.f32.mrf.mxu0
        %2027 = vmatprep.mubr.bf16.mxu0 0
        %2028 = vmatmul.mubr.bf16.gmra.mxu0 %v1920
        %v2029 = vpop.f32.mrf.mxu0
        %v2030 = vadd.f32 0.0, %v2029
        %v2031 = vpop.f32.mrf.mxu0
        %v2032 = vpop.f32.mrf.mxu0
        %v2033 = vadd.f32 0.0, %v2032
        %v2034 = vpop.f32.mrf.mxu0
        %2035 = vmatprep.mubr.bf16.mxu0 0
        %2036 = vmatmul.mubr.bf16.gmra.mxu0 %v1921
        %v2037 = vpop.f32.mrf.mxu0
        %v2038 = vadd.f32 0.0, %v2037
        %v2039 = vpop.f32.mrf.mxu0
        %v2040 = vpop.f32.mrf.mxu0
        %v2041 = vadd.f32 0.0, %v2040
        %v2042 = vpop.f32.mrf.mxu0
        %2043 = vmatprep.mubr.bf16.mxu0 0
        %2044 = vmatmul.mubr.bf16.gmra.mxu0 %v1922
        %v2045 = vpop.f32.mrf.mxu0
        %v2046 = vadd.f32 0.0, %v2045
        %v2047 = vpop.f32.mrf.mxu0
        %v2048 = vpop.f32.mrf.mxu0
        %v2049 = vadd.f32 0.0, %v2048
        %v2050 = vpop.f32.mrf.mxu0
        %2051 = vdwg.mxu0
        %v2052 = vpack.c.bf16 %v2022, %v2022
        %v2053 = vpack.c.bf16 %v2025, %v2025
        %v2054 = vpack.c.bf16 %v2030, %v2030
        %v2055 = vpack.c.bf16 %v2033, %v2033
        %v2056 = vpack.c.bf16 %v2038, %v2038
        %v2057 = vpack.c.bf16 %v2041, %v2041
        %v2058 = vpack.c.bf16 %v2046, %v2046
        %v2059 = vpack.c.bf16 %v2049, %v2049
        %v2060 = vld [vmem:[%s6] sm:$0xf]
        %v2061 = vld [vmem:[%s6 + $0x4] sm:$0xf]
        %v2064 = vunpack.c.l.b16 %v2060
        %v2065 = vunpack.c.l.b16 %v2061
        %v2066 = vpack.c.b16 %v2065, %v2064
        %vm2067 = vcmask 64512
        %v2069 = vsel %vm2067, %v2066, 0
        %vm2071 = vcmask 1043456
        %v2073 = vsel %vm2071, %v2052, 0
        %v2076 = vsel %vm2071, %v2053, 0
        %v2079 = vsel %vm2071, %v2054, 0
        %v2082 = vsel %vm2071, %v2055, 0
        %v2085 = vsel %vm2071, %v2056, 0
        %v2088 = vsel %vm2071, %v2057, 0
        %v2091 = vsel %vm2071, %v2058, 0
        %v2094 = vsel %vm2071, %v2059, 0
        %2096 = vmatprep.subr.bf16.mxu0 0
        %2097 = vmatpush1.bf16.msra.mxu0 0
        %2098 = vmatprep.subr.bf16.mxu0 0
        %2099 = vmatpush1.bf16.msra.mxu0 0
        %2100 = vmatprep.subr.bf16.mxu0 0
        %2101 = vmatpush1.bf16.msra.mxu0 0
        %2102 = vmatprep.subr.bf16.mxu0 0
        %2103 = vmatpush1.bf16.msra.mxu0 0
        %2104 = vmatprep.subr.bf16.mxu0 0
        %2105 = vmatpush1.bf16.msra.mxu0 0
        %2106 = vmatprep.subr.bf16.mxu0 0
        %2107 = vmatpush1.bf16.msra.mxu0 0
        %2108 = vmatprep.subr.bf16.mxu0 0
        %2109 = vmatpush1.bf16.msra.mxu0 0
        %2110 = vmatprep.subr.bf16.mxu0 %v2076
        %2111 = vmatpush1.bf16.msra.mxu0 %v2073
        %2112 = vmatprep.subr.bf16.mxu0 0
        %2113 = vmatpush2.bf16.msra.mxu0 0
        %2114 = vmatprep.subr.bf16.mxu0 0
        %2115 = vmatpush2.bf16.msra.mxu0 0
        %2116 = vmatprep.subr.bf16.mxu0 0
        %2117 = vmatpush2.bf16.msra.mxu0 0
        %2118 = vmatprep.subr.bf16.mxu0 0
        %2119 = vmatpush2.bf16.msra.mxu0 0
        %2120 = vmatprep.subr.bf16.mxu0 0
        %2121 = vmatpush2.bf16.msra.mxu0 0
        %2122 = vmatprep.subr.bf16.mxu0 0
        %2123 = vmatpush2.bf16.msra.mxu0 0
        %2124 = vmatprep.subr.bf16.mxu0 0
        %2125 = vmatpush2.bf16.msra.mxu0 0
        %2126 = vmatprep.subr.bf16.mxu0 0
        %2127 = vmatpush2.bf16.msra.mxu0 0
        %2128 = vmatprep.mubr.bf16.mxu0 0
        %2129 = vmatmul.mubr.bf16.gmra.mxu0 %v2069
        %v2130 = vpop.f32.mrf.mxu0
        %v2131 = vadd.f32 0.0, %v2130
        %v2132 = vpop.f32.mrf.mxu0
        %v2133 = vadd.f32 0.0, %v2132
        %v2134 = vpop.f32.mrf.mxu0
        %v2135 = vadd.f32 0.0, %v2134
        %v2136 = vpop.f32.mrf.mxu0
        %v2137 = vadd.f32 0.0, %v2136
        %2138 = vdwg.mxu0
        %2139 = vmatprep.subr.bf16.mxu0 0
        %2140 = vmatpush1.bf16.msra.mxu0 0
        %2141 = vmatprep.subr.bf16.mxu0 0
        %2142 = vmatpush1.bf16.msra.mxu0 0
        %2143 = vmatprep.subr.bf16.mxu0 0
        %2144 = vmatpush1.bf16.msra.mxu0 0
        %2145 = vmatprep.subr.bf16.mxu0 0
        %2146 = vmatpush1.bf16.msra.mxu0 0
        %2147 = vmatprep.subr.bf16.mxu0 0
        %2148 = vmatpush1.bf16.msra.mxu0 0
        %2149 = vmatprep.subr.bf16.mxu0 0
        %2150 = vmatpush1.bf16.msra.mxu0 0
        %2151 = vmatprep.subr.bf16.mxu0 0
        %2152 = vmatpush1.bf16.msra.mxu0 0
        %2153 = vmatprep.subr.bf16.mxu0 %v2082
        %2154 = vmatpush1.bf16.msra.mxu0 %v2079
        %2155 = vmatprep.subr.bf16.mxu0 0
        %2156 = vmatpush2.bf16.msra.mxu0 0
        %2157 = vmatprep.subr.bf16.mxu0 0
        %2158 = vmatpush2.bf16.msra.mxu0 0
        %2159 = vmatprep.subr.bf16.mxu0 0
        %2160 = vmatpush2.bf16.msra.mxu0 0
        %2161 = vmatprep.subr.bf16.mxu0 0
        %2162 = vmatpush2.bf16.msra.mxu0 0
        %2163 = vmatprep.subr.bf16.mxu0 0
        %2164 = vmatpush2.bf16.msra.mxu0 0
        %2165 = vmatprep.subr.bf16.mxu0 0
        %2166 = vmatpush2.bf16.msra.mxu0 0
        %2167 = vmatprep.subr.bf16.mxu0 0
        %2168 = vmatpush2.bf16.msra.mxu0 0
        %2169 = vmatprep.subr.bf16.mxu0 0
        %2170 = vmatpush2.bf16.msra.mxu0 0
        %2171 = vmatprep.mubr.bf16.mxu0 0
        %2172 = vmatmul.mubr.bf16.gmra.mxu0 %v2069
        %v2173 = vpop.f32.mrf.mxu0
        %v2174 = vadd.f32 0.0, %v2173
        %v2175 = vpop.f32.mrf.mxu0
        %v2176 = vadd.f32 0.0, %v2175
        %v2177 = vpop.f32.mrf.mxu0
        %v2178 = vadd.f32 0.0, %v2177
        %v2179 = vpop.f32.mrf.mxu0
        %v2180 = vadd.f32 0.0, %v2179
        %2181 = vdwg.mxu0
        %2182 = vmatprep.subr.bf16.mxu0 0
        %2183 = vmatpush1.bf16.msra.mxu0 0
        %2184 = vmatprep.subr.bf16.mxu0 0
        %2185 = vmatpush1.bf16.msra.mxu0 0
        %2186 = vmatprep.subr.bf16.mxu0 0
        %2187 = vmatpush1.bf16.msra.mxu0 0
        %2188 = vmatprep.subr.bf16.mxu0 0
        %2189 = vmatpush1.bf16.msra.mxu0 0
        %2190 = vmatprep.subr.bf16.mxu0 0
        %2191 = vmatpush1.bf16.msra.mxu0 0
        %2192 = vmatprep.subr.bf16.mxu0 0
        %2193 = vmatpush1.bf16.msra.mxu0 0
        %2194 = vmatprep.subr.bf16.mxu0 0
        %2195 = vmatpush1.bf16.msra.mxu0 0
        %2196 = vmatprep.subr.bf16.mxu0 %v2088
        %2197 = vmatpush1.bf16.msra.mxu0 %v2085
        %2198 = vmatprep.subr.bf16.mxu0 0
        %2199 = vmatpush2.bf16.msra.mxu0 0
        %2200 = vmatprep.subr.bf16.mxu0 0
        %2201 = vmatpush2.bf16.msra.mxu0 0
        %2202 = vmatprep.subr.bf16.mxu0 0
        %2203 = vmatpush2.bf16.msra.mxu0 0
        %2204 = vmatprep.subr.bf16.mxu0 0
        %2205 = vmatpush2.bf16.msra.mxu0 0
        %2206 = vmatprep.subr.bf16.mxu0 0
        %2207 = vmatpush2.bf16.msra.mxu0 0
        %2208 = vmatprep.subr.bf16.mxu0 0
        %2209 = vmatpush2.bf16.msra.mxu0 0
        %2210 = vmatprep.subr.bf16.mxu0 0
        %2211 = vmatpush2.bf16.msra.mxu0 0
        %2212 = vmatprep.subr.bf16.mxu0 0
        %2213 = vmatpush2.bf16.msra.mxu0 0
        %2214 = vmatprep.mubr.bf16.mxu0 0
        %2215 = vmatmul.mubr.bf16.gmra.mxu0 %v2069
        %v2216 = vpop.f32.mrf.mxu0
        %v2217 = vadd.f32 0.0, %v2216
        %v2218 = vpop.f32.mrf.mxu0
        %v2219 = vadd.f32 0.0, %v2218
        %v2220 = vpop.f32.mrf.mxu0
        %v2221 = vadd.f32 0.0, %v2220
        %v2222 = vpop.f32.mrf.mxu0
        %v2223 = vadd.f32 0.0, %v2222
        %2224 = vdwg.mxu0
        %2225 = vmatprep.subr.bf16.mxu0 0
        %2226 = vmatpush1.bf16.msra.mxu0 0
        %2227 = vmatprep.subr.bf16.mxu0 0
        %2228 = vmatpush1.bf16.msra.mxu0 0
        %2229 = vmatprep.subr.bf16.mxu0 0
        %2230 = vmatpush1.bf16.msra.mxu0 0
        %2231 = vmatprep.subr.bf16.mxu0 0
        %2232 = vmatpush1.bf16.msra.mxu0 0
        %2233 = vmatprep.subr.bf16.mxu0 0
        %2234 = vmatpush1.bf16.msra.mxu0 0
        %2235 = vmatprep.subr.bf16.mxu0 0
        %2236 = vmatpush1.bf16.msra.mxu0 0
        %2237 = vmatprep.subr.bf16.mxu0 0
        %2238 = vmatpush1.bf16.msra.mxu0 0
        %2239 = vmatprep.subr.bf16.mxu0 %v2094
        %2240 = vmatpush1.bf16.msra.mxu0 %v2091
        %2241 = vmatprep.subr.bf16.mxu0 0
        %2242 = vmatpush2.bf16.msra.mxu0 0
        %2243 = vmatprep.subr.bf16.mxu0 0
        %2244 = vmatpush2.bf16.msra.mxu0 0
        %2245 = vmatprep.subr.bf16.mxu0 0
        %2246 = vmatpush2.bf16.msra.mxu0 0
        %2247 = vmatprep.subr.bf16.mxu0 0
        %2248 = vmatpush2.bf16.msra.mxu0 0
        %2249 = vmatprep.subr.bf16.mxu0 0
        %2250 = vmatpush2.bf16.msra.mxu0 0
        %2251 = vmatprep.subr.bf16.mxu0 0
        %2252 = vmatpush2.bf16.msra.mxu0 0
        %2253 = vmatprep.subr.bf16.mxu0 0
        %2254 = vmatpush2.bf16.msra.mxu0 0
        %2255 = vmatprep.subr.bf16.mxu0 0
        %2256 = vmatpush2.bf16.msra.mxu0 0
        %2257 = vmatprep.mubr.bf16.mxu0 0
        %2258 = vmatmul.mubr.bf16.gmra.mxu0 %v2069
        %v2259 = vpop.f32.mrf.mxu0
        %v2260 = vadd.f32 0.0, %v2259
        %v2261 = vpop.f32.mrf.mxu0
        %v2262 = vadd.f32 0.0, %v2261
        %v2263 = vpop.f32.mrf.mxu0
        %v2264 = vadd.f32 0.0, %v2263
        %v2265 = vpop.f32.mrf.mxu0
        %v2266 = vadd.f32 0.0, %v2265
        %2267 = vdwg.mxu0
        %v2268 = vmul.f32 %v2131, 0.75
        %v2269 = vmul.f32 %v2135, 0.75
        %v2270 = vmul.f32 %v2133, 0.25
        %v2271 = vmul.f32 %v2137, 0.25
        %v2272 = vadd.f32 %v2268, %v2270
        %v2273 = vadd.f32 %v2269, %v2271
        %v2274 = vmul.f32 %v2131, 0.25
        %v2275 = vmul.f32 %v2135, 0.25
        %v2276 = vmul.f32 %v2133, 0.75
        %v2277 = vmul.f32 %v2137, 0.75
        %v2278 = vadd.f32 %v2274, %v2276
        %v2279 = vadd.f32 %v2275, %v2277
        %v2280 = vmul.f32 %v2174, 0.25
        %v2281 = vmul.f32 %v2178, 0.25
        %v2282 = vadd.f32 %v2276, %v2280
        %v2283 = vadd.f32 %v2277, %v2281
        %v2284 = vmul.f32 %v2174, 0.75
        %v2285 = vmul.f32 %v2178, 0.75
        %v2286 = vadd.f32 %v2270, %v2284
        %v2287 = vadd.f32 %v2271, %v2285
        %v2288 = vmul.f32 %v2176, 0.25
        %v2289 = vmul.f32 %v2180, 0.25
        %v2290 = vadd.f32 %v2284, %v2288
        %v2291 = vadd.f32 %v2285, %v2289
        %v2292 = vmul.f32 %v2176, 0.75
        %v2293 = vmul.f32 %v2180, 0.75
        %v2294 = vadd.f32 %v2280, %v2292
        %v2295 = vadd.f32 %v2281, %v2293
        %v2296 = vmul.f32 %v2217, 0.25
        %v2297 = vmul.f32 %v2221, 0.25
        %v2298 = vadd.f32 %v2292, %v2296
        %v2299 = vadd.f32 %v2293, %v2297
        %v2300 = vmul.f32 %v2217, 0.75
        %v2301 = vmul.f32 %v2221, 0.75
        %v2302 = vadd.f32 %v2288, %v2300
        %v2303 = vadd.f32 %v2289, %v2301
        %v2304 = vmul.f32 %v2219, 0.25
        %v2305 = vmul.f32 %v2223, 0.25
        %v2306 = vadd.f32 %v2300, %v2304
        %v2307 = vadd.f32 %v2301, %v2305
        %v2308 = vmul.f32 %v2219, 0.75
        %v2309 = vmul.f32 %v2223, 0.75
        %v2310 = vadd.f32 %v2296, %v2308
        %v2311 = vadd.f32 %v2297, %v2309
        %v2312 = vmul.f32 %v2260, 0.25
        %v2313 = vmul.f32 %v2264, 0.25
        %v2314 = vadd.f32 %v2308, %v2312
        %v2315 = vadd.f32 %v2309, %v2313
        %v2316 = vmul.f32 %v2260, 0.75
        %v2317 = vmul.f32 %v2264, 0.75
        %v2318 = vadd.f32 %v2304, %v2316
        %v2319 = vadd.f32 %v2305, %v2317
        %v2320 = vmul.f32 %v2262, 0.25
        %v2321 = vmul.f32 %v2266, 0.25
        %v2322 = vadd.f32 %v2316, %v2320
        %v2323 = vadd.f32 %v2317, %v2321
        %v2324 = vmul.f32 %v2262, 0.75
        %v2325 = vmul.f32 %v2266, 0.75
        %v2326 = vadd.f32 %v2312, %v2324
        %v2327 = vadd.f32 %v2313, %v2325
        %v2328 = vld [vmem:[%s497] sm:$0xff]
        %v2329 = vld [vmem:[%s497 + $0x8] sm:$0xff]
        %v2330 = vld [vmem:[%s497 + $0x10] sm:$0xff]
        %v2331 = vld [vmem:[%s497 + $0x18] sm:$0xff]
        %v2332 = vld [vmem:[%s497 + $0x20] sm:$0xff]
        %v2333 = vld [vmem:[%s497 + $0x28] sm:$0xff]
        %v2334 = vld [vmem:[%s497 + $0x30] sm:$0xff]
        %v2335 = vld [vmem:[%s497 + $0x38] sm:$0xff]
        %v2336 = vld [vmem:[%s497 + $0x40] sm:$0xff]
        %v2337 = vld [vmem:[%s497 + $0x48] sm:$0xff]
        %v2338 = vld [vmem:[%s497 + $0x50] sm:$0xff]
        %v2339 = vld [vmem:[%s497 + $0x58] sm:$0xff]
        %v2340 = vld [vmem:[%s497 + $0x60] sm:$0xff]
        %v2341 = vld [vmem:[%s497 + $0x68] sm:$0xff]
        %v2342 = vld [vmem:[%s497 + $0x70] sm:$0xff]
        %v2343 = vld [vmem:[%s497 + $0x78] sm:$0xff]
        %v2344 = vld [vmem:[%s497 + $0x80] sm:$0xff]
        %v2345 = vld [vmem:[%s497 + $0x88] sm:$0xff]
        %v2346 = vld [vmem:[%s497 + $0x90] sm:$0xff]
        %v2347 = vld [vmem:[%s497 + $0x98] sm:$0xff]
        %v2348 = vld [vmem:[%s497 + $0xa0] sm:$0xff]
        %v2349 = vld [vmem:[%s497 + $0xa8] sm:$0xff]
        %v2350 = vld [vmem:[%s497 + $0xb0] sm:$0xff]
        %v2351 = vld [vmem:[%s497 + $0xb8] sm:$0xff]
        %v2352 = vld [vmem:[%s497 + $0xc0] sm:$0xff]
        %v2353 = vld [vmem:[%s497 + $0xc8] sm:$0xff]
        %v2354 = vld [vmem:[%s497 + $0xd0] sm:$0xff]
        %v2355 = vld [vmem:[%s497 + $0xd8] sm:$0xff]
        %v2356 = vld [vmem:[%s497 + $0xe0] sm:$0xff]
        %v2357 = vld [vmem:[%s497 + $0xe8] sm:$0xff]
        %v2358 = vld [vmem:[%s497 + $0xf0] sm:$0xff]
        %v2359 = vld [vmem:[%s497 + $0xf8] sm:$0xff]
        %v2360 = vadd.f32 %v2131, %v2328
        %v2361 = vadd.f32 %v2135, %v2329
        %v2362 = vadd.f32 %v2272, %v2330
        %v2363 = vadd.f32 %v2273, %v2331
        %v2364 = vadd.f32 %v2278, %v2332
        %v2365 = vadd.f32 %v2279, %v2333
        %v2366 = vadd.f32 %v2282, %v2334
        %v2367 = vadd.f32 %v2283, %v2335
        %v2368 = vadd.f32 %v2286, %v2336
        %v2369 = vadd.f32 %v2287, %v2337
        %v2370 = vadd.f32 %v2290, %v2338
        %v2371 = vadd.f32 %v2291, %v2339
        %v2372 = vadd.f32 %v2294, %v2340
        %v2373 = vadd.f32 %v2295, %v2341
        %v2374 = vadd.f32 %v2298, %v2342
        %v2375 = vadd.f32 %v2299, %v2343
        %v2376 = vadd.f32 %v2302, %v2344
        %v2377 = vadd.f32 %v2303, %v2345
        %v2378 = vadd.f32 %v2306, %v2346
        %v2379 = vadd.f32 %v2307, %v2347
        %v2380 = vadd.f32 %v2310, %v2348
        %v2381 = vadd.f32 %v2311, %v2349
        %v2382 = vadd.f32 %v2314, %v2350
        %v2383 = vadd.f32 %v2315, %v2351
        %v2384 = vadd.f32 %v2318, %v2352
        %v2385 = vadd.f32 %v2319, %v2353
        %v2386 = vadd.f32 %v2322, %v2354
        %v2387 = vadd.f32 %v2323, %v2355
        %v2388 = vadd.f32 %v2326, %v2356
        %v2389 = vadd.f32 %v2327, %v2357
        %v2390 = vadd.f32 %v2262, %v2358
        %v2391 = vadd.f32 %v2266, %v2359
        %v2392 = vld [vmem:[#allocation14] sm:$0x1]
        %v2394 = vlaneseq
        %v2395 = vshrl.u32 %v2394, 7
        %v2396 = vsub.s32 0, %v2395
        %v2397 = vrot.slane %v2392, %v2396
        %v2399 = vmul.f32 %v2360, %v2397
        %v2400 = vmul.f32 %v2361, %v2397
        %v2401 = vmul.f32 %v2362, %v2397
        %v2402 = vmul.f32 %v2363, %v2397
        %v2403 = vmul.f32 %v2364, %v2397
        %v2404 = vmul.f32 %v2365, %v2397
        %v2405 = vmul.f32 %v2366, %v2397
        %v2406 = vmul.f32 %v2367, %v2397
        %v2407 = vmul.f32 %v2368, %v2397
        %v2408 = vmul.f32 %v2369, %v2397
        %v2409 = vmul.f32 %v2370, %v2397
        %v2410 = vmul.f32 %v2371, %v2397
        %v2411 = vmul.f32 %v2372, %v2397
        %v2412 = vmul.f32 %v2373, %v2397
        %v2413 = vmul.f32 %v2374, %v2397
        %v2414 = vmul.f32 %v2375, %v2397
        %v2415 = vmul.f32 %v2376, %v2397
        %v2416 = vmul.f32 %v2377, %v2397
        %v2417 = vmul.f32 %v2378, %v2397
        %v2418 = vmul.f32 %v2379, %v2397
        %v2419 = vmul.f32 %v2380, %v2397
        %v2420 = vmul.f32 %v2381, %v2397
        %v2421 = vmul.f32 %v2382, %v2397
        %v2422 = vmul.f32 %v2383, %v2397
        %v2423 = vmul.f32 %v2384, %v2397
        %v2424 = vmul.f32 %v2385, %v2397
        %v2425 = vmul.f32 %v2386, %v2397
        %v2426 = vmul.f32 %v2387, %v2397
        %v2427 = vmul.f32 %v2388, %v2397
        %v2428 = vmul.f32 %v2389, %v2397
        %v2429 = vmul.f32 %v2390, %v2397
        %v2430 = vmul.f32 %v2391, %v2397
        %v2431 = vld [vmem:[#allocation15] sm:$0x1]
        %v2433 = vlaneseq
        %v2434 = vshrl.u32 %v2433, 7
        %v2435 = vsub.s32 0, %v2434
        %v2436 = vrot.slane %v2431, %v2435
        %v2438 = vadd.f32 %v2399, %v2436
        %v2439 = vadd.f32 %v2400, %v2436
        %v2440 = vadd.f32 %v2401, %v2436
        %v2441 = vadd.f32 %v2402, %v2436
        %v2442 = vadd.f32 %v2403, %v2436
        %v2443 = vadd.f32 %v2404, %v2436
        %v2444 = vadd.f32 %v2405, %v2436
        %v2445 = vadd.f32 %v2406, %v2436
        %v2446 = vadd.f32 %v2407, %v2436
        %v2447 = vadd.f32 %v2408, %v2436
        %v2448 = vadd.f32 %v2409, %v2436
        %v2449 = vadd.f32 %v2410, %v2436
        %v2450 = vadd.f32 %v2411, %v2436
        %v2451 = vadd.f32 %v2412, %v2436
        %v2452 = vadd.f32 %v2413, %v2436
        %v2453 = vadd.f32 %v2414, %v2436
        %v2454 = vadd.f32 %v2415, %v2436
        %v2455 = vadd.f32 %v2416, %v2436
        %v2456 = vadd.f32 %v2417, %v2436
        %v2457 = vadd.f32 %v2418, %v2436
        %v2458 = vadd.f32 %v2419, %v2436
        %v2459 = vadd.f32 %v2420, %v2436
        %v2460 = vadd.f32 %v2421, %v2436
        %v2461 = vadd.f32 %v2422, %v2436
        %v2462 = vadd.f32 %v2423, %v2436
        %v2463 = vadd.f32 %v2424, %v2436
        %v2464 = vadd.f32 %v2425, %v2436
        %v2465 = vadd.f32 %v2426, %v2436
        %v2466 = vadd.f32 %v2427, %v2436
        %v2467 = vadd.f32 %v2428, %v2436
        %v2468 = vadd.f32 %v2429, %v2436
        %v2469 = vadd.f32 %v2430, %v2436
        %v2470 = vmax.f32 %v2438, 0.0
        %v2471 = vmax.f32 %v2439, 0.0
        %v2472 = vmax.f32 %v2440, 0.0
        %v2473 = vmax.f32 %v2441, 0.0
        %v2474 = vmax.f32 %v2442, 0.0
        %v2475 = vmax.f32 %v2443, 0.0
        %v2476 = vmax.f32 %v2444, 0.0
        %v2477 = vmax.f32 %v2445, 0.0
        %v2478 = vmax.f32 %v2446, 0.0
        %v2479 = vmax.f32 %v2447, 0.0
        %v2480 = vmax.f32 %v2448, 0.0
        %v2481 = vmax.f32 %v2449, 0.0
        %v2482 = vmax.f32 %v2450, 0.0
        %v2483 = vmax.f32 %v2451, 0.0
        %v2484 = vmax.f32 %v2452, 0.0
        %v2485 = vmax.f32 %v2453, 0.0
        %v2486 = vmax.f32 %v2454, 0.0
        %v2487 = vmax.f32 %v2455, 0.0
        %v2488 = vmax.f32 %v2456, 0.0
        %v2489 = vmax.f32 %v2457, 0.0
        %v2490 = vmax.f32 %v2458, 0.0
        %v2491 = vmax.f32 %v2459, 0.0
        %v2492 = vmax.f32 %v2460, 0.0
        %v2493 = vmax.f32 %v2461, 0.0
        %v2494 = vmax.f32 %v2462, 0.0
        %v2495 = vmax.f32 %v2463, 0.0
        %v2496 = vmax.f32 %v2464, 0.0
        %v2497 = vmax.f32 %v2465, 0.0
        %v2498 = vmax.f32 %v2466, 0.0
        %v2499 = vmax.f32 %v2467, 0.0
        %v2500 = vmax.f32 %v2468, 0.0
        %v2501 = vmax.f32 %v2469, 0.0
        %vm2534 = vcmask 1040384
        %v2535 = vrot.slane %v2470, 7
        %v2536 = vrot.slane %v2471, 7
        %v2537 = vsel %vm2534, %v2535, %v2536
        %v2538 = vrot.slane %v2472, 7
        %v2539 = vsel %vm2534, %v2536, %v2538
        %v2540 = vrot.slane %v2473, 7
        %v2541 = vsel %vm2534, %v2538, %v2540
        %v2542 = vrot.slane %v2474, 7
        %v2543 = vsel %vm2534, %v2540, %v2542
        %v2544 = vrot.slane %v2475, 7
        %v2545 = vsel %vm2534, %v2542, %v2544
        %v2546 = vrot.slane %v2476, 7
        %v2547 = vsel %vm2534, %v2544, %v2546
        %v2548 = vrot.slane %v2477, 7
        %v2549 = vsel %vm2534, %v2546, %v2548
        %v2550 = vrot.slane %v2478, 7
        %v2551 = vsel %vm2534, %v2548, %v2550
        %v2552 = vrot.slane %v2479, 7
        %v2553 = vsel %vm2534, %v2550, %v2552
        %v2554 = vrot.slane %v2480, 7
        %v2555 = vsel %vm2534, %v2552, %v2554
        %v2556 = vrot.slane %v2481, 7
        %v2557 = vsel %vm2534, %v2554, %v2556
        %v2558 = vrot.slane %v2482, 7
        %v2559 = vsel %vm2534, %v2556, %v2558
        %v2560 = vrot.slane %v2483, 7
        %v2561 = vsel %vm2534, %v2558, %v2560
        %v2562 = vrot.slane %v2484, 7
        %v2563 = vsel %vm2534, %v2560, %v2562
        %v2564 = vrot.slane %v2485, 7
        %v2565 = vsel %vm2534, %v2562, %v2564
        %v2566 = vrot.slane %v2486, 7
        %v2567 = vsel %vm2534, %v2564, %v2566
        %v2568 = vrot.slane %v2487, 7
        %v2569 = vsel %vm2534, %v2566, %v2568
        %v2570 = vrot.slane %v2488, 7
        %v2571 = vsel %vm2534, %v2568, %v2570
        %v2572 = vrot.slane %v2489, 7
        %v2573 = vsel %vm2534, %v2570, %v2572
        %v2574 = vrot.slane %v2490, 7
        %v2575 = vsel %vm2534, %v2572, %v2574
        %v2576 = vrot.slane %v2491, 7
        %v2577 = vsel %vm2534, %v2574, %v2576
        %v2578 = vrot.slane %v2492, 7
        %v2579 = vsel %vm2534, %v2576, %v2578
        %v2580 = vrot.slane %v2493, 7
        %v2581 = vsel %vm2534, %v2578, %v2580
        %v2582 = vrot.slane %v2494, 7
        %v2583 = vsel %vm2534, %v2580, %v2582
        %v2584 = vrot.slane %v2495, 7
        %v2585 = vsel %vm2534, %v2582, %v2584
        %v2586 = vrot.slane %v2496, 7
        %v2587 = vsel %vm2534, %v2584, %v2586
        %v2588 = vrot.slane %v2497, 7
        %v2589 = vsel %vm2534, %v2586, %v2588
        %v2590 = vrot.slane %v2498, 7
        %v2591 = vsel %vm2534, %v2588, %v2590
        %v2592 = vrot.slane %v2499, 7
        %v2593 = vsel %vm2534, %v2590, %v2592
        %v2594 = vrot.slane %v2500, 7
        %v2595 = vsel %vm2534, %v2592, %v2594
        %v2596 = vrot.slane %v2501, 7
        %v2597 = vsel %vm2534, %v2594, %v2596
        %v2630 = vsel %vm2534, 0.0, %v2535
        %v2631 = vld [vmem:[%s8] sm:$0xff]
        %v2632 = vld [vmem:[%s8 + $0x8] sm:$0xff]
        %v2633 = vld [vmem:[%s8 + $0x10] sm:$0xff]
        %v2634 = vld [vmem:[%s8 + $0x18] sm:$0xff]
        %v2635 = vld [vmem:[%s8 + $0x20] sm:$0xff]
        %v2636 = vld [vmem:[%s8 + $0x28] sm:$0xff]
        %v2637 = vld [vmem:[%s8 + $0x30] sm:$0xff]
        %v2638 = vld [vmem:[%s8 + $0x38] sm:$0xff]
        %v2639 = vld [vmem:[%s8 + $0x40] sm:$0xff]
        %v2640 = vld [vmem:[%s8 + $0x48] sm:$0xff]
        %v2641 = vld [vmem:[%s8 + $0x50] sm:$0xff]
        %v2642 = vld [vmem:[%s8 + $0x58] sm:$0xff]
        %v2643 = vld [vmem:[%s8 + $0x60] sm:$0xff]
        %v2644 = vld [vmem:[%s8 + $0x68] sm:$0xff]
        %v2645 = vld [vmem:[%s8 + $0x70] sm:$0xff]
        %v2646 = vld [vmem:[%s8 + $0x78] sm:$0xff]
        %v2647 = vld [vmem:[%s8 + $0x80] sm:$0xff]
        %v2648 = vld [vmem:[%s8 + $0x88] sm:$0xff]
        %v2649 = vld [vmem:[%s8 + $0x90] sm:$0xff]
        %v2650 = vld [vmem:[%s8 + $0x98] sm:$0xff]
        %v2651 = vld [vmem:[%s8 + $0xa0] sm:$0xff]
        %v2652 = vld [vmem:[%s8 + $0xa8] sm:$0xff]
        %v2653 = vld [vmem:[%s8 + $0xb0] sm:$0xff]
        %v2654 = vld [vmem:[%s8 + $0xb8] sm:$0xff]
        %v2655 = vld [vmem:[%s8 + $0xc0] sm:$0xff]
        %v2656 = vld [vmem:[%s8 + $0xc8] sm:$0xff]
        %v2657 = vld [vmem:[%s8 + $0xd0] sm:$0xff]
        %v2658 = vld [vmem:[%s8 + $0xd8] sm:$0xff]
        %v2659 = vld [vmem:[%s8 + $0xe0] sm:$0xff]
        %v2660 = vld [vmem:[%s8 + $0xe8] sm:$0xff]
        %v2661 = vld [vmem:[%s8 + $0xf0] sm:$0xff]
        %v2662 = vld [vmem:[%s8 + $0xf8] sm:$0xff]
        %2664 = vset.pattern.permute.xlu0 0
        %2665 = vperm.xlu0 %2664, %v2631
        %v2666 = vpop.permute.xlu0 %2665
        %2669 = vset.pattern.permute.xlu0 0
        %2670 = vperm.xlu0 %2669, %v2632
        %v2671 = vpop.permute.xlu0 %2670
        %2674 = vset.pattern.permute.xlu0 0
        %2675 = vperm.xlu0 %2674, %v2633
        %v2676 = vpop.permute.xlu0 %2675
        %2679 = vset.pattern.permute.xlu0 0
        %2680 = vperm.xlu0 %2679, %v2634
        %v2681 = vpop.permute.xlu0 %2680
        %2684 = vset.pattern.permute.xlu0 0
        %2685 = vperm.xlu0 %2684, %v2635
        %v2686 = vpop.permute.xlu0 %2685
        %2689 = vset.pattern.permute.xlu0 0
        %2690 = vperm.xlu0 %2689, %v2636
        %v2691 = vpop.permute.xlu0 %2690
        %2694 = vset.pattern.permute.xlu0 0
        %2695 = vperm.xlu0 %2694, %v2637
        %v2696 = vpop.permute.xlu0 %2695
        %2699 = vset.pattern.permute.xlu0 0
        %2700 = vperm.xlu0 %2699, %v2638
        %v2701 = vpop.permute.xlu0 %2700
        %2704 = vset.pattern.permute.xlu0 0
        %2705 = vperm.xlu0 %2704, %v2639
        %v2706 = vpop.permute.xlu0 %2705
        %2709 = vset.pattern.permute.xlu0 0
        %2710 = vperm.xlu0 %2709, %v2640
        %v2711 = vpop.permute.xlu0 %2710
        %2714 = vset.pattern.permute.xlu0 0
        %2715 = vperm.xlu0 %2714, %v2641
        %v2716 = vpop.permute.xlu0 %2715
        %2719 = vset.pattern.permute.xlu0 0
        %2720 = vperm.xlu0 %2719, %v2642
        %v2721 = vpop.permute.xlu0 %2720
        %2724 = vset.pattern.permute.xlu0 0
        %2725 = vperm.xlu0 %2724, %v2643
        %v2726 = vpop.permute.xlu0 %2725
        %2729 = vset.pattern.permute.xlu0 0
        %2730 = vperm.xlu0 %2729, %v2644
        %v2731 = vpop.permute.xlu0 %2730
        %2734 = vset.pattern.permute.xlu0 0
        %2735 = vperm.xlu0 %2734, %v2645
        %v2736 = vpop.permute.xlu0 %2735
        %2739 = vset.pattern.permute.xlu0 0
        %2740 = vperm.xlu0 %2739, %v2646
        %v2741 = vpop.permute.xlu0 %2740
        %2744 = vset.pattern.permute.xlu0 0
        %2745 = vperm.xlu0 %2744, %v2647
        %v2746 = vpop.permute.xlu0 %2745
        %2749 = vset.pattern.permute.xlu0 0
        %2750 = vperm.xlu0 %2749, %v2648
        %v2751 = vpop.permute.xlu0 %2750
        %2754 = vset.pattern.permute.xlu0 0
        %2755 = vperm.xlu0 %2754, %v2649
        %v2756 = vpop.permute.xlu0 %2755
        %2759 = vset.pattern.permute.xlu0 0
        %2760 = vperm.xlu0 %2759, %v2650
        %v2761 = vpop.permute.xlu0 %2760
        %2764 = vset.pattern.permute.xlu0 0
        %2765 = vperm.xlu0 %2764, %v2651
        %v2766 = vpop.permute.xlu0 %2765
        %2769 = vset.pattern.permute.xlu0 0
        %2770 = vperm.xlu0 %2769, %v2652
        %v2771 = vpop.permute.xlu0 %2770
        %2774 = vset.pattern.permute.xlu0 0
        %2775 = vperm.xlu0 %2774, %v2653
        %v2776 = vpop.permute.xlu0 %2775
        %2779 = vset.pattern.permute.xlu0 0
        %2780 = vperm.xlu0 %2779, %v2654
        %v2781 = vpop.permute.xlu0 %2780
        %2784 = vset.pattern.permute.xlu0 0
        %2785 = vperm.xlu0 %2784, %v2655
        %v2786 = vpop.permute.xlu0 %2785
        %2789 = vset.pattern.permute.xlu0 0
        %2790 = vperm.xlu0 %2789, %v2656
        %v2791 = vpop.permute.xlu0 %2790
        %2794 = vset.pattern.permute.xlu0 0
        %2795 = vperm.xlu0 %2794, %v2657
        %v2796 = vpop.permute.xlu0 %2795
        %2799 = vset.pattern.permute.xlu0 0
        %2800 = vperm.xlu0 %2799, %v2658
        %v2801 = vpop.permute.xlu0 %2800
        %2804 = vset.pattern.permute.xlu0 0
        %2805 = vperm.xlu0 %2804, %v2659
        %v2806 = vpop.permute.xlu0 %2805
        %2809 = vset.pattern.permute.xlu0 0
        %2810 = vperm.xlu0 %2809, %v2660
        %v2811 = vpop.permute.xlu0 %2810
        %2814 = vset.pattern.permute.xlu0 0
        %2815 = vperm.xlu0 %2814, %v2661
        %v2816 = vpop.permute.xlu0 %2815
        %2819 = vset.pattern.permute.xlu0 0
        %2820 = vperm.xlu0 %2819, %v2662
        %v2821 = vpop.permute.xlu0 %2820
        %v2823 = vmul.f32 %v2630, %v2666
        %v2824 = vmul.f32 %v2537, %v2671
        %v2825 = vmul.f32 %v2539, %v2676
        %v2826 = vmul.f32 %v2541, %v2681
        %v2827 = vmul.f32 %v2543, %v2686
        %v2828 = vmul.f32 %v2545, %v2691
        %v2829 = vmul.f32 %v2547, %v2696
        %v2830 = vmul.f32 %v2549, %v2701
        %v2831 = vmul.f32 %v2551, %v2706
        %v2832 = vmul.f32 %v2553, %v2711
        %v2833 = vmul.f32 %v2555, %v2716
        %v2834 = vmul.f32 %v2557, %v2721
        %v2835 = vmul.f32 %v2559, %v2726
        %v2836 = vmul.f32 %v2561, %v2731
        %v2837 = vmul.f32 %v2563, %v2736
        %v2838 = vmul.f32 %v2565, %v2741
        %v2839 = vmul.f32 %v2567, %v2746
        %v2840 = vmul.f32 %v2569, %v2751
        %v2841 = vmul.f32 %v2571, %v2756
        %v2842 = vmul.f32 %v2573, %v2761
        %v2843 = vmul.f32 %v2575, %v2766
        %v2844 = vmul.f32 %v2577, %v2771
        %v2845 = vmul.f32 %v2579, %v2776
        %v2846 = vmul.f32 %v2581, %v2781
        %v2847 = vmul.f32 %v2583, %v2786
        %v2848 = vmul.f32 %v2585, %v2791
        %v2849 = vmul.f32 %v2587, %v2796
        %v2850 = vmul.f32 %v2589, %v2801
        %v2851 = vmul.f32 %v2591, %v2806
        %v2852 = vmul.f32 %v2593, %v2811
        %v2853 = vmul.f32 %v2595, %v2816
        %v2854 = vmul.f32 %v2597, %v2821
        %vm2855 = vcmask 1046528
        %v2856 = vrot.slane %v2470, 1
        %v2857 = vrot.slane %v2471, 1
        %v2858 = vsel %vm2855, %v2856, %v2857
        %v2859 = vrot.slane %v2472, 1
        %v2860 = vsel %vm2855, %v2857, %v2859
        %v2861 = vrot.slane %v2473, 1
        %v2862 = vsel %vm2855, %v2859, %v2861
        %v2863 = vrot.slane %v2474, 1
        %v2864 = vsel %vm2855, %v2861, %v2863
        %v2865 = vrot.slane %v2475, 1
        %v2866 = vsel %vm2855, %v2863, %v2865
        %v2867 = vrot.slane %v2476, 1
        %v2868 = vsel %vm2855, %v2865, %v2867
        %v2869 = vrot.slane %v2477, 1
        %v2870 = vsel %vm2855, %v2867, %v2869
        %v2871 = vrot.slane %v2478, 1
        %v2872 = vsel %vm2855, %v2869, %v2871
        %v2873 = vrot.slane %v2479, 1
        %v2874 = vsel %vm2855, %v2871, %v2873
        %v2875 = vrot.slane %v2480, 1
        %v2876 = vsel %vm2855, %v2873, %v2875
        %v2877 = vrot.slane %v2481, 1
        %v2878 = vsel %vm2855, %v2875, %v2877
        %v2879 = vrot.slane %v2482, 1
        %v2880 = vsel %vm2855, %v2877, %v2879
        %v2881 = vrot.slane %v2483, 1
        %v2882 = vsel %vm2855, %v2879, %v2881
        %v2883 = vrot.slane %v2484, 1
        %v2884 = vsel %vm2855, %v2881, %v2883
        %v2885 = vrot.slane %v2485, 1
        %v2886 = vsel %vm2855, %v2883, %v2885
        %v2887 = vrot.slane %v2486, 1
        %v2888 = vsel %vm2855, %v2885, %v2887
        %v2889 = vrot.slane %v2487, 1
        %v2890 = vsel %vm2855, %v2887, %v2889
        %v2891 = vrot.slane %v2488, 1
        %v2892 = vsel %vm2855, %v2889, %v2891
        %v2893 = vrot.slane %v2489, 1
        %v2894 = vsel %vm2855, %v2891, %v2893
        %v2895 = vrot.slane %v2490, 1
        %v2896 = vsel %vm2855, %v2893, %v2895
        %v2897 = vrot.slane %v2491, 1
        %v2898 = vsel %vm2855, %v2895, %v2897
        %v2899 = vrot.slane %v2492, 1
        %v2900 = vsel %vm2855, %v2897, %v2899
        %v2901 = vrot.slane %v2493, 1
        %v2902 = vsel %vm2855, %v2899, %v2901
        %v2903 = vrot.slane %v2494, 1
        %v2904 = vsel %vm2855, %v2901, %v2903
        %v2905 = vrot.slane %v2495, 1
        %v2906 = vsel %vm2855, %v2903, %v2905
        %v2907 = vrot.slane %v2496, 1
        %v2908 = vsel %vm2855, %v2905, %v2907
        %v2909 = vrot.slane %v2497, 1
        %v2910 = vsel %vm2855, %v2907, %v2909
        %v2911 = vrot.slane %v2498, 1
        %v2912 = vsel %vm2855, %v2909, %v2911
        %v2913 = vrot.slane %v2499, 1
        %v2914 = vsel %vm2855, %v2911, %v2913
        %v2915 = vrot.slane %v2500, 1
        %v2916 = vsel %vm2855, %v2913, %v2915
        %v2917 = vrot.slane %v2501, 1
        %v2918 = vsel %vm2855, %v2915, %v2917
        %v2951 = vsel %vm2855, %v2917, 0.0
        %s2952 = scalar_lea.vmem %s8, 256
        %v2953 = vld [vmem:[%s2952] sm:$0xff]
        %v2954 = vld [vmem:[%s2952 + $0x8] sm:$0xff]
        %v2955 = vld [vmem:[%s2952 + $0x10] sm:$0xff]
        %v2956 = vld [vmem:[%s2952 + $0x18] sm:$0xff]
        %v2957 = vld [vmem:[%s2952 + $0x20] sm:$0xff]
        %v2958 = vld [vmem:[%s2952 + $0x28] sm:$0xff]
        %v2959 = vld [vmem:[%s2952 + $0x30] sm:$0xff]
        %v2960 = vld [vmem:[%s2952 + $0x38] sm:$0xff]
        %v2961 = vld [vmem:[%s2952 + $0x40] sm:$0xff]
        %v2962 = vld [vmem:[%s2952 + $0x48] sm:$0xff]
        %v2963 = vld [vmem:[%s2952 + $0x50] sm:$0xff]
        %v2964 = vld [vmem:[%s2952 + $0x58] sm:$0xff]
        %v2965 = vld [vmem:[%s2952 + $0x60] sm:$0xff]
        %v2966 = vld [vmem:[%s2952 + $0x68] sm:$0xff]
        %v2967 = vld [vmem:[%s2952 + $0x70] sm:$0xff]
        %v2968 = vld [vmem:[%s2952 + $0x78] sm:$0xff]
        %v2969 = vld [vmem:[%s2952 + $0x80] sm:$0xff]
        %v2970 = vld [vmem:[%s2952 + $0x88] sm:$0xff]
        %v2971 = vld [vmem:[%s2952 + $0x90] sm:$0xff]
        %v2972 = vld [vmem:[%s2952 + $0x98] sm:$0xff]
        %v2973 = vld [vmem:[%s2952 + $0xa0] sm:$0xff]
        %v2974 = vld [vmem:[%s2952 + $0xa8] sm:$0xff]
        %v2975 = vld [vmem:[%s2952 + $0xb0] sm:$0xff]
        %v2976 = vld [vmem:[%s2952 + $0xb8] sm:$0xff]
        %v2977 = vld [vmem:[%s2952 + $0xc0] sm:$0xff]
        %v2978 = vld [vmem:[%s2952 + $0xc8] sm:$0xff]
        %v2979 = vld [vmem:[%s2952 + $0xd0] sm:$0xff]
        %v2980 = vld [vmem:[%s2952 + $0xd8] sm:$0xff]
        %v2981 = vld [vmem:[%s2952 + $0xe0] sm:$0xff]
        %v2982 = vld [vmem:[%s2952 + $0xe8] sm:$0xff]
        %v2983 = vld [vmem:[%s2952 + $0xf0] sm:$0xff]
        %v2984 = vld [vmem:[%s2952 + $0xf8] sm:$0xff]
        %2986 = vset.pattern.permute.xlu0 0
        %2987 = vperm.xlu0 %2986, %v2953
        %v2988 = vpop.permute.xlu0 %2987
        %2991 = vset.pattern.permute.xlu0 0
        %2992 = vperm.xlu0 %2991, %v2954
        %v2993 = vpop.permute.xlu0 %2992
        %2996 = vset.pattern.permute.xlu0 0
        %2997 = vperm.xlu0 %2996, %v2955
        %v2998 = vpop.permute.xlu0 %2997
        %3001 = vset.pattern.permute.xlu0 0
        %3002 = vperm.xlu0 %3001, %v2956
        %v3003 = vpop.permute.xlu0 %3002
        %3006 = vset.pattern.permute.xlu0 0
        %3007 = vperm.xlu0 %3006, %v2957
        %v3008 = vpop.permute.xlu0 %3007
        %3011 = vset.pattern.permute.xlu0 0
        %3012 = vperm.xlu0 %3011, %v2958
        %v3013 = vpop.permute.xlu0 %3012
        %3016 = vset.pattern.permute.xlu0 0
        %3017 = vperm.xlu0 %3016, %v2959
        %v3018 = vpop.permute.xlu0 %3017
        %3021 = vset.pattern.permute.xlu0 0
        %3022 = vperm.xlu0 %3021, %v2960
        %v3023 = vpop.permute.xlu0 %3022
        %3026 = vset.pattern.permute.xlu0 0
        %3027 = vperm.xlu0 %3026, %v2961
        %v3028 = vpop.permute.xlu0 %3027
        %3031 = vset.pattern.permute.xlu0 0
        %3032 = vperm.xlu0 %3031, %v2962
        %v3033 = vpop.permute.xlu0 %3032
        %3036 = vset.pattern.permute.xlu0 0
        %3037 = vperm.xlu0 %3036, %v2963
        %v3038 = vpop.permute.xlu0 %3037
        %3041 = vset.pattern.permute.xlu0 0
        %3042 = vperm.xlu0 %3041, %v2964
        %v3043 = vpop.permute.xlu0 %3042
        %3046 = vset.pattern.permute.xlu0 0
        %3047 = vperm.xlu0 %3046, %v2965
        %v3048 = vpop.permute.xlu0 %3047
        %3051 = vset.pattern.permute.xlu0 0
        %3052 = vperm.xlu0 %3051, %v2966
        %v3053 = vpop.permute.xlu0 %3052
        %3056 = vset.pattern.permute.xlu0 0
        %3057 = vperm.xlu0 %3056, %v2967
        %v3058 = vpop.permute.xlu0 %3057
        %3061 = vset.pattern.permute.xlu0 0
        %3062 = vperm.xlu0 %3061, %v2968
        %v3063 = vpop.permute.xlu0 %3062
        %3066 = vset.pattern.permute.xlu0 0
        %3067 = vperm.xlu0 %3066, %v2969
        %v3068 = vpop.permute.xlu0 %3067
        %3071 = vset.pattern.permute.xlu0 0
        %3072 = vperm.xlu0 %3071, %v2970
        %v3073 = vpop.permute.xlu0 %3072
        %3076 = vset.pattern.permute.xlu0 0
        %3077 = vperm.xlu0 %3076, %v2971
        %v3078 = vpop.permute.xlu0 %3077
        %3081 = vset.pattern.permute.xlu0 0
        %3082 = vperm.xlu0 %3081, %v2972
        %v3083 = vpop.permute.xlu0 %3082
        %3086 = vset.pattern.permute.xlu0 0
        %3087 = vperm.xlu0 %3086, %v2973
        %v3088 = vpop.permute.xlu0 %3087
        %3091 = vset.pattern.permute.xlu0 0
        %3092 = vperm.xlu0 %3091, %v2974
        %v3093 = vpop.permute.xlu0 %3092
        %3096 = vset.pattern.permute.xlu0 0
        %3097 = vperm.xlu0 %3096, %v2975
        %v3098 = vpop.permute.xlu0 %3097
        %3101 = vset.pattern.permute.xlu0 0
        %3102 = vperm.xlu0 %3101, %v2976
        %v3103 = vpop.permute.xlu0 %3102
        %3106 = vset.pattern.permute.xlu0 0
        %3107 = vperm.xlu0 %3106, %v2977
        %v3108 = vpop.permute.xlu0 %3107
        %3111 = vset.pattern.permute.xlu0 0
        %3112 = vperm.xlu0 %3111, %v2978
        %v3113 = vpop.permute.xlu0 %3112
        %3116 = vset.pattern.permute.xlu0 0
        %3117 = vperm.xlu0 %3116, %v2979
        %v3118 = vpop.permute.xlu0 %3117
        %3121 = vset.pattern.permute.xlu0 0
        %3122 = vperm.xlu0 %3121, %v2980
        %v3123 = vpop.permute.xlu0 %3122
        %3126 = vset.pattern.permute.xlu0 0
        %3127 = vperm.xlu0 %3126, %v2981
        %v3128 = vpop.permute.xlu0 %3127
        %3131 = vset.pattern.permute.xlu0 0
        %3132 = vperm.xlu0 %3131, %v2982
        %v3133 = vpop.permute.xlu0 %3132
        %3136 = vset.pattern.permute.xlu0 0
        %3137 = vperm.xlu0 %3136, %v2983
        %v3138 = vpop.permute.xlu0 %3137
        %3141 = vset.pattern.permute.xlu0 0
        %3142 = vperm.xlu0 %3141, %v2984
        %v3143 = vpop.permute.xlu0 %3142
        %v3145 = vmul.f32 %v2858, %v2988
        %v3146 = vmul.f32 %v2860, %v2993
        %v3147 = vmul.f32 %v2862, %v2998
        %v3148 = vmul.f32 %v2864, %v3003
        %v3149 = vmul.f32 %v2866, %v3008
        %v3150 = vmul.f32 %v2868, %v3013
        %v3151 = vmul.f32 %v2870, %v3018
        %v3152 = vmul.f32 %v2872, %v3023
        %v3153 = vmul.f32 %v2874, %v3028
        %v3154 = vmul.f32 %v2876, %v3033
        %v3155 = vmul.f32 %v2878, %v3038
        %v3156 = vmul.f32 %v2880, %v3043
        %v3157 = vmul.f32 %v2882, %v3048
        %v3158 = vmul.f32 %v2884, %v3053
        %v3159 = vmul.f32 %v2886, %v3058
        %v3160 = vmul.f32 %v2888, %v3063
        %v3161 = vmul.f32 %v2890, %v3068
        %v3162 = vmul.f32 %v2892, %v3073
        %v3163 = vmul.f32 %v2894, %v3078
        %v3164 = vmul.f32 %v2896, %v3083
        %v3165 = vmul.f32 %v2898, %v3088
        %v3166 = vmul.f32 %v2900, %v3093
        %v3167 = vmul.f32 %v2902, %v3098
        %v3168 = vmul.f32 %v2904, %v3103
        %v3169 = vmul.f32 %v2906, %v3108
        %v3170 = vmul.f32 %v2908, %v3113
        %v3171 = vmul.f32 %v2910, %v3118
        %v3172 = vmul.f32 %v2912, %v3123
        %v3173 = vmul.f32 %v2914, %v3128
        %v3174 = vmul.f32 %v2916, %v3133
        %v3175 = vmul.f32 %v2918, %v3138
        %v3176 = vmul.f32 %v2951, %v3143
        %v3177 = vpack.c.bf16 %v2824, %v2823
        %v3178 = vpack.c.bf16 %v2826, %v2825
        %v3179 = vpack.c.bf16 %v2828, %v2827
        %v3180 = vpack.c.bf16 %v2830, %v2829
        %v3181 = vpack.c.bf16 %v2832, %v2831
        %v3182 = vpack.c.bf16 %v2834, %v2833
        %v3183 = vpack.c.bf16 %v2836, %v2835
        %v3184 = vpack.c.bf16 %v2838, %v2837
        %v3185 = vpack.c.bf16 %v2840, %v2839
        %v3186 = vpack.c.bf16 %v2842, %v2841
        %v3187 = vpack.c.bf16 %v2844, %v2843
        %v3188 = vpack.c.bf16 %v2846, %v2845
        %v3189 = vpack.c.bf16 %v2848, %v2847
        %v3190 = vpack.c.bf16 %v2850, %v2849
        %v3191 = vpack.c.bf16 %v2852, %v2851
        %v3192 = vpack.c.bf16 %v2854, %v2853
        %v3193 = vpack.c.bf16 %v2471, %v2470
        %v3194 = vpack.c.bf16 %v2473, %v2472
        %v3195 = vpack.c.bf16 %v2475, %v2474
        %v3196 = vpack.c.bf16 %v2477, %v2476
        %v3197 = vpack.c.bf16 %v2479, %v2478
        %v3198 = vpack.c.bf16 %v2481, %v2480
        %v3199 = vpack.c.bf16 %v2483, %v2482
        %v3200 = vpack.c.bf16 %v2485, %v2484
        %v3201 = vpack.c.bf16 %v2487, %v2486
        %v3202 = vpack.c.bf16 %v2489, %v2488
        %v3203 = vpack.c.bf16 %v2491, %v2490
        %v3204 = vpack.c.bf16 %v2493, %v2492
        %v3205 = vpack.c.bf16 %v2495, %v2494
        %v3206 = vpack.c.bf16 %v2497, %v2496
        %v3207 = vpack.c.bf16 %v2499, %v2498
        %v3208 = vpack.c.bf16 %v2501, %v2500
        %v3209 = vpack.c.bf16 %v3146, %v3145
        %v3210 = vpack.c.bf16 %v3148, %v3147
        %v3211 = vpack.c.bf16 %v3150, %v3149
        %v3212 = vpack.c.bf16 %v3152, %v3151
        %v3213 = vpack.c.bf16 %v3154, %v3153
        %v3214 = vpack.c.bf16 %v3156, %v3155
        %v3215 = vpack.c.bf16 %v3158, %v3157
        %v3216 = vpack.c.bf16 %v3160, %v3159
        %v3217 = vpack.c.bf16 %v3162, %v3161
        %v3218 = vpack.c.bf16 %v3164, %v3163
        %v3219 = vpack.c.bf16 %v3166, %v3165
        %v3220 = vpack.c.bf16 %v3168, %v3167
        %v3221 = vpack.c.bf16 %v3170, %v3169
        %v3222 = vpack.c.bf16 %v3172, %v3171
        %v3223 = vpack.c.bf16 %v3174, %v3173
        %v3224 = vpack.c.bf16 %v3176, %v3175
        %s3225 = scalar_lea.vmem %s11, 192
        %v3226 = vld [vmem:[%s3225] sm:$0xf]
        %v3227 = vld [vmem:[%s3225 + $0x4] sm:$0xf]
        %v3228 = vld [vmem:[%s3225 + $0x8] sm:$0xf]
        %v3229 = vld [vmem:[%s3225 + $0xc] sm:$0xf]
        %v3230 = vld [vmem:[%s3225 + $0x10] sm:$0xf]
        %v3231 = vld [vmem:[%s3225 + $0x14] sm:$0xf]
        %v3232 = vld [vmem:[%s3225 + $0x18] sm:$0xf]
        %v3233 = vld [vmem:[%s3225 + $0x1c] sm:$0xf]
        %v3234 = vld [vmem:[%s3225 + $0x20] sm:$0xf]
        %v3235 = vld [vmem:[%s3225 + $0x24] sm:$0xf]
        %v3236 = vld [vmem:[%s3225 + $0x28] sm:$0xf]
        %v3237 = vld [vmem:[%s3225 + $0x2c] sm:$0xf]
        %v3238 = vld [vmem:[%s3225 + $0x30] sm:$0xf]
        %v3239 = vld [vmem:[%s3225 + $0x34] sm:$0xf]
        %v3240 = vld [vmem:[%s3225 + $0x38] sm:$0xf]
        %v3241 = vld [vmem:[%s3225 + $0x3c] sm:$0xf]
        %v3242 = vld [vmem:[%s3225 + $0x40] sm:$0xf]
        %v3243 = vld [vmem:[%s3225 + $0x44] sm:$0xf]
        %v3244 = vld [vmem:[%s3225 + $0x48] sm:$0xf]
        %v3245 = vld [vmem:[%s3225 + $0x4c] sm:$0xf]
        %v3246 = vld [vmem:[%s3225 + $0x50] sm:$0xf]
        %v3247 = vld [vmem:[%s3225 + $0x54] sm:$0xf]
        %v3248 = vld [vmem:[%s3225 + $0x58] sm:$0xf]
        %v3249 = vld [vmem:[%s3225 + $0x5c] sm:$0xf]
        %v3250 = vld [vmem:[%s3225 + $0x60] sm:$0xf]
        %v3251 = vld [vmem:[%s3225 + $0x64] sm:$0xf]
        %v3252 = vld [vmem:[%s3225 + $0x68] sm:$0xf]
        %v3253 = vld [vmem:[%s3225 + $0x6c] sm:$0xf]
        %v3254 = vld [vmem:[%s3225 + $0x70] sm:$0xf]
        %v3255 = vld [vmem:[%s3225 + $0x74] sm:$0xf]
        %v3256 = vld [vmem:[%s3225 + $0x78] sm:$0xf]
        %v3257 = vld [vmem:[%s3225 + $0x7c] sm:$0xf]
        %v3258 = vld [vmem:[%s3225 + $0x80] sm:$0xf]
        %v3259 = vld [vmem:[%s3225 + $0x84] sm:$0xf]
        %v3260 = vld [vmem:[%s3225 + $0x88] sm:$0xf]
        %v3261 = vld [vmem:[%s3225 + $0x8c] sm:$0xf]
        %v3262 = vld [vmem:[%s3225 + $0x90] sm:$0xf]
        %v3263 = vld [vmem:[%s3225 + $0x94] sm:$0xf]
        %v3264 = vld [vmem:[%s3225 + $0x98] sm:$0xf]
        %v3265 = vld [vmem:[%s3225 + $0x9c] sm:$0xf]
        %v3266 = vld [vmem:[%s3225 + $0xa0] sm:$0xf]
        %v3267 = vld [vmem:[%s3225 + $0xa4] sm:$0xf]
        %v3268 = vld [vmem:[%s3225 + $0xa8] sm:$0xf]
        %v3269 = vld [vmem:[%s3225 + $0xac] sm:$0xf]
        %v3270 = vld [vmem:[%s3225 + $0xb0] sm:$0xf]
        %v3271 = vld [vmem:[%s3225 + $0xb4] sm:$0xf]
        %v3272 = vld [vmem:[%s3225 + $0xb8] sm:$0xf]
        %v3273 = vld [vmem:[%s3225 + $0xbc] sm:$0xf]
        %v3274 = vld [vmem:[%s11] sm:$0xf]
        %v3275 = vld [vmem:[%s11 + $0x4] sm:$0xf]
        %v3276 = vld [vmem:[%s11 + $0x8] sm:$0xf]
        %v3277 = vld [vmem:[%s11 + $0xc] sm:$0xf]
        %v3278 = vld [vmem:[%s11 + $0x10] sm:$0xf]
        %v3279 = vld [vmem:[%s11 + $0x14] sm:$0xf]
        %v3280 = vld [vmem:[%s11 + $0x18] sm:$0xf]
        %v3281 = vld [vmem:[%s11 + $0x1c] sm:$0xf]
        %v3282 = vld [vmem:[%s11 + $0x20] sm:$0xf]
        %v3283 = vld [vmem:[%s11 + $0x24] sm:$0xf]
        %v3284 = vld [vmem:[%s11 + $0x28] sm:$0xf]
        %v3285 = vld [vmem:[%s11 + $0x2c] sm:$0xf]
        %v3286 = vld [vmem:[%s11 + $0x30] sm:$0xf]
        %v3287 = vld [vmem:[%s11 + $0x34] sm:$0xf]
        %v3288 = vld [vmem:[%s11 + $0x38] sm:$0xf]
        %v3289 = vld [vmem:[%s11 + $0x3c] sm:$0xf]
        %v3290 = vld [vmem:[%s11 + $0x40] sm:$0xf]
        %v3291 = vld [vmem:[%s11 + $0x44] sm:$0xf]
        %v3292 = vld [vmem:[%s11 + $0x48] sm:$0xf]
        %v3293 = vld [vmem:[%s11 + $0x4c] sm:$0xf]
        %v3294 = vld [vmem:[%s11 + $0x50] sm:$0xf]
        %v3295 = vld [vmem:[%s11 + $0x54] sm:$0xf]
        %v3296 = vld [vmem:[%s11 + $0x58] sm:$0xf]
        %v3297 = vld [vmem:[%s11 + $0x5c] sm:$0xf]
        %v3298 = vld [vmem:[%s11 + $0x60] sm:$0xf]
        %v3299 = vld [vmem:[%s11 + $0x64] sm:$0xf]
        %v3300 = vld [vmem:[%s11 + $0x68] sm:$0xf]
        %v3301 = vld [vmem:[%s11 + $0x6c] sm:$0xf]
        %v3302 = vld [vmem:[%s11 + $0x70] sm:$0xf]
        %v3303 = vld [vmem:[%s11 + $0x74] sm:$0xf]
        %v3304 = vld [vmem:[%s11 + $0x78] sm:$0xf]
        %v3305 = vld [vmem:[%s11 + $0x7c] sm:$0xf]
        %v3306 = vld [vmem:[%s11 + $0x80] sm:$0xf]
        %v3307 = vld [vmem:[%s11 + $0x84] sm:$0xf]
        %v3308 = vld [vmem:[%s11 + $0x88] sm:$0xf]
        %v3309 = vld [vmem:[%s11 + $0x8c] sm:$0xf]
        %v3310 = vld [vmem:[%s11 + $0x90] sm:$0xf]
        %v3311 = vld [vmem:[%s11 + $0x94] sm:$0xf]
        %v3312 = vld [vmem:[%s11 + $0x98] sm:$0xf]
        %v3313 = vld [vmem:[%s11 + $0x9c] sm:$0xf]
        %v3314 = vld [vmem:[%s11 + $0xa0] sm:$0xf]
        %v3315 = vld [vmem:[%s11 + $0xa4] sm:$0xf]
        %v3316 = vld [vmem:[%s11 + $0xa8] sm:$0xf]
        %v3317 = vld [vmem:[%s11 + $0xac] sm:$0xf]
        %v3318 = vld [vmem:[%s11 + $0xb0] sm:$0xf]
        %v3319 = vld [vmem:[%s11 + $0xb4] sm:$0xf]
        %v3320 = vld [vmem:[%s11 + $0xb8] sm:$0xf]
        %v3321 = vld [vmem:[%s11 + $0xbc] sm:$0xf]
        %v3370 = vunpack.c.l.b16 %v3274
        %v3371 = vunpack.c.l.b16 %v3275
        %v3372 = vunpack.c.l.b16 %v3276
        %v3373 = vunpack.c.l.b16 %v3277
        %v3374 = vunpack.c.l.b16 %v3278
        %v3375 = vunpack.c.l.b16 %v3279
        %v3376 = vunpack.c.l.b16 %v3280
        %v3377 = vunpack.c.l.b16 %v3281
        %v3378 = vunpack.c.l.b16 %v3282
        %v3379 = vunpack.c.l.b16 %v3283
        %v3380 = vunpack.c.l.b16 %v3284
        %v3381 = vunpack.c.l.b16 %v3285
        %v3382 = vunpack.c.l.b16 %v3286
        %v3383 = vunpack.c.l.b16 %v3287
        %v3384 = vunpack.c.l.b16 %v3288
        %v3385 = vunpack.c.l.b16 %v3289
        %v3386 = vunpack.c.l.b16 %v3290
        %v3387 = vunpack.c.l.b16 %v3291
        %v3388 = vunpack.c.l.b16 %v3292
        %v3389 = vunpack.c.l.b16 %v3293
        %v3390 = vunpack.c.l.b16 %v3294
        %v3391 = vunpack.c.l.b16 %v3295
        %v3392 = vunpack.c.l.b16 %v3296
        %v3393 = vunpack.c.l.b16 %v3297
        %v3394 = vunpack.c.l.b16 %v3298
        %v3395 = vunpack.c.l.b16 %v3299
        %v3396 = vunpack.c.l.b16 %v3300
        %v3397 = vunpack.c.l.b16 %v3301
        %v3398 = vunpack.c.l.b16 %v3302
        %v3399 = vunpack.c.l.b16 %v3303
        %v3400 = vunpack.c.l.b16 %v3304
        %v3401 = vunpack.c.l.b16 %v3305
        %v3402 = vunpack.c.l.b16 %v3306
        %v3403 = vunpack.c.l.b16 %v3307
        %v3404 = vunpack.c.l.b16 %v3308
        %v3405 = vunpack.c.l.b16 %v3309
        %v3406 = vunpack.c.l.b16 %v3310
        %v3407 = vunpack.c.l.b16 %v3311
        %v3408 = vunpack.c.l.b16 %v3312
        %v3409 = vunpack.c.l.b16 %v3313
        %v3410 = vunpack.c.l.b16 %v3314
        %v3411 = vunpack.c.l.b16 %v3315
        %v3412 = vunpack.c.l.b16 %v3316
        %v3413 = vunpack.c.l.b16 %v3317
        %v3414 = vunpack.c.l.b16 %v3318
        %v3415 = vunpack.c.l.b16 %v3319
        %v3416 = vunpack.c.l.b16 %v3320
        %v3417 = vunpack.c.l.b16 %v3321
        %v3418 = vpack.c.b16 %v3371, %v3370
        %v3419 = vpack.c.b16 %v3373, %v3372
        %v3420 = vpack.c.b16 %v3375, %v3374
        %v3421 = vpack.c.b16 %v3377, %v3376
        %v3422 = vpack.c.b16 %v3379, %v3378
        %v3423 = vpack.c.b16 %v3381, %v3380
        %v3424 = vpack.c.b16 %v3383, %v3382
        %v3425 = vpack.c.b16 %v3385, %v3384
        %v3426 = vpack.c.b16 %v3387, %v3386
        %v3427 = vpack.c.b16 %v3389, %v3388
        %v3428 = vpack.c.b16 %v3391, %v3390
        %v3429 = vpack.c.b16 %v3393, %v3392
        %v3430 = vpack.c.b16 %v3395, %v3394
        %v3431 = vpack.c.b16 %v3397, %v3396
        %v3432 = vpack.c.b16 %v3399, %v3398
        %v3433 = vpack.c.b16 %v3401, %v3400
        %v3434 = vpack.c.b16 %v3403, %v3402
        %v3435 = vpack.c.b16 %v3405, %v3404
        %v3436 = vpack.c.b16 %v3407, %v3406
        %v3437 = vpack.c.b16 %v3409, %v3408
        %v3438 = vpack.c.b16 %v3411, %v3410
        %v3439 = vpack.c.b16 %v3413, %v3412
        %v3440 = vpack.c.b16 %v3415, %v3414
        %v3441 = vpack.c.b16 %v3417, %v3416
        %3466 = vmatprep.subr.bf16.mxu0 0
        %3467 = vmatpush1.bf16.msra.mxu0 %v3425
        %3468 = vmatprep.subr.bf16.mxu0 0
        %3469 = vmatpush1.bf16.msra.mxu0 %v3424
        %3470 = vmatprep.subr.bf16.mxu0 0
        %3471 = vmatpush1.bf16.msra.mxu0 %v3423
        %3472 = vmatprep.subr.bf16.mxu0 0
        %3473 = vmatpush1.bf16.msra.mxu0 %v3422
        %3474 = vmatprep.subr.bf16.mxu0 0
        %3475 = vmatpush1.bf16.msra.mxu0 %v3421
        %3476 = vmatprep.subr.bf16.mxu0 0
        %3477 = vmatpush1.bf16.msra.mxu0 %v3420
        %3478 = vmatprep.subr.bf16.mxu0 0
        %3479 = vmatpush1.bf16.msra.mxu0 %v3419
        %3480 = vmatprep.subr.bf16.mxu0 0
        %3481 = vmatpush1.bf16.msra.mxu0 %v3418
        %3482 = vmatprep.subr.bf16.mxu0 0
        %3483 = vmatpush2.bf16.msra.mxu0 %v3433
        %3484 = vmatprep.subr.bf16.mxu0 0
        %3485 = vmatpush2.bf16.msra.mxu0 %v3432
        %3486 = vmatprep.subr.bf16.mxu0 0
        %3487 = vmatpush2.bf16.msra.mxu0 %v3431
        %3488 = vmatprep.subr.bf16.mxu0 0
        %3489 = vmatpush2.bf16.msra.mxu0 %v3430
        %3490 = vmatprep.subr.bf16.mxu0 0
        %3491 = vmatpush2.bf16.msra.mxu0 %v3429
        %3492 = vmatprep.subr.bf16.mxu0 0
        %3493 = vmatpush2.bf16.msra.mxu0 %v3428
        %3494 = vmatprep.subr.bf16.mxu0 0
        %3495 = vmatpush2.bf16.msra.mxu0 %v3427
        %3496 = vmatprep.subr.bf16.mxu0 0
        %3497 = vmatpush2.bf16.msra.mxu0 %v3426
        %3498 = vmatprep.mubr.bf16.mxu0 0
        %3499 = vmatmul.mubr.bf16.gmra.mxu0 0
        %v3500 = vpop.f32.mrf.mxu0
        %v3501 = vadd.f32 0.0, %v3500
        %v3502 = vpop.f32.mrf.mxu0
        %v3503 = vpop.f32.mrf.mxu0
        %v3504 = vadd.f32 0.0, %v3503
        %v3505 = vpop.f32.mrf.mxu0
        %3506 = vmatprep.mubr.bf16.mxu0 %v3193
        %3507 = vmatmul.mubr.bf16.gmra.mxu0 %v3177
        %v3508 = vpop.f32.mrf.mxu0
        %v3509 = vadd.f32 0.0, %v3508
        %v3510 = vpop.f32.mrf.mxu0
        %v3511 = vpop.f32.mrf.mxu0
        %v3512 = vadd.f32 0.0, %v3511
        %v3513 = vpop.f32.mrf.mxu0
        %3514 = vmatprep.mubr.bf16.mxu0 %v3194
        %3515 = vmatmul.mubr.bf16.gmra.mxu0 %v3178
        %v3516 = vpop.f32.mrf.mxu0
        %v3517 = vadd.f32 0.0, %v3516
        %v3518 = vpop.f32.mrf.mxu0
        %v3519 = vpop.f32.mrf.mxu0
        %v3520 = vadd.f32 0.0, %v3519
        %v3521 = vpop.f32.mrf.mxu0
        %3522 = vmatprep.mubr.bf16.mxu0 %v3195
        %3523 = vmatmul.mubr.bf16.gmra.mxu0 %v3179
        %v3524 = vpop.f32.mrf.mxu0
        %v3525 = vadd.f32 0.0, %v3524
        %v3526 = vpop.f32.mrf.mxu0
        %v3527 = vpop.f32.mrf.mxu0
        %v3528 = vadd.f32 0.0, %v3527
        %v3529 = vpop.f32.mrf.mxu0
        %3530 = vmatprep.mubr.bf16.mxu0 %v3196
        %3531 = vmatmul.mubr.bf16.gmra.mxu0 %v3180
        %v3532 = vpop.f32.mrf.mxu0
        %v3533 = vadd.f32 0.0, %v3532
        %v3534 = vpop.f32.mrf.mxu0
        %v3535 = vpop.f32.mrf.mxu0
        %v3536 = vadd.f32 0.0, %v3535
        %v3537 = vpop.f32.mrf.mxu0
        %3538 = vmatprep.mubr.bf16.mxu0 %v3197
        %3539 = vmatmul.mubr.bf16.gmra.mxu0 %v3181
        %v3540 = vpop.f32.mrf.mxu0
        %v3541 = vadd.f32 0.0, %v3540
        %v3542 = vpop.f32.mrf.mxu0
        %v3543 = vpop.f32.mrf.mxu0
        %v3544 = vadd.f32 0.0, %v3543
        %v3545 = vpop.f32.mrf.mxu0
        %3546 = vmatprep.mubr.bf16.mxu0 %v3198
        %3547 = vmatmul.mubr.bf16.gmra.mxu0 %v3182
        %v3548 = vpop.f32.mrf.mxu0
        %v3549 = vadd.f32 0.0, %v3548
        %v3550 = vpop.f32.mrf.mxu0
        %v3551 = vpop.f32.mrf.mxu0
        %v3552 = vadd.f32 0.0, %v3551
        %v3553 = vpop.f32.mrf.mxu0
        %3554 = vmatprep.mubr.bf16.mxu0 %v3199
        %3555 = vmatmul.mubr.bf16.gmra.mxu0 %v3183
        %v3556 = vpop.f32.mrf.mxu0
        %v3557 = vadd.f32 0.0, %v3556
        %v3558 = vpop.f32.mrf.mxu0
        %v3559 = vpop.f32.mrf.mxu0
        %v3560 = vadd.f32 0.0, %v3559
        %v3561 = vpop.f32.mrf.mxu0
        %3562 = vmatprep.mubr.bf16.mxu0 %v3200
        %3563 = vmatmul.mubr.bf16.gmra.mxu0 %v3184
        %v3564 = vpop.f32.mrf.mxu0
        %v3565 = vadd.f32 0.0, %v3564
        %v3566 = vpop.f32.mrf.mxu0
        %v3567 = vpop.f32.mrf.mxu0
        %v3568 = vadd.f32 0.0, %v3567
        %v3569 = vpop.f32.mrf.mxu0
        %3570 = vmatprep.mubr.bf16.mxu0 %v3201
        %3571 = vmatmul.mubr.bf16.gmra.mxu0 %v3185
        %v3572 = vpop.f32.mrf.mxu0
        %v3573 = vadd.f32 0.0, %v3572
        %v3574 = vpop.f32.mrf.mxu0
        %v3575 = vpop.f32.mrf.mxu0
        %v3576 = vadd.f32 0.0, %v3575
        %v3577 = vpop.f32.mrf.mxu0
        %3578 = vmatprep.mubr.bf16.mxu0 %v3202
        %3579 = vmatmul.mubr.bf16.gmra.mxu0 %v3186
        %v3580 = vpop.f32.mrf.mxu0
        %v3581 = vadd.f32 0.0, %v3580
        %v3582 = vpop.f32.mrf.mxu0
        %v3583 = vpop.f32.mrf.mxu0
        %v3584 = vadd.f32 0.0, %v3583
        %v3585 = vpop.f32.mrf.mxu0
        %3586 = vmatprep.mubr.bf16.mxu0 %v3203
        %3587 = vmatmul.mubr.bf16.gmra.mxu0 %v3187
        %v3588 = vpop.f32.mrf.mxu0
        %v3589 = vadd.f32 0.0, %v3588
        %v3590 = vpop.f32.mrf.mxu0
        %v3591 = vpop.f32.mrf.mxu0
        %v3592 = vadd.f32 0.0, %v3591
        %v3593 = vpop.f32.mrf.mxu0
        %3594 = vmatprep.mubr.bf16.mxu0 %v3204
        %3595 = vmatmul.mubr.bf16.gmra.mxu0 %v3188
        %v3596 = vpop.f32.mrf.mxu0
        %v3597 = vadd.f32 0.0, %v3596
        %v3598 = vpop.f32.mrf.mxu0
        %v3599 = vpop.f32.mrf.mxu0
        %v3600 = vadd.f32 0.0, %v3599
        %v3601 = vpop.f32.mrf.mxu0
        %3602 = vmatprep.mubr.bf16.mxu0 %v3205
        %3603 = vmatmul.mubr.bf16.gmra.mxu0 %v3189
        %v3604 = vpop.f32.mrf.mxu0
        %v3605 = vadd.f32 0.0, %v3604
        %v3606 = vpop.f32.mrf.mxu0
        %v3607 = vpop.f32.mrf.mxu0
        %v3608 = vadd.f32 0.0, %v3607
        %v3609 = vpop.f32.mrf.mxu0
        %3610 = vmatprep.mubr.bf16.mxu0 %v3206
        %3611 = vmatmul.mubr.bf16.gmra.mxu0 %v3190
        %v3612 = vpop.f32.mrf.mxu0
        %v3613 = vadd.f32 0.0, %v3612
        %v3614 = vpop.f32.mrf.mxu0
        %v3615 = vpop.f32.mrf.mxu0
        %v3616 = vadd.f32 0.0, %v3615
        %v3617 = vpop.f32.mrf.mxu0
        %3618 = vmatprep.mubr.bf16.mxu0 %v3207
        %3619 = vmatmul.mubr.bf16.gmra.mxu0 %v3191
        %v3620 = vpop.f32.mrf.mxu0
        %v3621 = vadd.f32 0.0, %v3620
        %v3622 = vpop.f32.mrf.mxu0
        %v3623 = vpop.f32.mrf.mxu0
        %v3624 = vadd.f32 0.0, %v3623
        %v3625 = vpop.f32.mrf.mxu0
        %3626 = vdwg.mxu0
        %3627 = vmatprep.subr.bf16.mxu0 0
        %3628 = vmatpush1.bf16.msra.mxu0 %v3441
        %3629 = vmatprep.subr.bf16.mxu0 0
        %3630 = vmatpush1.bf16.msra.mxu0 %v3440
        %3631 = vmatprep.subr.bf16.mxu0 0
        %3632 = vmatpush1.bf16.msra.mxu0 %v3439
        %3633 = vmatprep.subr.bf16.mxu0 0
        %3634 = vmatpush1.bf16.msra.mxu0 %v3438
        %3635 = vmatprep.subr.bf16.mxu0 0
        %3636 = vmatpush1.bf16.msra.mxu0 %v3437
        %3637 = vmatprep.subr.bf16.mxu0 0
        %3638 = vmatpush1.bf16.msra.mxu0 %v3436
        %3639 = vmatprep.subr.bf16.mxu0 0
        %3640 = vmatpush1.bf16.msra.mxu0 %v3435
        %3641 = vmatprep.subr.bf16.mxu0 0
        %3642 = vmatpush1.bf16.msra.mxu0 %v3434
        %3643 = vmatprep.subr.bf16.mxu0 0
        %3644 = vmatpush2.bf16.msra.mxu0 0
        %3645 = vmatprep.subr.bf16.mxu0 0
        %3646 = vmatpush2.bf16.msra.mxu0 0
        %3647 = vmatprep.subr.bf16.mxu0 0
        %3648 = vmatpush2.bf16.msra.mxu0 0
        %3649 = vmatprep.subr.bf16.mxu0 0
        %3650 = vmatpush2.bf16.msra.mxu0 0
        %3651 = vmatprep.subr.bf16.mxu0 0
        %3652 = vmatpush2.bf16.msra.mxu0 0
        %3653 = vmatprep.subr.bf16.mxu0 0
        %3654 = vmatpush2.bf16.msra.mxu0 0
        %3655 = vmatprep.subr.bf16.mxu0 0
        %3656 = vmatpush2.bf16.msra.mxu0 0
        %3657 = vmatprep.subr.bf16.mxu0 0
        %3658 = vmatpush2.bf16.msra.mxu0 0
        %3659 = vmatprep.mubr.bf16.mxu0 0
        %3660 = vmatmul.mubr.bf16.gmra.mxu0 0
        %v3661 = vpop.f32.mrf.mxu0
        %v3662 = vadd.f32 %v3501, %v3661
        %v3663 = vpop.f32.mrf.mxu0
        %v3664 = vpop.f32.mrf.mxu0
        %v3665 = vadd.f32 %v3504, %v3664
        %v3666 = vpop.f32.mrf.mxu0
        %3667 = vmatprep.mubr.bf16.mxu0 0
        %3668 = vmatmul.mubr.bf16.gmra.mxu0 %v3209
        %v3669 = vpop.f32.mrf.mxu0
        %v3670 = vadd.f32 %v3509, %v3669
        %v3671 = vpop.f32.mrf.mxu0
        %v3672 = vpop.f32.mrf.mxu0
        %v3673 = vadd.f32 %v3512, %v3672
        %v3674 = vpop.f32.mrf.mxu0
        %3675 = vmatprep.mubr.bf16.mxu0 0
        %3676 = vmatmul.mubr.bf16.gmra.mxu0 %v3210
        %v3677 = vpop.f32.mrf.mxu0
        %v3678 = vadd.f32 %v3517, %v3677
        %v3679 = vpop.f32.mrf.mxu0
        %v3680 = vpop.f32.mrf.mxu0
        %v3681 = vadd.f32 %v3520, %v3680
        %v3682 = vpop.f32.mrf.mxu0
        %3683 = vmatprep.mubr.bf16.mxu0 0
        %3684 = vmatmul.mubr.bf16.gmra.mxu0 %v3211
        %v3685 = vpop.f32.mrf.mxu0
        %v3686 = vadd.f32 %v3525, %v3685
        %v3687 = vpop.f32.mrf.mxu0
        %v3688 = vpop.f32.mrf.mxu0
        %v3689 = vadd.f32 %v3528, %v3688
        %v3690 = vpop.f32.mrf.mxu0
        %3691 = vmatprep.mubr.bf16.mxu0 0
        %3692 = vmatmul.mubr.bf16.gmra.mxu0 %v3212
        %v3693 = vpop.f32.mrf.mxu0
        %v3694 = vadd.f32 %v3533, %v3693
        %v3695 = vpop.f32.mrf.mxu0
        %v3696 = vpop.f32.mrf.mxu0
        %v3697 = vadd.f32 %v3536, %v3696
        %v3698 = vpop.f32.mrf.mxu0
        %3699 = vmatprep.mubr.bf16.mxu0 0
        %3700 = vmatmul.mubr.bf16.gmra.mxu0 %v3213
        %v3701 = vpop.f32.mrf.mxu0
        %v3702 = vadd.f32 %v3541, %v3701
        %v3703 = vpop.f32.mrf.mxu0
        %v3704 = vpop.f32.mrf.mxu0
        %v3705 = vadd.f32 %v3544, %v3704
        %v3706 = vpop.f32.mrf.mxu0
        %3707 = vmatprep.mubr.bf16.mxu0 0
        %3708 = vmatmul.mubr.bf16.gmra.mxu0 %v3214
        %v3709 = vpop.f32.mrf.mxu0
        %v3710 = vadd.f32 %v3549, %v3709
        %v3711 = vpop.f32.mrf.mxu0
        %v3712 = vpop.f32.mrf.mxu0
        %v3713 = vadd.f32 %v3552, %v3712
        %v3714 = vpop.f32.mrf.mxu0
        %3715 = vmatprep.mubr.bf16.mxu0 0
        %3716 = vmatmul.mubr.bf16.gmra.mxu0 %v3215
        %v3717 = vpop.f32.mrf.mxu0
        %v3718 = vadd.f32 %v3557, %v3717
        %v3719 = vpop.f32.mrf.mxu0
        %v3720 = vpop.f32.mrf.mxu0
        %v3721 = vadd.f32 %v3560, %v3720
        %v3722 = vpop.f32.mrf.mxu0
        %3723 = vmatprep.mubr.bf16.mxu0 0
        %3724 = vmatmul.mubr.bf16.gmra.mxu0 %v3216
        %v3725 = vpop.f32.mrf.mxu0
        %v3726 = vadd.f32 %v3565, %v3725
        %v3727 = vpop.f32.mrf.mxu0
        %v3728 = vpop.f32.mrf.mxu0
        %v3729 = vadd.f32 %v3568, %v3728
        %v3730 = vpop.f32.mrf.mxu0
        %3731 = vmatprep.mubr.bf16.mxu0 0
        %3732 = vmatmul.mubr.bf16.gmra.mxu0 %v3217
        %v3733 = vpop.f32.mrf.mxu0
        %v3734 = vadd.f32 %v3573, %v3733
        %v3735 = vpop.f32.mrf.mxu0
        %v3736 = vpop.f32.mrf.mxu0
        %v3737 = vadd.f32 %v3576, %v3736
        %v3738 = vpop.f32.mrf.mxu0
        %3739 = vmatprep.mubr.bf16.mxu0 0
        %3740 = vmatmul.mubr.bf16.gmra.mxu0 %v3218
        %v3741 = vpop.f32.mrf.mxu0
        %v3742 = vadd.f32 %v3581, %v3741
        %v3743 = vpop.f32.mrf.mxu0
        %v3744 = vpop.f32.mrf.mxu0
        %v3745 = vadd.f32 %v3584, %v3744
        %v3746 = vpop.f32.mrf.mxu0
        %3747 = vmatprep.mubr.bf16.mxu0 0
        %3748 = vmatmul.mubr.bf16.gmra.mxu0 %v3219
        %v3749 = vpop.f32.mrf.mxu0
        %v3750 = vadd.f32 %v3589, %v3749
        %v3751 = vpop.f32.mrf.mxu0
        %v3752 = vpop.f32.mrf.mxu0
        %v3753 = vadd.f32 %v3592, %v3752
        %v3754 = vpop.f32.mrf.mxu0
        %3755 = vmatprep.mubr.bf16.mxu0 0
        %3756 = vmatmul.mubr.bf16.gmra.mxu0 %v3220
        %v3757 = vpop.f32.mrf.mxu0
        %v3758 = vadd.f32 %v3597, %v3757
        %v3759 = vpop.f32.mrf.mxu0
        %v3760 = vpop.f32.mrf.mxu0
        %v3761 = vadd.f32 %v3600, %v3760
        %v3762 = vpop.f32.mrf.mxu0
        %3763 = vmatprep.mubr.bf16.mxu0 0
        %3764 = vmatmul.mubr.bf16.gmra.mxu0 %v3221
        %v3765 = vpop.f32.mrf.mxu0
        %v3766 = vadd.f32 %v3605, %v3765
        %v3767 = vpop.f32.mrf.mxu0
        %v3768 = vpop.f32.mrf.mxu0
        %v3769 = vadd.f32 %v3608, %v3768
        %v3770 = vpop.f32.mrf.mxu0
        %3771 = vmatprep.mubr.bf16.mxu0 0
        %3772 = vmatmul.mubr.bf16.gmra.mxu0 %v3222
        %v3773 = vpop.f32.mrf.mxu0
        %v3774 = vadd.f32 %v3613, %v3773
        %v3775 = vpop.f32.mrf.mxu0
        %v3776 = vpop.f32.mrf.mxu0
        %v3777 = vadd.f32 %v3616, %v3776
        %v3778 = vpop.f32.mrf.mxu0
        %3779 = vmatprep.mubr.bf16.mxu0 0
        %3780 = vmatmul.mubr.bf16.gmra.mxu0 %v3223
        %v3781 = vpop.f32.mrf.mxu0
        %v3782 = vadd.f32 %v3621, %v3781
        %v3783 = vpop.f32.mrf.mxu0
        %v3784 = vpop.f32.mrf.mxu0
        %v3785 = vadd.f32 %v3624, %v3784
        %v3786 = vpop.f32.mrf.mxu0
        %3787 = vdwg.mxu0
        %v3836 = vunpack.c.l.b16 %v3226
        %v3837 = vunpack.c.l.b16 %v3227
        %v3838 = vunpack.c.l.b16 %v3228
        %v3839 = vunpack.c.l.b16 %v3229
        %v3840 = vunpack.c.l.b16 %v3230
        %v3841 = vunpack.c.l.b16 %v3231
        %v3842 = vunpack.c.l.b16 %v3232
        %v3843 = vunpack.c.l.b16 %v3233
        %v3844 = vunpack.c.l.b16 %v3234
        %v3845 = vunpack.c.l.b16 %v3235
        %v3846 = vunpack.c.l.b16 %v3236
        %v3847 = vunpack.c.l.b16 %v3237
        %v3848 = vunpack.c.l.b16 %v3238
        %v3849 = vunpack.c.l.b16 %v3239
        %v3850 = vunpack.c.l.b16 %v3240
        %v3851 = vunpack.c.l.b16 %v3241
        %v3852 = vunpack.c.l.b16 %v3242
        %v3853 = vunpack.c.l.b16 %v3243
        %v3854 = vunpack.c.l.b16 %v3244
        %v3855 = vunpack.c.l.b16 %v3245
        %v3856 = vunpack.c.l.b16 %v3246
        %v3857 = vunpack.c.l.b16 %v3247
        %v3858 = vunpack.c.l.b16 %v3248
        %v3859 = vunpack.c.l.b16 %v3249
        %v3860 = vunpack.c.l.b16 %v3250
        %v3861 = vunpack.c.l.b16 %v3251
        %v3862 = vunpack.c.l.b16 %v3252
        %v3863 = vunpack.c.l.b16 %v3253
        %v3864 = vunpack.c.l.b16 %v3254
        %v3865 = vunpack.c.l.b16 %v3255
        %v3866 = vunpack.c.l.b16 %v3256
        %v3867 = vunpack.c.l.b16 %v3257
        %v3868 = vunpack.c.l.b16 %v3258
        %v3869 = vunpack.c.l.b16 %v3259
        %v3870 = vunpack.c.l.b16 %v3260
        %v3871 = vunpack.c.l.b16 %v3261
        %v3872 = vunpack.c.l.b16 %v3262
        %v3873 = vunpack.c.l.b16 %v3263
        %v3874 = vunpack.c.l.b16 %v3264
        %v3875 = vunpack.c.l.b16 %v3265
        %v3876 = vunpack.c.l.b16 %v3266
        %v3877 = vunpack.c.l.b16 %v3267
        %v3878 = vunpack.c.l.b16 %v3268
        %v3879 = vunpack.c.l.b16 %v3269
        %v3880 = vunpack.c.l.b16 %v3270
        %v3881 = vunpack.c.l.b16 %v3271
        %v3882 = vunpack.c.l.b16 %v3272
        %v3883 = vunpack.c.l.b16 %v3273
        %v3884 = vpack.c.b16 %v3837, %v3836
        %v3885 = vpack.c.b16 %v3839, %v3838
        %v3886 = vpack.c.b16 %v3841, %v3840
        %v3887 = vpack.c.b16 %v3843, %v3842
        %v3888 = vpack.c.b16 %v3845, %v3844
        %v3889 = vpack.c.b16 %v3847, %v3846
        %v3890 = vpack.c.b16 %v3849, %v3848
        %v3891 = vpack.c.b16 %v3851, %v3850
        %v3892 = vpack.c.b16 %v3853, %v3852
        %v3893 = vpack.c.b16 %v3855, %v3854
        %v3894 = vpack.c.b16 %v3857, %v3856
        %v3895 = vpack.c.b16 %v3859, %v3858
        %v3896 = vpack.c.b16 %v3861, %v3860
        %v3897 = vpack.c.b16 %v3863, %v3862
        %v3898 = vpack.c.b16 %v3865, %v3864
        %v3899 = vpack.c.b16 %v3867, %v3866
        %v3900 = vpack.c.b16 %v3869, %v3868
        %v3901 = vpack.c.b16 %v3871, %v3870
        %v3902 = vpack.c.b16 %v3873, %v3872
        %v3903 = vpack.c.b16 %v3875, %v3874
        %v3904 = vpack.c.b16 %v3877, %v3876
        %v3905 = vpack.c.b16 %v3879, %v3878
        %v3906 = vpack.c.b16 %v3881, %v3880
        %v3907 = vpack.c.b16 %v3883, %v3882
        %3932 = vmatprep.subr.bf16.mxu0 0
        %3933 = vmatpush1.bf16.msra.mxu0 %v3891
        %3934 = vmatprep.subr.bf16.mxu0 0
        %3935 = vmatpush1.bf16.msra.mxu0 %v3890
        %3936 = vmatprep.subr.bf16.mxu0 0
        %3937 = vmatpush1.bf16.msra.mxu0 %v3889
        %3938 = vmatprep.subr.bf16.mxu0 0
        %3939 = vmatpush1.bf16.msra.mxu0 %v3888
        %3940 = vmatprep.subr.bf16.mxu0 0
        %3941 = vmatpush1.bf16.msra.mxu0 %v3887
        %3942 = vmatprep.subr.bf16.mxu0 0
        %3943 = vmatpush1.bf16.msra.mxu0 %v3886
        %3944 = vmatprep.subr.bf16.mxu0 0
        %3945 = vmatpush1.bf16.msra.mxu0 %v3885
        %3946 = vmatprep.subr.bf16.mxu0 0
        %3947 = vmatpush1.bf16.msra.mxu0 %v3884
        %3948 = vmatprep.subr.bf16.mxu0 0
        %3949 = vmatpush2.bf16.msra.mxu0 %v3899
        %3950 = vmatprep.subr.bf16.mxu0 0
        %3951 = vmatpush2.bf16.msra.mxu0 %v3898
        %3952 = vmatprep.subr.bf16.mxu0 0
        %3953 = vmatpush2.bf16.msra.mxu0 %v3897
        %3954 = vmatprep.subr.bf16.mxu0 0
        %3955 = vmatpush2.bf16.msra.mxu0 %v3896
        %3956 = vmatprep.subr.bf16.mxu0 0
        %3957 = vmatpush2.bf16.msra.mxu0 %v3895
        %3958 = vmatprep.subr.bf16.mxu0 0
        %3959 = vmatpush2.bf16.msra.mxu0 %v3894
        %3960 = vmatprep.subr.bf16.mxu0 0
        %3961 = vmatpush2.bf16.msra.mxu0 %v3893
        %3962 = vmatprep.subr.bf16.mxu0 0
        %3963 = vmatpush2.bf16.msra.mxu0 %v3892
        %3964 = vmatprep.mubr.bf16.mxu0 %v3193
        %3965 = vmatmul.mubr.bf16.gmra.mxu0 %v3177
        %v3966 = vpop.f32.mrf.mxu0
        %v3967 = vadd.f32 %v3662, %v3966
        %v3968 = vpop.f32.mrf.mxu0
        %v3969 = vpop.f32.mrf.mxu0
        %v3970 = vadd.f32 %v3665, %v3969
        %v3971 = vpop.f32.mrf.mxu0
        %3972 = vmatprep.mubr.bf16.mxu0 %v3194
        %3973 = vmatmul.mubr.bf16.gmra.mxu0 %v3178
        %v3974 = vpop.f32.mrf.mxu0
        %v3975 = vadd.f32 %v3670, %v3974
        %v3976 = vpop.f32.mrf.mxu0
        %v3977 = vpop.f32.mrf.mxu0
        %v3978 = vadd.f32 %v3673, %v3977
        %v3979 = vpop.f32.mrf.mxu0
        %3980 = vmatprep.mubr.bf16.mxu0 %v3195
        %3981 = vmatmul.mubr.bf16.gmra.mxu0 %v3179
        %v3982 = vpop.f32.mrf.mxu0
        %v3983 = vadd.f32 %v3678, %v3982
        %v3984 = vpop.f32.mrf.mxu0
        %v3985 = vpop.f32.mrf.mxu0
        %v3986 = vadd.f32 %v3681, %v3985
        %v3987 = vpop.f32.mrf.mxu0
        %3988 = vmatprep.mubr.bf16.mxu0 %v3196
        %3989 = vmatmul.mubr.bf16.gmra.mxu0 %v3180
        %v3990 = vpop.f32.mrf.mxu0
        %v3991 = vadd.f32 %v3686, %v3990
        %v3992 = vpop.f32.mrf.mxu0
        %v3993 = vpop.f32.mrf.mxu0
        %v3994 = vadd.f32 %v3689, %v3993
        %v3995 = vpop.f32.mrf.mxu0
        %3996 = vmatprep.mubr.bf16.mxu0 %v3197
        %3997 = vmatmul.mubr.bf16.gmra.mxu0 %v3181
        %v3998 = vpop.f32.mrf.mxu0
        %v3999 = vadd.f32 %v3694, %v3998
        %v4000 = vpop.f32.mrf.mxu0
        %v4001 = vpop.f32.mrf.mxu0
        %v4002 = vadd.f32 %v3697, %v4001
        %v4003 = vpop.f32.mrf.mxu0
        %4004 = vmatprep.mubr.bf16.mxu0 %v3198
        %4005 = vmatmul.mubr.bf16.gmra.mxu0 %v3182
        %v4006 = vpop.f32.mrf.mxu0
        %v4007 = vadd.f32 %v3702, %v4006
        %v4008 = vpop.f32.mrf.mxu0
        %v4009 = vpop.f32.mrf.mxu0
        %v4010 = vadd.f32 %v3705, %v4009
        %v4011 = vpop.f32.mrf.mxu0
        %4012 = vmatprep.mubr.bf16.mxu0 %v3199
        %4013 = vmatmul.mubr.bf16.gmra.mxu0 %v3183
        %v4014 = vpop.f32.mrf.mxu0
        %v4015 = vadd.f32 %v3710, %v4014
        %v4016 = vpop.f32.mrf.mxu0
        %v4017 = vpop.f32.mrf.mxu0
        %v4018 = vadd.f32 %v3713, %v4017
        %v4019 = vpop.f32.mrf.mxu0
        %4020 = vmatprep.mubr.bf16.mxu0 %v3200
        %4021 = vmatmul.mubr.bf16.gmra.mxu0 %v3184
        %v4022 = vpop.f32.mrf.mxu0
        %v4023 = vadd.f32 %v3718, %v4022
        %v4024 = vpop.f32.mrf.mxu0
        %v4025 = vpop.f32.mrf.mxu0
        %v4026 = vadd.f32 %v3721, %v4025
        %v4027 = vpop.f32.mrf.mxu0
        %4028 = vmatprep.mubr.bf16.mxu0 %v3201
        %4029 = vmatmul.mubr.bf16.gmra.mxu0 %v3185
        %v4030 = vpop.f32.mrf.mxu0
        %v4031 = vadd.f32 %v3726, %v4030
        %v4032 = vpop.f32.mrf.mxu0
        %v4033 = vpop.f32.mrf.mxu0
        %v4034 = vadd.f32 %v3729, %v4033
        %v4035 = vpop.f32.mrf.mxu0
        %4036 = vmatprep.mubr.bf16.mxu0 %v3202
        %4037 = vmatmul.mubr.bf16.gmra.mxu0 %v3186
        %v4038 = vpop.f32.mrf.mxu0
        %v4039 = vadd.f32 %v3734, %v4038
        %v4040 = vpop.f32.mrf.mxu0
        %v4041 = vpop.f32.mrf.mxu0
        %v4042 = vadd.f32 %v3737, %v4041
        %v4043 = vpop.f32.mrf.mxu0
        %4044 = vmatprep.mubr.bf16.mxu0 %v3203
        %4045 = vmatmul.mubr.bf16.gmra.mxu0 %v3187
        %v4046 = vpop.f32.mrf.mxu0
        %v4047 = vadd.f32 %v3742, %v4046
        %v4048 = vpop.f32.mrf.mxu0
        %v4049 = vpop.f32.mrf.mxu0
        %v4050 = vadd.f32 %v3745, %v4049
        %v4051 = vpop.f32.mrf.mxu0
        %4052 = vmatprep.mubr.bf16.mxu0 %v3204
        %4053 = vmatmul.mubr.bf16.gmra.mxu0 %v3188
        %v4054 = vpop.f32.mrf.mxu0
        %v4055 = vadd.f32 %v3750, %v4054
        %v4056 = vpop.f32.mrf.mxu0
        %v4057 = vpop.f32.mrf.mxu0
        %v4058 = vadd.f32 %v3753, %v4057
        %v4059 = vpop.f32.mrf.mxu0
        %4060 = vmatprep.mubr.bf16.mxu0 %v3205
        %4061 = vmatmul.mubr.bf16.gmra.mxu0 %v3189
        %v4062 = vpop.f32.mrf.mxu0
        %v4063 = vadd.f32 %v3758, %v4062
        %v4064 = vpop.f32.mrf.mxu0
        %v4065 = vpop.f32.mrf.mxu0
        %v4066 = vadd.f32 %v3761, %v4065
        %v4067 = vpop.f32.mrf.mxu0
        %4068 = vmatprep.mubr.bf16.mxu0 %v3206
        %4069 = vmatmul.mubr.bf16.gmra.mxu0 %v3190
        %v4070 = vpop.f32.mrf.mxu0
        %v4071 = vadd.f32 %v3766, %v4070
        %v4072 = vpop.f32.mrf.mxu0
        %v4073 = vpop.f32.mrf.mxu0
        %v4074 = vadd.f32 %v3769, %v4073
        %v4075 = vpop.f32.mrf.mxu0
        %4076 = vmatprep.mubr.bf16.mxu0 %v3207
        %4077 = vmatmul.mubr.bf16.gmra.mxu0 %v3191
        %v4078 = vpop.f32.mrf.mxu0
        %v4079 = vadd.f32 %v3774, %v4078
        %v4080 = vpop.f32.mrf.mxu0
        %v4081 = vpop.f32.mrf.mxu0
        %v4082 = vadd.f32 %v3777, %v4081
        %v4083 = vpop.f32.mrf.mxu0
        %4084 = vmatprep.mubr.bf16.mxu0 %v3208
        %4085 = vmatmul.mubr.bf16.gmra.mxu0 %v3192
        %v4086 = vpop.f32.mrf.mxu0
        %v4087 = vadd.f32 %v3782, %v4086
        %v4088 = vpop.f32.mrf.mxu0
        %v4089 = vpop.f32.mrf.mxu0
        %v4090 = vadd.f32 %v3785, %v4089
        %v4091 = vpop.f32.mrf.mxu0
        %4092 = vdwg.mxu0
        %4093 = vmatprep.subr.bf16.mxu0 0
        %4094 = vmatpush1.bf16.msra.mxu0 %v3907
        %4095 = vmatprep.subr.bf16.mxu0 0
        %4096 = vmatpush1.bf16.msra.mxu0 %v3906
        %4097 = vmatprep.subr.bf16.mxu0 0
        %4098 = vmatpush1.bf16.msra.mxu0 %v3905
        %4099 = vmatprep.subr.bf16.mxu0 0
        %4100 = vmatpush1.bf16.msra.mxu0 %v3904
        %4101 = vmatprep.subr.bf16.mxu0 0
        %4102 = vmatpush1.bf16.msra.mxu0 %v3903
        %4103 = vmatprep.subr.bf16.mxu0 0
        %4104 = vmatpush1.bf16.msra.mxu0 %v3902
        %4105 = vmatprep.subr.bf16.mxu0 0
        %4106 = vmatpush1.bf16.msra.mxu0 %v3901
        %4107 = vmatprep.subr.bf16.mxu0 0
        %4108 = vmatpush1.bf16.msra.mxu0 %v3900
        %4109 = vmatprep.subr.bf16.mxu0 0
        %4110 = vmatpush2.bf16.msra.mxu0 0
        %4111 = vmatprep.subr.bf16.mxu0 0
        %4112 = vmatpush2.bf16.msra.mxu0 0
        %4113 = vmatprep.subr.bf16.mxu0 0
        %4114 = vmatpush2.bf16.msra.mxu0 0
        %4115 = vmatprep.subr.bf16.mxu0 0
        %4116 = vmatpush2.bf16.msra.mxu0 0
        %4117 = vmatprep.subr.bf16.mxu0 0
        %4118 = vmatpush2.bf16.msra.mxu0 0
        %4119 = vmatprep.subr.bf16.mxu0 0
        %4120 = vmatpush2.bf16.msra.mxu0 0
        %4121 = vmatprep.subr.bf16.mxu0 0
        %4122 = vmatpush2.bf16.msra.mxu0 0
        %4123 = vmatprep.subr.bf16.mxu0 0
        %4124 = vmatpush2.bf16.msra.mxu0 0
        %4125 = vmatprep.mubr.bf16.mxu0 0
        %4126 = vmatmul.mubr.bf16.gmra.mxu0 %v3209
        %v4127 = vpop.f32.mrf.mxu0
        %v4128 = vadd.f32 %v3967, %v4127
        %v4129 = vpop.f32.mrf.mxu0
        %v4130 = vpop.f32.mrf.mxu0
        %v4131 = vadd.f32 %v3970, %v4130
        %v4132 = vpop.f32.mrf.mxu0
        %4133 = vmatprep.mubr.bf16.mxu0 0
        %4134 = vmatmul.mubr.bf16.gmra.mxu0 %v3210
        %v4135 = vpop.f32.mrf.mxu0
        %v4136 = vadd.f32 %v3975, %v4135
        %v4137 = vpop.f32.mrf.mxu0
        %v4138 = vpop.f32.mrf.mxu0
        %v4139 = vadd.f32 %v3978, %v4138
        %v4140 = vpop.f32.mrf.mxu0
        %4141 = vmatprep.mubr.bf16.mxu0 0
        %4142 = vmatmul.mubr.bf16.gmra.mxu0 %v3211
        %v4143 = vpop.f32.mrf.mxu0
        %v4144 = vadd.f32 %v3983, %v4143
        %v4145 = vpop.f32.mrf.mxu0
        %v4146 = vpop.f32.mrf.mxu0
        %v4147 = vadd.f32 %v3986, %v4146
        %v4148 = vpop.f32.mrf.mxu0
        %4149 = vmatprep.mubr.bf16.mxu0 0
        %4150 = vmatmul.mubr.bf16.gmra.mxu0 %v3212
        %v4151 = vpop.f32.mrf.mxu0
        %v4152 = vadd.f32 %v3991, %v4151
        %v4153 = vpop.f32.mrf.mxu0
        %v4154 = vpop.f32.mrf.mxu0
        %v4155 = vadd.f32 %v3994, %v4154
        %v4156 = vpop.f32.mrf.mxu0
        %4157 = vmatprep.mubr.bf16.mxu0 0
        %4158 = vmatmul.mubr.bf16.gmra.mxu0 %v3213
        %v4159 = vpop.f32.mrf.mxu0
        %v4160 = vadd.f32 %v3999, %v4159
        %v4161 = vpop.f32.mrf.mxu0
        %v4162 = vpop.f32.mrf.mxu0
        %v4163 = vadd.f32 %v4002, %v4162
        %v4164 = vpop.f32.mrf.mxu0
        %4165 = vmatprep.mubr.bf16.mxu0 0
        %4166 = vmatmul.mubr.bf16.gmra.mxu0 %v3214
        %v4167 = vpop.f32.mrf.mxu0
        %v4168 = vadd.f32 %v4007, %v4167
        %v4169 = vpop.f32.mrf.mxu0
        %v4170 = vpop.f32.mrf.mxu0
        %v4171 = vadd.f32 %v4010, %v4170
        %v4172 = vpop.f32.mrf.mxu0
        %4173 = vmatprep.mubr.bf16.mxu0 0
        %4174 = vmatmul.mubr.bf16.gmra.mxu0 %v3215
        %v4175 = vpop.f32.mrf.mxu0
        %v4176 = vadd.f32 %v4015, %v4175
        %v4177 = vpop.f32.mrf.mxu0
        %v4178 = vpop.f32.mrf.mxu0
        %v4179 = vadd.f32 %v4018, %v4178
        %v4180 = vpop.f32.mrf.mxu0
        %4181 = vmatprep.mubr.bf16.mxu0 0
        %4182 = vmatmul.mubr.bf16.gmra.mxu0 %v3216
        %v4183 = vpop.f32.mrf.mxu0
        %v4184 = vadd.f32 %v4023, %v4183
        %v4185 = vpop.f32.mrf.mxu0
        %v4186 = vpop.f32.mrf.mxu0
        %v4187 = vadd.f32 %v4026, %v4186
        %v4188 = vpop.f32.mrf.mxu0
        %4189 = vmatprep.mubr.bf16.mxu0 0
        %4190 = vmatmul.mubr.bf16.gmra.mxu0 %v3217
        %v4191 = vpop.f32.mrf.mxu0
        %v4192 = vadd.f32 %v4031, %v4191
        %v4193 = vpop.f32.mrf.mxu0
        %v4194 = vpop.f32.mrf.mxu0
        %v4195 = vadd.f32 %v4034, %v4194
        %v4196 = vpop.f32.mrf.mxu0
        %4197 = vmatprep.mubr.bf16.mxu0 0
        %4198 = vmatmul.mubr.bf16.gmra.mxu0 %v3218
        %v4199 = vpop.f32.mrf.mxu0
        %v4200 = vadd.f32 %v4039, %v4199
        %v4201 = vpop.f32.mrf.mxu0
        %v4202 = vpop.f32.mrf.mxu0
        %v4203 = vadd.f32 %v4042, %v4202
        %v4204 = vpop.f32.mrf.mxu0
        %4205 = vmatprep.mubr.bf16.mxu0 0
        %4206 = vmatmul.mubr.bf16.gmra.mxu0 %v3219
        %v4207 = vpop.f32.mrf.mxu0
        %v4208 = vadd.f32 %v4047, %v4207
        %v4209 = vpop.f32.mrf.mxu0
        %v4210 = vpop.f32.mrf.mxu0
        %v4211 = vadd.f32 %v4050, %v4210
        %v4212 = vpop.f32.mrf.mxu0
        %4213 = vmatprep.mubr.bf16.mxu0 0
        %4214 = vmatmul.mubr.bf16.gmra.mxu0 %v3220
        %v4215 = vpop.f32.mrf.mxu0
        %v4216 = vadd.f32 %v4055, %v4215
        %v4217 = vpop.f32.mrf.mxu0
        %v4218 = vpop.f32.mrf.mxu0
        %v4219 = vadd.f32 %v4058, %v4218
        %v4220 = vpop.f32.mrf.mxu0
        %4221 = vmatprep.mubr.bf16.mxu0 0
        %4222 = vmatmul.mubr.bf16.gmra.mxu0 %v3221
        %v4223 = vpop.f32.mrf.mxu0
        %v4224 = vadd.f32 %v4063, %v4223
        %v4225 = vpop.f32.mrf.mxu0
        %v4226 = vpop.f32.mrf.mxu0
        %v4227 = vadd.f32 %v4066, %v4226
        %v4228 = vpop.f32.mrf.mxu0
        %4229 = vmatprep.mubr.bf16.mxu0 0
        %4230 = vmatmul.mubr.bf16.gmra.mxu0 %v3222
        %v4231 = vpop.f32.mrf.mxu0
        %v4232 = vadd.f32 %v4071, %v4231
        %v4233 = vpop.f32.mrf.mxu0
        %v4234 = vpop.f32.mrf.mxu0
        %v4235 = vadd.f32 %v4074, %v4234
        %v4236 = vpop.f32.mrf.mxu0
        %4237 = vmatprep.mubr.bf16.mxu0 0
        %4238 = vmatmul.mubr.bf16.gmra.mxu0 %v3223
        %v4239 = vpop.f32.mrf.mxu0
        %v4240 = vadd.f32 %v4079, %v4239
        %v4241 = vpop.f32.mrf.mxu0
        %v4242 = vpop.f32.mrf.mxu0
        %v4243 = vadd.f32 %v4082, %v4242
        %v4244 = vpop.f32.mrf.mxu0
        %4245 = vmatprep.mubr.bf16.mxu0 0
        %4246 = vmatmul.mubr.bf16.gmra.mxu0 %v3224
        %v4247 = vpop.f32.mrf.mxu0
        %v4248 = vadd.f32 %v4087, %v4247
        %v4249 = vpop.f32.mrf.mxu0
        %v4250 = vpop.f32.mrf.mxu0
        %v4251 = vadd.f32 %v4090, %v4250
        %v4252 = vpop.f32.mrf.mxu0
        %4253 = vdwg.mxu0
        %s4254 = scalar_lea.vmem %s11, 384
        %v4255 = vld [vmem:[%s4254] sm:$0xf]
        %v4256 = vld [vmem:[%s4254 + $0x4] sm:$0xf]
        %v4257 = vld [vmem:[%s4254 + $0x8] sm:$0xf]
        %v4258 = vld [vmem:[%s4254 + $0xc] sm:$0xf]
        %v4259 = vld [vmem:[%s4254 + $0x10] sm:$0xf]
        %v4260 = vld [vmem:[%s4254 + $0x14] sm:$0xf]
        %v4261 = vld [vmem:[%s4254 + $0x18] sm:$0xf]
        %v4262 = vld [vmem:[%s4254 + $0x1c] sm:$0xf]
        %v4263 = vld [vmem:[%s4254 + $0x20] sm:$0xf]
        %v4264 = vld [vmem:[%s4254 + $0x24] sm:$0xf]
        %v4265 = vld [vmem:[%s4254 + $0x28] sm:$0xf]
        %v4266 = vld [vmem:[%s4254 + $0x2c] sm:$0xf]
        %v4267 = vld [vmem:[%s4254 + $0x30] sm:$0xf]
        %v4268 = vld [vmem:[%s4254 + $0x34] sm:$0xf]
        %v4269 = vld [vmem:[%s4254 + $0x38] sm:$0xf]
        %v4270 = vld [vmem:[%s4254 + $0x3c] sm:$0xf]
        %v4271 = vld [vmem:[%s4254 + $0x40] sm:$0xf]
        %v4272 = vld [vmem:[%s4254 + $0x44] sm:$0xf]
        %v4273 = vld [vmem:[%s4254 + $0x48] sm:$0xf]
        %v4274 = vld [vmem:[%s4254 + $0x4c] sm:$0xf]
        %v4275 = vld [vmem:[%s4254 + $0x50] sm:$0xf]
        %v4276 = vld [vmem:[%s4254 + $0x54] sm:$0xf]
        %v4277 = vld [vmem:[%s4254 + $0x58] sm:$0xf]
        %v4278 = vld [vmem:[%s4254 + $0x5c] sm:$0xf]
        %v4279 = vld [vmem:[%s4254 + $0x60] sm:$0xf]
        %v4280 = vld [vmem:[%s4254 + $0x64] sm:$0xf]
        %v4281 = vld [vmem:[%s4254 + $0x68] sm:$0xf]
        %v4282 = vld [vmem:[%s4254 + $0x6c] sm:$0xf]
        %v4283 = vld [vmem:[%s4254 + $0x70] sm:$0xf]
        %v4284 = vld [vmem:[%s4254 + $0x74] sm:$0xf]
        %v4285 = vld [vmem:[%s4254 + $0x78] sm:$0xf]
        %v4286 = vld [vmem:[%s4254 + $0x7c] sm:$0xf]
        %v4287 = vld [vmem:[%s4254 + $0x80] sm:$0xf]
        %v4288 = vld [vmem:[%s4254 + $0x84] sm:$0xf]
        %v4289 = vld [vmem:[%s4254 + $0x88] sm:$0xf]
        %v4290 = vld [vmem:[%s4254 + $0x8c] sm:$0xf]
        %v4291 = vld [vmem:[%s4254 + $0x90] sm:$0xf]
        %v4292 = vld [vmem:[%s4254 + $0x94] sm:$0xf]
        %v4293 = vld [vmem:[%s4254 + $0x98] sm:$0xf]
        %v4294 = vld [vmem:[%s4254 + $0x9c] sm:$0xf]
        %v4295 = vld [vmem:[%s4254 + $0xa0] sm:$0xf]
        %v4296 = vld [vmem:[%s4254 + $0xa4] sm:$0xf]
        %v4297 = vld [vmem:[%s4254 + $0xa8] sm:$0xf]
        %v4298 = vld [vmem:[%s4254 + $0xac] sm:$0xf]
        %v4299 = vld [vmem:[%s4254 + $0xb0] sm:$0xf]
        %v4300 = vld [vmem:[%s4254 + $0xb4] sm:$0xf]
        %v4301 = vld [vmem:[%s4254 + $0xb8] sm:$0xf]
        %v4302 = vld [vmem:[%s4254 + $0xbc] sm:$0xf]
        %v4351 = vunpack.c.l.b16 %v4255
        %v4352 = vunpack.c.l.b16 %v4256
        %v4353 = vunpack.c.l.b16 %v4257
        %v4354 = vunpack.c.l.b16 %v4258
        %v4355 = vunpack.c.l.b16 %v4259
        %v4356 = vunpack.c.l.b16 %v4260
        %v4357 = vunpack.c.l.b16 %v4261
        %v4358 = vunpack.c.l.b16 %v4262
        %v4359 = vunpack.c.l.b16 %v4263
        %v4360 = vunpack.c.l.b16 %v4264
        %v4361 = vunpack.c.l.b16 %v4265
        %v4362 = vunpack.c.l.b16 %v4266
        %v4363 = vunpack.c.l.b16 %v4267
        %v4364 = vunpack.c.l.b16 %v4268
        %v4365 = vunpack.c.l.b16 %v4269
        %v4366 = vunpack.c.l.b16 %v4270
        %v4367 = vunpack.c.l.b16 %v4271
        %v4368 = vunpack.c.l.b16 %v4272
        %v4369 = vunpack.c.l.b16 %v4273
        %v4370 = vunpack.c.l.b16 %v4274
        %v4371 = vunpack.c.l.b16 %v4275
        %v4372 = vunpack.c.l.b16 %v4276
        %v4373 = vunpack.c.l.b16 %v4277
        %v4374 = vunpack.c.l.b16 %v4278
        %v4375 = vunpack.c.l.b16 %v4279
        %v4376 = vunpack.c.l.b16 %v4280
        %v4377 = vunpack.c.l.b16 %v4281
        %v4378 = vunpack.c.l.b16 %v4282
        %v4379 = vunpack.c.l.b16 %v4283
        %v4380 = vunpack.c.l.b16 %v4284
        %v4381 = vunpack.c.l.b16 %v4285
        %v4382 = vunpack.c.l.b16 %v4286
        %v4383 = vunpack.c.l.b16 %v4287
        %v4384 = vunpack.c.l.b16 %v4288
        %v4385 = vunpack.c.l.b16 %v4289
        %v4386 = vunpack.c.l.b16 %v4290
        %v4387 = vunpack.c.l.b16 %v4291
        %v4388 = vunpack.c.l.b16 %v4292
        %v4389 = vunpack.c.l.b16 %v4293
        %v4390 = vunpack.c.l.b16 %v4294
        %v4391 = vunpack.c.l.b16 %v4295
        %v4392 = vunpack.c.l.b16 %v4296
        %v4393 = vunpack.c.l.b16 %v4297
        %v4394 = vunpack.c.l.b16 %v4298
        %v4395 = vunpack.c.l.b16 %v4299
        %v4396 = vunpack.c.l.b16 %v4300
        %v4397 = vunpack.c.l.b16 %v4301
        %v4398 = vunpack.c.l.b16 %v4302
        %v4399 = vpack.c.b16 %v4352, %v4351
        %v4400 = vpack.c.b16 %v4354, %v4353
        %v4401 = vpack.c.b16 %v4356, %v4355
        %v4402 = vpack.c.b16 %v4358, %v4357
        %v4403 = vpack.c.b16 %v4360, %v4359
        %v4404 = vpack.c.b16 %v4362, %v4361
        %v4405 = vpack.c.b16 %v4364, %v4363
        %v4406 = vpack.c.b16 %v4366, %v4365
        %v4407 = vpack.c.b16 %v4368, %v4367
        %v4408 = vpack.c.b16 %v4370, %v4369
        %v4409 = vpack.c.b16 %v4372, %v4371
        %v4410 = vpack.c.b16 %v4374, %v4373
        %v4411 = vpack.c.b16 %v4376, %v4375
        %v4412 = vpack.c.b16 %v4378, %v4377
        %v4413 = vpack.c.b16 %v4380, %v4379
        %v4414 = vpack.c.b16 %v4382, %v4381
        %v4415 = vpack.c.b16 %v4384, %v4383
        %v4416 = vpack.c.b16 %v4386, %v4385
        %v4417 = vpack.c.b16 %v4388, %v4387
        %v4418 = vpack.c.b16 %v4390, %v4389
        %v4419 = vpack.c.b16 %v4392, %v4391
        %v4420 = vpack.c.b16 %v4394, %v4393
        %v4421 = vpack.c.b16 %v4396, %v4395
        %v4422 = vpack.c.b16 %v4398, %v4397
        %4447 = vmatprep.subr.bf16.mxu0 0
        %4448 = vmatpush1.bf16.msra.mxu0 %v4406
        %4449 = vmatprep.subr.bf16.mxu0 0
        %4450 = vmatpush1.bf16.msra.mxu0 %v4405
        %4451 = vmatprep.subr.bf16.mxu0 0
        %4452 = vmatpush1.bf16.msra.mxu0 %v4404
        %4453 = vmatprep.subr.bf16.mxu0 0
        %4454 = vmatpush1.bf16.msra.mxu0 %v4403
        %4455 = vmatprep.subr.bf16.mxu0 0
        %4456 = vmatpush1.bf16.msra.mxu0 %v4402
        %4457 = vmatprep.subr.bf16.mxu0 0
        %4458 = vmatpush1.bf16.msra.mxu0 %v4401
        %4459 = vmatprep.subr.bf16.mxu0 0
        %4460 = vmatpush1.bf16.msra.mxu0 %v4400
        %4461 = vmatprep.subr.bf16.mxu0 0
        %4462 = vmatpush1.bf16.msra.mxu0 %v4399
        %4463 = vmatprep.subr.bf16.mxu0 0
        %4464 = vmatpush2.bf16.msra.mxu0 %v4414
        %4465 = vmatprep.subr.bf16.mxu0 0
        %4466 = vmatpush2.bf16.msra.mxu0 %v4413
        %4467 = vmatprep.subr.bf16.mxu0 0
        %4468 = vmatpush2.bf16.msra.mxu0 %v4412
        %4469 = vmatprep.subr.bf16.mxu0 0
        %4470 = vmatpush2.bf16.msra.mxu0 %v4411
        %4471 = vmatprep.subr.bf16.mxu0 0
        %4472 = vmatpush2.bf16.msra.mxu0 %v4410
        %4473 = vmatprep.subr.bf16.mxu0 0
        %4474 = vmatpush2.bf16.msra.mxu0 %v4409
        %4475 = vmatprep.subr.bf16.mxu0 0
        %4476 = vmatpush2.bf16.msra.mxu0 %v4408
        %4477 = vmatprep.subr.bf16.mxu0 0
        %4478 = vmatpush2.bf16.msra.mxu0 %v4407
        %4479 = vmatprep.mubr.bf16.mxu0 %v3194
        %4480 = vmatmul.mubr.bf16.gmra.mxu0 %v3178
        %v4481 = vpop.f32.mrf.mxu0
        %v4482 = vadd.f32 0.0, %v4481
        %v4483 = vpop.f32.mrf.mxu0
        %v4484 = vpop.f32.mrf.mxu0
        %v4485 = vadd.f32 0.0, %v4484
        %v4486 = vpop.f32.mrf.mxu0
        %4487 = vmatprep.mubr.bf16.mxu0 %v3195
        %4488 = vmatmul.mubr.bf16.gmra.mxu0 %v3179
        %v4489 = vpop.f32.mrf.mxu0
        %v4490 = vadd.f32 0.0, %v4489
        %v4491 = vpop.f32.mrf.mxu0
        %v4492 = vpop.f32.mrf.mxu0
        %v4493 = vadd.f32 0.0, %v4492
        %v4494 = vpop.f32.mrf.mxu0
        %4495 = vmatprep.mubr.bf16.mxu0 %v3196
        %4496 = vmatmul.mubr.bf16.gmra.mxu0 %v3180
        %v4497 = vpop.f32.mrf.mxu0
        %v4498 = vadd.f32 0.0, %v4497
        %v4499 = vpop.f32.mrf.mxu0
        %v4500 = vpop.f32.mrf.mxu0
        %v4501 = vadd.f32 0.0, %v4500
        %v4502 = vpop.f32.mrf.mxu0
        %4503 = vmatprep.mubr.bf16.mxu0 %v3197
        %4504 = vmatmul.mubr.bf16.gmra.mxu0 %v3181
        %v4505 = vpop.f32.mrf.mxu0
        %v4506 = vadd.f32 0.0, %v4505
        %v4507 = vpop.f32.mrf.mxu0
        %v4508 = vpop.f32.mrf.mxu0
        %v4509 = vadd.f32 0.0, %v4508
        %v4510 = vpop.f32.mrf.mxu0
        %4511 = vmatprep.mubr.bf16.mxu0 %v3198
        %4512 = vmatmul.mubr.bf16.gmra.mxu0 %v3182
        %v4513 = vpop.f32.mrf.mxu0
        %v4514 = vadd.f32 0.0, %v4513
        %v4515 = vpop.f32.mrf.mxu0
        %v4516 = vpop.f32.mrf.mxu0
        %v4517 = vadd.f32 0.0, %v4516
        %v4518 = vpop.f32.mrf.mxu0
        %4519 = vmatprep.mubr.bf16.mxu0 %v3199
        %4520 = vmatmul.mubr.bf16.gmra.mxu0 %v3183
        %v4521 = vpop.f32.mrf.mxu0
        %v4522 = vadd.f32 0.0, %v4521
        %v4523 = vpop.f32.mrf.mxu0
        %v4524 = vpop.f32.mrf.mxu0
        %v4525 = vadd.f32 0.0, %v4524
        %v4526 = vpop.f32.mrf.mxu0
        %4527 = vmatprep.mubr.bf16.mxu0 %v3200
        %4528 = vmatmul.mubr.bf16.gmra.mxu0 %v3184
        %v4529 = vpop.f32.mrf.mxu0
        %v4530 = vadd.f32 0.0, %v4529
        %v4531 = vpop.f32.mrf.mxu0
        %v4532 = vpop.f32.mrf.mxu0
        %v4533 = vadd.f32 0.0, %v4532
        %v4534 = vpop.f32.mrf.mxu0
        %4535 = vmatprep.mubr.bf16.mxu0 %v3201
        %4536 = vmatmul.mubr.bf16.gmra.mxu0 %v3185
        %v4537 = vpop.f32.mrf.mxu0
        %v4538 = vadd.f32 0.0, %v4537
        %v4539 = vpop.f32.mrf.mxu0
        %v4540 = vpop.f32.mrf.mxu0
        %v4541 = vadd.f32 0.0, %v4540
        %v4542 = vpop.f32.mrf.mxu0
        %4543 = vmatprep.mubr.bf16.mxu0 %v3202
        %4544 = vmatmul.mubr.bf16.gmra.mxu0 %v3186
        %v4545 = vpop.f32.mrf.mxu0
        %v4546 = vadd.f32 0.0, %v4545
        %v4547 = vpop.f32.mrf.mxu0
        %v4548 = vpop.f32.mrf.mxu0
        %v4549 = vadd.f32 0.0, %v4548
        %v4550 = vpop.f32.mrf.mxu0
        %4551 = vmatprep.mubr.bf16.mxu0 %v3203
        %4552 = vmatmul.mubr.bf16.gmra.mxu0 %v3187
        %v4553 = vpop.f32.mrf.mxu0
        %v4554 = vadd.f32 0.0, %v4553
        %v4555 = vpop.f32.mrf.mxu0
        %v4556 = vpop.f32.mrf.mxu0
        %v4557 = vadd.f32 0.0, %v4556
        %v4558 = vpop.f32.mrf.mxu0
        %4559 = vmatprep.mubr.bf16.mxu0 %v3204
        %4560 = vmatmul.mubr.bf16.gmra.mxu0 %v3188
        %v4561 = vpop.f32.mrf.mxu0
        %v4562 = vadd.f32 0.0, %v4561
        %v4563 = vpop.f32.mrf.mxu0
        %v4564 = vpop.f32.mrf.mxu0
        %v4565 = vadd.f32 0.0, %v4564
        %v4566 = vpop.f32.mrf.mxu0
        %4567 = vmatprep.mubr.bf16.mxu0 %v3205
        %4568 = vmatmul.mubr.bf16.gmra.mxu0 %v3189
        %v4569 = vpop.f32.mrf.mxu0
        %v4570 = vadd.f32 0.0, %v4569
        %v4571 = vpop.f32.mrf.mxu0
        %v4572 = vpop.f32.mrf.mxu0
        %v4573 = vadd.f32 0.0, %v4572
        %v4574 = vpop.f32.mrf.mxu0
        %4575 = vmatprep.mubr.bf16.mxu0 %v3206
        %4576 = vmatmul.mubr.bf16.gmra.mxu0 %v3190
        %v4577 = vpop.f32.mrf.mxu0
        %v4578 = vadd.f32 0.0, %v4577
        %v4579 = vpop.f32.mrf.mxu0
        %v4580 = vpop.f32.mrf.mxu0
        %v4581 = vadd.f32 0.0, %v4580
        %v4582 = vpop.f32.mrf.mxu0
        %4583 = vmatprep.mubr.bf16.mxu0 %v3207
        %4584 = vmatmul.mubr.bf16.gmra.mxu0 %v3191
        %v4585 = vpop.f32.mrf.mxu0
        %v4586 = vadd.f32 0.0, %v4585
        %v4587 = vpop.f32.mrf.mxu0
        %v4588 = vpop.f32.mrf.mxu0
        %v4589 = vadd.f32 0.0, %v4588
        %v4590 = vpop.f32.mrf.mxu0
        %4591 = vmatprep.mubr.bf16.mxu0 %v3208
        %4592 = vmatmul.mubr.bf16.gmra.mxu0 %v3192
        %v4593 = vpop.f32.mrf.mxu0
        %v4594 = vadd.f32 0.0, %v4593
        %v4595 = vpop.f32.mrf.mxu0
        %v4596 = vpop.f32.mrf.mxu0
        %v4597 = vadd.f32 0.0, %v4596
        %v4598 = vpop.f32.mrf.mxu0
        %4599 = vmatprep.mubr.bf16.mxu0 0
        %4600 = vmatmul.mubr.bf16.gmra.mxu0 0
        %v4601 = vpop.f32.mrf.mxu0
        %v4602 = vadd.f32 0.0, %v4601
        %v4603 = vpop.f32.mrf.mxu0
        %v4604 = vpop.f32.mrf.mxu0
        %v4605 = vadd.f32 0.0, %v4604
        %v4606 = vpop.f32.mrf.mxu0
        %4607 = vdwg.mxu0
        %4608 = vmatprep.subr.bf16.mxu0 0
        %4609 = vmatpush1.bf16.msra.mxu0 %v4422
        %4610 = vmatprep.subr.bf16.mxu0 0
        %4611 = vmatpush1.bf16.msra.mxu0 %v4421
        %4612 = vmatprep.subr.bf16.mxu0 0
        %4613 = vmatpush1.bf16.msra.mxu0 %v4420
        %4614 = vmatprep.subr.bf16.mxu0 0
        %4615 = vmatpush1.bf16.msra.mxu0 %v4419
        %4616 = vmatprep.subr.bf16.mxu0 0
        %4617 = vmatpush1.bf16.msra.mxu0 %v4418
        %4618 = vmatprep.subr.bf16.mxu0 0
        %4619 = vmatpush1.bf16.msra.mxu0 %v4417
        %4620 = vmatprep.subr.bf16.mxu0 0
        %4621 = vmatpush1.bf16.msra.mxu0 %v4416
        %4622 = vmatprep.subr.bf16.mxu0 0
        %4623 = vmatpush1.bf16.msra.mxu0 %v4415
        %4624 = vmatprep.subr.bf16.mxu0 0
        %4625 = vmatpush2.bf16.msra.mxu0 0
        %4626 = vmatprep.subr.bf16.mxu0 0
        %4627 = vmatpush2.bf16.msra.mxu0 0
        %4628 = vmatprep.subr.bf16.mxu0 0
        %4629 = vmatpush2.bf16.msra.mxu0 0
        %4630 = vmatprep.subr.bf16.mxu0 0
        %4631 = vmatpush2.bf16.msra.mxu0 0
        %4632 = vmatprep.subr.bf16.mxu0 0
        %4633 = vmatpush2.bf16.msra.mxu0 0
        %4634 = vmatprep.subr.bf16.mxu0 0
        %4635 = vmatpush2.bf16.msra.mxu0 0
        %4636 = vmatprep.subr.bf16.mxu0 0
        %4637 = vmatpush2.bf16.msra.mxu0 0
        %4638 = vmatprep.subr.bf16.mxu0 0
        %4639 = vmatpush2.bf16.msra.mxu0 0
        %4640 = vmatprep.mubr.bf16.mxu0 0
        %4641 = vmatmul.mubr.bf16.gmra.mxu0 %v3210
        %v4642 = vpop.f32.mrf.mxu0
        %v4643 = vadd.f32 %v4482, %v4642
        %v4644 = vpop.f32.mrf.mxu0
        %v4645 = vpop.f32.mrf.mxu0
        %v4646 = vadd.f32 %v4485, %v4645
        %v4647 = vpop.f32.mrf.mxu0
        %4648 = vmatprep.mubr.bf16.mxu0 0
        %4649 = vmatmul.mubr.bf16.gmra.mxu0 %v3211
        %v4650 = vpop.f32.mrf.mxu0
        %v4651 = vadd.f32 %v4490, %v4650
        %v4652 = vpop.f32.mrf.mxu0
        %v4653 = vpop.f32.mrf.mxu0
        %v4654 = vadd.f32 %v4493, %v4653
        %v4655 = vpop.f32.mrf.mxu0
        %4656 = vmatprep.mubr.bf16.mxu0 0
        %4657 = vmatmul.mubr.bf16.gmra.mxu0 %v3212
        %v4658 = vpop.f32.mrf.mxu0
        %v4659 = vadd.f32 %v4498, %v4658
        %v4660 = vpop.f32.mrf.mxu0
        %v4661 = vpop.f32.mrf.mxu0
        %v4662 = vadd.f32 %v4501, %v4661
        %v4663 = vpop.f32.mrf.mxu0
        %4664 = vmatprep.mubr.bf16.mxu0 0
        %4665 = vmatmul.mubr.bf16.gmra.mxu0 %v3213
        %v4666 = vpop.f32.mrf.mxu0
        %v4667 = vadd.f32 %v4506, %v4666
        %v4668 = vpop.f32.mrf.mxu0
        %v4669 = vpop.f32.mrf.mxu0
        %v4670 = vadd.f32 %v4509, %v4669
        %v4671 = vpop.f32.mrf.mxu0
        %4672 = vmatprep.mubr.bf16.mxu0 0
        %4673 = vmatmul.mubr.bf16.gmra.mxu0 %v3214
        %v4674 = vpop.f32.mrf.mxu0
        %v4675 = vadd.f32 %v4514, %v4674
        %v4676 = vpop.f32.mrf.mxu0
        %v4677 = vpop.f32.mrf.mxu0
        %v4678 = vadd.f32 %v4517, %v4677
        %v4679 = vpop.f32.mrf.mxu0
        %4680 = vmatprep.mubr.bf16.mxu0 0
        %4681 = vmatmul.mubr.bf16.gmra.mxu0 %v3215
        %v4682 = vpop.f32.mrf.mxu0
        %v4683 = vadd.f32 %v4522, %v4682
        %v4684 = vpop.f32.mrf.mxu0
        %v4685 = vpop.f32.mrf.mxu0
        %v4686 = vadd.f32 %v4525, %v4685
        %v4687 = vpop.f32.mrf.mxu0
        %4688 = vmatprep.mubr.bf16.mxu0 0
        %4689 = vmatmul.mubr.bf16.gmra.mxu0 %v3216
        %v4690 = vpop.f32.mrf.mxu0
        %v4691 = vadd.f32 %v4530, %v4690
        %v4692 = vpop.f32.mrf.mxu0
        %v4693 = vpop.f32.mrf.mxu0
        %v4694 = vadd.f32 %v4533, %v4693
        %v4695 = vpop.f32.mrf.mxu0
        %4696 = vmatprep.mubr.bf16.mxu0 0
        %4697 = vmatmul.mubr.bf16.gmra.mxu0 %v3217
        %v4698 = vpop.f32.mrf.mxu0
        %v4699 = vadd.f32 %v4538, %v4698
        %v4700 = vpop.f32.mrf.mxu0
        %v4701 = vpop.f32.mrf.mxu0
        %v4702 = vadd.f32 %v4541, %v4701
        %v4703 = vpop.f32.mrf.mxu0
        %4704 = vmatprep.mubr.bf16.mxu0 0
        %4705 = vmatmul.mubr.bf16.gmra.mxu0 %v3218
        %v4706 = vpop.f32.mrf.mxu0
        %v4707 = vadd.f32 %v4546, %v4706
        %v4708 = vpop.f32.mrf.mxu0
        %v4709 = vpop.f32.mrf.mxu0
        %v4710 = vadd.f32 %v4549, %v4709
        %v4711 = vpop.f32.mrf.mxu0
        %4712 = vmatprep.mubr.bf16.mxu0 0
        %4713 = vmatmul.mubr.bf16.gmra.mxu0 %v3219
        %v4714 = vpop.f32.mrf.mxu0
        %v4715 = vadd.f32 %v4554, %v4714
        %v4716 = vpop.f32.mrf.mxu0
        %v4717 = vpop.f32.mrf.mxu0
        %v4718 = vadd.f32 %v4557, %v4717
        %v4719 = vpop.f32.mrf.mxu0
        %4720 = vmatprep.mubr.bf16.mxu0 0
        %4721 = vmatmul.mubr.bf16.gmra.mxu0 %v3220
        %v4722 = vpop.f32.mrf.mxu0
        %v4723 = vadd.f32 %v4562, %v4722
        %v4724 = vpop.f32.mrf.mxu0
        %v4725 = vpop.f32.mrf.mxu0
        %v4726 = vadd.f32 %v4565, %v4725
        %v4727 = vpop.f32.mrf.mxu0
        %4728 = vmatprep.mubr.bf16.mxu0 0
        %4729 = vmatmul.mubr.bf16.gmra.mxu0 %v3221
        %v4730 = vpop.f32.mrf.mxu0
        %v4731 = vadd.f32 %v4570, %v4730
        %v4732 = vpop.f32.mrf.mxu0
        %v4733 = vpop.f32.mrf.mxu0
        %v4734 = vadd.f32 %v4573, %v4733
        %v4735 = vpop.f32.mrf.mxu0
        %4736 = vmatprep.mubr.bf16.mxu0 0
        %4737 = vmatmul.mubr.bf16.gmra.mxu0 %v3222
        %v4738 = vpop.f32.mrf.mxu0
        %v4739 = vadd.f32 %v4578, %v4738
        %v4740 = vpop.f32.mrf.mxu0
        %v4741 = vpop.f32.mrf.mxu0
        %v4742 = vadd.f32 %v4581, %v4741
        %v4743 = vpop.f32.mrf.mxu0
        %4744 = vmatprep.mubr.bf16.mxu0 0
        %4745 = vmatmul.mubr.bf16.gmra.mxu0 %v3223
        %v4746 = vpop.f32.mrf.mxu0
        %v4747 = vadd.f32 %v4586, %v4746
        %v4748 = vpop.f32.mrf.mxu0
        %v4749 = vpop.f32.mrf.mxu0
        %v4750 = vadd.f32 %v4589, %v4749
        %v4751 = vpop.f32.mrf.mxu0
        %4752 = vmatprep.mubr.bf16.mxu0 0
        %4753 = vmatmul.mubr.bf16.gmra.mxu0 %v3224
        %v4754 = vpop.f32.mrf.mxu0
        %v4755 = vadd.f32 %v4594, %v4754
        %v4756 = vpop.f32.mrf.mxu0
        %v4757 = vpop.f32.mrf.mxu0
        %v4758 = vadd.f32 %v4597, %v4757
        %v4759 = vpop.f32.mrf.mxu0
        %4760 = vmatprep.mubr.bf16.mxu0 0
        %4761 = vmatmul.mubr.bf16.gmra.mxu0 0
        %v4762 = vpop.f32.mrf.mxu0
        %v4763 = vadd.f32 %v4602, %v4762
        %v4764 = vpop.f32.mrf.mxu0
        %v4765 = vpop.f32.mrf.mxu0
        %v4766 = vadd.f32 %v4605, %v4765
        %v4767 = vpop.f32.mrf.mxu0
        %4768 = vdwg.mxu0
        %v4769 = vadd.f32 %v4128, %v4643
        %v4770 = vadd.f32 %v4131, %v4646
        %v4771 = vadd.f32 %v4136, %v4651
        %v4772 = vadd.f32 %v4139, %v4654
        %v4773 = vadd.f32 %v4144, %v4659
        %v4774 = vadd.f32 %v4147, %v4662
        %v4775 = vadd.f32 %v4152, %v4667
        %v4776 = vadd.f32 %v4155, %v4670
        %v4777 = vadd.f32 %v4160, %v4675
        %v4778 = vadd.f32 %v4163, %v4678
        %v4779 = vadd.f32 %v4168, %v4683
        %v4780 = vadd.f32 %v4171, %v4686
        %v4781 = vadd.f32 %v4176, %v4691
        %v4782 = vadd.f32 %v4179, %v4694
        %v4783 = vadd.f32 %v4184, %v4699
        %v4784 = vadd.f32 %v4187, %v4702
        %v4785 = vadd.f32 %v4192, %v4707
        %v4786 = vadd.f32 %v4195, %v4710
        %v4787 = vadd.f32 %v4200, %v4715
        %v4788 = vadd.f32 %v4203, %v4718
        %v4789 = vadd.f32 %v4208, %v4723
        %v4790 = vadd.f32 %v4211, %v4726
        %v4791 = vadd.f32 %v4216, %v4731
        %v4792 = vadd.f32 %v4219, %v4734
        %v4793 = vadd.f32 %v4224, %v4739
        %v4794 = vadd.f32 %v4227, %v4742
        %v4795 = vadd.f32 %v4232, %v4747
        %v4796 = vadd.f32 %v4235, %v4750
        %v4797 = vadd.f32 %v4240, %v4755
        %v4798 = vadd.f32 %v4243, %v4758
        %v4799 = vadd.f32 %v4248, %v4763
        %v4800 = vadd.f32 %v4251, %v4766
        %4801 = vst [vmem:[%s550] sm:$0xff] %v4769
        %4802 = vst [vmem:[%s550 + $0x8] sm:$0xff] %v4770
        %4803 = vst [vmem:[%s550 + $0x10] sm:$0xff] %v4771
        %4804 = vst [vmem:[%s550 + $0x18] sm:$0xff] %v4772
        %4805 = vst [vmem:[%s550 + $0x20] sm:$0xff] %v4773
        %4806 = vst [vmem:[%s550 + $0x28] sm:$0xff] %v4774
        %4807 = vst [vmem:[%s550 + $0x30] sm:$0xff] %v4775
        %4808 = vst [vmem:[%s550 + $0x38] sm:$0xff] %v4776
        %4809 = vst [vmem:[%s550 + $0x40] sm:$0xff] %v4777
        %4810 = vst [vmem:[%s550 + $0x48] sm:$0xff] %v4778
        %4811 = vst [vmem:[%s550 + $0x50] sm:$0xff] %v4779
        %4812 = vst [vmem:[%s550 + $0x58] sm:$0xff] %v4780
        %4813 = vst [vmem:[%s550 + $0x60] sm:$0xff] %v4781
        %4814 = vst [vmem:[%s550 + $0x68] sm:$0xff] %v4782
        %4815 = vst [vmem:[%s550 + $0x70] sm:$0xff] %v4783
        %4816 = vst [vmem:[%s550 + $0x78] sm:$0xff] %v4784
        %4817 = vst [vmem:[%s550 + $0x80] sm:$0xff] %v4785
        %4818 = vst [vmem:[%s550 + $0x88] sm:$0xff] %v4786
        %4819 = vst [vmem:[%s550 + $0x90] sm:$0xff] %v4787
        %4820 = vst [vmem:[%s550 + $0x98] sm:$0xff] %v4788
        %4821 = vst [vmem:[%s550 + $0xa0] sm:$0xff] %v4789
        %4822 = vst [vmem:[%s550 + $0xa8] sm:$0xff] %v4790
        %4823 = vst [vmem:[%s550 + $0xb0] sm:$0xff] %v4791
        %4824 = vst [vmem:[%s550 + $0xb8] sm:$0xff] %v4792
        %4825 = vst [vmem:[%s550 + $0xc0] sm:$0xff] %v4793
        %4826 = vst [vmem:[%s550 + $0xc8] sm:$0xff] %v4794
        %4827 = vst [vmem:[%s550 + $0xd0] sm:$0xff] %v4795
        %4828 = vst [vmem:[%s550 + $0xd8] sm:$0xff] %v4796
        %4829 = vst [vmem:[%s550 + $0xe0] sm:$0xff] %v4797
        %4830 = vst [vmem:[%s550 + $0xe8] sm:$0xff] %v4798
        %4831 = vst [vmem:[%s550 + $0xf0] sm:$0xff] %v4799
        %4832 = vst [vmem:[%s550 + $0xf8] sm:$0xff] %v4800
        %s4833 = sand.u32 %s305, 1
        %s4834 = scalar_lea.sflag [#allocation5], %s4833
        %s4835 = sand.u32 %s305, 1
        %s4836 = smul.addr %s4835, 256
        %s4837 = scalar_lea.vmem [#allocation17], %s4836
        // Predicated region
        $region101: #{tpu_custom_call.1} parent=67 // pred_check
          %p4838 = pneg %p315
        $region102: #{tpu_custom_call.1} parent=67 // pred_check_branch
          %4840 = sbr.rel (%p4838) target = $region104
        $region103: #{tpu_custom_call.1} parent=67 // pred_region
          %s4842 = ssub.s32 4096, 4096
          %4843 = vsyncadd %s4834, %s4842
          %s4844 = smul.addr %s35, 32
          %s4845 = smul.addr %s4844, 128
          %s4846 = scalar_lea.hbm %s12, %s4845
          %s4847 = sshll.u32 %s4837, 4
          %s4848 = int_to_ptr.vmem [resolvable:$true] %s4847
          %4853 = dma.vmem_to_hbm [thread:$0]  %s4848, 4096, %s4846, %s4834, 128, 128, 8
        $region104: #{tpu_custom_call.1} parent=67 // pred_fallthru
          _
      $region68: #{tpu_custom_call.1} parent=5 // pred_fallthru
        _
      %p4854 = scmp.le.s32.totalorder 2, %s30
      // Predicated region
      $region105: #{tpu_custom_call.1} parent=5 // pred_check
        %p4855 = pneg %p4854
      $region106: #{tpu_custom_call.1} parent=5 // pred_check_branch
        %4857 = sbr.rel (%p4855) target = $region108
      $region107: #{tpu_custom_call.1} parent=5 // pred_region
        %s4858 = ssub.s32 %s30, 2
        // Predicated region
        $region109: #{tpu_custom_call.1} parent=107 // pred_check
          %p4859 = pneg %p321
        $region110: #{tpu_custom_call.1} parent=107 // pred_check_branch
          %4861 = sbr.rel (%p4859) target = $region112
        $region111: #{tpu_custom_call.1} parent=107 // pred_region
          %s4862 = sand.u32 %s306, 1
          %s4863 = scalar_lea.sflag [#allocation5], %s4862
          %s4864 = sand.u32 %s306, 1
          %s4865 = smul.addr %s4864, 256
          %s4866 = scalar_lea.vmem [#allocation17], %s4865
          %4867 = dma.done %s4863, 4096
        $region112: #{tpu_custom_call.1} parent=107 // pred_fallthru
          _
      $region108: #{tpu_custom_call.1} parent=5 // pred_fallthru
        _
    $region6: #{tpu_custom_call.1} parent=1 // loop_footer
      %s34 = sadd.s32 1, %s30
    $region7: #{tpu_custom_call.1} parent=1 // loop_footer_branch
      %29 = sbr.rel target = $region3
    $region8: #{tpu_custom_call.1} parent=1 // loop_exit
      _
    %4868 = vsyncpa [#allocation4], 1
    %s4869 = scalar_lea.sflag [#allocation4], 1
    %4870 = vsyncpa %s4869, 1
    %4871 = vsyncpa [#allocation7], 1
    %4872 = vsyncpa [#allocation10], 1
    %4873 = vsyncpa [#allocation13], 1
    %s4874 = scalar_lea.sflag [#allocation13], 1
    %4875 = vsyncpa %s4874, 1
    %4876 = vsyncpa [#allocation16], 1
    %4877 = vsyncpa [#allocation5], 1
    %s4878 = scalar_lea.sflag [#allocation5], 1
    %4879 = vsyncpa %s4878, 1

</llo_original>
